<compile_context>
chip_gen: v7x
topology: tpu7x:2x2x1
jax: 0.10.0
libtpu: 0.0.40
codegen_flags: <defaults>
</compile_context>

<pallas_src>
import functools

import jax
import jax.numpy as jnp
from jax.experimental import pallas as pl
from jax.experimental.pallas import tpu as pltpu

LN_EPS = 1e-6  # timm ViT uses LayerNorm(eps=1e-6)

_BLOCK_WEIGHT_NAMES = ['ln1_w', 'ln1_b', 'w_qkv', 'b_qkv', 'w_o', 'b_o',
                       'ln2_w', 'ln2_b', 'w_fc1', 'b_fc1', 'w_fc2', 'b_fc2']


# ----------------------------- in-kernel helpers -----------------------------

def _erf(x):
    # Abramowitz & Stegun 7.1.26 rational approximation, |err| < 1.5e-7.
    a1, a2, a3, a4, a5 = 0.254829592, -0.284496736, 1.421413741, -1.453152027, 1.061405429
    p = 0.3275911
    ax = jnp.abs(x)
    t = 1.0 / (1.0 + p * ax)
    y = 1.0 - (((((a5 * t + a4) * t + a3) * t + a2) * t + a1) * t) * jnp.exp(-ax * ax)
    return jnp.where(x < 0, -y, y)


def _gelu_exact(x):
    # nn.GELU() default in timm == exact erf GELU (f32 math).
    return 0.5 * x * (1.0 + _erf(x * 0.7071067811865476))


def _layernorm(x, w, b):
    mu = jnp.mean(x, axis=-1, keepdims=True)
    var = jnp.mean((x - mu) ** 2, axis=-1, keepdims=True)
    return (x - mu) * jax.lax.rsqrt(var + LN_EPS) * w + b


# --------------------------------- fused kernel -----------------------------------

def vit_fused_kernel(patches_ref, pw_ref, pb_ref, cls_ref, pos_ref,
                     ln1w, ln1b, wqkv, bqkv, wo, bo,
                     ln2w, ln2b, w1, b1, w2, b2,
                     lnfw, lnfb, headw,
                     o_ref, x_sc, *, num_heads, seq_len, normalize):
    # grid = (batch_block, layer); the (Bt, S_pad, D) activation lives in x_sc (VMEM)
    # across the whole layer sweep, so per-layer weights are streamed once per Bt images.
    l = pl.program_id(1)
    Bt, S_pad, D = x_sc.shape
    N = patches_ref.shape[1]
    nh = num_heads
    dh = D // nh

    # ---- layer-0 prologue: patch embed + CLS + pos-embed, slice-stored into VMEM ----
    @pl.when(l == 0)
    def _():
        tok = (jnp.dot(patches_ref[...].reshape(Bt * N, -1).astype(jnp.bfloat16),
                       pw_ref[...], preferred_element_type=jnp.float32)
               + pb_ref[...]).reshape(Bt, N, D)
        x_sc[:, 0:1, :] = jnp.broadcast_to(cls_ref[...] + pos_ref[0:1, :], (Bt, 1, D))
        x_sc[:, 1:N + 1, :] = tok + pos_ref[1:N + 1, :]
        if S_pad > N + 1:  # keep pad rows finite (pad keys are masked below)
            x_sc[:, N + 1:, :] = jnp.zeros((Bt, S_pad - N - 1, D), jnp.float32)

    x = x_sc[...].reshape(Bt * S_pad, D)                       # f32 activation

    # --- pre-LN multi-head self-attention (heads + batch fused into one MXU batch dim) ---
    h = _layernorm(x, ln1w[0], ln1b[0])
    # 1/sqrt(dh) scale is pre-folded into the Q slice of wqkv/bqkv (parameter prep).
    qkv = (jnp.dot(h.astype(jnp.bfloat16), wqkv[0],
                   preferred_element_type=jnp.float32) + bqkv[0]).astype(jnp.bfloat16)

    def heads(t2d):                                            # (Bt*S, D) -> (Bt*nh, S, dh)
        t = t2d.reshape(Bt, S_pad, nh, dh)
        return jnp.swapaxes(t, 1, 2).reshape(Bt * nh, S_pad, dh)

    q = heads(qkv[:, 0 * D:1 * D])
    k = heads(qkv[:, 1 * D:2 * D])
    v = heads(qkv[:, 2 * D:3 * D])

    scores = jnp.einsum('hqd,hkd->hqk', q, k,
                        preferred_element_type=jnp.float32)    # (Bt*nh, S, S)
    if seq_len < S_pad:                                        # mask padded key columns
        kidx = jax.lax.broadcasted_iota(jnp.int32, scores.shape, 2)
        scores = jnp.where(kidx < seq_len, scores, -1e30)

    m = jnp.max(scores, axis=-1, keepdims=True)
    e = jnp.exp(scores - m)
    p = e * pl.reciprocal(jnp.sum(e, axis=-1, keepdims=True), approx=True)

    ctx = jnp.einsum('hqk,hkd->hqd', p.astype(jnp.bfloat16), v,
                     preferred_element_type=jnp.float32)       # (Bt*nh, S, dh)
    attn = jnp.swapaxes(ctx.reshape(Bt, nh, S_pad, dh), 1, 2).reshape(Bt * S_pad, D)

    x = x + (jnp.dot(attn.astype(jnp.bfloat16), wo[0],
                     preferred_element_type=jnp.float32) + bo[0])

    # --- pre-LN MLP ---
    h2 = _layernorm(x, ln2w[0], ln2b[0])
    h2 = jnp.dot(h2.astype(jnp.bfloat16), w1[0],
                 preferred_element_type=jnp.float32) + b1[0]
    h2 = _gelu_exact(h2)
    x = x + (jnp.dot(h2.astype(jnp.bfloat16), w2[0],
                     preferred_element_type=jnp.float32) + b2[0])

    x_sc[...] = x.reshape(Bt, S_pad, D)

    # ---- last-layer epilogue: final LN on CLS + head proj (+ normalize); write (Bt,1,E) ----
    @pl.when(l == pl.num_programs(1) - 1)
    def _():
        cls_x = x.reshape(Bt, S_pad, D)[:, 0:1, :].reshape(Bt, D)
        f = _layernorm(cls_x, lnfw[...], lnfb[...])
        feats = jnp.dot(f.astype(jnp.bfloat16), headw[...],
                        preferred_element_type=jnp.float32)     # (Bt, E)
        if normalize:
            inv = jax.lax.rsqrt(jnp.maximum(jnp.sum(feats * feats, axis=-1,
                                                    keepdims=True), 1e-24))
            feats = feats * inv
        o_ref[...] = feats.reshape(Bt, 1, feats.shape[-1])


# ------------------------------ pallas wrapper -------------------------------

def _pick_batch_block(B, max_bt=8):
    # Largest divisor of B that is <= max_bt: amortizes per-layer weight DMA across Bt
    # images while keeping the (Bt, S_pad, D) activation + temporaries inside VMEM.
    # TODO(synk): pad the batch when B is prime/large so Bt never collapses to 1.
    for bt in range(min(B, max_bt), 0, -1):
        if B % bt == 0:
            return bt
    return 1


def _vmem_limit_bytes():
    # Budget ~85% of physical VMEM (128 MiB v5e/v6e, 64 MiB v7x); conservative fallback.
    try:
        cap = int(getattr(pltpu.get_tpu_info(), 'vmem_capacity_bytes', 0))
    except Exception:
        cap = 0
    if cap <= 0:
        cap = 64 * 1024 * 1024
    return int(min(max(cap * 0.85, 32 * 1024 * 1024), 120 * 1024 * 1024))


def run_vit(patches, pos_padded, params, *, seq_len, S_pad, Bt, normalize):
    B, N, P = patches.shape
    D = params['patch_w'].shape[1]
    E = params['head_w'].shape[1]
    stacked = params['blocks']
    L = stacked['w_qkv'].shape[0]
    nb = B // Bt

    weights = [stacked[n] for n in _BLOCK_WEIGHT_NAMES]
    layer_map = lambda bb, l: (l, 0, 0)          # streamed per layer, reused across Bt images
    const2 = lambda bb, l: (0, 0)                # fetched once, resident across the grid
    w_specs = [pl.BlockSpec((1,) + w.shape[1:], layer_map) for w in weights]

    out = pl.pallas_call(
        functools.partial(vit_fused_kernel, num_heads=params['num_heads'],
                          seq_len=seq_len, normalize=normalize),
        out_shape=jax.ShapeDtypeStruct((B, 1, E), jnp.float32),
        grid=(nb, L),
        in_specs=[pl.BlockSpec((Bt, N, P), lambda bb, l: (bb, 0, 0)),
                  pl.BlockSpec((P, D), const2),
                  pl.BlockSpec((1, D), const2),
                  pl.BlockSpec((1, D), const2),
                  pl.BlockSpec((S_pad, D), const2)]
                 + w_specs
                 + [pl.BlockSpec((1, D), const2),
                    pl.BlockSpec((1, D), const2),
                    pl.BlockSpec((D, E), const2)],
        out_specs=pl.BlockSpec((Bt, 1, E), lambda bb, l: (bb, 0, 0)),
        scratch_shapes=[pltpu.VMEM((Bt, S_pad, D), jnp.float32)],
        compiler_params=pltpu.CompilerParams(
            dimension_semantics=("parallel", "arbitrary"),
            vmem_limit_bytes=_vmem_limit_bytes()),
    )(patches, params['patch_w'], params['patch_b'], params['cls_token'], pos_padded,
      *weights, params['ln_f_w'], params['ln_f_b'], params['head_w'])
    return out.reshape(B, E)


# ------------------------------- full forward ---------------------------------

def biomedclip_vision_forward(inputs, params, *, modality='rgb', normalize=False):
    """Mirrors BiomedCLIPVision.forward: takes a dict, returns a 1-tuple."""
    x_nchw = inputs[modality]                          # (B, C, H, W), NCHW
    B, C, H, W = x_nchw.shape
    p = params['patch_size']
    nh_, nw_ = H // p, W // p
    N = nh_ * nw_
    S = N + 1
    S_pad = ((S + 15) // 16) * 16                      # multiple of 16 (bf16 packing / lanes)

    # unfold into patches in (C, ph, pw) order -> equivalent to stride-p conv
    patches = x_nchw.reshape(B, C, nh_, p, nw_, p)
    patches = patches.transpose(0, 2, 4, 1, 3, 5).reshape(B, N, C * p * p)

    pos_padded = jnp.pad(params['pos_embed'], ((0, S_pad - S), (0, 0)))
    Bt = _pick_batch_block(B)

    feats = run_vit(patches, pos_padded, params, seq_len=S, S_pad=S_pad,
                    Bt=Bt, normalize=normalize)
    return (feats,)


# ------------------------------ parameter prep ---------------------------------

def prepare_block_weights(per_layer, num_heads):
    """Parameter-prep: stack per-layer weights to (L, ...), fold the 1/sqrt(dh) attention
    scale into the Q slice of w_qkv/b_qkv, and cast matmul weights to bf16."""
    D = per_layer[0]['w_qkv'].shape[0]
    scale = (D // num_heads) ** -0.5
    folded = []
    for blk in per_layer:
        blk = dict(blk)
        blk['w_qkv'] = blk['w_qkv'].at[:, :D].multiply(scale)
        blk['b_qkv'] = blk['b_qkv'].at[:, :D].multiply(scale)
        folded.append(blk)
    bf16_names = {'w_qkv', 'w_o', 'w_fc1', 'w_fc2'}
    stacked = {}
    for name in _BLOCK_WEIGHT_NAMES:
        arr = jnp.stack([b[name] for b in folded], axis=0)     # (L, ...)
        stacked[name] = arr.astype(jnp.bfloat16 if name in bf16_names else jnp.float32)
    return stacked


def init_params(key, *, C=3, patch=4, D=32, num_heads=4, mlp=128, depth=2,
                S=17, E=64):
    # TODO(synk): the real module loads open_clip_pytorch_model.bin from the HF hub;
    # here parameters are synthesized deterministically with the same shapes/roles.
    keys = jax.random.split(key, 4 + depth)

    def rnd(k, shape, scale=0.02):
        return (scale * jax.random.normal(k, shape)).astype(jnp.float32)

    P = C * patch * patch
    params = {
        'patch_size': patch,
        'num_heads': num_heads,
        'patch_w': rnd(keys[0], (P, D)).astype(jnp.bfloat16),  # conv weight, flat & T
        'patch_b': jnp.zeros((1, D), jnp.float32),
        'cls_token': rnd(keys[1], (1, D)),
        'pos_embed': rnd(keys[2], (S, D)),
        'ln_f_w': jnp.ones((1, D), jnp.float32),
        'ln_f_b': jnp.zeros((1, D), jnp.float32),
        'head_w': rnd(keys[3], (D, E)).astype(jnp.bfloat16),   # open_clip proj (no bias)
    }

    per_layer = []
    for i in range(depth):
        k = jax.random.split(keys[4 + i], 4)
        per_layer.append({
            'ln1_w': jnp.ones((1, D), jnp.float32),
            'ln1_b': jnp.zeros((1, D), jnp.float32),
            'w_qkv': rnd(k[0], (D, 3 * D)),
            'b_qkv': jnp.zeros((1, 3 * D), jnp.float32),
            'w_o': rnd(k[1], (D, D)),
            'b_o': jnp.zeros((1, D), jnp.float32),
            'ln2_w': jnp.ones((1, D), jnp.float32),
            'ln2_b': jnp.zeros((1, D), jnp.float32),
            'w_fc1': rnd(k[2], (D, mlp)),
            'b_fc1': jnp.zeros((1, mlp), jnp.float32),
            'w_fc2': rnd(k[3], (mlp, D)),
            'b_fc2': jnp.zeros((1, D), jnp.float32),
        })

    params['blocks'] = prepare_block_weights(per_layer, num_heads)
    return params


if __name__ == "__main__":
    key = jax.random.PRNGKey(0)
    pkey, xkey = jax.random.split(key)

    # small shapes consistent with the ViT forward (real model: 3x224x224, p=16,
    # D=768, 12 heads, 12 layers, emb_dim=512)
    B, C, H, W = 2, 3, 16, 16
    patch, D, heads, mlp, depth, E = 4, 32, 4, 128, 2, 64
    S = (H // patch) * (W // patch) + 1                    # 16 patches + CLS = 17

    params = init_params(pkey, C=C, patch=patch, D=D, num_heads=heads,
                         mlp=mlp, depth=depth, S=S, E=E)
    x = jax.random.normal(xkey, (B, C, H, W), jnp.float32)

    (feats,) = biomedclip_vision_forward({'rgb': x}, params,
                                         modality='rgb', normalize=False)
    jax.block_until_ready(feats)
    assert feats.shape == (B, E) and feats.dtype == jnp.float32
    print("KERNEL_OK")
</pallas_src>

<mosaic_0001>
module attributes {stable_mosaic.version = 11 : i64} {
  func.func @vit_fused_kernel(%arg0: i32, %arg1: i32, %arg2: memref<2x16x48xf32, #tpu.memory_space<vmem>>, %arg3: memref<48x32xbf16, #tpu.memory_space<vmem>>, %arg4: memref<1x32xf32, #tpu.memory_space<vmem>>, %arg5: memref<1x32xf32, #tpu.memory_space<vmem>>, %arg6: memref<32x32xf32, #tpu.memory_space<vmem>>, %arg7: memref<1x1x32xf32, #tpu.memory_space<vmem>>, %arg8: memref<1x1x32xf32, #tpu.memory_space<vmem>>, %arg9: memref<1x32x96xbf16, #tpu.memory_space<vmem>>, %arg10: memref<1x1x96xf32, #tpu.memory_space<vmem>>, %arg11: memref<1x32x32xbf16, #tpu.memory_space<vmem>>, %arg12: memref<1x1x32xf32, #tpu.memory_space<vmem>>, %arg13: memref<1x1x32xf32, #tpu.memory_space<vmem>>, %arg14: memref<1x1x32xf32, #tpu.memory_space<vmem>>, %arg15: memref<1x32x128xbf16, #tpu.memory_space<vmem>>, %arg16: memref<1x1x128xf32, #tpu.memory_space<vmem>>, %arg17: memref<1x128x32xbf16, #tpu.memory_space<vmem>>, %arg18: memref<1x1x32xf32, #tpu.memory_space<vmem>>, %arg19: memref<1x32xf32, #tpu.memory_space<vmem>>, %arg20: memref<1x32xf32, #tpu.memory_space<vmem>>, %arg21: memref<32x64xbf16, #tpu.memory_space<vmem>>, %arg22: memref<2x1x64xf32, #tpu.memory_space<vmem>>, %arg23: memref<2x32x32xf32, #tpu.memory_space<vmem>>) attributes {dimension_semantics = [#tpu.dimension_semantics<parallel>, #tpu.dimension_semantics<arbitrary>], iteration_bounds = array<i64: 1, 2>, scalar_prefetch = 0 : i64, scratch_operands = 1 : i64, tpu.core_type = #tpu.core_type<tc>, window_params = [{transform_indices = @transform_0, window_bounds = array<i64: 2, 16, 48>}, {pipeline_mode = #tpu.pipeline_mode<synchronous>, transform_indices = @transform_1, window_bounds = array<i64: 48, 32>}, {pipeline_mode = #tpu.pipeline_mode<synchronous>, transform_indices = @transform_2, window_bounds = array<i64: 1, 32>}, {pipeline_mode = #tpu.pipeline_mode<synchronous>, transform_indices = @transform_3, window_bounds = array<i64: 1, 32>}, {pipeline_mode = #tpu.pipeline_mode<synchronous>, transform_indices = @transform_4, window_bounds = array<i64: 32, 32>}, {transform_indices = @transform_5, window_bounds = array<i64: 1, 1, 32>}, {transform_indices = @transform_6, window_bounds = array<i64: 1, 1, 32>}, {transform_indices = @transform_7, window_bounds = array<i64: 1, 32, 96>}, {transform_indices = @transform_8, window_bounds = array<i64: 1, 1, 96>}, {transform_indices = @transform_9, window_bounds = array<i64: 1, 32, 32>}, {transform_indices = @transform_10, window_bounds = array<i64: 1, 1, 32>}, {transform_indices = @transform_11, window_bounds = array<i64: 1, 1, 32>}, {transform_indices = @transform_12, window_bounds = array<i64: 1, 1, 32>}, {transform_indices = @transform_13, window_bounds = array<i64: 1, 32, 128>}, {transform_indices = @transform_14, window_bounds = array<i64: 1, 1, 128>}, {transform_indices = @transform_15, window_bounds = array<i64: 1, 128, 32>}, {transform_indices = @transform_16, window_bounds = array<i64: 1, 1, 32>}, {pipeline_mode = #tpu.pipeline_mode<synchronous>, transform_indices = @transform_17, window_bounds = array<i64: 1, 32>}, {pipeline_mode = #tpu.pipeline_mode<synchronous>, transform_indices = @transform_18, window_bounds = array<i64: 1, 32>}, {pipeline_mode = #tpu.pipeline_mode<synchronous>, transform_indices = @transform_19, window_bounds = array<i64: 32, 64>}, {transform_indices = @transform_20, window_bounds = array<i64: 2, 1, 64>}]} {
    %c0_i32 = arith.constant 0 : i32
    %0 = arith.cmpi eq, %arg1, %c0_i32 : i32
    %1 = arith.extui %0 : i1 to i32
    %c0_i32_0 = arith.constant 0 : i32
    %2 = arith.cmpi ne, %1, %c0_i32_0 : i32
    scf.if %2 {
      %c0_76 = arith.constant 0 : index
      %c0_77 = arith.constant 0 : index
      %c0_78 = arith.constant 0 : index
      %170 = vector.load %arg2[%c0_76, %c0_77, %c0_78] : memref<2x16x48xf32, #tpu.memory_space<vmem>>, vector<2x16x48xf32>
      %171 = vector.shape_cast %170 : vector<2x16x48xf32> to vector<32x48xf32>
      %172 = arith.truncf %171 : vector<32x48xf32> to vector<32x48xbf16>
      %c0_79 = arith.constant 0 : index
      %c0_80 = arith.constant 0 : index
      %173 = vector.load %arg3[%c0_79, %c0_80] : memref<48x32xbf16, #tpu.memory_space<vmem>>, vector<48x32xbf16>
      %cst_81 = arith.constant dense<0.000000e+00> : vector<32x32xf32>
      %174 = tpu.matmul %172, %173, %cst_81 {dimension_numbers = #tpu.dot_dimension_numbers<[1], [0], [0], [1], [0, 0, 1, 1], [], []>} : vector<32x48xbf16>, vector<48x32xbf16>, vector<32x32xf32> -> vector<32x32xf32>
      %c0_82 = arith.constant 0 : index
      %c0_83 = arith.constant 0 : index
      %175 = vector.load %arg4[%c0_82, %c0_83] : memref<1x32xf32, #tpu.memory_space<vmem>>, vector<1x32xf32>
      %176 = vector.broadcast %175 : vector<1x32xf32> to vector<32x32xf32>
      %177 = arith.addf %174, %176 : vector<32x32xf32>
      %178 = vector.shape_cast %177 : vector<32x32xf32> to vector<2x16x32xf32>
      %c0_84 = arith.constant 0 : index
      %c0_85 = arith.constant 0 : index
      %179 = vector.load %arg5[%c0_84, %c0_85] : memref<1x32xf32, #tpu.memory_space<vmem>>, vector<1x32xf32>
      %c0_86 = arith.constant 0 : index
      %c0_87 = arith.constant 0 : index
      %180 = vector.load %arg6[%c0_86, %c0_87] : memref<32x32xf32, #tpu.memory_space<vmem>>, vector<1x32xf32>
      %181 = arith.addf %179, %180 : vector<1x32xf32>
      %182 = vector.shape_cast %181 : vector<1x32xf32> to vector<1x1x32xf32>
      %183 = vector.broadcast %182 : vector<1x1x32xf32> to vector<2x1x32xf32>
      %c0_88 = arith.constant 0 : index
      %c0_89 = arith.constant 0 : index
      %c0_90 = arith.constant 0 : index
      %184 = vector.load %arg23[%c0_88, %c0_89, %c0_90] : memref<2x32x32xf32, #tpu.memory_space<vmem>>, vector<2x1x32xf32>
      tpu.vector_store %arg23[%c0_88, %c0_89, %c0_90], %183 {strides = array<i32>} : memref<2x32x32xf32, #tpu.memory_space<vmem>>, vector<2x1x32xf32>,
      %c1 = arith.constant 1 : index
      %c0_91 = arith.constant 0 : index
      %185 = vector.load %arg6[%c1, %c0_91] : memref<32x32xf32, #tpu.memory_space<vmem>>, vector<16x32xf32>
      %186 = vector.shape_cast %185 : vector<16x32xf32> to vector<1x16x32xf32>
      %187 = vector.broadcast %186 : vector<1x16x32xf32> to vector<2x16x32xf32>
      %188 = arith.addf %178, %187 : vector<2x16x32xf32>
      %c0_92 = arith.constant 0 : index
      %c1_93 = arith.constant 1 : index
      %c0_94 = arith.constant 0 : index
      %189 = vector.load %arg23[%c0_92, %c1_93, %c0_94] : memref<2x32x32xf32, #tpu.memory_space<vmem>>, vector<2x16x32xf32>
      tpu.vector_store %arg23[%c0_92, %c1_93, %c0_94], %188 {strides = array<i32>} : memref<2x32x32xf32, #tpu.memory_space<vmem>>, vector<2x16x32xf32>,
      %cst_95 = arith.constant 0.000000e+00 : f32
      %190 = vector.broadcast %cst_95 : f32 to vector<2x15x32xf32>
      %c0_96 = arith.constant 0 : index
      %c17 = arith.constant 17 : index
      %c0_97 = arith.constant 0 : index
      %191 = vector.load %arg23[%c0_96, %c17, %c0_97] : memref<2x32x32xf32, #tpu.memory_space<vmem>>, vector<2x15x32xf32>
      tpu.vector_store %arg23[%c0_96, %c17, %c0_97], %190 {strides = array<i32>} : memref<2x32x32xf32, #tpu.memory_space<vmem>>, vector<2x15x32xf32>,
    } else {
    }
    %c0 = arith.constant 0 : index
    %c0_1 = arith.constant 0 : index
    %c0_2 = arith.constant 0 : index
    %3 = vector.load %arg23[%c0, %c0_1, %c0_2] : memref<2x32x32xf32, #tpu.memory_space<vmem>>, vector<2x32x32xf32>
    %4 = vector.shape_cast %3 : vector<2x32x32xf32> to vector<64x32xf32>
    %c0_3 = arith.constant 0 : index
    %c0_4 = arith.constant 0 : index
    %c0_5 = arith.constant 0 : index
    %5 = vector.load %arg7[%c0_3, %c0_4, %c0_5] : memref<1x1x32xf32, #tpu.memory_space<vmem>>, vector<1x1x32xf32>
    %6 = vector.shape_cast %5 : vector<1x1x32xf32> to vector<1x32xf32>
    %c0_6 = arith.constant 0 : index
    %c0_7 = arith.constant 0 : index
    %c0_8 = arith.constant 0 : index
    %7 = vector.load %arg8[%c0_6, %c0_7, %c0_8] : memref<1x1x32xf32, #tpu.memory_space<vmem>>, vector<1x1x32xf32>
    %8 = vector.shape_cast %7 : vector<1x1x32xf32> to vector<1x32xf32>
    %cst = arith.constant dense<0.000000e+00> : vector<64xf32>
    %9 = vector.multi_reduction <add>, %4, %cst [1] : vector<64x32xf32> to vector<64xf32>
    %10 = vector.shape_cast %9 : vector<64xf32> to vector<64x1xf32>
    %cst_9 = arith.constant 3.200000e+01 : f32
    %11 = vector.broadcast %cst_9 : f32 to vector<64x1xf32>
    %12 = arith.divf %10, %11 : vector<64x1xf32>
    %13 = vector.broadcast %12 : vector<64x1xf32> to vector<64x32xf32>
    %14 = arith.subf %4, %13 : vector<64x32xf32>
    %15 = arith.mulf %14, %14 : vector<64x32xf32>
    %cst_10 = arith.constant dense<0.000000e+00> : vector<64xf32>
    %16 = vector.multi_reduction <add>, %15, %cst_10 [1] : vector<64x32xf32> to vector<64xf32>
    %17 = vector.shape_cast %16 : vector<64xf32> to vector<64x1xf32>
    %cst_11 = arith.constant 3.200000e+01 : f32
    %18 = vector.broadcast %cst_11 : f32 to vector<64x1xf32>
    %19 = arith.divf %17, %18 : vector<64x1xf32>
    %20 = vector.broadcast %12 : vector<64x1xf32> to vector<64x32xf32>
    %21 = arith.subf %4, %20 : vector<64x32xf32>
    %cst_12 = arith.constant 9.99999997E-7 : f32
    %22 = vector.broadcast %cst_12 : f32 to vector<64x1xf32>
    %23 = arith.addf %19, %22 : vector<64x1xf32>
    %24 = math.rsqrt %23 : vector<64x1xf32>
    %25 = vector.broadcast %24 : vector<64x1xf32> to vector<64x32xf32>
    %26 = arith.mulf %21, %25 : vector<64x32xf32>
    %27 = vector.broadcast %6 : vector<1x32xf32> to vector<64x32xf32>
    %28 = arith.mulf %26, %27 : vector<64x32xf32>
    %29 = vector.broadcast %8 : vector<1x32xf32> to vector<64x32xf32>
    %30 = arith.addf %28, %29 : vector<64x32xf32>
    %31 = arith.truncf %30 : vector<64x32xf32> to vector<64x32xbf16>
    %c0_13 = arith.constant 0 : index
    %c0_14 = arith.constant 0 : index
    %c0_15 = arith.constant 0 : index
    %32 = vector.load %arg9[%c0_13, %c0_14, %c0_15] : memref<1x32x96xbf16, #tpu.memory_space<vmem>>, vector<1x32x96xbf16>
    %33 = vector.shape_cast %32 : vector<1x32x96xbf16> to vector<32x96xbf16>
    %cst_16 = arith.constant dense<0.000000e+00> : vector<64x96xf32>
    %34 = tpu.matmul %31, %33, %cst_16 {dimension_numbers = #tpu.dot_dimension_numbers<[1], [0], [0], [1], [0, 0, 1, 1], [], []>} : vector<64x32xbf16>, vector<32x96xbf16>, vector<64x96xf32> -> vector<64x96xf32>
    %c0_17 = arith.constant 0 : index
    %c0_18 = arith.constant 0 : index
    %c0_19 = arith.constant 0 : index
    %35 = vector.load %arg10[%c0_17, %c0_18, %c0_19] : memref<1x1x96xf32, #tpu.memory_space<vmem>>, vector<1x1x96xf32>
    %36 = vector.shape_cast %35 : vector<1x1x96xf32> to vector<1x96xf32>
    %37 = vector.broadcast %36 : vector<1x96xf32> to vector<64x96xf32>
    %38 = arith.addf %34, %37 : vector<64x96xf32>
    %39 = arith.truncf %38 : vector<64x96xf32> to vector<64x96xbf16>
    %40 = vector.extract_strided_slice %39 {offsets = [0, 0], sizes = [64, 32], strides = [1, 1]} : vector<64x96xbf16> to vector<64x32xbf16>
    %41 = vector.shape_cast %40 : vector<64x32xbf16> to vector<2x32x4x8xbf16>
    %42 = tpu.transpose %41, [0, 2, 1, 3] : vector<2x32x4x8xbf16> -> vector<2x4x32x8xbf16>
    %43 = vector.shape_cast %42 : vector<2x4x32x8xbf16> to vector<8x32x8xbf16>
    %44 = vector.extract_strided_slice %39 {offsets = [0, 32], sizes = [64, 32], strides = [1, 1]} : vector<64x96xbf16> to vector<64x32xbf16>
    %45 = vector.shape_cast %44 : vector<64x32xbf16> to vector<2x32x4x8xbf16>
    %46 = tpu.transpose %45, [0, 2, 1, 3] : vector<2x32x4x8xbf16> -> vector<2x4x32x8xbf16>
    %47 = vector.shape_cast %46 : vector<2x4x32x8xbf16> to vector<8x32x8xbf16>
    %48 = vector.extract_strided_slice %39 {offsets = [0, 64], sizes = [64, 32], strides = [1, 1]} : vector<64x96xbf16> to vector<64x32xbf16>
    %49 = vector.shape_cast %48 : vector<64x32xbf16> to vector<2x32x4x8xbf16>
    %50 = tpu.transpose %49, [0, 2, 1, 3] : vector<2x32x4x8xbf16> -> vector<2x4x32x8xbf16>
    %51 = vector.shape_cast %50 : vector<2x4x32x8xbf16> to vector<8x32x8xbf16>
    "tpu.trace_start"() <{level = 10 : i32, message = "hqd,hkd->hqk"}> : () -> ()
    %cst_20 = arith.constant dense<0.000000e+00> : vector<8x32x32xf32>
    %52 = tpu.matmul %43, %47, %cst_20 {dimension_numbers = #tpu.dot_dimension_numbers<[2], [2], [1], [1], [0, 0, 0, 1, 1, 1], [0], [0]>} : vector<8x32x8xbf16>, vector<8x32x8xbf16>, vector<8x32x32xf32> -> vector<8x32x32xf32>
    "tpu.trace_stop"() : () -> ()
    %53 = tpu.iota {dimensions = array<i32: 2>} : vector<8x32x32xi32>
    %c17_i32 = arith.constant 17 : i32
    %54 = vector.broadcast %c17_i32 : i32 to vector<8x32x32xi32>
    %55 = arith.cmpi slt, %53, %54 : vector<8x32x32xi32>
    %cst_21 = arith.constant -1.000000e+30 : f32
    %56 = vector.broadcast %cst_21 : f32 to vector<8x32x32xf32>
    %57 = arith.select %55, %52, %56 : vector<8x32x32xi1>, vector<8x32x32xf32>
    %cst_22 = arith.constant dense<0xFF800000> : vector<8x32xf32>
    %58 = vector.multi_reduction <maximumf>, %57, %cst_22 [2] : vector<8x32x32xf32> to vector<8x32xf32>
    %59 = vector.shape_cast %58 : vector<8x32xf32> to vector<8x32x1xf32>
    %60 = vector.broadcast %59 : vector<8x32x1xf32> to vector<8x32x32xf32>
    %61 = arith.subf %57, %60 : vector<8x32x32xf32>
    %62 = math.exp %61 : vector<8x32x32xf32>
    %cst_23 = arith.constant dense<0.000000e+00> : vector<8x32xf32>
    %63 = vector.multi_reduction <add>, %62, %cst_23 [2] : vector<8x32x32xf32> to vector<8x32xf32>
    %64 = vector.shape_cast %63 : vector<8x32xf32> to vector<8x32x1xf32>
    %65 = tpu.reciprocal %64 {approx = true} : vector<8x32x1xf32> -> vector<8x32x1xf32>
    %66 = vector.broadcast %65 : vector<8x32x1xf32> to vector<8x32x32xf32>
    %67 = arith.mulf %62, %66 : vector<8x32x32xf32>
    %68 = arith.truncf %67 : vector<8x32x32xf32> to vector<8x32x32xbf16>
    "tpu.trace_start"() <{level = 10 : i32, message = "hqk,hkd->hqd"}> : () -> ()
    %cst_24 = arith.constant dense<0.000000e+00> : vector<8x32x8xf32>
    %69 = tpu.matmul %68, %51, %cst_24 {dimension_numbers = #tpu.dot_dimension_numbers<[2], [1], [1], [2], [0, 0, 0, 1, 1, 2], [0], [0]>} : vector<8x32x32xbf16>, vector<8x32x8xbf16>, vector<8x32x8xf32> -> vector<8x32x8xf32>
    "tpu.trace_stop"() : () -> ()
    %70 = vector.shape_cast %69 : vector<8x32x8xf32> to vector<2x4x32x8xf32>
    %71 = tpu.transpose %70, [0, 2, 1, 3] : vector<2x4x32x8xf32> -> vector<2x32x4x8xf32>
    %72 = vector.shape_cast %71 : vector<2x32x4x8xf32> to vector<64x32xf32>
    %73 = arith.truncf %72 : vector<64x32xf32> to vector<64x32xbf16>
    %c0_25 = arith.constant 0 : index
    %c0_26 = arith.constant 0 : index
    %c0_27 = arith.constant 0 : index
    %74 = vector.load %arg11[%c0_25, %c0_26, %c0_27] : memref<1x32x32xbf16, #tpu.memory_space<vmem>>, vector<1x32x32xbf16>
    %75 = vector.shape_cast %74 : vector<1x32x32xbf16> to vector<32x32xbf16>
    %cst_28 = arith.constant dense<0.000000e+00> : vector<64x32xf32>
    %76 = tpu.matmul %73, %75, %cst_28 {dimension_numbers = #tpu.dot_dimension_numbers<[1], [0], [0], [1], [0, 0, 1, 1], [], []>} : vector<64x32xbf16>, vector<32x32xbf16>, vector<64x32xf32> -> vector<64x32xf32>
    %c0_29 = arith.constant 0 : index
    %c0_30 = arith.constant 0 : index
    %c0_31 = arith.constant 0 : index
    %77 = vector.load %arg12[%c0_29, %c0_30, %c0_31] : memref<1x1x32xf32, #tpu.memory_space<vmem>>, vector<1x1x32xf32>
    %78 = vector.shape_cast %77 : vector<1x1x32xf32> to vector<1x32xf32>
    %79 = vector.broadcast %78 : vector<1x32xf32> to vector<64x32xf32>
    %80 = arith.addf %76, %79 : vector<64x32xf32>
    %81 = arith.addf %4, %80 : vector<64x32xf32>
    %c0_32 = arith.constant 0 : index
    %c0_33 = arith.constant 0 : index
    %c0_34 = arith.constant 0 : index
    %82 = vector.load %arg13[%c0_32, %c0_33, %c0_34] : memref<1x1x32xf32, #tpu.memory_space<vmem>>, vector<1x1x32xf32>
    %83 = vector.shape_cast %82 : vector<1x1x32xf32> to vector<1x32xf32>
    %c0_35 = arith.constant 0 : index
    %c0_36 = arith.constant 0 : index
    %c0_37 = arith.constant 0 : index
    %84 = vector.load %arg14[%c0_35, %c0_36, %c0_37] : memref<1x1x32xf32, #tpu.memory_space<vmem>>, vector<1x1x32xf32>
    %85 = vector.shape_cast %84 : vector<1x1x32xf32> to vector<1x32xf32>
    %cst_38 = arith.constant dense<0.000000e+00> : vector<64xf32>
    %86 = vector.multi_reduction <add>, %81, %cst_38 [1] : vector<64x32xf32> to vector<64xf32>
    %87 = vector.shape_cast %86 : vector<64xf32> to vector<64x1xf32>
    %cst_39 = arith.constant 3.200000e+01 : f32
    %88 = vector.broadcast %cst_39 : f32 to vector<64x1xf32>
    %89 = arith.divf %87, %88 : vector<64x1xf32>
    %90 = vector.broadcast %89 : vector<64x1xf32> to vector<64x32xf32>
    %91 = arith.subf %81, %90 : vector<64x32xf32>
    %92 = arith.mulf %91, %91 : vector<64x32xf32>
    %cst_40 = arith.constant dense<0.000000e+00> : vector<64xf32>
    %93 = vector.multi_reduction <add>, %92, %cst_40 [1] : vector<64x32xf32> to vector<64xf32>
    %94 = vector.shape_cast %93 : vector<64xf32> to vector<64x1xf32>
    %cst_41 = arith.constant 3.200000e+01 : f32
    %95 = vector.broadcast %cst_41 : f32 to vector<64x1xf32>
    %96 = arith.divf %94, %95 : vector<64x1xf32>
    %97 = vector.broadcast %89 : vector<64x1xf32> to vector<64x32xf32>
    %98 = arith.subf %81, %97 : vector<64x32xf32>
    %cst_42 = arith.constant 9.99999997E-7 : f32
    %99 = vector.broadcast %cst_42 : f32 to vector<64x1xf32>
    %100 = arith.addf %96, %99 : vector<64x1xf32>
    %101 = math.rsqrt %100 : vector<64x1xf32>
    %102 = vector.broadcast %101 : vector<64x1xf32> to vector<64x32xf32>
    %103 = arith.mulf %98, %102 : vector<64x32xf32>
    %104 = vector.broadcast %83 : vector<1x32xf32> to vector<64x32xf32>
    %105 = arith.mulf %103, %104 : vector<64x32xf32>
    %106 = vector.broadcast %85 : vector<1x32xf32> to vector<64x32xf32>
    %107 = arith.addf %105, %106 : vector<64x32xf32>
    %108 = arith.truncf %107 : vector<64x32xf32> to vector<64x32xbf16>
    %c0_43 = arith.constant 0 : index
    %c0_44 = arith.constant 0 : index
    %c0_45 = arith.constant 0 : index
    %109 = vector.load %arg15[%c0_43, %c0_44, %c0_45] : memref<1x32x128xbf16, #tpu.memory_space<vmem>>, vector<1x32x128xbf16>
    %110 = vector.shape_cast %109 : vector<1x32x128xbf16> to vector<32x128xbf16>
    %cst_46 = arith.constant dense<0.000000e+00> : vector<64x128xf32>
    %111 = tpu.matmul %108, %110, %cst_46 {dimension_numbers = #tpu.dot_dimension_numbers<[1], [0], [0], [1], [0, 0, 1, 1], [], []>} : vector<64x32xbf16>, vector<32x128xbf16>, vector<64x128xf32> -> vector<64x128xf32>
    %c0_47 = arith.constant 0 : index
    %c0_48 = arith.constant 0 : index
    %c0_49 = arith.constant 0 : index
    %112 = vector.load %arg16[%c0_47, %c0_48, %c0_49] : memref<1x1x128xf32, #tpu.memory_space<vmem>>, vector<1x1x128xf32>
    %113 = vector.shape_cast %112 : vector<1x1x128xf32> to vector<1x128xf32>
    %114 = vector.broadcast %113 : vector<1x128xf32> to vector<64x128xf32>
    %115 = arith.addf %111, %114 : vector<64x128xf32>
    %cst_50 = arith.constant 5.000000e-01 : f32
    %116 = vector.broadcast %cst_50 : f32 to vector<64x128xf32>
    %117 = arith.mulf %116, %115 : vector<64x128xf32>
    %cst_51 = arith.constant 0.707106769 : f32
    %118 = vector.broadcast %cst_51 : f32 to vector<64x128xf32>
    %119 = arith.mulf %115, %118 : vector<64x128xf32>
    %120 = math.absf %119 : vector<64x128xf32>
    %cst_52 = arith.constant 0.327591091 : f32
    %121 = vector.broadcast %cst_52 : f32 to vector<64x128xf32>
    %122 = arith.mulf %121, %120 : vector<64x128xf32>
    %cst_53 = arith.constant 1.000000e+00 : f32
    %123 = vector.broadcast %cst_53 : f32 to vector<64x128xf32>
    %124 = arith.addf %123, %122 : vector<64x128xf32>
    %cst_54 = arith.constant 1.000000e+00 : f32
    %125 = vector.broadcast %cst_54 : f32 to vector<64x128xf32>
    %126 = arith.divf %125, %124 : vector<64x128xf32>
    %cst_55 = arith.constant 1.06140542 : f32
    %127 = vector.broadcast %cst_55 : f32 to vector<64x128xf32>
    %128 = arith.mulf %127, %126 : vector<64x128xf32>
    %cst_56 = arith.constant -1.45315206 : f32
    %129 = vector.broadcast %cst_56 : f32 to vector<64x128xf32>
    %130 = arith.addf %128, %129 : vector<64x128xf32>
    %131 = arith.mulf %130, %126 : vector<64x128xf32>
    %cst_57 = arith.constant 1.42141378 : f32
    %132 = vector.broadcast %cst_57 : f32 to vector<64x128xf32>
    %133 = arith.addf %131, %132 : vector<64x128xf32>
    %134 = arith.mulf %133, %126 : vector<64x128xf32>
    %cst_58 = arith.constant -0.284496725 : f32
    %135 = vector.broadcast %cst_58 : f32 to vector<64x128xf32>
    %136 = arith.addf %134, %135 : vector<64x128xf32>
    %137 = arith.mulf %136, %126 : vector<64x128xf32>
    %cst_59 = arith.constant 0.254829586 : f32
    %138 = vector.broadcast %cst_59 : f32 to vector<64x128xf32>
    %139 = arith.addf %137, %138 : vector<64x128xf32>
    %140 = arith.mulf %139, %126 : vector<64x128xf32>
    %cst_60 = arith.constant 0.000000e+00 : f32
    %141 = vector.broadcast %cst_60 : f32 to vector<64x128xf32>
    %142 = arith.subf %141, %120 : vector<64x128xf32>
    %143 = arith.mulf %142, %120 : vector<64x128xf32>
    %144 = math.exp %143 : vector<64x128xf32>
    %145 = arith.mulf %140, %144 : vector<64x128xf32>
    %cst_61 = arith.constant 1.000000e+00 : f32
    %146 = vector.broadcast %cst_61 : f32 to vector<64x128xf32>
    %147 = arith.subf %146, %145 : vector<64x128xf32>
    %cst_62 = arith.constant 0.000000e+00 : f32
    %148 = vector.broadcast %cst_62 : f32 to vector<64x128xf32>
    %149 = arith.cmpf olt, %119, %148 : vector<64x128xf32>
    %cst_63 = arith.constant 0.000000e+00 : f32
    %150 = vector.broadcast %cst_63 : f32 to vector<64x128xf32>
    %151 = arith.subf %150, %147 : vector<64x128xf32>
    %152 = arith.select %149, %151, %147 : vector<64x128xi1>, vector<64x128xf32>
    %cst_64 = arith.constant 1.000000e+00 : f32
    %153 = vector.broadcast %cst_64 : f32 to vector<64x128xf32>
    %154 = arith.addf %153, %152 : vector<64x128xf32>
    %155 = arith.mulf %117, %154 : vector<64x128xf32>
    %156 = arith.truncf %155 : vector<64x128xf32> to vector<64x128xbf16>
    %c0_65 = arith.constant 0 : index
    %c0_66 = arith.constant 0 : index
    %c0_67 = arith.constant 0 : index
    %157 = vector.load %arg17[%c0_65, %c0_66, %c0_67] : memref<1x128x32xbf16, #tpu.memory_space<vmem>>, vector<1x128x32xbf16>
    %158 = vector.shape_cast %157 : vector<1x128x32xbf16> to vector<128x32xbf16>
    %cst_68 = arith.constant dense<0.000000e+00> : vector<64x32xf32>
    %159 = tpu.matmul %156, %158, %cst_68 {dimension_numbers = #tpu.dot_dimension_numbers<[1], [0], [0], [1], [0, 0, 1, 1], [], []>} : vector<64x128xbf16>, vector<128x32xbf16>, vector<64x32xf32> -> vector<64x32xf32>
    %c0_69 = arith.constant 0 : index
    %c0_70 = arith.constant 0 : index
    %c0_71 = arith.constant 0 : index
    %160 = vector.load %arg18[%c0_69, %c0_70, %c0_71] : memref<1x1x32xf32, #tpu.memory_space<vmem>>, vector<1x1x32xf32>
    %161 = vector.shape_cast %160 : vector<1x1x32xf32> to vector<1x32xf32>
    %162 = vector.broadcast %161 : vector<1x32xf32> to vector<64x32xf32>
    %163 = arith.addf %159, %162 : vector<64x32xf32>
    %164 = arith.addf %81, %163 : vector<64x32xf32>
    %165 = vector.shape_cast %164 : vector<64x32xf32> to vector<2x32x32xf32>
    %c0_72 = arith.constant 0 : index
    %c0_73 = arith.constant 0 : index
    %c0_74 = arith.constant 0 : index
    %166 = vector.load %arg23[%c0_72, %c0_73, %c0_74] : memref<2x32x32xf32, #tpu.memory_space<vmem>>, vector<2x32x32xf32>
    tpu.vector_store %arg23[%c0_72, %c0_73, %c0_74], %165 {strides = array<i32>} : memref<2x32x32xf32, #tpu.memory_space<vmem>>, vector<2x32x32xf32>,
    %c1_i32 = arith.constant 1 : i32
    %167 = arith.cmpi eq, %arg1, %c1_i32 : i32
    %168 = arith.extui %167 : i1 to i32
    %c0_i32_75 = arith.constant 0 : i32
    %169 = arith.cmpi ne, %168, %c0_i32_75 : i32
    scf.if %169 {
      %170 = vector.shape_cast %164 : vector<64x32xf32> to vector<2x32x32xf32>
      %171 = vector.extract_strided_slice %170 {offsets = [0, 0, 0], sizes = [2, 1, 32], strides = [1, 1, 1]} : vector<2x32x32xf32> to vector<2x1x32xf32>
      %172 = vector.shape_cast %171 : vector<2x1x32xf32> to vector<2x32xf32>
      %c0_76 = arith.constant 0 : index
      %c0_77 = arith.constant 0 : index
      %173 = vector.load %arg19[%c0_76, %c0_77] : memref<1x32xf32, #tpu.memory_space<vmem>>, vector<1x32xf32>
      %c0_78 = arith.constant 0 : index
      %c0_79 = arith.constant 0 : index
      %174 = vector.load %arg20[%c0_78, %c0_79] : memref<1x32xf32, #tpu.memory_space<vmem>>, vector<1x32xf32>
      %cst_80 = arith.constant dense<0.000000e+00> : vector<2xf32>
      %175 = vector.multi_reduction <add>, %172, %cst_80 [1] : vector<2x32xf32> to vector<2xf32>
      %176 = vector.shape_cast %175 : vector<2xf32> to vector<2x1xf32>
      %cst_81 = arith.constant 3.200000e+01 : f32
      %177 = vector.broadcast %cst_81 : f32 to vector<2x1xf32>
      %178 = arith.divf %176, %177 : vector<2x1xf32>
      %179 = vector.broadcast %178 : vector<2x1xf32> to vector<2x32xf32>
      %180 = arith.subf %172, %179 : vector<2x32xf32>
      %181 = arith.mulf %180, %180 : vector<2x32xf32>
      %cst_82 = arith.constant dense<0.000000e+00> : vector<2xf32>
      %182 = vector.multi_reduction <add>, %181, %cst_82 [1] : vector<2x32xf32> to vector<2xf32>
      %183 = vector.shape_cast %182 : vector<2xf32> to vector<2x1xf32>
      %cst_83 = arith.constant 3.200000e+01 : f32
      %184 = vector.broadcast %cst_83 : f32 to vector<2x1xf32>
      %185 = arith.divf %183, %184 : vector<2x1xf32>
      %186 = vector.broadcast %178 : vector<2x1xf32> to vector<2x32xf32>
      %187 = arith.subf %172, %186 : vector<2x32xf32>
      %cst_84 = arith.constant 9.99999997E-7 : f32
      %188 = vector.broadcast %cst_84 : f32 to vector<2x1xf32>
      %189 = arith.addf %185, %188 : vector<2x1xf32>
      %190 = math.rsqrt %189 : vector<2x1xf32>
      %191 = vector.broadcast %190 : vector<2x1xf32> to vector<2x32xf32>
      %192 = arith.mulf %187, %191 : vector<2x32xf32>
      %193 = vector.broadcast %173 : vector<1x32xf32> to vector<2x32xf32>
      %194 = arith.mulf %192, %193 : vector<2x32xf32>
      %195 = vector.broadcast %174 : vector<1x32xf32> to vector<2x32xf32>
      %196 = arith.addf %194, %195 : vector<2x32xf32>
      %197 = arith.truncf %196 : vector<2x32xf32> to vector<2x32xbf16>
      %c0_85 = arith.constant 0 : index
      %c0_86 = arith.constant 0 : index
      %198 = vector.load %arg21[%c0_85, %c0_86] : memref<32x64xbf16, #tpu.memory_space<vmem>>, vector<32x64xbf16>
      %cst_87 = arith.constant dense<0.000000e+00> : vector<2x64xf32>
      %199 = tpu.matmul %197, %198, %cst_87 {dimension_numbers = #tpu.dot_dimension_numbers<[1], [0], [0], [1], [0, 0, 1, 1], [], []>} : vector<2x32xbf16>, vector<32x64xbf16>, vector<2x64xf32> -> vector<2x64xf32>
      %200 = vector.shape_cast %199 : vector<2x64xf32> to vector<2x1x64xf32>
      %c0_88 = arith.constant 0 : index
      %c0_89 = arith.constant 0 : index
      %c0_90 = arith.constant 0 : index
      %201 = vector.load %arg22[%c0_88, %c0_89, %c0_90] : memref<2x1x64xf32, #tpu.memory_space<vmem>>, vector<2x1x64xf32>
      tpu.vector_store %arg22[%c0_88, %c0_89, %c0_90], %200 {strides = array<i32>} : memref<2x1x64xf32, #tpu.memory_space<vmem>>, vector<2x1x64xf32>,
    } else {
    }
    return
  }
  func.func @transform_0(%arg0: i32, %arg1: i32) -> (i32, i32, i32) {
    %c0_i32 = arith.constant 0 : i32
    %c0_i32_0 = arith.constant 0 : i32
    %c0_i32_1 = arith.constant 0 : i32
    return %arg0, %c0_i32, %c0_i32_0 : i32, i32, i32
  }
  func.func @transform_1(%arg0: i32, %arg1: i32) -> (i32, i32) {
    %c0_i32 = arith.constant 0 : i32
    %c0_i32_0 = arith.constant 0 : i32
    %c0_i32_1 = arith.constant 0 : i32
    return %c0_i32, %c0_i32_0 : i32, i32
  }
  func.func @transform_2(%arg0: i32, %arg1: i32) -> (i32, i32) {
    %c0_i32 = arith.constant 0 : i32
    %c0_i32_0 = arith.constant 0 : i32
    %c0_i32_1 = arith.constant 0 : i32
    return %c0_i32, %c0_i32_0 : i32, i32
  }
  func.func @transform_3(%arg0: i32, %arg1: i32) -> (i32, i32) {
    %c0_i32 = arith.constant 0 : i32
    %c0_i32_0 = arith.constant 0 : i32
    %c0_i32_1 = arith.constant 0 : i32
    return %c0_i32, %c0_i32_0 : i32, i32
  }
  func.func @transform_4(%arg0: i32, %arg1: i32) -> (i32, i32) {
    %c0_i32 = arith.constant 0 : i32
    %c0_i32_0 = arith.constant 0 : i32
    %c0_i32_1 = arith.constant 0 : i32
    return %c0_i32, %c0_i32_0 : i32, i32
  }
  func.func @transform_5(%arg0: i32, %arg1: i32) -> (i32, i32, i32) {
    %c0_i32 = arith.constant 0 : i32
    %c0_i32_0 = arith.constant 0 : i32
    %c0_i32_1 = arith.constant 0 : i32
    return %arg1, %c0_i32, %c0_i32_0 : i32, i32, i32
  }
  func.func @transform_6(%arg0: i32, %arg1: i32) -> (i32, i32, i32) {
    %c0_i32 = arith.constant 0 : i32
    %c0_i32_0 = arith.constant 0 : i32
    %c0_i32_1 = arith.constant 0 : i32
    return %arg1, %c0_i32, %c0_i32_0 : i32, i32, i32
  }
  func.func @transform_7(%arg0: i32, %arg1: i32) -> (i32, i32, i32) {
    %c0_i32 = arith.constant 0 : i32
    %c0_i32_0 = arith.constant 0 : i32
    %c0_i32_1 = arith.constant 0 : i32
    return %arg1, %c0_i32, %c0_i32_0 : i32, i32, i32
  }
  func.func @transform_8(%arg0: i32, %arg1: i32) -> (i32, i32, i32) {
    %c0_i32 = arith.constant 0 : i32
    %c0_i32_0 = arith.constant 0 : i32
    %c0_i32_1 = arith.constant 0 : i32
    return %arg1, %c0_i32, %c0_i32_0 : i32, i32, i32
  }
  func.func @transform_9(%arg0: i32, %arg1: i32) -> (i32, i32, i32) {
    %c0_i32 = arith.constant 0 : i32
    %c0_i32_0 = arith.constant 0 : i32
    %c0_i32_1 = arith.constant 0 : i32
    return %arg1, %c0_i32, %c0_i32_0 : i32, i32, i32
  }
  func.func @transform_10(%arg0: i32, %arg1: i32) -> (i32, i32, i32) {
    %c0_i32 = arith.constant 0 : i32
    %c0_i32_0 = arith.constant 0 : i32
    %c0_i32_1 = arith.constant 0 : i32
    return %arg1, %c0_i32, %c0_i32_0 : i32, i32, i32
  }
  func.func @transform_11(%arg0: i32, %arg1: i32) -> (i32, i32, i32) {
    %c0_i32 = arith.constant 0 : i32
    %c0_i32_0 = arith.constant 0 : i32
    %c0_i32_1 = arith.constant 0 : i32
    return %arg1, %c0_i32, %c0_i32_0 : i32, i32, i32
  }
  func.func @transform_12(%arg0: i32, %arg1: i32) -> (i32, i32, i32) {
    %c0_i32 = arith.constant 0 : i32
    %c0_i32_0 = arith.constant 0 : i32
    %c0_i32_1 = arith.constant 0 : i32
    return %arg1, %c0_i32, %c0_i32_0 : i32, i32, i32
  }
  func.func @transform_13(%arg0: i32, %arg1: i32) -> (i32, i32, i32) {
    %c0_i32 = arith.constant 0 : i32
    %c0_i32_0 = arith.constant 0 : i32
    %c0_i32_1 = arith.constant 0 : i32
    return %arg1, %c0_i32, %c0_i32_0 : i32, i32, i32
  }
  func.func @transform_14(%arg0: i32, %arg1: i32) -> (i32, i32, i32) {
    %c0_i32 = arith.constant 0 : i32
    %c0_i32_0 = arith.constant 0 : i32
    %c0_i32_1 = arith.constant 0 : i32
    return %arg1, %c0_i32, %c0_i32_0 : i32, i32, i32
  }
  func.func @transform_15(%arg0: i32, %arg1: i32) -> (i32, i32, i32) {
    %c0_i32 = arith.constant 0 : i32
    %c0_i32_0 = arith.constant 0 : i32
    %c0_i32_1 = arith.constant 0 : i32
    return %arg1, %c0_i32, %c0_i32_0 : i32, i32, i32
  }
  func.func @transform_16(%arg0: i32, %arg1: i32) -> (i32, i32, i32) {
    %c0_i32 = arith.constant 0 : i32
    %c0_i32_0 = arith.constant 0 : i32
    %c0_i32_1 = arith.constant 0 : i32
    return %arg1, %c0_i32, %c0_i32_0 : i32, i32, i32
  }
  func.func @transform_17(%arg0: i32, %arg1: i32) -> (i32, i32) {
    %c0_i32 = arith.constant 0 : i32
    %c0_i32_0 = arith.constant 0 : i32
    %c0_i32_1 = arith.constant 0 : i32
    return %c0_i32, %c0_i32_0 : i32, i32
  }
  func.func @transform_18(%arg0: i32, %arg1: i32) -> (i32, i32) {
    %c0_i32 = arith.constant 0 : i32
    %c0_i32_0 = arith.constant 0 : i32
    %c0_i32_1 = arith.constant 0 : i32
    return %c0_i32, %c0_i32_0 : i32, i32
  }
  func.func @transform_19(%arg0: i32, %arg1: i32) -> (i32, i32) {
    %c0_i32 = arith.constant 0 : i32
    %c0_i32_0 = arith.constant 0 : i32
    %c0_i32_1 = arith.constant 0 : i32
    return %c0_i32, %c0_i32_0 : i32, i32
  }
  func.func @transform_20(%arg0: i32, %arg1: i32) -> (i32, i32, i32) {
    %c0_i32 = arith.constant 0 : i32
    %c0_i32_0 = arith.constant 0 : i32
    %c0_i32_1 = arith.constant 0 : i32
    return %arg0, %c0_i32, %c0_i32_0 : i32, i32, i32
  }
}

</mosaic_0001>

<llo_original>
// kernel: tpu_custom_call.1
$region0: #{tpu_custom_call.1}
  #allocation0 [shape = 'u32[]', space=smem, size = 0x4, offset = 0x4, fixed_abs, tag = 'smem constant byte address 0x4 - core index']
  #allocation1 [shape = 'u32[144,128]{1,0:T(1,128)}', space=vmem, size = 0x12000, scoped, tag = 'internal scratch']
  #allocation2 [shape = 'f32[2,32,32]{2,1,0:T(8,128)}', space=vmem, size = 0x8000, scoped, tag = 'scratch operand']
  %s0 = inlined_call_operand.vmem [shape: f32[2,16,48], index: 0, kind: input, shape index: {}]
  %s1 = inlined_call_operand.vmem [shape: bf16[48,32], index: 1, kind: input, shape index: {}]
  %s2 = inlined_call_operand.hbm [shape: f32[1,32], index: 2, kind: input, shape index: {}]
  %s3 = inlined_call_operand.hbm [shape: f32[1,32], index: 3, kind: input, shape index: {}]
  %s4 = inlined_call_operand.vmem [shape: f32[32,32], index: 4, kind: input, shape index: {}]
  %s5 = inlined_call_operand.vmem [shape: f32[2,1,32], index: 5, kind: input, shape index: {}]
  %s6 = inlined_call_operand.vmem [shape: f32[2,1,32], index: 6, kind: input, shape index: {}]
  %s7 = inlined_call_operand.vmem [shape: bf16[2,32,96], index: 7, kind: input, shape index: {}]
  %s8 = inlined_call_operand.vmem [shape: f32[2,1,96], index: 8, kind: input, shape index: {}]
  %s9 = inlined_call_operand.vmem [shape: bf16[2,32,32], index: 9, kind: input, shape index: {}]
  %s10 = inlined_call_operand.vmem [shape: f32[2,1,32], index: 10, kind: input, shape index: {}]
  %s11 = inlined_call_operand.vmem [shape: f32[2,1,32], index: 11, kind: input, shape index: {}]
  %s12 = inlined_call_operand.vmem [shape: f32[2,1,32], index: 12, kind: input, shape index: {}]
  %s13 = inlined_call_operand.vmem [shape: bf16[2,32,128], index: 13, kind: input, shape index: {}]
  %s14 = inlined_call_operand.vmem [shape: f32[2,1,128], index: 14, kind: input, shape index: {}]
  %s15 = inlined_call_operand.vmem [shape: bf16[2,128,32], index: 15, kind: input, shape index: {}]
  %s16 = inlined_call_operand.vmem [shape: f32[2,1,32], index: 16, kind: input, shape index: {}]
  %s17 = inlined_call_operand.vmem [shape: f32[1,32], index: 17, kind: input, shape index: {}]
  %s18 = inlined_call_operand.vmem [shape: f32[1,32], index: 18, kind: input, shape index: {}]
  %s19 = inlined_call_operand.vmem [shape: bf16[32,64], index: 19, kind: input, shape index: {}]
  %s20 = inlined_call_operand.hbm [shape: f32[2,1,64], index: 20, kind: output, shape index: {}]
  %s21 = sld [smem:[#allocation0]]
  $region129: #{tpu_custom_call.1} parent=0
    _
  %s23 = ssub.s32 1, %s21
  %s24 = scalar_select 0, %s23, %s21
  $region1: #{tpu_custom_call.1} parent=0
    #allocation3 [shape = 'u8[512]{0}', space=vmem, size = 0x400, scoped, tag = 'input window, operand 2, single buffered']
    #allocation4 [shape = 's32[2]{0}', space=sflag, size = 0x8, scoped, tag = 'scoped memory for tpu_custom_call.1']
    #allocation5 [shape = 's32[2]{0}', space=sflag, size = 0x8, scoped, tag = 'scoped memory for tpu_custom_call.1']
    #allocation6 [shape = 'u8[512]{0}', space=vmem, size = 0x400, scoped, tag = 'input window, operand 3, single buffered']
    #allocation7 [shape = 's32[1]{0}', space=sflag, size = 0x4, scoped, tag = 'scoped memory for tpu_custom_call.1']
    #allocation8 [shape = 'u8[1024]{0}', space=vmem, size = 0x400, scoped, tag = 'output window, operand 0, single buffered']
    %25 = vsyncpa [#allocation4], 0
    %26 = vsyncpa [#allocation7], 0
    %27 = vsyncpa [#allocation5], 0
    loop: start=0, step=1, limit=4
    $region2: #{tpu_custom_call.1} parent=1 // loop_pre_header
      _
    $region3: #{tpu_custom_call.1} parent=1 // loop_header
      %s29 = sphi 0, %s33
      %p30 = scmp.ge.s32.totalorder %s29, 4
      %s36 = sphi 0, %s48
      %s37 = sphi 0, %s44
      %s38 = sphi 0, %s36
      %s39 = sphi 0, %s37
      %s40 = sphi 0, %s38
      %s41 = sphi 0, %s39
      %s51 = sphi 0, %s53
      %s54 = sphi 0, %s51
      %s55 = sphi 0, %s54
      %s71 = sphi 0, %s55
      %s75 = sphi 0, %s75
      %s77 = sphi 0, %s75
      %s78 = sphi 0, %s77
      %s92 = sphi 0, %s78
      %s96 = sphi 0, %s96
      %s98 = sphi 0, %s96
      %s99 = sphi 0, %s98
      %s113 = sphi 0, %s99
      %s117 = sphi 0, %s117
      %s119 = sphi 0, %s117
      %s120 = sphi 0, %s119
      %s134 = sphi 0, %s120
      %s138 = sphi 0, %s138
      %s140 = sphi 0, %s138
      %s141 = sphi 0, %s140
      %s155 = sphi 0, %s141
      %s161 = sphi 0, %s163
      %s164 = sphi 0, %s161
      %s165 = sphi 0, %s164
      %s181 = sphi 0, %s165
      %s187 = sphi 0, %s189
      %s190 = sphi 0, %s187
      %s191 = sphi 0, %s190
      %s207 = sphi 0, %s191
      %s213 = sphi 0, %s215
      %s216 = sphi 0, %s213
      %s217 = sphi 0, %s216
      %s233 = sphi 0, %s217
      %s239 = sphi 0, %s241
      %s242 = sphi 0, %s239
      %s243 = sphi 0, %s242
      %s259 = sphi 0, %s243
      %s265 = sphi 0, %s267
      %s268 = sphi 0, %s265
      %s269 = sphi 0, %s268
      %s285 = sphi 0, %s269
      %s291 = sphi 0, %s293
      %s294 = sphi 0, %s291
      %s295 = sphi 0, %s294
      %s311 = sphi 0, %s295
      %s317 = sphi 0, %s319
      %s320 = sphi 0, %s317
      %s321 = sphi 0, %s320
      %s337 = sphi 0, %s321
      %s343 = sphi 0, %s345
      %s346 = sphi 0, %s343
      %s347 = sphi 0, %s346
      %s363 = sphi 0, %s347
      %s369 = sphi 0, %s371
      %s372 = sphi 0, %s369
      %s373 = sphi 0, %s372
      %s389 = sphi 0, %s373
      %s395 = sphi 0, %s397
      %s398 = sphi 0, %s395
      %s399 = sphi 0, %s398
      %s415 = sphi 0, %s399
      %s421 = sphi 0, %s423
      %s424 = sphi 0, %s421
      %s425 = sphi 0, %s424
      %s441 = sphi 0, %s425
      %s447 = sphi 0, %s449
      %s450 = sphi 0, %s447
      %s451 = sphi 0, %s450
      %s467 = sphi 0, %s451
      %s471 = sphi 0, %s471
      %s473 = sphi 0, %s471
      %s474 = sphi 0, %s473
      %s488 = sphi 0, %s474
      %s492 = sphi 0, %s492
      %s494 = sphi 0, %s492
      %s495 = sphi 0, %s494
      %s509 = sphi 0, %s495
      %s513 = sphi 0, %s513
      %s515 = sphi 0, %s513
      %s516 = sphi 0, %s515
      %s530 = sphi 0, %s516
      %s536 = sphi 0, %s538
      %s539 = sphi 0, %s536
      %s540 = sphi 0, %s539
      %s556 = sphi 0, %s540
    $region4: #{tpu_custom_call.1} parent=1 // loop_header_branch
      %32 = sbr.rel (%p30) target = $region8
    $region5: #{tpu_custom_call.1} parent=1 // loop_body
      %s34 = ssub.s32 %s29, 1
      %s35 = ssub.s32 %s29, 2
      %s42 = sadd.s32 1, %s37
      %p43 = scmp.ge.s32.totalorder %s42, 2
      %s44 = scalar_select %p43, 0, %s42
      %s45 = sadd.s32 1, %s36
      %s46 = scalar_select %p43, %s45, %s36
      %p47 = scmp.ge.s32.totalorder %s46, 1
      %s48 = scalar_select %p47, 0, %s46
      %s49 = ssub.s32 %s36, %s48
      %p50 = scmp.eq.s32.totalorder %s49, 0
      %s52 = sadd.s32 %s51, 1
      %s53 = scalar_select %p50, %s51, %s52
      %p56 = pneg %p50
      %p57 = scmp.eq.s32.totalorder %s29, 1
      %p58 = por %p56, %p57
      %p59 = scmp.ne.s32.totalorder %s51, %s54
      %p60 = scmp.eq.s32.totalorder %s29, 0
      %p61 = por %p59, %p60
      %p62 = scmp.ne.s32.totalorder %s51, %s54
      %p63 = scmp.eq.s32.totalorder %s34, 1
      %p64 = por %p62, %p63
      %p65 = scmp.ne.s32.totalorder %s54, %s55
      %p66 = scmp.eq.s32.totalorder %s34, 0
      %p67 = por %p65, %p66
      %p68 = scmp.ne.s32.totalorder %s54, %s55
      %p69 = scmp.eq.s32.totalorder %s35, 1
      %p70 = por %p68, %p69
      %p72 = scmp.ne.s32.totalorder %s55, %s71
      %p73 = scmp.eq.s32.totalorder %s35, 0
      %p74 = por %p72, %p73
      %s76 = sadd.s32 %s75, 1
      %p79 = scmp.eq.s32.totalorder %s29, 1
      %p80 = scmp.ne.s32.totalorder %s75, %s77
      %p81 = scmp.eq.s32.totalorder %s29, 0
      %p82 = por %p80, %p81
      %p83 = scmp.ne.s32.totalorder %s75, %s77
      %p84 = scmp.eq.s32.totalorder %s34, 1
      %p85 = por %p83, %p84
      %p86 = scmp.ne.s32.totalorder %s77, %s78
      %p87 = scmp.eq.s32.totalorder %s34, 0
      %p88 = por %p86, %p87
      %p89 = scmp.ne.s32.totalorder %s77, %s78
      %p90 = scmp.eq.s32.totalorder %s35, 1
      %p91 = por %p89, %p90
      %p93 = scmp.ne.s32.totalorder %s78, %s92
      %p94 = scmp.eq.s32.totalorder %s35, 0
      %p95 = por %p93, %p94
      %s97 = sadd.s32 %s96, 1
      %p100 = scmp.eq.s32.totalorder %s29, 1
      %p101 = scmp.ne.s32.totalorder %s96, %s98
      %p102 = scmp.eq.s32.totalorder %s29, 0
      %p103 = por %p101, %p102
      %p104 = scmp.ne.s32.totalorder %s96, %s98
      %p105 = scmp.eq.s32.totalorder %s34, 1
      %p106 = por %p104, %p105
      %p107 = scmp.ne.s32.totalorder %s98, %s99
      %p108 = scmp.eq.s32.totalorder %s34, 0
      %p109 = por %p107, %p108
      %p110 = scmp.ne.s32.totalorder %s98, %s99
      %p111 = scmp.eq.s32.totalorder %s35, 1
      %p112 = por %p110, %p111
      %p114 = scmp.ne.s32.totalorder %s99, %s113
      %p115 = scmp.eq.s32.totalorder %s35, 0
      %p116 = por %p114, %p115
      %s118 = sadd.s32 %s117, 1
      %p121 = scmp.eq.s32.totalorder %s29, 1
      %p122 = scmp.ne.s32.totalorder %s117, %s119
      %p123 = scmp.eq.s32.totalorder %s29, 0
      %p124 = por %p122, %p123
      %p125 = scmp.ne.s32.totalorder %s117, %s119
      %p126 = scmp.eq.s32.totalorder %s34, 1
      %p127 = por %p125, %p126
      %p128 = scmp.ne.s32.totalorder %s119, %s120
      %p129 = scmp.eq.s32.totalorder %s34, 0
      %p130 = por %p128, %p129
      %p131 = scmp.ne.s32.totalorder %s119, %s120
      %p132 = scmp.eq.s32.totalorder %s35, 1
      %p133 = por %p131, %p132
      %p135 = scmp.ne.s32.totalorder %s120, %s134
      %p136 = scmp.eq.s32.totalorder %s35, 0
      %p137 = por %p135, %p136
      %s139 = sadd.s32 %s138, 1
      %p142 = scmp.eq.s32.totalorder %s29, 1
      %p143 = scmp.ne.s32.totalorder %s138, %s140
      %p144 = scmp.eq.s32.totalorder %s29, 0
      %p145 = por %p143, %p144
      %p146 = scmp.ne.s32.totalorder %s138, %s140
      %p147 = scmp.eq.s32.totalorder %s34, 1
      %p148 = por %p146, %p147
      %p149 = scmp.ne.s32.totalorder %s140, %s141
      %p150 = scmp.eq.s32.totalorder %s34, 0
      %p151 = por %p149, %p150
      %p152 = scmp.ne.s32.totalorder %s140, %s141
      %p153 = scmp.eq.s32.totalorder %s35, 1
      %p154 = por %p152, %p153
      %p156 = scmp.ne.s32.totalorder %s141, %s155
      %p157 = scmp.eq.s32.totalorder %s35, 0
      %p158 = por %p156, %p157
      %s159 = ssub.s32 %s37, %s44
      %p160 = scmp.eq.s32.totalorder %s159, 0
      %s162 = sadd.s32 %s161, 1
      %s163 = scalar_select %p160, %s161, %s162
      %p166 = pneg %p160
      %p167 = scmp.eq.s32.totalorder %s29, 1
      %p168 = por %p166, %p167
      %p169 = scmp.ne.s32.totalorder %s161, %s164
      %p170 = scmp.eq.s32.totalorder %s29, 0
      %p171 = por %p169, %p170
      %p172 = scmp.ne.s32.totalorder %s161, %s164
      %p173 = scmp.eq.s32.totalorder %s34, 1
      %p174 = por %p172, %p173
      %p175 = scmp.ne.s32.totalorder %s164, %s165
      %p176 = scmp.eq.s32.totalorder %s34, 0
      %p177 = por %p175, %p176
      %p178 = scmp.ne.s32.totalorder %s164, %s165
      %p179 = scmp.eq.s32.totalorder %s35, 1
      %p180 = por %p178, %p179
      %p182 = scmp.ne.s32.totalorder %s165, %s181
      %p183 = scmp.eq.s32.totalorder %s35, 0
      %p184 = por %p182, %p183
      %s185 = ssub.s32 %s37, %s44
      %p186 = scmp.eq.s32.totalorder %s185, 0
      %s188 = sadd.s32 %s187, 1
      %s189 = scalar_select %p186, %s187, %s188
      %p192 = pneg %p186
      %p193 = scmp.eq.s32.totalorder %s29, 1
      %p194 = por %p192, %p193
      %p195 = scmp.ne.s32.totalorder %s187, %s190
      %p196 = scmp.eq.s32.totalorder %s29, 0
      %p197 = por %p195, %p196
      %p198 = scmp.ne.s32.totalorder %s187, %s190
      %p199 = scmp.eq.s32.totalorder %s34, 1
      %p200 = por %p198, %p199
      %p201 = scmp.ne.s32.totalorder %s190, %s191
      %p202 = scmp.eq.s32.totalorder %s34, 0
      %p203 = por %p201, %p202
      %p204 = scmp.ne.s32.totalorder %s190, %s191
      %p205 = scmp.eq.s32.totalorder %s35, 1
      %p206 = por %p204, %p205
      %p208 = scmp.ne.s32.totalorder %s191, %s207
      %p209 = scmp.eq.s32.totalorder %s35, 0
      %p210 = por %p208, %p209
      %s211 = ssub.s32 %s37, %s44
      %p212 = scmp.eq.s32.totalorder %s211, 0
      %s214 = sadd.s32 %s213, 1
      %s215 = scalar_select %p212, %s213, %s214
      %p218 = pneg %p212
      %p219 = scmp.eq.s32.totalorder %s29, 1
      %p220 = por %p218, %p219
      %p221 = scmp.ne.s32.totalorder %s213, %s216
      %p222 = scmp.eq.s32.totalorder %s29, 0
      %p223 = por %p221, %p222
      %p224 = scmp.ne.s32.totalorder %s213, %s216
      %p225 = scmp.eq.s32.totalorder %s34, 1
      %p226 = por %p224, %p225
      %p227 = scmp.ne.s32.totalorder %s216, %s217
      %p228 = scmp.eq.s32.totalorder %s34, 0
      %p229 = por %p227, %p228
      %p230 = scmp.ne.s32.totalorder %s216, %s217
      %p231 = scmp.eq.s32.totalorder %s35, 1
      %p232 = por %p230, %p231
      %p234 = scmp.ne.s32.totalorder %s217, %s233
      %p235 = scmp.eq.s32.totalorder %s35, 0
      %p236 = por %p234, %p235
      %s237 = ssub.s32 %s37, %s44
      %p238 = scmp.eq.s32.totalorder %s237, 0
      %s240 = sadd.s32 %s239, 1
      %s241 = scalar_select %p238, %s239, %s240
      %p244 = pneg %p238
      %p245 = scmp.eq.s32.totalorder %s29, 1
      %p246 = por %p244, %p245
      %p247 = scmp.ne.s32.totalorder %s239, %s242
      %p248 = scmp.eq.s32.totalorder %s29, 0
      %p249 = por %p247, %p248
      %p250 = scmp.ne.s32.totalorder %s239, %s242
      %p251 = scmp.eq.s32.totalorder %s34, 1
      %p252 = por %p250, %p251
      %p253 = scmp.ne.s32.totalorder %s242, %s243
      %p254 = scmp.eq.s32.totalorder %s34, 0
      %p255 = por %p253, %p254
      %p256 = scmp.ne.s32.totalorder %s242, %s243
      %p257 = scmp.eq.s32.totalorder %s35, 1
      %p258 = por %p256, %p257
      %p260 = scmp.ne.s32.totalorder %s243, %s259
      %p261 = scmp.eq.s32.totalorder %s35, 0
      %p262 = por %p260, %p261
      %s263 = ssub.s32 %s37, %s44
      %p264 = scmp.eq.s32.totalorder %s263, 0
      %s266 = sadd.s32 %s265, 1
      %s267 = scalar_select %p264, %s265, %s266
      %p270 = pneg %p264
      %p271 = scmp.eq.s32.totalorder %s29, 1
      %p272 = por %p270, %p271
      %p273 = scmp.ne.s32.totalorder %s265, %s268
      %p274 = scmp.eq.s32.totalorder %s29, 0
      %p275 = por %p273, %p274
      %p276 = scmp.ne.s32.totalorder %s265, %s268
      %p277 = scmp.eq.s32.totalorder %s34, 1
      %p278 = por %p276, %p277
      %p279 = scmp.ne.s32.totalorder %s268, %s269
      %p280 = scmp.eq.s32.totalorder %s34, 0
      %p281 = por %p279, %p280
      %p282 = scmp.ne.s32.totalorder %s268, %s269
      %p283 = scmp.eq.s32.totalorder %s35, 1
      %p284 = por %p282, %p283
      %p286 = scmp.ne.s32.totalorder %s269, %s285
      %p287 = scmp.eq.s32.totalorder %s35, 0
      %p288 = por %p286, %p287
      %s289 = ssub.s32 %s37, %s44
      %p290 = scmp.eq.s32.totalorder %s289, 0
      %s292 = sadd.s32 %s291, 1
      %s293 = scalar_select %p290, %s291, %s292
      %p296 = pneg %p290
      %p297 = scmp.eq.s32.totalorder %s29, 1
      %p298 = por %p296, %p297
      %p299 = scmp.ne.s32.totalorder %s291, %s294
      %p300 = scmp.eq.s32.totalorder %s29, 0
      %p301 = por %p299, %p300
      %p302 = scmp.ne.s32.totalorder %s291, %s294
      %p303 = scmp.eq.s32.totalorder %s34, 1
      %p304 = por %p302, %p303
      %p305 = scmp.ne.s32.totalorder %s294, %s295
      %p306 = scmp.eq.s32.totalorder %s34, 0
      %p307 = por %p305, %p306
      %p308 = scmp.ne.s32.totalorder %s294, %s295
      %p309 = scmp.eq.s32.totalorder %s35, 1
      %p310 = por %p308, %p309
      %p312 = scmp.ne.s32.totalorder %s295, %s311
      %p313 = scmp.eq.s32.totalorder %s35, 0
      %p314 = por %p312, %p313
      %s315 = ssub.s32 %s37, %s44
      %p316 = scmp.eq.s32.totalorder %s315, 0
      %s318 = sadd.s32 %s317, 1
      %s319 = scalar_select %p316, %s317, %s318
      %p322 = pneg %p316
      %p323 = scmp.eq.s32.totalorder %s29, 1
      %p324 = por %p322, %p323
      %p325 = scmp.ne.s32.totalorder %s317, %s320
      %p326 = scmp.eq.s32.totalorder %s29, 0
      %p327 = por %p325, %p326
      %p328 = scmp.ne.s32.totalorder %s317, %s320
      %p329 = scmp.eq.s32.totalorder %s34, 1
      %p330 = por %p328, %p329
      %p331 = scmp.ne.s32.totalorder %s320, %s321
      %p332 = scmp.eq.s32.totalorder %s34, 0
      %p333 = por %p331, %p332
      %p334 = scmp.ne.s32.totalorder %s320, %s321
      %p335 = scmp.eq.s32.totalorder %s35, 1
      %p336 = por %p334, %p335
      %p338 = scmp.ne.s32.totalorder %s321, %s337
      %p339 = scmp.eq.s32.totalorder %s35, 0
      %p340 = por %p338, %p339
      %s341 = ssub.s32 %s37, %s44
      %p342 = scmp.eq.s32.totalorder %s341, 0
      %s344 = sadd.s32 %s343, 1
      %s345 = scalar_select %p342, %s343, %s344
      %p348 = pneg %p342
      %p349 = scmp.eq.s32.totalorder %s29, 1
      %p350 = por %p348, %p349
      %p351 = scmp.ne.s32.totalorder %s343, %s346
      %p352 = scmp.eq.s32.totalorder %s29, 0
      %p353 = por %p351, %p352
      %p354 = scmp.ne.s32.totalorder %s343, %s346
      %p355 = scmp.eq.s32.totalorder %s34, 1
      %p356 = por %p354, %p355
      %p357 = scmp.ne.s32.totalorder %s346, %s347
      %p358 = scmp.eq.s32.totalorder %s34, 0
      %p359 = por %p357, %p358
      %p360 = scmp.ne.s32.totalorder %s346, %s347
      %p361 = scmp.eq.s32.totalorder %s35, 1
      %p362 = por %p360, %p361
      %p364 = scmp.ne.s32.totalorder %s347, %s363
      %p365 = scmp.eq.s32.totalorder %s35, 0
      %p366 = por %p364, %p365
      %s367 = ssub.s32 %s37, %s44
      %p368 = scmp.eq.s32.totalorder %s367, 0
      %s370 = sadd.s32 %s369, 1
      %s371 = scalar_select %p368, %s369, %s370
      %p374 = pneg %p368
      %p375 = scmp.eq.s32.totalorder %s29, 1
      %p376 = por %p374, %p375
      %p377 = scmp.ne.s32.totalorder %s369, %s372
      %p378 = scmp.eq.s32.totalorder %s29, 0
      %p379 = por %p377, %p378
      %p380 = scmp.ne.s32.totalorder %s369, %s372
      %p381 = scmp.eq.s32.totalorder %s34, 1
      %p382 = por %p380, %p381
      %p383 = scmp.ne.s32.totalorder %s372, %s373
      %p384 = scmp.eq.s32.totalorder %s34, 0
      %p385 = por %p383, %p384
      %p386 = scmp.ne.s32.totalorder %s372, %s373
      %p387 = scmp.eq.s32.totalorder %s35, 1
      %p388 = por %p386, %p387
      %p390 = scmp.ne.s32.totalorder %s373, %s389
      %p391 = scmp.eq.s32.totalorder %s35, 0
      %p392 = por %p390, %p391
      %s393 = ssub.s32 %s37, %s44
      %p394 = scmp.eq.s32.totalorder %s393, 0
      %s396 = sadd.s32 %s395, 1
      %s397 = scalar_select %p394, %s395, %s396
      %p400 = pneg %p394
      %p401 = scmp.eq.s32.totalorder %s29, 1
      %p402 = por %p400, %p401
      %p403 = scmp.ne.s32.totalorder %s395, %s398
      %p404 = scmp.eq.s32.totalorder %s29, 0
      %p405 = por %p403, %p404
      %p406 = scmp.ne.s32.totalorder %s395, %s398
      %p407 = scmp.eq.s32.totalorder %s34, 1
      %p408 = por %p406, %p407
      %p409 = scmp.ne.s32.totalorder %s398, %s399
      %p410 = scmp.eq.s32.totalorder %s34, 0
      %p411 = por %p409, %p410
      %p412 = scmp.ne.s32.totalorder %s398, %s399
      %p413 = scmp.eq.s32.totalorder %s35, 1
      %p414 = por %p412, %p413
      %p416 = scmp.ne.s32.totalorder %s399, %s415
      %p417 = scmp.eq.s32.totalorder %s35, 0
      %p418 = por %p416, %p417
      %s419 = ssub.s32 %s37, %s44
      %p420 = scmp.eq.s32.totalorder %s419, 0
      %s422 = sadd.s32 %s421, 1
      %s423 = scalar_select %p420, %s421, %s422
      %p426 = pneg %p420
      %p427 = scmp.eq.s32.totalorder %s29, 1
      %p428 = por %p426, %p427
      %p429 = scmp.ne.s32.totalorder %s421, %s424
      %p430 = scmp.eq.s32.totalorder %s29, 0
      %p431 = por %p429, %p430
      %p432 = scmp.ne.s32.totalorder %s421, %s424
      %p433 = scmp.eq.s32.totalorder %s34, 1
      %p434 = por %p432, %p433
      %p435 = scmp.ne.s32.totalorder %s424, %s425
      %p436 = scmp.eq.s32.totalorder %s34, 0
      %p437 = por %p435, %p436
      %p438 = scmp.ne.s32.totalorder %s424, %s425
      %p439 = scmp.eq.s32.totalorder %s35, 1
      %p440 = por %p438, %p439
      %p442 = scmp.ne.s32.totalorder %s425, %s441
      %p443 = scmp.eq.s32.totalorder %s35, 0
      %p444 = por %p442, %p443
      %s445 = ssub.s32 %s37, %s44
      %p446 = scmp.eq.s32.totalorder %s445, 0
      %s448 = sadd.s32 %s447, 1
      %s449 = scalar_select %p446, %s447, %s448
      %p452 = pneg %p446
      %p453 = scmp.eq.s32.totalorder %s29, 1
      %p454 = por %p452, %p453
      %p455 = scmp.ne.s32.totalorder %s447, %s450
      %p456 = scmp.eq.s32.totalorder %s29, 0
      %p457 = por %p455, %p456
      %p458 = scmp.ne.s32.totalorder %s447, %s450
      %p459 = scmp.eq.s32.totalorder %s34, 1
      %p460 = por %p458, %p459
      %p461 = scmp.ne.s32.totalorder %s450, %s451
      %p462 = scmp.eq.s32.totalorder %s34, 0
      %p463 = por %p461, %p462
      %p464 = scmp.ne.s32.totalorder %s450, %s451
      %p465 = scmp.eq.s32.totalorder %s35, 1
      %p466 = por %p464, %p465
      %p468 = scmp.ne.s32.totalorder %s451, %s467
      %p469 = scmp.eq.s32.totalorder %s35, 0
      %p470 = por %p468, %p469
      %s472 = sadd.s32 %s471, 1
      %p475 = scmp.eq.s32.totalorder %s29, 1
      %p476 = scmp.ne.s32.totalorder %s471, %s473
      %p477 = scmp.eq.s32.totalorder %s29, 0
      %p478 = por %p476, %p477
      %p479 = scmp.ne.s32.totalorder %s471, %s473
      %p480 = scmp.eq.s32.totalorder %s34, 1
      %p481 = por %p479, %p480
      %p482 = scmp.ne.s32.totalorder %s473, %s474
      %p483 = scmp.eq.s32.totalorder %s34, 0
      %p484 = por %p482, %p483
      %p485 = scmp.ne.s32.totalorder %s473, %s474
      %p486 = scmp.eq.s32.totalorder %s35, 1
      %p487 = por %p485, %p486
      %p489 = scmp.ne.s32.totalorder %s474, %s488
      %p490 = scmp.eq.s32.totalorder %s35, 0
      %p491 = por %p489, %p490
      %s493 = sadd.s32 %s492, 1
      %p496 = scmp.eq.s32.totalorder %s29, 1
      %p497 = scmp.ne.s32.totalorder %s492, %s494
      %p498 = scmp.eq.s32.totalorder %s29, 0
      %p499 = por %p497, %p498
      %p500 = scmp.ne.s32.totalorder %s492, %s494
      %p501 = scmp.eq.s32.totalorder %s34, 1
      %p502 = por %p500, %p501
      %p503 = scmp.ne.s32.totalorder %s494, %s495
      %p504 = scmp.eq.s32.totalorder %s34, 0
      %p505 = por %p503, %p504
      %p506 = scmp.ne.s32.totalorder %s494, %s495
      %p507 = scmp.eq.s32.totalorder %s35, 1
      %p508 = por %p506, %p507
      %p510 = scmp.ne.s32.totalorder %s495, %s509
      %p511 = scmp.eq.s32.totalorder %s35, 0
      %p512 = por %p510, %p511
      %s514 = sadd.s32 %s513, 1
      %p517 = scmp.eq.s32.totalorder %s29, 1
      %p518 = scmp.ne.s32.totalorder %s513, %s515
      %p519 = scmp.eq.s32.totalorder %s29, 0
      %p520 = por %p518, %p519
      %p521 = scmp.ne.s32.totalorder %s513, %s515
      %p522 = scmp.eq.s32.totalorder %s34, 1
      %p523 = por %p521, %p522
      %p524 = scmp.ne.s32.totalorder %s515, %s516
      %p525 = scmp.eq.s32.totalorder %s34, 0
      %p526 = por %p524, %p525
      %p527 = scmp.ne.s32.totalorder %s515, %s516
      %p528 = scmp.eq.s32.totalorder %s35, 1
      %p529 = por %p527, %p528
      %p531 = scmp.ne.s32.totalorder %s516, %s530
      %p532 = scmp.eq.s32.totalorder %s35, 0
      %p533 = por %p531, %p532
      %s534 = ssub.s32 %s36, %s48
      %p535 = scmp.eq.s32.totalorder %s534, 0
      %s537 = sadd.s32 %s536, 1
      %s538 = scalar_select %p535, %s536, %s537
      %p541 = pneg %p535
      %p542 = scmp.eq.s32.totalorder %s29, 1
      %p543 = por %p541, %p542
      %p544 = scmp.ne.s32.totalorder %s536, %s539
      %p545 = scmp.eq.s32.totalorder %s29, 0
      %p546 = por %p544, %p545
      %p547 = scmp.ne.s32.totalorder %s536, %s539
      %p548 = scmp.eq.s32.totalorder %s34, 1
      %p549 = por %p547, %p548
      %p550 = scmp.ne.s32.totalorder %s539, %s540
      %p551 = scmp.eq.s32.totalorder %s34, 0
      %p552 = por %p550, %p551
      %p553 = scmp.ne.s32.totalorder %s539, %s540
      %p554 = scmp.eq.s32.totalorder %s35, 1
      %p555 = por %p553, %p554
      %p557 = scmp.ne.s32.totalorder %s540, %s556
      %p558 = scmp.eq.s32.totalorder %s35, 0
      %p559 = por %p557, %p558
      %p560 = scmp.le.s32.totalorder 1, %s29
      %p561 = scmp.lt.s32.totalorder %s29, 3
      %p562 = pnand %p560, %p561
      %p563 = pneg %p562
      // Predicated region
      $region9: #{tpu_custom_call.1} parent=5 // pred_check
        _
      $region10: #{tpu_custom_call.1} parent=5 // pred_check_branch
        %565 = sbr.rel (%p562) target = $region12
      $region11: #{tpu_custom_call.1} parent=5 // pred_region
        %s566 = ssub.s32 %s29, 1
        // Predicated region
        $region13: #{tpu_custom_call.1} parent=11 // pred_check
          %p567 = pneg %p67
        $region14: #{tpu_custom_call.1} parent=11 // pred_check_branch
          %569 = sbr.rel (%p567) target = $region16
        $region15: #{tpu_custom_call.1} parent=11 // pred_region
          %s570 = smul.u32 2, %s38
          %p571 = scmp.lt.s32.totalorder %s570, 1
          %s572 = scalar_select %p571, %s570, 1
          %s573 = smul.addr %s572, 2
          %s574 = smul.addr %s573, 8
          %s575 = scalar_lea.vmem %s0, %s574
          %s576 = smul.u32 2, %s38
        $region16: #{tpu_custom_call.1} parent=11 // pred_fallthru
          _
        // Predicated region
        $region17: #{tpu_custom_call.1} parent=11 // pred_check
          %p577 = pneg %p88
        $region18: #{tpu_custom_call.1} parent=11 // pred_check_branch
          %579 = sbr.rel (%p577) target = $region20
        $region19: #{tpu_custom_call.1} parent=11 // pred_region
          _
        $region20: #{tpu_custom_call.1} parent=11 // pred_fallthru
          _
        // Predicated region
        $region21: #{tpu_custom_call.1} parent=11 // pred_check
          %p580 = pneg %p109
        $region22: #{tpu_custom_call.1} parent=11 // pred_check_branch
          %582 = sbr.rel (%p580) target = $region24
        $region23: #{tpu_custom_call.1} parent=11 // pred_region
          %s584 = ssub.s32 16, 16
          %585 = vsyncadd [#allocation4], %s584
          %s587 = sshll.u32 [#allocation3], 4
          %s588 = int_to_ptr.vmem [resolvable:$true] %s587
          %590 = dma.hbm_to_vmem [thread:$0]  %s2, 16, %s588, [#allocation4]
        $region24: #{tpu_custom_call.1} parent=11 // pred_fallthru
          _
        // Predicated region
        $region25: #{tpu_custom_call.1} parent=11 // pred_check
          %p591 = pneg %p130
        $region26: #{tpu_custom_call.1} parent=11 // pred_check_branch
          %593 = sbr.rel (%p591) target = $region28
        $region27: #{tpu_custom_call.1} parent=11 // pred_region
          %s595 = ssub.s32 16, 16
          %596 = vsyncadd [#allocation7], %s595
          %s598 = sshll.u32 [#allocation6], 4
          %s599 = int_to_ptr.vmem [resolvable:$true] %s598
          %601 = dma.hbm_to_vmem [thread:$0]  %s3, 16, %s599, [#allocation7]
        $region28: #{tpu_custom_call.1} parent=11 // pred_fallthru
          _
        // Predicated region
        $region29: #{tpu_custom_call.1} parent=11 // pred_check
          %p602 = pneg %p151
        $region30: #{tpu_custom_call.1} parent=11 // pred_check_branch
          %604 = sbr.rel (%p602) target = $region32
        $region31: #{tpu_custom_call.1} parent=11 // pred_region
          _
        $region32: #{tpu_custom_call.1} parent=11 // pred_fallthru
          _
        // Predicated region
        $region33: #{tpu_custom_call.1} parent=11 // pred_check
          %p605 = pneg %p484
        $region34: #{tpu_custom_call.1} parent=11 // pred_check_branch
          %607 = sbr.rel (%p605) target = $region36
        $region35: #{tpu_custom_call.1} parent=11 // pred_region
          _
        $region36: #{tpu_custom_call.1} parent=11 // pred_fallthru
          _
        // Predicated region
        $region37: #{tpu_custom_call.1} parent=11 // pred_check
          %p608 = pneg %p505
        $region38: #{tpu_custom_call.1} parent=11 // pred_check_branch
          %610 = sbr.rel (%p608) target = $region40
        $region39: #{tpu_custom_call.1} parent=11 // pred_region
          _
        $region40: #{tpu_custom_call.1} parent=11 // pred_fallthru
          _
        // Predicated region
        $region41: #{tpu_custom_call.1} parent=11 // pred_check
          %p611 = pneg %p526
        $region42: #{tpu_custom_call.1} parent=11 // pred_check_branch
          %613 = sbr.rel (%p611) target = $region44
        $region43: #{tpu_custom_call.1} parent=11 // pred_region
          _
        $region44: #{tpu_custom_call.1} parent=11 // pred_fallthru
          _
      $region12: #{tpu_custom_call.1} parent=5 // pred_fallthru
        _
      %p614 = scmp.lt.s32.totalorder %s29, 2
      // Predicated region
      $region45: #{tpu_custom_call.1} parent=5 // pred_check
        %p615 = pneg %p614
      $region46: #{tpu_custom_call.1} parent=5 // pred_check_branch
        %617 = sbr.rel (%p615) target = $region48
      $region47: #{tpu_custom_call.1} parent=5 // pred_region
        // Predicated region
        $region49: #{tpu_custom_call.1} parent=47 // pred_check
          %p618 = pneg %p171
        $region50: #{tpu_custom_call.1} parent=47 // pred_check_branch
          %620 = sbr.rel (%p618) target = $region52
        $region51: #{tpu_custom_call.1} parent=47 // pred_region
          %p621 = scmp.lt.s32.totalorder %s37, 1
          %s622 = scalar_select %p621, %s37, 1
          %s623 = scalar_lea.vmem %s5, %s622
        $region52: #{tpu_custom_call.1} parent=47 // pred_fallthru
          _
        // Predicated region
        $region53: #{tpu_custom_call.1} parent=47 // pred_check
          %p624 = pneg %p197
        $region54: #{tpu_custom_call.1} parent=47 // pred_check_branch
          %626 = sbr.rel (%p624) target = $region56
        $region55: #{tpu_custom_call.1} parent=47 // pred_region
          %p627 = scmp.lt.s32.totalorder %s37, 1
          %s628 = scalar_select %p627, %s37, 1
          %s629 = scalar_lea.vmem %s6, %s628
        $region56: #{tpu_custom_call.1} parent=47 // pred_fallthru
          _
        // Predicated region
        $region57: #{tpu_custom_call.1} parent=47 // pred_check
          %p630 = pneg %p223
        $region58: #{tpu_custom_call.1} parent=47 // pred_check_branch
          %632 = sbr.rel (%p630) target = $region60
        $region59: #{tpu_custom_call.1} parent=47 // pred_region
          %p633 = scmp.lt.s32.totalorder %s37, 1
          %s634 = scalar_select %p633, %s37, 1
          %s635 = smul.addr %s634, 4
          %s636 = smul.addr %s635, 4
          %s637 = scalar_lea.vmem %s7, %s636
        $region60: #{tpu_custom_call.1} parent=47 // pred_fallthru
          _
        // Predicated region
        $region61: #{tpu_custom_call.1} parent=47 // pred_check
          %p638 = pneg %p249
        $region62: #{tpu_custom_call.1} parent=47 // pred_check_branch
          %640 = sbr.rel (%p638) target = $region64
        $region63: #{tpu_custom_call.1} parent=47 // pred_region
          %p641 = scmp.lt.s32.totalorder %s37, 1
          %s642 = scalar_select %p641, %s37, 1
          %s643 = scalar_lea.vmem %s8, %s642
        $region64: #{tpu_custom_call.1} parent=47 // pred_fallthru
          _
        // Predicated region
        $region65: #{tpu_custom_call.1} parent=47 // pred_check
          %p644 = pneg %p275
        $region66: #{tpu_custom_call.1} parent=47 // pred_check_branch
          %646 = sbr.rel (%p644) target = $region68
        $region67: #{tpu_custom_call.1} parent=47 // pred_region
          %p647 = scmp.lt.s32.totalorder %s37, 1
          %s648 = scalar_select %p647, %s37, 1
          %s649 = smul.addr %s648, 4
          %s650 = smul.addr %s649, 4
          %s651 = scalar_lea.vmem %s9, %s650
        $region68: #{tpu_custom_call.1} parent=47 // pred_fallthru
          _
        // Predicated region
        $region69: #{tpu_custom_call.1} parent=47 // pred_check
          %p652 = pneg %p301
        $region70: #{tpu_custom_call.1} parent=47 // pred_check_branch
          %654 = sbr.rel (%p652) target = $region72
        $region71: #{tpu_custom_call.1} parent=47 // pred_region
          %p655 = scmp.lt.s32.totalorder %s37, 1
          %s656 = scalar_select %p655, %s37, 1
          %s657 = scalar_lea.vmem %s10, %s656
        $region72: #{tpu_custom_call.1} parent=47 // pred_fallthru
          _
        // Predicated region
        $region73: #{tpu_custom_call.1} parent=47 // pred_check
          %p658 = pneg %p327
        $region74: #{tpu_custom_call.1} parent=47 // pred_check_branch
          %660 = sbr.rel (%p658) target = $region76
        $region75: #{tpu_custom_call.1} parent=47 // pred_region
          %p661 = scmp.lt.s32.totalorder %s37, 1
          %s662 = scalar_select %p661, %s37, 1
          %s663 = scalar_lea.vmem %s11, %s662
        $region76: #{tpu_custom_call.1} parent=47 // pred_fallthru
          _
        // Predicated region
        $region77: #{tpu_custom_call.1} parent=47 // pred_check
          %p664 = pneg %p353
        $region78: #{tpu_custom_call.1} parent=47 // pred_check_branch
          %666 = sbr.rel (%p664) target = $region80
        $region79: #{tpu_custom_call.1} parent=47 // pred_region
          %p667 = scmp.lt.s32.totalorder %s37, 1
          %s668 = scalar_select %p667, %s37, 1
          %s669 = scalar_lea.vmem %s12, %s668
        $region80: #{tpu_custom_call.1} parent=47 // pred_fallthru
          _
        // Predicated region
        $region81: #{tpu_custom_call.1} parent=47 // pred_check
          %p670 = pneg %p379
        $region82: #{tpu_custom_call.1} parent=47 // pred_check_branch
          %672 = sbr.rel (%p670) target = $region84
        $region83: #{tpu_custom_call.1} parent=47 // pred_region
          %p673 = scmp.lt.s32.totalorder %s37, 1
          %s674 = scalar_select %p673, %s37, 1
          %s675 = smul.addr %s674, 4
          %s676 = smul.addr %s675, 4
          %s677 = scalar_lea.vmem %s13, %s676
        $region84: #{tpu_custom_call.1} parent=47 // pred_fallthru
          _
        // Predicated region
        $region85: #{tpu_custom_call.1} parent=47 // pred_check
          %p678 = pneg %p405
        $region86: #{tpu_custom_call.1} parent=47 // pred_check_branch
          %680 = sbr.rel (%p678) target = $region88
        $region87: #{tpu_custom_call.1} parent=47 // pred_region
          %p681 = scmp.lt.s32.totalorder %s37, 1
          %s682 = scalar_select %p681, %s37, 1
          %s683 = scalar_lea.vmem %s14, %s682
        $region88: #{tpu_custom_call.1} parent=47 // pred_fallthru
          _
        // Predicated region
        $region89: #{tpu_custom_call.1} parent=47 // pred_check
          %p684 = pneg %p431
        $region90: #{tpu_custom_call.1} parent=47 // pred_check_branch
          %686 = sbr.rel (%p684) target = $region92
        $region91: #{tpu_custom_call.1} parent=47 // pred_region
          %p687 = scmp.lt.s32.totalorder %s37, 1
          %s688 = scalar_select %p687, %s37, 1
          %s689 = smul.addr %s688, 16
          %s690 = smul.addr %s689, 4
          %s691 = scalar_lea.vmem %s15, %s690
        $region92: #{tpu_custom_call.1} parent=47 // pred_fallthru
          _
        // Predicated region
        $region93: #{tpu_custom_call.1} parent=47 // pred_check
          %p692 = pneg %p457
        $region94: #{tpu_custom_call.1} parent=47 // pred_check_branch
          %694 = sbr.rel (%p692) target = $region96
        $region95: #{tpu_custom_call.1} parent=47 // pred_region
          %p695 = scmp.lt.s32.totalorder %s37, 1
          %s696 = scalar_select %p695, %s37, 1
          %s697 = scalar_lea.vmem %s16, %s696
        $region96: #{tpu_custom_call.1} parent=47 // pred_fallthru
          _
      $region48: #{tpu_custom_call.1} parent=5 // pred_fallthru
        _
      %p698 = scmp.le.s32.totalorder 1, %s29
      %p699 = scmp.lt.s32.totalorder %s29, 3
      %p700 = pnand %p698, %p699
      %p701 = pneg %p700
      // Predicated region
      $region97: #{tpu_custom_call.1} parent=5 // pred_check
        _
      $region98: #{tpu_custom_call.1} parent=5 // pred_check_branch
        %703 = sbr.rel (%p700) target = $region100
      $region99: #{tpu_custom_call.1} parent=5 // pred_region
        %s704 = ssub.s32 %s29, 1
        // Predicated region
        $region101: #{tpu_custom_call.1} parent=99 // pred_check
          %p705 = pneg %p109
        $region102: #{tpu_custom_call.1} parent=99 // pred_check_branch
          %707 = sbr.rel (%p705) target = $region104
        $region103: #{tpu_custom_call.1} parent=99 // pred_region
          %708 = dma.done [#allocation4], 16
        $region104: #{tpu_custom_call.1} parent=99 // pred_fallthru
          _
        // Predicated region
        $region105: #{tpu_custom_call.1} parent=99 // pred_check
          %p709 = pneg %p130
        $region106: #{tpu_custom_call.1} parent=99 // pred_check_branch
          %711 = sbr.rel (%p709) target = $region108
        $region107: #{tpu_custom_call.1} parent=99 // pred_region
          %712 = dma.done [#allocation7], 16
        $region108: #{tpu_custom_call.1} parent=99 // pred_fallthru
          _
        %s713 = smul.u32 2, %s38
        %p714 = scmp.lt.s32.totalorder %s713, 1
        %s715 = scalar_select %p714, %s713, 1
        %s716 = smul.addr %s715, 2
        %s717 = smul.addr %s716, 8
        %s718 = scalar_lea.vmem %s0, %s717
        %p719 = pneg %p67
        %p720 = pneg %p64
        %p721 = pneg %p88
        %p722 = pneg %p85
        %p723 = pneg %p109
        %p724 = pneg %p106
        %p725 = pneg %p130
        %p726 = pneg %p127
        %p727 = pneg %p151
        %p728 = pneg %p148
        %p729 = scmp.lt.s32.totalorder %s39, 1
        %s730 = scalar_select %p729, %s39, 1
        %s731 = scalar_lea.vmem %s5, %s730
        %p732 = pneg %p177
        %p733 = pneg %p174
        %p734 = scmp.lt.s32.totalorder %s39, 1
        %s735 = scalar_select %p734, %s39, 1
        %s736 = scalar_lea.vmem %s6, %s735
        %p737 = pneg %p203
        %p738 = pneg %p200
        %p739 = scmp.lt.s32.totalorder %s39, 1
        %s740 = scalar_select %p739, %s39, 1
        %s741 = smul.addr %s740, 4
        %s742 = smul.addr %s741, 4
        %s743 = scalar_lea.vmem %s7, %s742
        %p744 = pneg %p229
        %p745 = pneg %p226
        %p746 = scmp.lt.s32.totalorder %s39, 1
        %s747 = scalar_select %p746, %s39, 1
        %s748 = scalar_lea.vmem %s8, %s747
        %p749 = pneg %p255
        %p750 = pneg %p252
        %p751 = scmp.lt.s32.totalorder %s39, 1
        %s752 = scalar_select %p751, %s39, 1
        %s753 = smul.addr %s752, 4
        %s754 = smul.addr %s753, 4
        %s755 = scalar_lea.vmem %s9, %s754
        %p756 = pneg %p281
        %p757 = pneg %p278
        %p758 = scmp.lt.s32.totalorder %s39, 1
        %s759 = scalar_select %p758, %s39, 1
        %s760 = scalar_lea.vmem %s10, %s759
        %p761 = pneg %p307
        %p762 = pneg %p304
        %p763 = scmp.lt.s32.totalorder %s39, 1
        %s764 = scalar_select %p763, %s39, 1
        %s765 = scalar_lea.vmem %s11, %s764
        %p766 = pneg %p333
        %p767 = pneg %p330
        %p768 = scmp.lt.s32.totalorder %s39, 1
        %s769 = scalar_select %p768, %s39, 1
        %s770 = scalar_lea.vmem %s12, %s769
        %p771 = pneg %p359
        %p772 = pneg %p356
        %p773 = scmp.lt.s32.totalorder %s39, 1
        %s774 = scalar_select %p773, %s39, 1
        %s775 = smul.addr %s774, 4
        %s776 = smul.addr %s775, 4
        %s777 = scalar_lea.vmem %s13, %s776
        %p778 = pneg %p385
        %p779 = pneg %p382
        %p780 = scmp.lt.s32.totalorder %s39, 1
        %s781 = scalar_select %p780, %s39, 1
        %s782 = scalar_lea.vmem %s14, %s781
        %p783 = pneg %p411
        %p784 = pneg %p408
        %p785 = scmp.lt.s32.totalorder %s39, 1
        %s786 = scalar_select %p785, %s39, 1
        %s787 = smul.addr %s786, 16
        %s788 = smul.addr %s787, 4
        %s789 = scalar_lea.vmem %s15, %s788
        %p790 = pneg %p437
        %p791 = pneg %p434
        %p792 = scmp.lt.s32.totalorder %s39, 1
        %s793 = scalar_select %p792, %s39, 1
        %s794 = scalar_lea.vmem %s16, %s793
        %p795 = pneg %p463
        %p796 = pneg %p460
        %p797 = pneg %p484
        %p798 = pneg %p481
        %p799 = pneg %p505
        %p800 = pneg %p502
        %p801 = pneg %p526
        %p802 = pneg %p523
        %p803 = pneg %p552
        %p804 = pneg %p549
        %s805 = smul.u32 2, %s38
        %p806 = scmp.lt.s32.totalorder %s805, 1
        %s807 = scalar_select %p806, %s805, 1
        %s808 = smul.addr %s807, 2
        %s809 = smul.addr %s808, 8
        %s810 = scalar_lea.vmem %s0, %s809
        %s811 = smul.u32 2, %s38
        %p812 = scmp.lt.s32.totalorder %s39, 1
        %s813 = scalar_select %p812, %s39, 1
        %s814 = scalar_lea.vmem %s5, %s813
        %p815 = scmp.lt.s32.totalorder %s39, 1
        %s816 = scalar_select %p815, %s39, 1
        %s817 = scalar_lea.vmem %s6, %s816
        %p818 = scmp.lt.s32.totalorder %s39, 1
        %s819 = scalar_select %p818, %s39, 1
        %s820 = smul.addr %s819, 4
        %s821 = smul.addr %s820, 4
        %s822 = scalar_lea.vmem %s7, %s821
        %p823 = scmp.lt.s32.totalorder %s39, 1
        %s824 = scalar_select %p823, %s39, 1
        %s825 = scalar_lea.vmem %s8, %s824
        %p826 = scmp.lt.s32.totalorder %s39, 1
        %s827 = scalar_select %p826, %s39, 1
        %s828 = smul.addr %s827, 4
        %s829 = smul.addr %s828, 4
        %s830 = scalar_lea.vmem %s9, %s829
        %p831 = scmp.lt.s32.totalorder %s39, 1
        %s832 = scalar_select %p831, %s39, 1
        %s833 = scalar_lea.vmem %s10, %s832
        %p834 = scmp.lt.s32.totalorder %s39, 1
        %s835 = scalar_select %p834, %s39, 1
        %s836 = scalar_lea.vmem %s11, %s835
        %p837 = scmp.lt.s32.totalorder %s39, 1
        %s838 = scalar_select %p837, %s39, 1
        %s839 = scalar_lea.vmem %s12, %s838
        %p840 = scmp.lt.s32.totalorder %s39, 1
        %s841 = scalar_select %p840, %s39, 1
        %s842 = smul.addr %s841, 4
        %s843 = smul.addr %s842, 4
        %s844 = scalar_lea.vmem %s13, %s843
        %p845 = scmp.lt.s32.totalorder %s39, 1
        %s846 = scalar_select %p845, %s39, 1
        %s847 = scalar_lea.vmem %s14, %s846
        %p848 = scmp.lt.s32.totalorder %s39, 1
        %s849 = scalar_select %p848, %s39, 1
        %s850 = smul.addr %s849, 16
        %s851 = smul.addr %s850, 4
        %s852 = scalar_lea.vmem %s15, %s851
        %p853 = scmp.lt.s32.totalorder %s39, 1
        %s854 = scalar_select %p853, %s39, 1
        %s855 = scalar_lea.vmem %s16, %s854
        %s856 = smul.u32 2, %s38
        %p858 = scmp.eq.s32.totalorder %s39, 0
        // Predicated region
        $region109: #{tpu_custom_call.1} parent=99 // pred_check
          %p859 = pneg %p858
        $region110: #{tpu_custom_call.1} parent=99 // pred_check_branch
          %861 = sbr.rel (%p859) target = $region112
        $region111: #{tpu_custom_call.1} parent=99 // pred_region
          %v862 = vld [vmem:[%s810] sm:$0xff]
          %v863 = vld [vmem:[%s810 + $0x8] sm:$0xff]
          %v864 = vld [vmem:[%s810 + $0x10] sm:$0xff]
          %v865 = vld [vmem:[%s810 + $0x18] sm:$0xff]
          %v866 = vpack.c.bf16 %v863, %v862
          %v867 = vpack.c.bf16 %v865, %v864
          %v868 = vld [vmem:[%s1] sm:$0xf]
          %v869 = vld [vmem:[%s1 + $0x4] sm:$0xf]
          %v870 = vld [vmem:[%s1 + $0x8] sm:$0xf]
          %v871 = vld [vmem:[%s1 + $0xc] sm:$0xf]
          %v872 = vld [vmem:[%s1 + $0x10] sm:$0xf]
          %v873 = vld [vmem:[%s1 + $0x14] sm:$0xf]
          %v874 = vld [vmem:[#allocation3] sm:$0x1]
          %v876 = vlaneseq
          %v877 = vshrl.u32 %v876, 7
          %v878 = vsub.s32 0, %v877
          %v879 = vrot.slane %v874, %v878
          %v887 = vunpack.c.l.b16 %v868
          %v888 = vunpack.c.l.b16 %v869
          %v889 = vunpack.c.l.b16 %v870
          %v890 = vunpack.c.l.b16 %v871
          %v891 = vunpack.c.l.b16 %v872
          %v892 = vunpack.c.l.b16 %v873
          %v893 = vpack.c.b16 %v888, %v887
          %v894 = vpack.c.b16 %v890, %v889
          %v895 = vpack.c.b16 %v892, %v891
          %vm899 = vcmask 392192
          %v901 = vsel %vm899, %v866, 0
          %v904 = vsel %vm899, %v867, 0
          %906 = vmatprep.subr.bf16.mxu0 0
          %907 = vmatpush1.bf16.msra.mxu0 %v893
          %908 = vmatprep.subr.bf16.mxu0 0
          %909 = vmatpush1.bf16.msra.mxu0 %v894
          %910 = vmatprep.subr.bf16.mxu0 0
          %911 = vmatpush1.bf16.msra.mxu0 %v895
          %912 = vmatprep.subr.bf16.mxu0 0
          %913 = vmatpush1.bf16.msra.mxu0 0
          %914 = vmatprep.subr.bf16.mxu0 0
          %915 = vmatpush1.bf16.msra.mxu0 0
          %916 = vmatprep.subr.bf16.mxu0 0
          %917 = vmatpush1.bf16.msra.mxu0 0
          %918 = vmatprep.subr.bf16.mxu0 0
          %919 = vmatpush1.bf16.msra.mxu0 0
          %920 = vmatprep.subr.bf16.mxu0 0
          %921 = vmatpush1.bf16.msra.mxu0 0
          %922 = vmatprep.subr.bf16.mxu0 0
          %923 = vmatpush1.bf16.msra.mxu0 0
          %924 = vmatprep.subr.bf16.mxu0 0
          %925 = vmatpush1.bf16.msra.mxu0 0
          %926 = vmatprep.subr.bf16.mxu0 0
          %927 = vmatpush1.bf16.msra.mxu0 0
          %928 = vmatprep.subr.bf16.mxu0 0
          %929 = vmatpush1.bf16.msra.mxu0 0
          %930 = vmatprep.subr.bf16.mxu0 0
          %931 = vmatpush1.bf16.msra.mxu0 0
          %932 = vmatprep.subr.bf16.mxu0 0
          %933 = vmatpush1.bf16.msra.mxu0 0
          %934 = vmatprep.subr.bf16.mxu0 0
          %935 = vmatpush1.bf16.msra.mxu0 0
          %936 = vmatprep.subr.bf16.mxu0 0
          %937 = vmatpush1.bf16.msra.mxu0 0
          %938 = vmatprep.mubr.bf16.mxu0 0
          %939 = vmatmul.mubr.bf16.gmra.mrb[0].mxu0 %v901
          %v940 = vpop.f32.mrb[0].mxu0
          %v941 = vadd.f32 %v879, %v940
          %v942 = vpop.f32.mrb[0].mxu0
          %v943 = vpop.f32.mrb[0].mxu0
          %v944 = vadd.f32 %v879, %v943
          %v945 = vpop.f32.mrb[0].mxu0
          %946 = vmatprep.mubr.bf16.mxu0 0
          %947 = vmatmul.mubr.bf16.gmra.mrb[0].mxu0 %v904
          %v948 = vpop.f32.mrb[0].mxu0
          %v949 = vadd.f32 %v879, %v948
          %v950 = vpop.f32.mrb[0].mxu0
          %v951 = vpop.f32.mrb[0].mxu0
          %v952 = vadd.f32 %v879, %v951
          %v953 = vpop.f32.mrb[0].mxu0
          %954 = vdwg.mxu0
          %v955 = vld [vmem:[#allocation6] sm:$0x1]
          %v956 = vld [vmem:[%s4] sm:$0x1]
          %v957 = vadd.f32 %v955, %v956
          %vm958 = vcmask 253952
          %959 = vst.msk [vmem:[#allocation2] sm:$0x1] %vm958, %v957
          %960 = vst.msk [vmem:[#allocation2 + $0x20] sm:$0x1] %vm958, %v957
          %v961 = vld [vmem:[%s4 + $0x1] sm:$0xff]
          %v962 = vld [vmem:[%s4 + $0x9] sm:$0xff]
          %v963 = vadd.f32 %v941, %v961
          %v964 = vadd.f32 %v944, %v962
          %v965 = vadd.f32 %v949, %v961
          %v966 = vadd.f32 %v952, %v962
          %vm967 = vcmask 261120
          %968 = vst.msk [vmem:[#allocation2 + $0x1] sm:$0xff] %vm967, %v963
          %969 = vst.msk [vmem:[#allocation2 + $0x9] sm:$0xff] %vm967, %v964
          %970 = vst.msk [vmem:[#allocation2 + $0x21] sm:$0xff] %vm967, %v965
          %971 = vst.msk [vmem:[#allocation2 + $0x29] sm:$0xff] %vm967, %v966
          %972 = vst.msk [vmem:[#allocation2 + $0x11] sm:$0xff] %vm967, 0.0
          %vm973 = vcmask 260096
          %974 = vst.msk [vmem:[#allocation2 + $0x19] sm:$0x7f] %vm973, 0.0
          %975 = vst.msk [vmem:[#allocation2 + $0x31] sm:$0xff] %vm967, 0.0
          %976 = vst.msk [vmem:[#allocation2 + $0x39] sm:$0x7f] %vm973, 0.0
        $region112: #{tpu_custom_call.1} parent=99 // pred_fallthru
          _
        %v977 = vld [vmem:[#allocation2] sm:$0xff]
        %v978 = vld [vmem:[#allocation2 + $0x8] sm:$0xff]
        %v979 = vld [vmem:[#allocation2 + $0x10] sm:$0xff]
        %v980 = vld [vmem:[#allocation2 + $0x18] sm:$0xff]
        %v981 = vld [vmem:[#allocation2 + $0x20] sm:$0xff]
        %v982 = vld [vmem:[#allocation2 + $0x28] sm:$0xff]
        %v983 = vld [vmem:[#allocation2 + $0x30] sm:$0xff]
        %v984 = vld [vmem:[#allocation2 + $0x38] sm:$0xff]
        %v985 = vld [vmem:[%s814] sm:$0x1]
        %v986 = vld [vmem:[%s817] sm:$0x1]
        %vm987 = vcmask 261120
        %v988 = vsel %vm987, %v977, 0.0
        %989 = vadd.xlane.f32.xlu0 %v988
        %v990 = vpop.xlane.xlu0 %989
        %v991 = vsel %vm987, %v978, 0.0
        %992 = vadd.xlane.f32.xlu0 %v991
        %v993 = vpop.xlane.xlu0 %992
        %v994 = vsel %vm987, %v979, 0.0
        %995 = vadd.xlane.f32.xlu0 %v994
        %v996 = vpop.xlane.xlu0 %995
        %v997 = vsel %vm987, %v980, 0.0
        %998 = vadd.xlane.f32.xlu0 %v997
        %v999 = vpop.xlane.xlu0 %998
        %v1000 = vsel %vm987, %v981, 0.0
        %1001 = vadd.xlane.f32.xlu0 %v1000
        %v1002 = vpop.xlane.xlu0 %1001
        %v1003 = vsel %vm987, %v982, 0.0
        %1004 = vadd.xlane.f32.xlu0 %v1003
        %v1005 = vpop.xlane.xlu0 %1004
        %v1006 = vsel %vm987, %v983, 0.0
        %1007 = vadd.xlane.f32.xlu0 %v1006
        %v1008 = vpop.xlane.xlu0 %1007
        %v1009 = vsel %vm987, %v984, 0.0
        %1010 = vadd.xlane.f32.xlu0 %v1009
        %v1011 = vpop.xlane.xlu0 %1010
        %v1012 = vrcp.pop 32.0
        %v1013 = vmul.f32 %v990, %v1012
        %v1014 = vmul.f32 %v993, %v1012
        %v1015 = vmul.f32 %v996, %v1012
        %v1016 = vmul.f32 %v999, %v1012
        %v1017 = vmul.f32 %v1002, %v1012
        %v1018 = vmul.f32 %v1005, %v1012
        %v1019 = vmul.f32 %v1008, %v1012
        %v1020 = vmul.f32 %v1011, %v1012
        %v1021 = vsub.f32 %v977, %v1013
        %v1022 = vsub.f32 %v978, %v1014
        %v1023 = vsub.f32 %v979, %v1015
        %v1024 = vsub.f32 %v980, %v1016
        %v1025 = vsub.f32 %v981, %v1017
        %v1026 = vsub.f32 %v982, %v1018
        %v1027 = vsub.f32 %v983, %v1019
        %v1028 = vsub.f32 %v984, %v1020
        %v1029 = vmul.f32 %v1021, %v1021
        %v1030 = vmul.f32 %v1022, %v1022
        %v1031 = vmul.f32 %v1023, %v1023
        %v1032 = vmul.f32 %v1024, %v1024
        %v1033 = vmul.f32 %v1025, %v1025
        %v1034 = vmul.f32 %v1026, %v1026
        %v1035 = vmul.f32 %v1027, %v1027
        %v1036 = vmul.f32 %v1028, %v1028
        %v1037 = vsel %vm987, %v1029, 0.0
        %1038 = vadd.xlane.f32.xlu0 %v1037
        %v1039 = vpop.xlane.xlu0 %1038
        %v1040 = vsel %vm987, %v1030, 0.0
        %1041 = vadd.xlane.f32.xlu0 %v1040
        %v1042 = vpop.xlane.xlu0 %1041
        %v1043 = vsel %vm987, %v1031, 0.0
        %1044 = vadd.xlane.f32.xlu0 %v1043
        %v1045 = vpop.xlane.xlu0 %1044
        %v1046 = vsel %vm987, %v1032, 0.0
        %1047 = vadd.xlane.f32.xlu0 %v1046
        %v1048 = vpop.xlane.xlu0 %1047
        %v1049 = vsel %vm987, %v1033, 0.0
        %1050 = vadd.xlane.f32.xlu0 %v1049
        %v1051 = vpop.xlane.xlu0 %1050
        %v1052 = vsel %vm987, %v1034, 0.0
        %1053 = vadd.xlane.f32.xlu0 %v1052
        %v1054 = vpop.xlane.xlu0 %1053
        %v1055 = vsel %vm987, %v1035, 0.0
        %1056 = vadd.xlane.f32.xlu0 %v1055
        %v1057 = vpop.xlane.xlu0 %1056
        %v1058 = vsel %vm987, %v1036, 0.0
        %1059 = vadd.xlane.f32.xlu0 %v1058
        %v1060 = vpop.xlane.xlu0 %1059
        %v1061 = vmul.f32 %v1039, %v1012
        %v1062 = vmul.f32 %v1042, %v1012
        %v1063 = vmul.f32 %v1045, %v1012
        %v1064 = vmul.f32 %v1048, %v1012
        %v1065 = vmul.f32 %v1051, %v1012
        %v1066 = vmul.f32 %v1054, %v1012
        %v1067 = vmul.f32 %v1057, %v1012
        %v1068 = vmul.f32 %v1060, %v1012
        %v1069 = vadd.f32 %v1061, 1e-06
        %v1070 = vadd.f32 %v1062, 1e-06
        %v1071 = vadd.f32 %v1063, 1e-06
        %v1072 = vadd.f32 %v1064, 1e-06
        %v1073 = vadd.f32 %v1065, 1e-06
        %v1074 = vadd.f32 %v1066, 1e-06
        %v1075 = vadd.f32 %v1067, 1e-06
        %v1076 = vadd.f32 %v1068, 1e-06
        %v1077 = vrsqrt.pop %v1069
        %v1078 = vrsqrt.pop %v1070
        %v1079 = vrsqrt.pop %v1071
        %v1080 = vrsqrt.pop %v1072
        %v1081 = vrsqrt.pop %v1073
        %v1082 = vrsqrt.pop %v1074
        %v1083 = vrsqrt.pop %v1075
        %v1084 = vrsqrt.pop %v1076
        %v1085 = vmul.f32 %v1021, %v1077
        %v1086 = vmul.f32 %v1022, %v1078
        %v1087 = vmul.f32 %v1023, %v1079
        %v1088 = vmul.f32 %v1024, %v1080
        %v1089 = vmul.f32 %v1025, %v1081
        %v1090 = vmul.f32 %v1026, %v1082
        %v1091 = vmul.f32 %v1027, %v1083
        %v1092 = vmul.f32 %v1028, %v1084
        %v1094 = vlaneseq
        %v1095 = vshrl.u32 %v1094, 7
        %v1096 = vsub.s32 0, %v1095
        %v1097 = vrot.slane %v985, %v1096
        %v1099 = vmul.f32 %v1085, %v1097
        %v1100 = vmul.f32 %v1086, %v1097
        %v1101 = vmul.f32 %v1087, %v1097
        %v1102 = vmul.f32 %v1088, %v1097
        %v1103 = vmul.f32 %v1089, %v1097
        %v1104 = vmul.f32 %v1090, %v1097
        %v1105 = vmul.f32 %v1091, %v1097
        %v1106 = vmul.f32 %v1092, %v1097
        %v1108 = vlaneseq
        %v1109 = vshrl.u32 %v1108, 7
        %v1110 = vsub.s32 0, %v1109
        %v1111 = vrot.slane %v986, %v1110
        %v1113 = vadd.f32 %v1099, %v1111
        %v1114 = vadd.f32 %v1100, %v1111
        %v1115 = vadd.f32 %v1101, %v1111
        %v1116 = vadd.f32 %v1102, %v1111
        %v1117 = vadd.f32 %v1103, %v1111
        %v1118 = vadd.f32 %v1104, %v1111
        %v1119 = vadd.f32 %v1105, %v1111
        %v1120 = vadd.f32 %v1106, %v1111
        %v1121 = vpack.c.bf16 %v1114, %v1113
        %v1122 = vpack.c.bf16 %v1116, %v1115
        %v1123 = vpack.c.bf16 %v1118, %v1117
        %v1124 = vpack.c.bf16 %v1120, %v1119
        %v1125 = vld [vmem:[%s822] sm:$0xf]
        %v1126 = vld [vmem:[%s822 + $0x4] sm:$0xf]
        %v1127 = vld [vmem:[%s822 + $0x8] sm:$0xf]
        %v1128 = vld [vmem:[%s822 + $0xc] sm:$0xf]
        %v1129 = vld [vmem:[%s825] sm:$0x1]
        %v1131 = vlaneseq
        %v1132 = vshrl.u32 %v1131, 7
        %v1133 = vsub.s32 0, %v1132
        %v1134 = vrot.slane %v1129, %v1133
        %v1140 = vunpack.c.l.b16 %v1125
        %v1141 = vunpack.c.l.b16 %v1126
        %v1142 = vunpack.c.l.b16 %v1127
        %v1143 = vunpack.c.l.b16 %v1128
        %v1144 = vpack.c.b16 %v1141, %v1140
        %v1145 = vpack.c.b16 %v1143, %v1142
        %v1149 = vsel %vm987, %v1121, 0
        %v1152 = vsel %vm987, %v1122, 0
        %v1155 = vsel %vm987, %v1123, 0
        %v1158 = vsel %vm987, %v1124, 0
        %1160 = vmatprep.subr.bf16.mxu0 0
        %1161 = vmatpush1.bf16.msra.mxu0 %v1144
        %1162 = vmatprep.subr.bf16.mxu0 0
        %1163 = vmatpush1.bf16.msra.mxu0 %v1145
        %1164 = vmatprep.subr.bf16.mxu0 0
        %1165 = vmatpush1.bf16.msra.mxu0 0
        %1166 = vmatprep.subr.bf16.mxu0 0
        %1167 = vmatpush1.bf16.msra.mxu0 0
        %1168 = vmatprep.subr.bf16.mxu0 0
        %1169 = vmatpush1.bf16.msra.mxu0 0
        %1170 = vmatprep.subr.bf16.mxu0 0
        %1171 = vmatpush1.bf16.msra.mxu0 0
        %1172 = vmatprep.subr.bf16.mxu0 0
        %1173 = vmatpush1.bf16.msra.mxu0 0
        %1174 = vmatprep.subr.bf16.mxu0 0
        %1175 = vmatpush1.bf16.msra.mxu0 0
        %1176 = vmatprep.subr.bf16.mxu0 0
        %1177 = vmatpush1.bf16.msra.mxu0 0
        %1178 = vmatprep.subr.bf16.mxu0 0
        %1179 = vmatpush1.bf16.msra.mxu0 0
        %1180 = vmatprep.subr.bf16.mxu0 0
        %1181 = vmatpush1.bf16.msra.mxu0 0
        %1182 = vmatprep.subr.bf16.mxu0 0
        %1183 = vmatpush1.bf16.msra.mxu0 0
        %1184 = vmatprep.subr.bf16.mxu0 0
        %1185 = vmatpush1.bf16.msra.mxu0 0
        %1186 = vmatprep.subr.bf16.mxu0 0
        %1187 = vmatpush1.bf16.msra.mxu0 0
        %1188 = vmatprep.subr.bf16.mxu0 0
        %1189 = vmatpush1.bf16.msra.mxu0 0
        %1190 = vmatprep.subr.bf16.mxu0 0
        %1191 = vmatpush1.bf16.msra.mxu0 0
        %1192 = vmatprep.mubr.bf16.mxu0 0
        %1193 = vmatmul.mubr.bf16.gmra.mrb[0].mxu0 %v1149
        %v1194 = vpop.f32.mrb[0].mxu0
        %v1195 = vadd.f32 %v1134, %v1194
        %v1196 = vpop.f32.mrb[0].mxu0
        %v1197 = vpop.f32.mrb[0].mxu0
        %v1198 = vadd.f32 %v1134, %v1197
        %v1199 = vpop.f32.mrb[0].mxu0
        %1200 = vmatprep.mubr.bf16.mxu0 0
        %1201 = vmatmul.mubr.bf16.gmra.mrb[0].mxu0 %v1152
        %v1202 = vpop.f32.mrb[0].mxu0
        %v1203 = vadd.f32 %v1134, %v1202
        %v1204 = vpop.f32.mrb[0].mxu0
        %v1205 = vpop.f32.mrb[0].mxu0
        %v1206 = vadd.f32 %v1134, %v1205
        %v1207 = vpop.f32.mrb[0].mxu0
        %1208 = vmatprep.mubr.bf16.mxu0 0
        %1209 = vmatmul.mubr.bf16.gmra.mrb[0].mxu0 %v1155
        %v1210 = vpop.f32.mrb[0].mxu0
        %v1211 = vadd.f32 %v1134, %v1210
        %v1212 = vpop.f32.mrb[0].mxu0
        %v1213 = vpop.f32.mrb[0].mxu0
        %v1214 = vadd.f32 %v1134, %v1213
        %v1215 = vpop.f32.mrb[0].mxu0
        %1216 = vmatprep.mubr.bf16.mxu0 0
        %1217 = vmatmul.mubr.bf16.gmra.mrb[0].mxu0 %v1158
        %v1218 = vpop.f32.mrb[0].mxu0
        %v1219 = vadd.f32 %v1134, %v1218
        %v1220 = vpop.f32.mrb[0].mxu0
        %v1221 = vpop.f32.mrb[0].mxu0
        %v1222 = vadd.f32 %v1134, %v1221
        %v1223 = vpop.f32.mrb[0].mxu0
        %1224 = vdwg.mxu0
        %v1225 = vpack.c.bf16 %v1198, %v1195
        %v1226 = vpack.c.bf16 %v1206, %v1203
        %v1227 = vpack.c.bf16 %v1214, %v1211
        %v1228 = vpack.c.bf16 %v1222, %v1219
        %1233 = vrot.lane.b32.xlu0 %v1225, 120
        %v1234 = vpop.permute.xlu0 %1233
        %1235 = vrot.lane.b32.xlu0 %v1226, 120
        %v1236 = vpop.permute.xlu0 %1235
        %1237 = vrot.lane.b32.xlu0 %v1227, 120
        %v1238 = vpop.permute.xlu0 %1237
        %1239 = vrot.lane.b32.xlu0 %v1228, 120
        %v1240 = vpop.permute.xlu0 %1239
        %1241 = vrot.lane.b32.xlu0 %v1225, 112
        %v1242 = vpop.permute.xlu0 %1241
        %1243 = vrot.lane.b32.xlu0 %v1226, 112
        %v1244 = vpop.permute.xlu0 %1243
        %1245 = vrot.lane.b32.xlu0 %v1227, 112
        %v1246 = vpop.permute.xlu0 %1245
        %1247 = vrot.lane.b32.xlu0 %v1228, 112
        %v1248 = vpop.permute.xlu0 %1247
        %1249 = vrot.lane.b32.xlu0 %v1225, 104
        %v1250 = vpop.permute.xlu0 %1249
        %1251 = vrot.lane.b32.xlu0 %v1226, 104
        %v1252 = vpop.permute.xlu0 %1251
        %1253 = vrot.lane.b32.xlu0 %v1227, 104
        %v1254 = vpop.permute.xlu0 %1253
        %1255 = vrot.lane.b32.xlu0 %v1228, 104
        %v1256 = vpop.permute.xlu0 %1255
        %v1259 = vpack.i.b16 %v1234, %v1225
        %v1261 = vshrl.u32 %v1225, 16
        %v1262 = vshrl.u32 %v1234, 16
        %v1263 = vpack.i.b16 %v1262, %v1261
        %v1267 = vpack.i.b16 %v1250, %v1242
        %v1269 = vshrl.u32 %v1242, 16
        %v1270 = vshrl.u32 %v1250, 16
        %v1271 = vpack.i.b16 %v1270, %v1269
        %v1274 = vpack.i.b16 0, 0
        %v1276 = vshrl.u32 0, 16
        %v1277 = vpack.i.b16 %v1276, %v1276
        %v1281 = vpack.i.b16 %v1236, %v1226
        %v1283 = vshrl.u32 %v1226, 16
        %v1284 = vshrl.u32 %v1236, 16
        %v1285 = vpack.i.b16 %v1284, %v1283
        %v1289 = vpack.i.b16 %v1252, %v1244
        %v1291 = vshrl.u32 %v1244, 16
        %v1292 = vshrl.u32 %v1252, 16
        %v1293 = vpack.i.b16 %v1292, %v1291
        %v1297 = vpack.i.b16 %v1238, %v1227
        %v1299 = vshrl.u32 %v1227, 16
        %v1300 = vshrl.u32 %v1238, 16
        %v1301 = vpack.i.b16 %v1300, %v1299
        %v1305 = vpack.i.b16 %v1254, %v1246
        %v1307 = vshrl.u32 %v1246, 16
        %v1308 = vshrl.u32 %v1254, 16
        %v1309 = vpack.i.b16 %v1308, %v1307
        %v1313 = vpack.i.b16 %v1240, %v1228
        %v1315 = vshrl.u32 %v1228, 16
        %v1316 = vshrl.u32 %v1240, 16
        %v1317 = vpack.i.b16 %v1316, %v1315
        %v1321 = vpack.i.b16 %v1256, %v1248
        %v1323 = vshrl.u32 %v1248, 16
        %v1324 = vshrl.u32 %v1256, 16
        %v1325 = vpack.i.b16 %v1324, %v1323
        %v1327 = vcombine.high %v1259, %v1274
        %v1329 = vunpack.c.l.s4 1983009808
        %v1330 = vunpack.c.0.s8 %v1329
        %v1331 = vlaneseq
        %v1332 = vshrl.u32 %v1331, 7
        %v1333 = vsub.s32 %v1330, %v1332
        %v1334 = vrot.slane %v1259, %v1333
        %v1336 = vunpack.c.l.s4 1983009808
        %v1337 = vunpack.c.0.s8 %v1336
        %v1338 = vlaneseq
        %v1339 = vshrl.u32 %v1338, 7
        %v1340 = vsub.s32 %v1337, %v1339
        %v1341 = vrot.slane %v1327, %v1340
        %v1342 = vcombine.high %v1267, %v1274
        %v1344 = vunpack.c.l.s4 1983009808
        %v1345 = vunpack.c.0.s8 %v1344
        %v1346 = vlaneseq
        %v1347 = vshrl.u32 %v1346, 7
        %v1348 = vsub.s32 %v1345, %v1347
        %v1349 = vrot.slane %v1267, %v1348
        %v1351 = vunpack.c.l.s4 1983009808
        %v1352 = vunpack.c.0.s8 %v1351
        %v1353 = vlaneseq
        %v1354 = vshrl.u32 %v1353, 7
        %v1355 = vsub.s32 %v1352, %v1354
        %v1356 = vrot.slane %v1342, %v1355
        %v1357 = vcombine.low %v1334, %v1349
        %v1358 = vcombine.high %v1334, %v1349
        %v1360 = vunpack.c.l.s4 1934713408
        %v1361 = vunpack.c.0.s8 %v1360
        %v1362 = vlaneseq
        %v1363 = vshrl.u32 %v1362, 7
        %v1364 = vsub.s32 %v1361, %v1363
        %v1365 = vrot.slane %v1357, %v1364
        %v1367 = vunpack.c.l.s4 1934713408
        %v1368 = vunpack.c.0.s8 %v1367
        %v1369 = vlaneseq
        %v1370 = vshrl.u32 %v1369, 7
        %v1371 = vsub.s32 %v1368, %v1370
        %v1372 = vrot.slane %v1358, %v1371
        %v1373 = vcombine.low %v1341, %v1356
        %v1374 = vcombine.high %v1341, %v1356
        %v1376 = vunpack.c.l.s4 1934713408
        %v1377 = vunpack.c.0.s8 %v1376
        %v1378 = vlaneseq
        %v1379 = vshrl.u32 %v1378, 7
        %v1380 = vsub.s32 %v1377, %v1379
        %v1381 = vrot.slane %v1373, %v1380
        %v1383 = vunpack.c.l.s4 1934713408
        %v1384 = vunpack.c.0.s8 %v1383
        %v1385 = vlaneseq
        %v1386 = vshrl.u32 %v1385, 7
        %v1387 = vsub.s32 %v1384, %v1386
        %v1388 = vrot.slane %v1374, %v1387
        %v1389 = vcombine.high %v1365, 0
        %v1390 = vcombine.high %v1372, 0
        %v1391 = vcombine.high %v1381, 0
        %v1392 = vcombine.high %v1388, 0
        %v1393 = vcombine.high %v1263, %v1277
        %v1395 = vunpack.c.l.s4 1983009808
        %v1396 = vunpack.c.0.s8 %v1395
        %v1397 = vlaneseq
        %v1398 = vshrl.u32 %v1397, 7
        %v1399 = vsub.s32 %v1396, %v1398
        %v1400 = vrot.slane %v1263, %v1399
        %v1402 = vunpack.c.l.s4 1983009808
        %v1403 = vunpack.c.0.s8 %v1402
        %v1404 = vlaneseq
        %v1405 = vshrl.u32 %v1404, 7
        %v1406 = vsub.s32 %v1403, %v1405
        %v1407 = vrot.slane %v1393, %v1406
        %v1408 = vcombine.high %v1271, %v1277
        %v1410 = vunpack.c.l.s4 1983009808
        %v1411 = vunpack.c.0.s8 %v1410
        %v1412 = vlaneseq
        %v1413 = vshrl.u32 %v1412, 7
        %v1414 = vsub.s32 %v1411, %v1413
        %v1415 = vrot.slane %v1271, %v1414
        %v1417 = vunpack.c.l.s4 1983009808
        %v1418 = vunpack.c.0.s8 %v1417
        %v1419 = vlaneseq
        %v1420 = vshrl.u32 %v1419, 7
        %v1421 = vsub.s32 %v1418, %v1420
        %v1422 = vrot.slane %v1408, %v1421
        %v1423 = vcombine.low %v1400, %v1415
        %v1424 = vcombine.high %v1400, %v1415
        %v1426 = vunpack.c.l.s4 1934713408
        %v1427 = vunpack.c.0.s8 %v1426
        %v1428 = vlaneseq
        %v1429 = vshrl.u32 %v1428, 7
        %v1430 = vsub.s32 %v1427, %v1429
        %v1431 = vrot.slane %v1423, %v1430
        %v1433 = vunpack.c.l.s4 1934713408
        %v1434 = vunpack.c.0.s8 %v1433
        %v1435 = vlaneseq
        %v1436 = vshrl.u32 %v1435, 7
        %v1437 = vsub.s32 %v1434, %v1436
        %v1438 = vrot.slane %v1424, %v1437
        %v1439 = vcombine.low %v1407, %v1422
        %v1440 = vcombine.high %v1407, %v1422
        %v1442 = vunpack.c.l.s4 1934713408
        %v1443 = vunpack.c.0.s8 %v1442
        %v1444 = vlaneseq
        %v1445 = vshrl.u32 %v1444, 7
        %v1446 = vsub.s32 %v1443, %v1445
        %v1447 = vrot.slane %v1439, %v1446
        %v1449 = vunpack.c.l.s4 1934713408
        %v1450 = vunpack.c.0.s8 %v1449
        %v1451 = vlaneseq
        %v1452 = vshrl.u32 %v1451, 7
        %v1453 = vsub.s32 %v1450, %v1452
        %v1454 = vrot.slane %v1440, %v1453
        %v1455 = vcombine.high %v1431, 0
        %v1456 = vcombine.high %v1438, 0
        %v1457 = vcombine.high %v1447, 0
        %v1458 = vcombine.high %v1454, 0
        %v1459 = vcombine.high %v1281, %v1274
        %v1461 = vunpack.c.l.s4 1983009808
        %v1462 = vunpack.c.0.s8 %v1461
        %v1463 = vlaneseq
        %v1464 = vshrl.u32 %v1463, 7
        %v1465 = vsub.s32 %v1462, %v1464
        %v1466 = vrot.slane %v1281, %v1465
        %v1468 = vunpack.c.l.s4 1983009808
        %v1469 = vunpack.c.0.s8 %v1468
        %v1470 = vlaneseq
        %v1471 = vshrl.u32 %v1470, 7
        %v1472 = vsub.s32 %v1469, %v1471
        %v1473 = vrot.slane %v1459, %v1472
        %v1474 = vcombine.high %v1289, %v1274
        %v1476 = vunpack.c.l.s4 1983009808
        %v1477 = vunpack.c.0.s8 %v1476
        %v1478 = vlaneseq
        %v1479 = vshrl.u32 %v1478, 7
        %v1480 = vsub.s32 %v1477, %v1479
        %v1481 = vrot.slane %v1289, %v1480
        %v1483 = vunpack.c.l.s4 1983009808
        %v1484 = vunpack.c.0.s8 %v1483
        %v1485 = vlaneseq
        %v1486 = vshrl.u32 %v1485, 7
        %v1487 = vsub.s32 %v1484, %v1486
        %v1488 = vrot.slane %v1474, %v1487
        %v1489 = vcombine.low %v1466, %v1481
        %v1490 = vcombine.high %v1466, %v1481
        %v1492 = vunpack.c.l.s4 1934713408
        %v1493 = vunpack.c.0.s8 %v1492
        %v1494 = vlaneseq
        %v1495 = vshrl.u32 %v1494, 7
        %v1496 = vsub.s32 %v1493, %v1495
        %v1497 = vrot.slane %v1489, %v1496
        %v1499 = vunpack.c.l.s4 1934713408
        %v1500 = vunpack.c.0.s8 %v1499
        %v1501 = vlaneseq
        %v1502 = vshrl.u32 %v1501, 7
        %v1503 = vsub.s32 %v1500, %v1502
        %v1504 = vrot.slane %v1490, %v1503
        %v1505 = vcombine.low %v1473, %v1488
        %v1506 = vcombine.high %v1473, %v1488
        %v1508 = vunpack.c.l.s4 1934713408
        %v1509 = vunpack.c.0.s8 %v1508
        %v1510 = vlaneseq
        %v1511 = vshrl.u32 %v1510, 7
        %v1512 = vsub.s32 %v1509, %v1511
        %v1513 = vrot.slane %v1505, %v1512
        %v1515 = vunpack.c.l.s4 1934713408
        %v1516 = vunpack.c.0.s8 %v1515
        %v1517 = vlaneseq
        %v1518 = vshrl.u32 %v1517, 7
        %v1519 = vsub.s32 %v1516, %v1518
        %v1520 = vrot.slane %v1506, %v1519
        %v1521 = vcombine.high %v1497, 0
        %v1522 = vcombine.high %v1504, 0
        %v1523 = vcombine.high %v1513, 0
        %v1524 = vcombine.high %v1520, 0
        %v1525 = vcombine.high %v1285, %v1277
        %v1527 = vunpack.c.l.s4 1983009808
        %v1528 = vunpack.c.0.s8 %v1527
        %v1529 = vlaneseq
        %v1530 = vshrl.u32 %v1529, 7
        %v1531 = vsub.s32 %v1528, %v1530
        %v1532 = vrot.slane %v1285, %v1531
        %v1534 = vunpack.c.l.s4 1983009808
        %v1535 = vunpack.c.0.s8 %v1534
        %v1536 = vlaneseq
        %v1537 = vshrl.u32 %v1536, 7
        %v1538 = vsub.s32 %v1535, %v1537
        %v1539 = vrot.slane %v1525, %v1538
        %v1540 = vcombine.high %v1293, %v1277
        %v1542 = vunpack.c.l.s4 1983009808
        %v1543 = vunpack.c.0.s8 %v1542
        %v1544 = vlaneseq
        %v1545 = vshrl.u32 %v1544, 7
        %v1546 = vsub.s32 %v1543, %v1545
        %v1547 = vrot.slane %v1293, %v1546
        %v1549 = vunpack.c.l.s4 1983009808
        %v1550 = vunpack.c.0.s8 %v1549
        %v1551 = vlaneseq
        %v1552 = vshrl.u32 %v1551, 7
        %v1553 = vsub.s32 %v1550, %v1552
        %v1554 = vrot.slane %v1540, %v1553
        %v1555 = vcombine.low %v1532, %v1547
        %v1556 = vcombine.high %v1532, %v1547
        %v1558 = vunpack.c.l.s4 1934713408
        %v1559 = vunpack.c.0.s8 %v1558
        %v1560 = vlaneseq
        %v1561 = vshrl.u32 %v1560, 7
        %v1562 = vsub.s32 %v1559, %v1561
        %v1563 = vrot.slane %v1555, %v1562
        %v1565 = vunpack.c.l.s4 1934713408
        %v1566 = vunpack.c.0.s8 %v1565
        %v1567 = vlaneseq
        %v1568 = vshrl.u32 %v1567, 7
        %v1569 = vsub.s32 %v1566, %v1568
        %v1570 = vrot.slane %v1556, %v1569
        %v1571 = vcombine.low %v1539, %v1554
        %v1572 = vcombine.high %v1539, %v1554
        %v1574 = vunpack.c.l.s4 1934713408
        %v1575 = vunpack.c.0.s8 %v1574
        %v1576 = vlaneseq
        %v1577 = vshrl.u32 %v1576, 7
        %v1578 = vsub.s32 %v1575, %v1577
        %v1579 = vrot.slane %v1571, %v1578
        %v1581 = vunpack.c.l.s4 1934713408
        %v1582 = vunpack.c.0.s8 %v1581
        %v1583 = vlaneseq
        %v1584 = vshrl.u32 %v1583, 7
        %v1585 = vsub.s32 %v1582, %v1584
        %v1586 = vrot.slane %v1572, %v1585
        %v1587 = vcombine.high %v1563, 0
        %v1588 = vcombine.high %v1570, 0
        %v1589 = vcombine.high %v1579, 0
        %v1590 = vcombine.high %v1586, 0
        %v1591 = vcombine.high %v1297, %v1274
        %v1593 = vunpack.c.l.s4 1983009808
        %v1594 = vunpack.c.0.s8 %v1593
        %v1595 = vlaneseq
        %v1596 = vshrl.u32 %v1595, 7
        %v1597 = vsub.s32 %v1594, %v1596
        %v1598 = vrot.slane %v1297, %v1597
        %v1600 = vunpack.c.l.s4 1983009808
        %v1601 = vunpack.c.0.s8 %v1600
        %v1602 = vlaneseq
        %v1603 = vshrl.u32 %v1602, 7
        %v1604 = vsub.s32 %v1601, %v1603
        %v1605 = vrot.slane %v1591, %v1604
        %v1606 = vcombine.high %v1305, %v1274
        %v1608 = vunpack.c.l.s4 1983009808
        %v1609 = vunpack.c.0.s8 %v1608
        %v1610 = vlaneseq
        %v1611 = vshrl.u32 %v1610, 7
        %v1612 = vsub.s32 %v1609, %v1611
        %v1613 = vrot.slane %v1305, %v1612
        %v1615 = vunpack.c.l.s4 1983009808
        %v1616 = vunpack.c.0.s8 %v1615
        %v1617 = vlaneseq
        %v1618 = vshrl.u32 %v1617, 7
        %v1619 = vsub.s32 %v1616, %v1618
        %v1620 = vrot.slane %v1606, %v1619
        %v1621 = vcombine.low %v1598, %v1613
        %v1622 = vcombine.high %v1598, %v1613
        %v1624 = vunpack.c.l.s4 1934713408
        %v1625 = vunpack.c.0.s8 %v1624
        %v1626 = vlaneseq
        %v1627 = vshrl.u32 %v1626, 7
        %v1628 = vsub.s32 %v1625, %v1627
        %v1629 = vrot.slane %v1621, %v1628
        %v1631 = vunpack.c.l.s4 1934713408
        %v1632 = vunpack.c.0.s8 %v1631
        %v1633 = vlaneseq
        %v1634 = vshrl.u32 %v1633, 7
        %v1635 = vsub.s32 %v1632, %v1634
        %v1636 = vrot.slane %v1622, %v1635
        %v1637 = vcombine.low %v1605, %v1620
        %v1638 = vcombine.high %v1605, %v1620
        %v1640 = vunpack.c.l.s4 1934713408
        %v1641 = vunpack.c.0.s8 %v1640
        %v1642 = vlaneseq
        %v1643 = vshrl.u32 %v1642, 7
        %v1644 = vsub.s32 %v1641, %v1643
        %v1645 = vrot.slane %v1637, %v1644
        %v1647 = vunpack.c.l.s4 1934713408
        %v1648 = vunpack.c.0.s8 %v1647
        %v1649 = vlaneseq
        %v1650 = vshrl.u32 %v1649, 7
        %v1651 = vsub.s32 %v1648, %v1650
        %v1652 = vrot.slane %v1638, %v1651
        %v1653 = vcombine.high %v1629, 0
        %v1654 = vcombine.high %v1636, 0
        %v1655 = vcombine.high %v1645, 0
        %v1656 = vcombine.high %v1652, 0
        %v1657 = vcombine.high %v1301, %v1277
        %v1659 = vunpack.c.l.s4 1983009808
        %v1660 = vunpack.c.0.s8 %v1659
        %v1661 = vlaneseq
        %v1662 = vshrl.u32 %v1661, 7
        %v1663 = vsub.s32 %v1660, %v1662
        %v1664 = vrot.slane %v1301, %v1663
        %v1666 = vunpack.c.l.s4 1983009808
        %v1667 = vunpack.c.0.s8 %v1666
        %v1668 = vlaneseq
        %v1669 = vshrl.u32 %v1668, 7
        %v1670 = vsub.s32 %v1667, %v1669
        %v1671 = vrot.slane %v1657, %v1670
        %v1672 = vcombine.high %v1309, %v1277
        %v1674 = vunpack.c.l.s4 1983009808
        %v1675 = vunpack.c.0.s8 %v1674
        %v1676 = vlaneseq
        %v1677 = vshrl.u32 %v1676, 7
        %v1678 = vsub.s32 %v1675, %v1677
        %v1679 = vrot.slane %v1309, %v1678
        %v1681 = vunpack.c.l.s4 1983009808
        %v1682 = vunpack.c.0.s8 %v1681
        %v1683 = vlaneseq
        %v1684 = vshrl.u32 %v1683, 7
        %v1685 = vsub.s32 %v1682, %v1684
        %v1686 = vrot.slane %v1672, %v1685
        %v1687 = vcombine.low %v1664, %v1679
        %v1688 = vcombine.high %v1664, %v1679
        %v1690 = vunpack.c.l.s4 1934713408
        %v1691 = vunpack.c.0.s8 %v1690
        %v1692 = vlaneseq
        %v1693 = vshrl.u32 %v1692, 7
        %v1694 = vsub.s32 %v1691, %v1693
        %v1695 = vrot.slane %v1687, %v1694
        %v1697 = vunpack.c.l.s4 1934713408
        %v1698 = vunpack.c.0.s8 %v1697
        %v1699 = vlaneseq
        %v1700 = vshrl.u32 %v1699, 7
        %v1701 = vsub.s32 %v1698, %v1700
        %v1702 = vrot.slane %v1688, %v1701
        %v1703 = vcombine.low %v1671, %v1686
        %v1704 = vcombine.high %v1671, %v1686
        %v1706 = vunpack.c.l.s4 1934713408
        %v1707 = vunpack.c.0.s8 %v1706
        %v1708 = vlaneseq
        %v1709 = vshrl.u32 %v1708, 7
        %v1710 = vsub.s32 %v1707, %v1709
        %v1711 = vrot.slane %v1703, %v1710
        %v1713 = vunpack.c.l.s4 1934713408
        %v1714 = vunpack.c.0.s8 %v1713
        %v1715 = vlaneseq
        %v1716 = vshrl.u32 %v1715, 7
        %v1717 = vsub.s32 %v1714, %v1716
        %v1718 = vrot.slane %v1704, %v1717
        %v1719 = vcombine.high %v1695, 0
        %v1720 = vcombine.high %v1702, 0
        %v1721 = vcombine.high %v1711, 0
        %v1722 = vcombine.high %v1718, 0
        %v1723 = vcombine.high %v1313, %v1274
        %v1725 = vunpack.c.l.s4 1983009808
        %v1726 = vunpack.c.0.s8 %v1725
        %v1727 = vlaneseq
        %v1728 = vshrl.u32 %v1727, 7
        %v1729 = vsub.s32 %v1726, %v1728
        %v1730 = vrot.slane %v1313, %v1729
        %v1732 = vunpack.c.l.s4 1983009808
        %v1733 = vunpack.c.0.s8 %v1732
        %v1734 = vlaneseq
        %v1735 = vshrl.u32 %v1734, 7
        %v1736 = vsub.s32 %v1733, %v1735
        %v1737 = vrot.slane %v1723, %v1736
        %v1738 = vcombine.high %v1321, %v1274
        %v1740 = vunpack.c.l.s4 1983009808
        %v1741 = vunpack.c.0.s8 %v1740
        %v1742 = vlaneseq
        %v1743 = vshrl.u32 %v1742, 7
        %v1744 = vsub.s32 %v1741, %v1743
        %v1745 = vrot.slane %v1321, %v1744
        %v1747 = vunpack.c.l.s4 1983009808
        %v1748 = vunpack.c.0.s8 %v1747
        %v1749 = vlaneseq
        %v1750 = vshrl.u32 %v1749, 7
        %v1751 = vsub.s32 %v1748, %v1750
        %v1752 = vrot.slane %v1738, %v1751
        %v1753 = vcombine.low %v1730, %v1745
        %v1754 = vcombine.high %v1730, %v1745
        %v1756 = vunpack.c.l.s4 1934713408
        %v1757 = vunpack.c.0.s8 %v1756
        %v1758 = vlaneseq
        %v1759 = vshrl.u32 %v1758, 7
        %v1760 = vsub.s32 %v1757, %v1759
        %v1761 = vrot.slane %v1753, %v1760
        %v1763 = vunpack.c.l.s4 1934713408
        %v1764 = vunpack.c.0.s8 %v1763
        %v1765 = vlaneseq
        %v1766 = vshrl.u32 %v1765, 7
        %v1767 = vsub.s32 %v1764, %v1766
        %v1768 = vrot.slane %v1754, %v1767
        %v1769 = vcombine.low %v1737, %v1752
        %v1770 = vcombine.high %v1737, %v1752
        %v1772 = vunpack.c.l.s4 1934713408
        %v1773 = vunpack.c.0.s8 %v1772
        %v1774 = vlaneseq
        %v1775 = vshrl.u32 %v1774, 7
        %v1776 = vsub.s32 %v1773, %v1775
        %v1777 = vrot.slane %v1769, %v1776
        %v1779 = vunpack.c.l.s4 1934713408
        %v1780 = vunpack.c.0.s8 %v1779
        %v1781 = vlaneseq
        %v1782 = vshrl.u32 %v1781, 7
        %v1783 = vsub.s32 %v1780, %v1782
        %v1784 = vrot.slane %v1770, %v1783
        %v1785 = vcombine.high %v1761, 0
        %v1786 = vcombine.high %v1768, 0
        %v1787 = vcombine.high %v1777, 0
        %v1788 = vcombine.high %v1784, 0
        %v1789 = vcombine.high %v1317, %v1277
        %v1791 = vunpack.c.l.s4 1983009808
        %v1792 = vunpack.c.0.s8 %v1791
        %v1793 = vlaneseq
        %v1794 = vshrl.u32 %v1793, 7
        %v1795 = vsub.s32 %v1792, %v1794
        %v1796 = vrot.slane %v1317, %v1795
        %v1798 = vunpack.c.l.s4 1983009808
        %v1799 = vunpack.c.0.s8 %v1798
        %v1800 = vlaneseq
        %v1801 = vshrl.u32 %v1800, 7
        %v1802 = vsub.s32 %v1799, %v1801
        %v1803 = vrot.slane %v1789, %v1802
        %v1804 = vcombine.high %v1325, %v1277
        %v1806 = vunpack.c.l.s4 1983009808
        %v1807 = vunpack.c.0.s8 %v1806
        %v1808 = vlaneseq
        %v1809 = vshrl.u32 %v1808, 7
        %v1810 = vsub.s32 %v1807, %v1809
        %v1811 = vrot.slane %v1325, %v1810
        %v1813 = vunpack.c.l.s4 1983009808
        %v1814 = vunpack.c.0.s8 %v1813
        %v1815 = vlaneseq
        %v1816 = vshrl.u32 %v1815, 7
        %v1817 = vsub.s32 %v1814, %v1816
        %v1818 = vrot.slane %v1804, %v1817
        %v1819 = vcombine.low %v1796, %v1811
        %v1820 = vcombine.high %v1796, %v1811
        %v1822 = vunpack.c.l.s4 1934713408
        %v1823 = vunpack.c.0.s8 %v1822
        %v1824 = vlaneseq
        %v1825 = vshrl.u32 %v1824, 7
        %v1826 = vsub.s32 %v1823, %v1825
        %v1827 = vrot.slane %v1819, %v1826
        %v1829 = vunpack.c.l.s4 1934713408
        %v1830 = vunpack.c.0.s8 %v1829
        %v1831 = vlaneseq
        %v1832 = vshrl.u32 %v1831, 7
        %v1833 = vsub.s32 %v1830, %v1832
        %v1834 = vrot.slane %v1820, %v1833
        %v1835 = vcombine.low %v1803, %v1818
        %v1836 = vcombine.high %v1803, %v1818
        %v1838 = vunpack.c.l.s4 1934713408
        %v1839 = vunpack.c.0.s8 %v1838
        %v1840 = vlaneseq
        %v1841 = vshrl.u32 %v1840, 7
        %v1842 = vsub.s32 %v1839, %v1841
        %v1843 = vrot.slane %v1835, %v1842
        %v1845 = vunpack.c.l.s4 1934713408
        %v1846 = vunpack.c.0.s8 %v1845
        %v1847 = vlaneseq
        %v1848 = vshrl.u32 %v1847, 7
        %v1849 = vsub.s32 %v1846, %v1848
        %v1850 = vrot.slane %v1836, %v1849
        %v1851 = vcombine.high %v1827, 0
        %v1852 = vcombine.high %v1834, 0
        %v1853 = vcombine.high %v1843, 0
        %v1854 = vcombine.high %v1850, 0
        %v1855 = vcombine.low %v1365, %v1372
        %v1857 = vunpack.c.l.s4 1983009808
        %v1858 = vunpack.c.0.s8 %v1857
        %v1859 = vlaneseq
        %v1860 = vshrl.u32 %v1859, 7
        %v1861 = vsub.s32 %v1858, %v1860
        %v1862 = vrot.slane %v1855, %v1861
        %v1863 = vcombine.low %v1389, %v1390
        %v1865 = vunpack.c.l.s4 1983009808
        %v1866 = vunpack.c.0.s8 %v1865
        %v1867 = vlaneseq
        %v1868 = vshrl.u32 %v1867, 7
        %v1869 = vsub.s32 %v1866, %v1868
        %v1870 = vrot.slane %v1863, %v1869
        %v1871 = vcombine.low %v1381, %v1388
        %v1873 = vunpack.c.l.s4 1983009808
        %v1874 = vunpack.c.0.s8 %v1873
        %v1875 = vlaneseq
        %v1876 = vshrl.u32 %v1875, 7
        %v1877 = vsub.s32 %v1874, %v1876
        %v1878 = vrot.slane %v1871, %v1877
        %v1879 = vcombine.low %v1391, %v1392
        %v1881 = vunpack.c.l.s4 1983009808
        %v1882 = vunpack.c.0.s8 %v1881
        %v1883 = vlaneseq
        %v1884 = vshrl.u32 %v1883, 7
        %v1885 = vsub.s32 %v1882, %v1884
        %v1886 = vrot.slane %v1879, %v1885
        %v1887 = vcombine.low %v1862, %v1870
        %v1889 = vunpack.c.l.s4 1934713408
        %v1890 = vunpack.c.0.s8 %v1889
        %v1891 = vlaneseq
        %v1892 = vshrl.u32 %v1891, 7
        %v1893 = vsub.s32 %v1890, %v1892
        %v1894 = vrot.slane %v1887, %v1893
        %v1895 = vcombine.low %v1878, %v1886
        %v1897 = vunpack.c.l.s4 1934713408
        %v1898 = vunpack.c.0.s8 %v1897
        %v1899 = vlaneseq
        %v1900 = vshrl.u32 %v1899, 7
        %v1901 = vsub.s32 %v1898, %v1900
        %v1902 = vrot.slane %v1895, %v1901
        %v1903 = vcombine.low %v1894, %v1902
        %v1904 = vcombine.high %v1894, %v1902
        %v1905 = vcombine.low %v1431, %v1438
        %v1907 = vunpack.c.l.s4 1983009808
        %v1908 = vunpack.c.0.s8 %v1907
        %v1909 = vlaneseq
        %v1910 = vshrl.u32 %v1909, 7
        %v1911 = vsub.s32 %v1908, %v1910
        %v1912 = vrot.slane %v1905, %v1911
        %v1913 = vcombine.low %v1455, %v1456
        %v1915 = vunpack.c.l.s4 1983009808
        %v1916 = vunpack.c.0.s8 %v1915
        %v1917 = vlaneseq
        %v1918 = vshrl.u32 %v1917, 7
        %v1919 = vsub.s32 %v1916, %v1918
        %v1920 = vrot.slane %v1913, %v1919
        %v1921 = vcombine.low %v1447, %v1454
        %v1923 = vunpack.c.l.s4 1983009808
        %v1924 = vunpack.c.0.s8 %v1923
        %v1925 = vlaneseq
        %v1926 = vshrl.u32 %v1925, 7
        %v1927 = vsub.s32 %v1924, %v1926
        %v1928 = vrot.slane %v1921, %v1927
        %v1929 = vcombine.low %v1457, %v1458
        %v1931 = vunpack.c.l.s4 1983009808
        %v1932 = vunpack.c.0.s8 %v1931
        %v1933 = vlaneseq
        %v1934 = vshrl.u32 %v1933, 7
        %v1935 = vsub.s32 %v1932, %v1934
        %v1936 = vrot.slane %v1929, %v1935
        %v1937 = vcombine.low %v1912, %v1920
        %v1939 = vunpack.c.l.s4 1934713408
        %v1940 = vunpack.c.0.s8 %v1939
        %v1941 = vlaneseq
        %v1942 = vshrl.u32 %v1941, 7
        %v1943 = vsub.s32 %v1940, %v1942
        %v1944 = vrot.slane %v1937, %v1943
        %v1945 = vcombine.low %v1928, %v1936
        %v1947 = vunpack.c.l.s4 1934713408
        %v1948 = vunpack.c.0.s8 %v1947
        %v1949 = vlaneseq
        %v1950 = vshrl.u32 %v1949, 7
        %v1951 = vsub.s32 %v1948, %v1950
        %v1952 = vrot.slane %v1945, %v1951
        %v1953 = vcombine.low %v1944, %v1952
        %v1954 = vcombine.high %v1944, %v1952
        %v1955 = vcombine.low %v1497, %v1504
        %v1957 = vunpack.c.l.s4 1983009808
        %v1958 = vunpack.c.0.s8 %v1957
        %v1959 = vlaneseq
        %v1960 = vshrl.u32 %v1959, 7
        %v1961 = vsub.s32 %v1958, %v1960
        %v1962 = vrot.slane %v1955, %v1961
        %v1963 = vcombine.low %v1521, %v1522
        %v1965 = vunpack.c.l.s4 1983009808
        %v1966 = vunpack.c.0.s8 %v1965
        %v1967 = vlaneseq
        %v1968 = vshrl.u32 %v1967, 7
        %v1969 = vsub.s32 %v1966, %v1968
        %v1970 = vrot.slane %v1963, %v1969
        %v1971 = vcombine.low %v1513, %v1520
        %v1973 = vunpack.c.l.s4 1983009808
        %v1974 = vunpack.c.0.s8 %v1973
        %v1975 = vlaneseq
        %v1976 = vshrl.u32 %v1975, 7
        %v1977 = vsub.s32 %v1974, %v1976
        %v1978 = vrot.slane %v1971, %v1977
        %v1979 = vcombine.low %v1523, %v1524
        %v1981 = vunpack.c.l.s4 1983009808
        %v1982 = vunpack.c.0.s8 %v1981
        %v1983 = vlaneseq
        %v1984 = vshrl.u32 %v1983, 7
        %v1985 = vsub.s32 %v1982, %v1984
        %v1986 = vrot.slane %v1979, %v1985
        %v1987 = vcombine.low %v1962, %v1970
        %v1989 = vunpack.c.l.s4 1934713408
        %v1990 = vunpack.c.0.s8 %v1989
        %v1991 = vlaneseq
        %v1992 = vshrl.u32 %v1991, 7
        %v1993 = vsub.s32 %v1990, %v1992
        %v1994 = vrot.slane %v1987, %v1993
        %v1995 = vcombine.low %v1978, %v1986
        %v1997 = vunpack.c.l.s4 1934713408
        %v1998 = vunpack.c.0.s8 %v1997
        %v1999 = vlaneseq
        %v2000 = vshrl.u32 %v1999, 7
        %v2001 = vsub.s32 %v1998, %v2000
        %v2002 = vrot.slane %v1995, %v2001
        %v2003 = vcombine.low %v1994, %v2002
        %v2004 = vcombine.high %v1994, %v2002
        %v2005 = vcombine.low %v1563, %v1570
        %v2007 = vunpack.c.l.s4 1983009808
        %v2008 = vunpack.c.0.s8 %v2007
        %v2009 = vlaneseq
        %v2010 = vshrl.u32 %v2009, 7
        %v2011 = vsub.s32 %v2008, %v2010
        %v2012 = vrot.slane %v2005, %v2011
        %v2013 = vcombine.low %v1587, %v1588
        %v2015 = vunpack.c.l.s4 1983009808
        %v2016 = vunpack.c.0.s8 %v2015
        %v2017 = vlaneseq
        %v2018 = vshrl.u32 %v2017, 7
        %v2019 = vsub.s32 %v2016, %v2018
        %v2020 = vrot.slane %v2013, %v2019
        %v2021 = vcombine.low %v1579, %v1586
        %v2023 = vunpack.c.l.s4 1983009808
        %v2024 = vunpack.c.0.s8 %v2023
        %v2025 = vlaneseq
        %v2026 = vshrl.u32 %v2025, 7
        %v2027 = vsub.s32 %v2024, %v2026
        %v2028 = vrot.slane %v2021, %v2027
        %v2029 = vcombine.low %v1589, %v1590
        %v2031 = vunpack.c.l.s4 1983009808
        %v2032 = vunpack.c.0.s8 %v2031
        %v2033 = vlaneseq
        %v2034 = vshrl.u32 %v2033, 7
        %v2035 = vsub.s32 %v2032, %v2034
        %v2036 = vrot.slane %v2029, %v2035
        %v2037 = vcombine.low %v2012, %v2020
        %v2039 = vunpack.c.l.s4 1934713408
        %v2040 = vunpack.c.0.s8 %v2039
        %v2041 = vlaneseq
        %v2042 = vshrl.u32 %v2041, 7
        %v2043 = vsub.s32 %v2040, %v2042
        %v2044 = vrot.slane %v2037, %v2043
        %v2045 = vcombine.low %v2028, %v2036
        %v2047 = vunpack.c.l.s4 1934713408
        %v2048 = vunpack.c.0.s8 %v2047
        %v2049 = vlaneseq
        %v2050 = vshrl.u32 %v2049, 7
        %v2051 = vsub.s32 %v2048, %v2050
        %v2052 = vrot.slane %v2045, %v2051
        %v2053 = vcombine.low %v2044, %v2052
        %v2054 = vcombine.high %v2044, %v2052
        %v2055 = vcombine.low %v1629, %v1636
        %v2057 = vunpack.c.l.s4 1983009808
        %v2058 = vunpack.c.0.s8 %v2057
        %v2059 = vlaneseq
        %v2060 = vshrl.u32 %v2059, 7
        %v2061 = vsub.s32 %v2058, %v2060
        %v2062 = vrot.slane %v2055, %v2061
        %v2063 = vcombine.low %v1653, %v1654
        %v2065 = vunpack.c.l.s4 1983009808
        %v2066 = vunpack.c.0.s8 %v2065
        %v2067 = vlaneseq
        %v2068 = vshrl.u32 %v2067, 7
        %v2069 = vsub.s32 %v2066, %v2068
        %v2070 = vrot.slane %v2063, %v2069
        %v2071 = vcombine.low %v1645, %v1652
        %v2073 = vunpack.c.l.s4 1983009808
        %v2074 = vunpack.c.0.s8 %v2073
        %v2075 = vlaneseq
        %v2076 = vshrl.u32 %v2075, 7
        %v2077 = vsub.s32 %v2074, %v2076
        %v2078 = vrot.slane %v2071, %v2077
        %v2079 = vcombine.low %v1655, %v1656
        %v2081 = vunpack.c.l.s4 1983009808
        %v2082 = vunpack.c.0.s8 %v2081
        %v2083 = vlaneseq
        %v2084 = vshrl.u32 %v2083, 7
        %v2085 = vsub.s32 %v2082, %v2084
        %v2086 = vrot.slane %v2079, %v2085
        %v2087 = vcombine.low %v2062, %v2070
        %v2089 = vunpack.c.l.s4 1934713408
        %v2090 = vunpack.c.0.s8 %v2089
        %v2091 = vlaneseq
        %v2092 = vshrl.u32 %v2091, 7
        %v2093 = vsub.s32 %v2090, %v2092
        %v2094 = vrot.slane %v2087, %v2093
        %v2095 = vcombine.low %v2078, %v2086
        %v2097 = vunpack.c.l.s4 1934713408
        %v2098 = vunpack.c.0.s8 %v2097
        %v2099 = vlaneseq
        %v2100 = vshrl.u32 %v2099, 7
        %v2101 = vsub.s32 %v2098, %v2100
        %v2102 = vrot.slane %v2095, %v2101
        %v2103 = vcombine.low %v2094, %v2102
        %v2104 = vcombine.high %v2094, %v2102
        %v2105 = vcombine.low %v1695, %v1702
        %v2107 = vunpack.c.l.s4 1983009808
        %v2108 = vunpack.c.0.s8 %v2107
        %v2109 = vlaneseq
        %v2110 = vshrl.u32 %v2109, 7
        %v2111 = vsub.s32 %v2108, %v2110
        %v2112 = vrot.slane %v2105, %v2111
        %v2113 = vcombine.low %v1719, %v1720
        %v2115 = vunpack.c.l.s4 1983009808
        %v2116 = vunpack.c.0.s8 %v2115
        %v2117 = vlaneseq
        %v2118 = vshrl.u32 %v2117, 7
        %v2119 = vsub.s32 %v2116, %v2118
        %v2120 = vrot.slane %v2113, %v2119
        %v2121 = vcombine.low %v1711, %v1718
        %v2123 = vunpack.c.l.s4 1983009808
        %v2124 = vunpack.c.0.s8 %v2123
        %v2125 = vlaneseq
        %v2126 = vshrl.u32 %v2125, 7
        %v2127 = vsub.s32 %v2124, %v2126
        %v2128 = vrot.slane %v2121, %v2127
        %v2129 = vcombine.low %v1721, %v1722
        %v2131 = vunpack.c.l.s4 1983009808
        %v2132 = vunpack.c.0.s8 %v2131
        %v2133 = vlaneseq
        %v2134 = vshrl.u32 %v2133, 7
        %v2135 = vsub.s32 %v2132, %v2134
        %v2136 = vrot.slane %v2129, %v2135
        %v2137 = vcombine.low %v2112, %v2120
        %v2139 = vunpack.c.l.s4 1934713408
        %v2140 = vunpack.c.0.s8 %v2139
        %v2141 = vlaneseq
        %v2142 = vshrl.u32 %v2141, 7
        %v2143 = vsub.s32 %v2140, %v2142
        %v2144 = vrot.slane %v2137, %v2143
        %v2145 = vcombine.low %v2128, %v2136
        %v2147 = vunpack.c.l.s4 1934713408
        %v2148 = vunpack.c.0.s8 %v2147
        %v2149 = vlaneseq
        %v2150 = vshrl.u32 %v2149, 7
        %v2151 = vsub.s32 %v2148, %v2150
        %v2152 = vrot.slane %v2145, %v2151
        %v2153 = vcombine.low %v2144, %v2152
        %v2154 = vcombine.high %v2144, %v2152
        %v2155 = vcombine.low %v1761, %v1768
        %v2157 = vunpack.c.l.s4 1983009808
        %v2158 = vunpack.c.0.s8 %v2157
        %v2159 = vlaneseq
        %v2160 = vshrl.u32 %v2159, 7
        %v2161 = vsub.s32 %v2158, %v2160
        %v2162 = vrot.slane %v2155, %v2161
        %v2163 = vcombine.low %v1785, %v1786
        %v2165 = vunpack.c.l.s4 1983009808
        %v2166 = vunpack.c.0.s8 %v2165
        %v2167 = vlaneseq
        %v2168 = vshrl.u32 %v2167, 7
        %v2169 = vsub.s32 %v2166, %v2168
        %v2170 = vrot.slane %v2163, %v2169
        %v2171 = vcombine.low %v1777, %v1784
        %v2173 = vunpack.c.l.s4 1983009808
        %v2174 = vunpack.c.0.s8 %v2173
        %v2175 = vlaneseq
        %v2176 = vshrl.u32 %v2175, 7
        %v2177 = vsub.s32 %v2174, %v2176
        %v2178 = vrot.slane %v2171, %v2177
        %v2179 = vcombine.low %v1787, %v1788
        %v2181 = vunpack.c.l.s4 1983009808
        %v2182 = vunpack.c.0.s8 %v2181
        %v2183 = vlaneseq
        %v2184 = vshrl.u32 %v2183, 7
        %v2185 = vsub.s32 %v2182, %v2184
        %v2186 = vrot.slane %v2179, %v2185
        %v2187 = vcombine.low %v2162, %v2170
        %v2189 = vunpack.c.l.s4 1934713408
        %v2190 = vunpack.c.0.s8 %v2189
        %v2191 = vlaneseq
        %v2192 = vshrl.u32 %v2191, 7
        %v2193 = vsub.s32 %v2190, %v2192
        %v2194 = vrot.slane %v2187, %v2193
        %v2195 = vcombine.low %v2178, %v2186
        %v2197 = vunpack.c.l.s4 1934713408
        %v2198 = vunpack.c.0.s8 %v2197
        %v2199 = vlaneseq
        %v2200 = vshrl.u32 %v2199, 7
        %v2201 = vsub.s32 %v2198, %v2200
        %v2202 = vrot.slane %v2195, %v2201
        %v2203 = vcombine.low %v2194, %v2202
        %v2204 = vcombine.high %v2194, %v2202
        %v2205 = vcombine.low %v1827, %v1834
        %v2207 = vunpack.c.l.s4 1983009808
        %v2208 = vunpack.c.0.s8 %v2207
        %v2209 = vlaneseq
        %v2210 = vshrl.u32 %v2209, 7
        %v2211 = vsub.s32 %v2208, %v2210
        %v2212 = vrot.slane %v2205, %v2211
        %v2213 = vcombine.low %v1851, %v1852
        %v2215 = vunpack.c.l.s4 1983009808
        %v2216 = vunpack.c.0.s8 %v2215
        %v2217 = vlaneseq
        %v2218 = vshrl.u32 %v2217, 7
        %v2219 = vsub.s32 %v2216, %v2218
        %v2220 = vrot.slane %v2213, %v2219
        %v2221 = vcombine.low %v1843, %v1850
        %v2223 = vunpack.c.l.s4 1983009808
        %v2224 = vunpack.c.0.s8 %v2223
        %v2225 = vlaneseq
        %v2226 = vshrl.u32 %v2225, 7
        %v2227 = vsub.s32 %v2224, %v2226
        %v2228 = vrot.slane %v2221, %v2227
        %v2229 = vcombine.low %v1853, %v1854
        %v2231 = vunpack.c.l.s4 1983009808
        %v2232 = vunpack.c.0.s8 %v2231
        %v2233 = vlaneseq
        %v2234 = vshrl.u32 %v2233, 7
        %v2235 = vsub.s32 %v2232, %v2234
        %v2236 = vrot.slane %v2229, %v2235
        %v2237 = vcombine.low %v2212, %v2220
        %v2239 = vunpack.c.l.s4 1934713408
        %v2240 = vunpack.c.0.s8 %v2239
        %v2241 = vlaneseq
        %v2242 = vshrl.u32 %v2241, 7
        %v2243 = vsub.s32 %v2240, %v2242
        %v2244 = vrot.slane %v2237, %v2243
        %v2245 = vcombine.low %v2228, %v2236
        %v2247 = vunpack.c.l.s4 1934713408
        %v2248 = vunpack.c.0.s8 %v2247
        %v2249 = vlaneseq
        %v2250 = vshrl.u32 %v2249, 7
        %v2251 = vsub.s32 %v2248, %v2250
        %v2252 = vrot.slane %v2245, %v2251
        %v2253 = vcombine.low %v2244, %v2252
        %v2254 = vcombine.high %v2244, %v2252
        %v2257 = vpack.i.b16 %v1953, %v1903
        %v2258 = vshrl.u32 %v1903, 16
        %v2259 = vshrl.u32 %v1953, 16
        %v2260 = vpack.i.b16 %v2259, %v2258
        %v2263 = vpack.i.b16 %v1954, %v1904
        %v2264 = vshrl.u32 %v1904, 16
        %v2265 = vshrl.u32 %v1954, 16
        %v2266 = vpack.i.b16 %v2265, %v2264
        %v2269 = vpack.i.b16 %v2053, %v2003
        %v2270 = vshrl.u32 %v2003, 16
        %v2271 = vshrl.u32 %v2053, 16
        %v2272 = vpack.i.b16 %v2271, %v2270
        %v2275 = vpack.i.b16 %v2054, %v2004
        %v2276 = vshrl.u32 %v2004, 16
        %v2277 = vshrl.u32 %v2054, 16
        %v2278 = vpack.i.b16 %v2277, %v2276
        %v2281 = vpack.i.b16 %v2153, %v2103
        %v2282 = vshrl.u32 %v2103, 16
        %v2283 = vshrl.u32 %v2153, 16
        %v2284 = vpack.i.b16 %v2283, %v2282
        %v2287 = vpack.i.b16 %v2154, %v2104
        %v2288 = vshrl.u32 %v2104, 16
        %v2289 = vshrl.u32 %v2154, 16
        %v2290 = vpack.i.b16 %v2289, %v2288
        %v2293 = vpack.i.b16 %v2253, %v2203
        %v2294 = vshrl.u32 %v2203, 16
        %v2295 = vshrl.u32 %v2253, 16
        %v2296 = vpack.i.b16 %v2295, %v2294
        %v2299 = vpack.i.b16 %v2254, %v2204
        %v2300 = vshrl.u32 %v2204, 16
        %v2301 = vshrl.u32 %v2254, 16
        %v2302 = vpack.i.b16 %v2301, %v2300
        %2303 = vrot.lane.b32.xlu0 %v1225, 96
        %v2304 = vpop.permute.xlu0 %2303
        %2305 = vrot.lane.b32.xlu0 %v1226, 96
        %v2306 = vpop.permute.xlu0 %2305
        %2307 = vrot.lane.b32.xlu0 %v1227, 96
        %v2308 = vpop.permute.xlu0 %2307
        %2309 = vrot.lane.b32.xlu0 %v1228, 96
        %v2310 = vpop.permute.xlu0 %2309
        %2311 = vrot.lane.b32.xlu0 %v1234, 96
        %v2312 = vpop.permute.xlu0 %2311
        %2313 = vrot.lane.b32.xlu0 %v1236, 96
        %v2314 = vpop.permute.xlu0 %2313
        %2315 = vrot.lane.b32.xlu0 %v1238, 96
        %v2316 = vpop.permute.xlu0 %2315
        %2317 = vrot.lane.b32.xlu0 %v1240, 96
        %v2318 = vpop.permute.xlu0 %2317
        %2319 = vrot.lane.b32.xlu0 %v1242, 96
        %v2320 = vpop.permute.xlu0 %2319
        %2321 = vrot.lane.b32.xlu0 %v1244, 96
        %v2322 = vpop.permute.xlu0 %2321
        %2323 = vrot.lane.b32.xlu0 %v1246, 96
        %v2324 = vpop.permute.xlu0 %2323
        %2325 = vrot.lane.b32.xlu0 %v1248, 96
        %v2326 = vpop.permute.xlu0 %2325
        %2327 = vrot.lane.b32.xlu0 %v1250, 96
        %v2328 = vpop.permute.xlu0 %2327
        %2329 = vrot.lane.b32.xlu0 %v1252, 96
        %v2330 = vpop.permute.xlu0 %2329
        %2331 = vrot.lane.b32.xlu0 %v1254, 96
        %v2332 = vpop.permute.xlu0 %2331
        %2333 = vrot.lane.b32.xlu0 %v1256, 96
        %v2334 = vpop.permute.xlu0 %2333
        %v2337 = vpack.i.b16 %v2312, %v2304
        %v2339 = vshrl.u32 %v2304, 16
        %v2340 = vshrl.u32 %v2312, 16
        %v2341 = vpack.i.b16 %v2340, %v2339
        %v2345 = vpack.i.b16 %v2328, %v2320
        %v2347 = vshrl.u32 %v2320, 16
        %v2348 = vshrl.u32 %v2328, 16
        %v2349 = vpack.i.b16 %v2348, %v2347
        %v2353 = vpack.i.b16 %v2314, %v2306
        %v2355 = vshrl.u32 %v2306, 16
        %v2356 = vshrl.u32 %v2314, 16
        %v2357 = vpack.i.b16 %v2356, %v2355
        %v2361 = vpack.i.b16 %v2330, %v2322
        %v2363 = vshrl.u32 %v2322, 16
        %v2364 = vshrl.u32 %v2330, 16
        %v2365 = vpack.i.b16 %v2364, %v2363
        %v2369 = vpack.i.b16 %v2316, %v2308
        %v2371 = vshrl.u32 %v2308, 16
        %v2372 = vshrl.u32 %v2316, 16
        %v2373 = vpack.i.b16 %v2372, %v2371
        %v2377 = vpack.i.b16 %v2332, %v2324
        %v2379 = vshrl.u32 %v2324, 16
        %v2380 = vshrl.u32 %v2332, 16
        %v2381 = vpack.i.b16 %v2380, %v2379
        %v2385 = vpack.i.b16 %v2318, %v2310
        %v2387 = vshrl.u32 %v2310, 16
        %v2388 = vshrl.u32 %v2318, 16
        %v2389 = vpack.i.b16 %v2388, %v2387
        %v2393 = vpack.i.b16 %v2334, %v2326
        %v2395 = vshrl.u32 %v2326, 16
        %v2396 = vshrl.u32 %v2334, 16
        %v2397 = vpack.i.b16 %v2396, %v2395
        %v2399 = vcombine.high %v2337, %v1274
        %v2401 = vunpack.c.l.s4 1983009808
        %v2402 = vunpack.c.0.s8 %v2401
        %v2403 = vlaneseq
        %v2404 = vshrl.u32 %v2403, 7
        %v2405 = vsub.s32 %v2402, %v2404
        %v2406 = vrot.slane %v2337, %v2405
        %v2408 = vunpack.c.l.s4 1983009808
        %v2409 = vunpack.c.0.s8 %v2408
        %v2410 = vlaneseq
        %v2411 = vshrl.u32 %v2410, 7
        %v2412 = vsub.s32 %v2409, %v2411
        %v2413 = vrot.slane %v2399, %v2412
        %v2414 = vcombine.high %v2345, %v1274
        %v2416 = vunpack.c.l.s4 1983009808
        %v2417 = vunpack.c.0.s8 %v2416
        %v2418 = vlaneseq
        %v2419 = vshrl.u32 %v2418, 7
        %v2420 = vsub.s32 %v2417, %v2419
        %v2421 = vrot.slane %v2345, %v2420
        %v2423 = vunpack.c.l.s4 1983009808
        %v2424 = vunpack.c.0.s8 %v2423
        %v2425 = vlaneseq
        %v2426 = vshrl.u32 %v2425, 7
        %v2427 = vsub.s32 %v2424, %v2426
        %v2428 = vrot.slane %v2414, %v2427
        %v2429 = vcombine.low %v2406, %v2421
        %v2430 = vcombine.high %v2406, %v2421
        %v2432 = vunpack.c.l.s4 1934713408
        %v2433 = vunpack.c.0.s8 %v2432
        %v2434 = vlaneseq
        %v2435 = vshrl.u32 %v2434, 7
        %v2436 = vsub.s32 %v2433, %v2435
        %v2437 = vrot.slane %v2429, %v2436
        %v2439 = vunpack.c.l.s4 1934713408
        %v2440 = vunpack.c.0.s8 %v2439
        %v2441 = vlaneseq
        %v2442 = vshrl.u32 %v2441, 7
        %v2443 = vsub.s32 %v2440, %v2442
        %v2444 = vrot.slane %v2430, %v2443
        %v2445 = vcombine.low %v2413, %v2428
        %v2446 = vcombine.high %v2413, %v2428
        %v2448 = vunpack.c.l.s4 1934713408
        %v2449 = vunpack.c.0.s8 %v2448
        %v2450 = vlaneseq
        %v2451 = vshrl.u32 %v2450, 7
        %v2452 = vsub.s32 %v2449, %v2451
        %v2453 = vrot.slane %v2445, %v2452
        %v2455 = vunpack.c.l.s4 1934713408
        %v2456 = vunpack.c.0.s8 %v2455
        %v2457 = vlaneseq
        %v2458 = vshrl.u32 %v2457, 7
        %v2459 = vsub.s32 %v2456, %v2458
        %v2460 = vrot.slane %v2446, %v2459
        %v2461 = vcombine.high %v2437, 0
        %v2462 = vcombine.high %v2444, 0
        %v2463 = vcombine.high %v2453, 0
        %v2464 = vcombine.high %v2460, 0
        %v2465 = vcombine.high %v2341, %v1277
        %v2467 = vunpack.c.l.s4 1983009808
        %v2468 = vunpack.c.0.s8 %v2467
        %v2469 = vlaneseq
        %v2470 = vshrl.u32 %v2469, 7
        %v2471 = vsub.s32 %v2468, %v2470
        %v2472 = vrot.slane %v2341, %v2471
        %v2474 = vunpack.c.l.s4 1983009808
        %v2475 = vunpack.c.0.s8 %v2474
        %v2476 = vlaneseq
        %v2477 = vshrl.u32 %v2476, 7
        %v2478 = vsub.s32 %v2475, %v2477
        %v2479 = vrot.slane %v2465, %v2478
        %v2480 = vcombine.high %v2349, %v1277
        %v2482 = vunpack.c.l.s4 1983009808
        %v2483 = vunpack.c.0.s8 %v2482
        %v2484 = vlaneseq
        %v2485 = vshrl.u32 %v2484, 7
        %v2486 = vsub.s32 %v2483, %v2485
        %v2487 = vrot.slane %v2349, %v2486
        %v2489 = vunpack.c.l.s4 1983009808
        %v2490 = vunpack.c.0.s8 %v2489
        %v2491 = vlaneseq
        %v2492 = vshrl.u32 %v2491, 7
        %v2493 = vsub.s32 %v2490, %v2492
        %v2494 = vrot.slane %v2480, %v2493
        %v2495 = vcombine.low %v2472, %v2487
        %v2496 = vcombine.high %v2472, %v2487
        %v2498 = vunpack.c.l.s4 1934713408
        %v2499 = vunpack.c.0.s8 %v2498
        %v2500 = vlaneseq
        %v2501 = vshrl.u32 %v2500, 7
        %v2502 = vsub.s32 %v2499, %v2501
        %v2503 = vrot.slane %v2495, %v2502
        %v2505 = vunpack.c.l.s4 1934713408
        %v2506 = vunpack.c.0.s8 %v2505
        %v2507 = vlaneseq
        %v2508 = vshrl.u32 %v2507, 7
        %v2509 = vsub.s32 %v2506, %v2508
        %v2510 = vrot.slane %v2496, %v2509
        %v2511 = vcombine.low %v2479, %v2494
        %v2512 = vcombine.high %v2479, %v2494
        %v2514 = vunpack.c.l.s4 1934713408
        %v2515 = vunpack.c.0.s8 %v2514
        %v2516 = vlaneseq
        %v2517 = vshrl.u32 %v2516, 7
        %v2518 = vsub.s32 %v2515, %v2517
        %v2519 = vrot.slane %v2511, %v2518
        %v2521 = vunpack.c.l.s4 1934713408
        %v2522 = vunpack.c.0.s8 %v2521
        %v2523 = vlaneseq
        %v2524 = vshrl.u32 %v2523, 7
        %v2525 = vsub.s32 %v2522, %v2524
        %v2526 = vrot.slane %v2512, %v2525
        %v2527 = vcombine.high %v2503, 0
        %v2528 = vcombine.high %v2510, 0
        %v2529 = vcombine.high %v2519, 0
        %v2530 = vcombine.high %v2526, 0
        %v2531 = vcombine.high %v2353, %v1274
        %v2533 = vunpack.c.l.s4 1983009808
        %v2534 = vunpack.c.0.s8 %v2533
        %v2535 = vlaneseq
        %v2536 = vshrl.u32 %v2535, 7
        %v2537 = vsub.s32 %v2534, %v2536
        %v2538 = vrot.slane %v2353, %v2537
        %v2540 = vunpack.c.l.s4 1983009808
        %v2541 = vunpack.c.0.s8 %v2540
        %v2542 = vlaneseq
        %v2543 = vshrl.u32 %v2542, 7
        %v2544 = vsub.s32 %v2541, %v2543
        %v2545 = vrot.slane %v2531, %v2544
        %v2546 = vcombine.high %v2361, %v1274
        %v2548 = vunpack.c.l.s4 1983009808
        %v2549 = vunpack.c.0.s8 %v2548
        %v2550 = vlaneseq
        %v2551 = vshrl.u32 %v2550, 7
        %v2552 = vsub.s32 %v2549, %v2551
        %v2553 = vrot.slane %v2361, %v2552
        %v2555 = vunpack.c.l.s4 1983009808
        %v2556 = vunpack.c.0.s8 %v2555
        %v2557 = vlaneseq
        %v2558 = vshrl.u32 %v2557, 7
        %v2559 = vsub.s32 %v2556, %v2558
        %v2560 = vrot.slane %v2546, %v2559
        %v2561 = vcombine.low %v2538, %v2553
        %v2562 = vcombine.high %v2538, %v2553
        %v2564 = vunpack.c.l.s4 1934713408
        %v2565 = vunpack.c.0.s8 %v2564
        %v2566 = vlaneseq
        %v2567 = vshrl.u32 %v2566, 7
        %v2568 = vsub.s32 %v2565, %v2567
        %v2569 = vrot.slane %v2561, %v2568
        %v2571 = vunpack.c.l.s4 1934713408
        %v2572 = vunpack.c.0.s8 %v2571
        %v2573 = vlaneseq
        %v2574 = vshrl.u32 %v2573, 7
        %v2575 = vsub.s32 %v2572, %v2574
        %v2576 = vrot.slane %v2562, %v2575
        %v2577 = vcombine.low %v2545, %v2560
        %v2578 = vcombine.high %v2545, %v2560
        %v2580 = vunpack.c.l.s4 1934713408
        %v2581 = vunpack.c.0.s8 %v2580
        %v2582 = vlaneseq
        %v2583 = vshrl.u32 %v2582, 7
        %v2584 = vsub.s32 %v2581, %v2583
        %v2585 = vrot.slane %v2577, %v2584
        %v2587 = vunpack.c.l.s4 1934713408
        %v2588 = vunpack.c.0.s8 %v2587
        %v2589 = vlaneseq
        %v2590 = vshrl.u32 %v2589, 7
        %v2591 = vsub.s32 %v2588, %v2590
        %v2592 = vrot.slane %v2578, %v2591
        %v2593 = vcombine.high %v2569, 0
        %v2594 = vcombine.high %v2576, 0
        %v2595 = vcombine.high %v2585, 0
        %v2596 = vcombine.high %v2592, 0
        %v2597 = vcombine.high %v2357, %v1277
        %v2599 = vunpack.c.l.s4 1983009808
        %v2600 = vunpack.c.0.s8 %v2599
        %v2601 = vlaneseq
        %v2602 = vshrl.u32 %v2601, 7
        %v2603 = vsub.s32 %v2600, %v2602
        %v2604 = vrot.slane %v2357, %v2603
        %v2606 = vunpack.c.l.s4 1983009808
        %v2607 = vunpack.c.0.s8 %v2606
        %v2608 = vlaneseq
        %v2609 = vshrl.u32 %v2608, 7
        %v2610 = vsub.s32 %v2607, %v2609
        %v2611 = vrot.slane %v2597, %v2610
        %v2612 = vcombine.high %v2365, %v1277
        %v2614 = vunpack.c.l.s4 1983009808
        %v2615 = vunpack.c.0.s8 %v2614
        %v2616 = vlaneseq
        %v2617 = vshrl.u32 %v2616, 7
        %v2618 = vsub.s32 %v2615, %v2617
        %v2619 = vrot.slane %v2365, %v2618
        %v2621 = vunpack.c.l.s4 1983009808
        %v2622 = vunpack.c.0.s8 %v2621
        %v2623 = vlaneseq
        %v2624 = vshrl.u32 %v2623, 7
        %v2625 = vsub.s32 %v2622, %v2624
        %v2626 = vrot.slane %v2612, %v2625
        %v2627 = vcombine.low %v2604, %v2619
        %v2628 = vcombine.high %v2604, %v2619
        %v2630 = vunpack.c.l.s4 1934713408
        %v2631 = vunpack.c.0.s8 %v2630
        %v2632 = vlaneseq
        %v2633 = vshrl.u32 %v2632, 7
        %v2634 = vsub.s32 %v2631, %v2633
        %v2635 = vrot.slane %v2627, %v2634
        %v2637 = vunpack.c.l.s4 1934713408
        %v2638 = vunpack.c.0.s8 %v2637
        %v2639 = vlaneseq
        %v2640 = vshrl.u32 %v2639, 7
        %v2641 = vsub.s32 %v2638, %v2640
        %v2642 = vrot.slane %v2628, %v2641
        %v2643 = vcombine.low %v2611, %v2626
        %v2644 = vcombine.high %v2611, %v2626
        %v2646 = vunpack.c.l.s4 1934713408
        %v2647 = vunpack.c.0.s8 %v2646
        %v2648 = vlaneseq
        %v2649 = vshrl.u32 %v2648, 7
        %v2650 = vsub.s32 %v2647, %v2649
        %v2651 = vrot.slane %v2643, %v2650
        %v2653 = vunpack.c.l.s4 1934713408
        %v2654 = vunpack.c.0.s8 %v2653
        %v2655 = vlaneseq
        %v2656 = vshrl.u32 %v2655, 7
        %v2657 = vsub.s32 %v2654, %v2656
        %v2658 = vrot.slane %v2644, %v2657
        %v2659 = vcombine.high %v2635, 0
        %v2660 = vcombine.high %v2642, 0
        %v2661 = vcombine.high %v2651, 0
        %v2662 = vcombine.high %v2658, 0
        %v2663 = vcombine.high %v2369, %v1274
        %v2665 = vunpack.c.l.s4 1983009808
        %v2666 = vunpack.c.0.s8 %v2665
        %v2667 = vlaneseq
        %v2668 = vshrl.u32 %v2667, 7
        %v2669 = vsub.s32 %v2666, %v2668
        %v2670 = vrot.slane %v2369, %v2669
        %v2672 = vunpack.c.l.s4 1983009808
        %v2673 = vunpack.c.0.s8 %v2672
        %v2674 = vlaneseq
        %v2675 = vshrl.u32 %v2674, 7
        %v2676 = vsub.s32 %v2673, %v2675
        %v2677 = vrot.slane %v2663, %v2676
        %v2678 = vcombine.high %v2377, %v1274
        %v2680 = vunpack.c.l.s4 1983009808
        %v2681 = vunpack.c.0.s8 %v2680
        %v2682 = vlaneseq
        %v2683 = vshrl.u32 %v2682, 7
        %v2684 = vsub.s32 %v2681, %v2683
        %v2685 = vrot.slane %v2377, %v2684
        %v2687 = vunpack.c.l.s4 1983009808
        %v2688 = vunpack.c.0.s8 %v2687
        %v2689 = vlaneseq
        %v2690 = vshrl.u32 %v2689, 7
        %v2691 = vsub.s32 %v2688, %v2690
        %v2692 = vrot.slane %v2678, %v2691
        %v2693 = vcombine.low %v2670, %v2685
        %v2694 = vcombine.high %v2670, %v2685
        %v2696 = vunpack.c.l.s4 1934713408
        %v2697 = vunpack.c.0.s8 %v2696
        %v2698 = vlaneseq
        %v2699 = vshrl.u32 %v2698, 7
        %v2700 = vsub.s32 %v2697, %v2699
        %v2701 = vrot.slane %v2693, %v2700
        %v2703 = vunpack.c.l.s4 1934713408
        %v2704 = vunpack.c.0.s8 %v2703
        %v2705 = vlaneseq
        %v2706 = vshrl.u32 %v2705, 7
        %v2707 = vsub.s32 %v2704, %v2706
        %v2708 = vrot.slane %v2694, %v2707
        %v2709 = vcombine.low %v2677, %v2692
        %v2710 = vcombine.high %v2677, %v2692
        %v2712 = vunpack.c.l.s4 1934713408
        %v2713 = vunpack.c.0.s8 %v2712
        %v2714 = vlaneseq
        %v2715 = vshrl.u32 %v2714, 7
        %v2716 = vsub.s32 %v2713, %v2715
        %v2717 = vrot.slane %v2709, %v2716
        %v2719 = vunpack.c.l.s4 1934713408
        %v2720 = vunpack.c.0.s8 %v2719
        %v2721 = vlaneseq
        %v2722 = vshrl.u32 %v2721, 7
        %v2723 = vsub.s32 %v2720, %v2722
        %v2724 = vrot.slane %v2710, %v2723
        %v2725 = vcombine.high %v2701, 0
        %v2726 = vcombine.high %v2708, 0
        %v2727 = vcombine.high %v2717, 0
        %v2728 = vcombine.high %v2724, 0
        %v2729 = vcombine.high %v2373, %v1277
        %v2731 = vunpack.c.l.s4 1983009808
        %v2732 = vunpack.c.0.s8 %v2731
        %v2733 = vlaneseq
        %v2734 = vshrl.u32 %v2733, 7
        %v2735 = vsub.s32 %v2732, %v2734
        %v2736 = vrot.slane %v2373, %v2735
        %v2738 = vunpack.c.l.s4 1983009808
        %v2739 = vunpack.c.0.s8 %v2738
        %v2740 = vlaneseq
        %v2741 = vshrl.u32 %v2740, 7
        %v2742 = vsub.s32 %v2739, %v2741
        %v2743 = vrot.slane %v2729, %v2742
        %v2744 = vcombine.high %v2381, %v1277
        %v2746 = vunpack.c.l.s4 1983009808
        %v2747 = vunpack.c.0.s8 %v2746
        %v2748 = vlaneseq
        %v2749 = vshrl.u32 %v2748, 7
        %v2750 = vsub.s32 %v2747, %v2749
        %v2751 = vrot.slane %v2381, %v2750
        %v2753 = vunpack.c.l.s4 1983009808
        %v2754 = vunpack.c.0.s8 %v2753
        %v2755 = vlaneseq
        %v2756 = vshrl.u32 %v2755, 7
        %v2757 = vsub.s32 %v2754, %v2756
        %v2758 = vrot.slane %v2744, %v2757
        %v2759 = vcombine.low %v2736, %v2751
        %v2760 = vcombine.high %v2736, %v2751
        %v2762 = vunpack.c.l.s4 1934713408
        %v2763 = vunpack.c.0.s8 %v2762
        %v2764 = vlaneseq
        %v2765 = vshrl.u32 %v2764, 7
        %v2766 = vsub.s32 %v2763, %v2765
        %v2767 = vrot.slane %v2759, %v2766
        %v2769 = vunpack.c.l.s4 1934713408
        %v2770 = vunpack.c.0.s8 %v2769
        %v2771 = vlaneseq
        %v2772 = vshrl.u32 %v2771, 7
        %v2773 = vsub.s32 %v2770, %v2772
        %v2774 = vrot.slane %v2760, %v2773
        %v2775 = vcombine.low %v2743, %v2758
        %v2776 = vcombine.high %v2743, %v2758
        %v2778 = vunpack.c.l.s4 1934713408
        %v2779 = vunpack.c.0.s8 %v2778
        %v2780 = vlaneseq
        %v2781 = vshrl.u32 %v2780, 7
        %v2782 = vsub.s32 %v2779, %v2781
        %v2783 = vrot.slane %v2775, %v2782
        %v2785 = vunpack.c.l.s4 1934713408
        %v2786 = vunpack.c.0.s8 %v2785
        %v2787 = vlaneseq
        %v2788 = vshrl.u32 %v2787, 7
        %v2789 = vsub.s32 %v2786, %v2788
        %v2790 = vrot.slane %v2776, %v2789
        %v2791 = vcombine.high %v2767, 0
        %v2792 = vcombine.high %v2774, 0
        %v2793 = vcombine.high %v2783, 0
        %v2794 = vcombine.high %v2790, 0
        %v2795 = vcombine.high %v2385, %v1274
        %v2797 = vunpack.c.l.s4 1983009808
        %v2798 = vunpack.c.0.s8 %v2797
        %v2799 = vlaneseq
        %v2800 = vshrl.u32 %v2799, 7
        %v2801 = vsub.s32 %v2798, %v2800
        %v2802 = vrot.slane %v2385, %v2801
        %v2804 = vunpack.c.l.s4 1983009808
        %v2805 = vunpack.c.0.s8 %v2804
        %v2806 = vlaneseq
        %v2807 = vshrl.u32 %v2806, 7
        %v2808 = vsub.s32 %v2805, %v2807
        %v2809 = vrot.slane %v2795, %v2808
        %v2810 = vcombine.high %v2393, %v1274
        %v2812 = vunpack.c.l.s4 1983009808
        %v2813 = vunpack.c.0.s8 %v2812
        %v2814 = vlaneseq
        %v2815 = vshrl.u32 %v2814, 7
        %v2816 = vsub.s32 %v2813, %v2815
        %v2817 = vrot.slane %v2393, %v2816
        %v2819 = vunpack.c.l.s4 1983009808
        %v2820 = vunpack.c.0.s8 %v2819
        %v2821 = vlaneseq
        %v2822 = vshrl.u32 %v2821, 7
        %v2823 = vsub.s32 %v2820, %v2822
        %v2824 = vrot.slane %v2810, %v2823
        %v2825 = vcombine.low %v2802, %v2817
        %v2826 = vcombine.high %v2802, %v2817
        %v2828 = vunpack.c.l.s4 1934713408
        %v2829 = vunpack.c.0.s8 %v2828
        %v2830 = vlaneseq
        %v2831 = vshrl.u32 %v2830, 7
        %v2832 = vsub.s32 %v2829, %v2831
        %v2833 = vrot.slane %v2825, %v2832
        %v2835 = vunpack.c.l.s4 1934713408
        %v2836 = vunpack.c.0.s8 %v2835
        %v2837 = vlaneseq
        %v2838 = vshrl.u32 %v2837, 7
        %v2839 = vsub.s32 %v2836, %v2838
        %v2840 = vrot.slane %v2826, %v2839
        %v2841 = vcombine.low %v2809, %v2824
        %v2842 = vcombine.high %v2809, %v2824
        %v2844 = vunpack.c.l.s4 1934713408
        %v2845 = vunpack.c.0.s8 %v2844
        %v2846 = vlaneseq
        %v2847 = vshrl.u32 %v2846, 7
        %v2848 = vsub.s32 %v2845, %v2847
        %v2849 = vrot.slane %v2841, %v2848
        %v2851 = vunpack.c.l.s4 1934713408
        %v2852 = vunpack.c.0.s8 %v2851
        %v2853 = vlaneseq
        %v2854 = vshrl.u32 %v2853, 7
        %v2855 = vsub.s32 %v2852, %v2854
        %v2856 = vrot.slane %v2842, %v2855
        %v2857 = vcombine.high %v2833, 0
        %v2858 = vcombine.high %v2840, 0
        %v2859 = vcombine.high %v2849, 0
        %v2860 = vcombine.high %v2856, 0
        %v2861 = vcombine.high %v2389, %v1277
        %v2863 = vunpack.c.l.s4 1983009808
        %v2864 = vunpack.c.0.s8 %v2863
        %v2865 = vlaneseq
        %v2866 = vshrl.u32 %v2865, 7
        %v2867 = vsub.s32 %v2864, %v2866
        %v2868 = vrot.slane %v2389, %v2867
        %v2870 = vunpack.c.l.s4 1983009808
        %v2871 = vunpack.c.0.s8 %v2870
        %v2872 = vlaneseq
        %v2873 = vshrl.u32 %v2872, 7
        %v2874 = vsub.s32 %v2871, %v2873
        %v2875 = vrot.slane %v2861, %v2874
        %v2876 = vcombine.high %v2397, %v1277
        %v2878 = vunpack.c.l.s4 1983009808
        %v2879 = vunpack.c.0.s8 %v2878
        %v2880 = vlaneseq
        %v2881 = vshrl.u32 %v2880, 7
        %v2882 = vsub.s32 %v2879, %v2881
        %v2883 = vrot.slane %v2397, %v2882
        %v2885 = vunpack.c.l.s4 1983009808
        %v2886 = vunpack.c.0.s8 %v2885
        %v2887 = vlaneseq
        %v2888 = vshrl.u32 %v2887, 7
        %v2889 = vsub.s32 %v2886, %v2888
        %v2890 = vrot.slane %v2876, %v2889
        %v2891 = vcombine.low %v2868, %v2883
        %v2892 = vcombine.high %v2868, %v2883
        %v2894 = vunpack.c.l.s4 1934713408
        %v2895 = vunpack.c.0.s8 %v2894
        %v2896 = vlaneseq
        %v2897 = vshrl.u32 %v2896, 7
        %v2898 = vsub.s32 %v2895, %v2897
        %v2899 = vrot.slane %v2891, %v2898
        %v2901 = vunpack.c.l.s4 1934713408
        %v2902 = vunpack.c.0.s8 %v2901
        %v2903 = vlaneseq
        %v2904 = vshrl.u32 %v2903, 7
        %v2905 = vsub.s32 %v2902, %v2904
        %v2906 = vrot.slane %v2892, %v2905
        %v2907 = vcombine.low %v2875, %v2890
        %v2908 = vcombine.high %v2875, %v2890
        %v2910 = vunpack.c.l.s4 1934713408
        %v2911 = vunpack.c.0.s8 %v2910
        %v2912 = vlaneseq
        %v2913 = vshrl.u32 %v2912, 7
        %v2914 = vsub.s32 %v2911, %v2913
        %v2915 = vrot.slane %v2907, %v2914
        %v2917 = vunpack.c.l.s4 1934713408
        %v2918 = vunpack.c.0.s8 %v2917
        %v2919 = vlaneseq
        %v2920 = vshrl.u32 %v2919, 7
        %v2921 = vsub.s32 %v2918, %v2920
        %v2922 = vrot.slane %v2908, %v2921
        %v2923 = vcombine.high %v2899, 0
        %v2924 = vcombine.high %v2906, 0
        %v2925 = vcombine.high %v2915, 0
        %v2926 = vcombine.high %v2922, 0
        %v2927 = vcombine.low %v2437, %v2444
        %v2929 = vunpack.c.l.s4 1983009808
        %v2930 = vunpack.c.0.s8 %v2929
        %v2931 = vlaneseq
        %v2932 = vshrl.u32 %v2931, 7
        %v2933 = vsub.s32 %v2930, %v2932
        %v2934 = vrot.slane %v2927, %v2933
        %v2935 = vcombine.low %v2461, %v2462
        %v2937 = vunpack.c.l.s4 1983009808
        %v2938 = vunpack.c.0.s8 %v2937
        %v2939 = vlaneseq
        %v2940 = vshrl.u32 %v2939, 7
        %v2941 = vsub.s32 %v2938, %v2940
        %v2942 = vrot.slane %v2935, %v2941
        %v2943 = vcombine.low %v2453, %v2460
        %v2945 = vunpack.c.l.s4 1983009808
        %v2946 = vunpack.c.0.s8 %v2945
        %v2947 = vlaneseq
        %v2948 = vshrl.u32 %v2947, 7
        %v2949 = vsub.s32 %v2946, %v2948
        %v2950 = vrot.slane %v2943, %v2949
        %v2951 = vcombine.low %v2463, %v2464
        %v2953 = vunpack.c.l.s4 1983009808
        %v2954 = vunpack.c.0.s8 %v2953
        %v2955 = vlaneseq
        %v2956 = vshrl.u32 %v2955, 7
        %v2957 = vsub.s32 %v2954, %v2956
        %v2958 = vrot.slane %v2951, %v2957
        %v2959 = vcombine.low %v2934, %v2942
        %v2961 = vunpack.c.l.s4 1934713408
        %v2962 = vunpack.c.0.s8 %v2961
        %v2963 = vlaneseq
        %v2964 = vshrl.u32 %v2963, 7
        %v2965 = vsub.s32 %v2962, %v2964
        %v2966 = vrot.slane %v2959, %v2965
        %v2967 = vcombine.low %v2950, %v2958
        %v2969 = vunpack.c.l.s4 1934713408
        %v2970 = vunpack.c.0.s8 %v2969
        %v2971 = vlaneseq
        %v2972 = vshrl.u32 %v2971, 7
        %v2973 = vsub.s32 %v2970, %v2972
        %v2974 = vrot.slane %v2967, %v2973
        %v2975 = vcombine.low %v2966, %v2974
        %v2976 = vcombine.high %v2966, %v2974
        %v2977 = vcombine.low %v2503, %v2510
        %v2979 = vunpack.c.l.s4 1983009808
        %v2980 = vunpack.c.0.s8 %v2979
        %v2981 = vlaneseq
        %v2982 = vshrl.u32 %v2981, 7
        %v2983 = vsub.s32 %v2980, %v2982
        %v2984 = vrot.slane %v2977, %v2983
        %v2985 = vcombine.low %v2527, %v2528
        %v2987 = vunpack.c.l.s4 1983009808
        %v2988 = vunpack.c.0.s8 %v2987
        %v2989 = vlaneseq
        %v2990 = vshrl.u32 %v2989, 7
        %v2991 = vsub.s32 %v2988, %v2990
        %v2992 = vrot.slane %v2985, %v2991
        %v2993 = vcombine.low %v2519, %v2526
        %v2995 = vunpack.c.l.s4 1983009808
        %v2996 = vunpack.c.0.s8 %v2995
        %v2997 = vlaneseq
        %v2998 = vshrl.u32 %v2997, 7
        %v2999 = vsub.s32 %v2996, %v2998
        %v3000 = vrot.slane %v2993, %v2999
        %v3001 = vcombine.low %v2529, %v2530
        %v3003 = vunpack.c.l.s4 1983009808
        %v3004 = vunpack.c.0.s8 %v3003
        %v3005 = vlaneseq
        %v3006 = vshrl.u32 %v3005, 7
        %v3007 = vsub.s32 %v3004, %v3006
        %v3008 = vrot.slane %v3001, %v3007
        %v3009 = vcombine.low %v2984, %v2992
        %v3011 = vunpack.c.l.s4 1934713408
        %v3012 = vunpack.c.0.s8 %v3011
        %v3013 = vlaneseq
        %v3014 = vshrl.u32 %v3013, 7
        %v3015 = vsub.s32 %v3012, %v3014
        %v3016 = vrot.slane %v3009, %v3015
        %v3017 = vcombine.low %v3000, %v3008
        %v3019 = vunpack.c.l.s4 1934713408
        %v3020 = vunpack.c.0.s8 %v3019
        %v3021 = vlaneseq
        %v3022 = vshrl.u32 %v3021, 7
        %v3023 = vsub.s32 %v3020, %v3022
        %v3024 = vrot.slane %v3017, %v3023
        %v3025 = vcombine.low %v3016, %v3024
        %v3026 = vcombine.high %v3016, %v3024
        %v3027 = vcombine.low %v2569, %v2576
        %v3029 = vunpack.c.l.s4 1983009808
        %v3030 = vunpack.c.0.s8 %v3029
        %v3031 = vlaneseq
        %v3032 = vshrl.u32 %v3031, 7
        %v3033 = vsub.s32 %v3030, %v3032
        %v3034 = vrot.slane %v3027, %v3033
        %v3035 = vcombine.low %v2593, %v2594
        %v3037 = vunpack.c.l.s4 1983009808
        %v3038 = vunpack.c.0.s8 %v3037
        %v3039 = vlaneseq
        %v3040 = vshrl.u32 %v3039, 7
        %v3041 = vsub.s32 %v3038, %v3040
        %v3042 = vrot.slane %v3035, %v3041
        %v3043 = vcombine.low %v2585, %v2592
        %v3045 = vunpack.c.l.s4 1983009808
        %v3046 = vunpack.c.0.s8 %v3045
        %v3047 = vlaneseq
        %v3048 = vshrl.u32 %v3047, 7
        %v3049 = vsub.s32 %v3046, %v3048
        %v3050 = vrot.slane %v3043, %v3049
        %v3051 = vcombine.low %v2595, %v2596
        %v3053 = vunpack.c.l.s4 1983009808
        %v3054 = vunpack.c.0.s8 %v3053
        %v3055 = vlaneseq
        %v3056 = vshrl.u32 %v3055, 7
        %v3057 = vsub.s32 %v3054, %v3056
        %v3058 = vrot.slane %v3051, %v3057
        %v3059 = vcombine.low %v3034, %v3042
        %v3061 = vunpack.c.l.s4 1934713408
        %v3062 = vunpack.c.0.s8 %v3061
        %v3063 = vlaneseq
        %v3064 = vshrl.u32 %v3063, 7
        %v3065 = vsub.s32 %v3062, %v3064
        %v3066 = vrot.slane %v3059, %v3065
        %v3067 = vcombine.low %v3050, %v3058
        %v3069 = vunpack.c.l.s4 1934713408
        %v3070 = vunpack.c.0.s8 %v3069
        %v3071 = vlaneseq
        %v3072 = vshrl.u32 %v3071, 7
        %v3073 = vsub.s32 %v3070, %v3072
        %v3074 = vrot.slane %v3067, %v3073
        %v3075 = vcombine.low %v3066, %v3074
        %v3076 = vcombine.high %v3066, %v3074
        %v3077 = vcombine.low %v2635, %v2642
        %v3079 = vunpack.c.l.s4 1983009808
        %v3080 = vunpack.c.0.s8 %v3079
        %v3081 = vlaneseq
        %v3082 = vshrl.u32 %v3081, 7
        %v3083 = vsub.s32 %v3080, %v3082
        %v3084 = vrot.slane %v3077, %v3083
        %v3085 = vcombine.low %v2659, %v2660
        %v3087 = vunpack.c.l.s4 1983009808
        %v3088 = vunpack.c.0.s8 %v3087
        %v3089 = vlaneseq
        %v3090 = vshrl.u32 %v3089, 7
        %v3091 = vsub.s32 %v3088, %v3090
        %v3092 = vrot.slane %v3085, %v3091
        %v3093 = vcombine.low %v2651, %v2658
        %v3095 = vunpack.c.l.s4 1983009808
        %v3096 = vunpack.c.0.s8 %v3095
        %v3097 = vlaneseq
        %v3098 = vshrl.u32 %v3097, 7
        %v3099 = vsub.s32 %v3096, %v3098
        %v3100 = vrot.slane %v3093, %v3099
        %v3101 = vcombine.low %v2661, %v2662
        %v3103 = vunpack.c.l.s4 1983009808
        %v3104 = vunpack.c.0.s8 %v3103
        %v3105 = vlaneseq
        %v3106 = vshrl.u32 %v3105, 7
        %v3107 = vsub.s32 %v3104, %v3106
        %v3108 = vrot.slane %v3101, %v3107
        %v3109 = vcombine.low %v3084, %v3092
        %v3111 = vunpack.c.l.s4 1934713408
        %v3112 = vunpack.c.0.s8 %v3111
        %v3113 = vlaneseq
        %v3114 = vshrl.u32 %v3113, 7
        %v3115 = vsub.s32 %v3112, %v3114
        %v3116 = vrot.slane %v3109, %v3115
        %v3117 = vcombine.low %v3100, %v3108
        %v3119 = vunpack.c.l.s4 1934713408
        %v3120 = vunpack.c.0.s8 %v3119
        %v3121 = vlaneseq
        %v3122 = vshrl.u32 %v3121, 7
        %v3123 = vsub.s32 %v3120, %v3122
        %v3124 = vrot.slane %v3117, %v3123
        %v3125 = vcombine.low %v3116, %v3124
        %v3126 = vcombine.high %v3116, %v3124
        %v3127 = vcombine.low %v2701, %v2708
        %v3129 = vunpack.c.l.s4 1983009808
        %v3130 = vunpack.c.0.s8 %v3129
        %v3131 = vlaneseq
        %v3132 = vshrl.u32 %v3131, 7
        %v3133 = vsub.s32 %v3130, %v3132
        %v3134 = vrot.slane %v3127, %v3133
        %v3135 = vcombine.low %v2725, %v2726
        %v3137 = vunpack.c.l.s4 1983009808
        %v3138 = vunpack.c.0.s8 %v3137
        %v3139 = vlaneseq
        %v3140 = vshrl.u32 %v3139, 7
        %v3141 = vsub.s32 %v3138, %v3140
        %v3142 = vrot.slane %v3135, %v3141
        %v3143 = vcombine.low %v2717, %v2724
        %v3145 = vunpack.c.l.s4 1983009808
        %v3146 = vunpack.c.0.s8 %v3145
        %v3147 = vlaneseq
        %v3148 = vshrl.u32 %v3147, 7
        %v3149 = vsub.s32 %v3146, %v3148
        %v3150 = vrot.slane %v3143, %v3149
        %v3151 = vcombine.low %v2727, %v2728
        %v3153 = vunpack.c.l.s4 1983009808
        %v3154 = vunpack.c.0.s8 %v3153
        %v3155 = vlaneseq
        %v3156 = vshrl.u32 %v3155, 7
        %v3157 = vsub.s32 %v3154, %v3156
        %v3158 = vrot.slane %v3151, %v3157
        %v3159 = vcombine.low %v3134, %v3142
        %v3161 = vunpack.c.l.s4 1934713408
        %v3162 = vunpack.c.0.s8 %v3161
        %v3163 = vlaneseq
        %v3164 = vshrl.u32 %v3163, 7
        %v3165 = vsub.s32 %v3162, %v3164
        %v3166 = vrot.slane %v3159, %v3165
        %v3167 = vcombine.low %v3150, %v3158
        %v3169 = vunpack.c.l.s4 1934713408
        %v3170 = vunpack.c.0.s8 %v3169
        %v3171 = vlaneseq
        %v3172 = vshrl.u32 %v3171, 7
        %v3173 = vsub.s32 %v3170, %v3172
        %v3174 = vrot.slane %v3167, %v3173
        %v3175 = vcombine.low %v3166, %v3174
        %v3176 = vcombine.high %v3166, %v3174
        %v3177 = vcombine.low %v2767, %v2774
        %v3179 = vunpack.c.l.s4 1983009808
        %v3180 = vunpack.c.0.s8 %v3179
        %v3181 = vlaneseq
        %v3182 = vshrl.u32 %v3181, 7
        %v3183 = vsub.s32 %v3180, %v3182
        %v3184 = vrot.slane %v3177, %v3183
        %v3185 = vcombine.low %v2791, %v2792
        %v3187 = vunpack.c.l.s4 1983009808
        %v3188 = vunpack.c.0.s8 %v3187
        %v3189 = vlaneseq
        %v3190 = vshrl.u32 %v3189, 7
        %v3191 = vsub.s32 %v3188, %v3190
        %v3192 = vrot.slane %v3185, %v3191
        %v3193 = vcombine.low %v2783, %v2790
        %v3195 = vunpack.c.l.s4 1983009808
        %v3196 = vunpack.c.0.s8 %v3195
        %v3197 = vlaneseq
        %v3198 = vshrl.u32 %v3197, 7
        %v3199 = vsub.s32 %v3196, %v3198
        %v3200 = vrot.slane %v3193, %v3199
        %v3201 = vcombine.low %v2793, %v2794
        %v3203 = vunpack.c.l.s4 1983009808
        %v3204 = vunpack.c.0.s8 %v3203
        %v3205 = vlaneseq
        %v3206 = vshrl.u32 %v3205, 7
        %v3207 = vsub.s32 %v3204, %v3206
        %v3208 = vrot.slane %v3201, %v3207
        %v3209 = vcombine.low %v3184, %v3192
        %v3211 = vunpack.c.l.s4 1934713408
        %v3212 = vunpack.c.0.s8 %v3211
        %v3213 = vlaneseq
        %v3214 = vshrl.u32 %v3213, 7
        %v3215 = vsub.s32 %v3212, %v3214
        %v3216 = vrot.slane %v3209, %v3215
        %v3217 = vcombine.low %v3200, %v3208
        %v3219 = vunpack.c.l.s4 1934713408
        %v3220 = vunpack.c.0.s8 %v3219
        %v3221 = vlaneseq
        %v3222 = vshrl.u32 %v3221, 7
        %v3223 = vsub.s32 %v3220, %v3222
        %v3224 = vrot.slane %v3217, %v3223
        %v3225 = vcombine.low %v3216, %v3224
        %v3226 = vcombine.high %v3216, %v3224
        %v3227 = vcombine.low %v2833, %v2840
        %v3229 = vunpack.c.l.s4 1983009808
        %v3230 = vunpack.c.0.s8 %v3229
        %v3231 = vlaneseq
        %v3232 = vshrl.u32 %v3231, 7
        %v3233 = vsub.s32 %v3230, %v3232
        %v3234 = vrot.slane %v3227, %v3233
        %v3235 = vcombine.low %v2857, %v2858
        %v3237 = vunpack.c.l.s4 1983009808
        %v3238 = vunpack.c.0.s8 %v3237
        %v3239 = vlaneseq
        %v3240 = vshrl.u32 %v3239, 7
        %v3241 = vsub.s32 %v3238, %v3240
        %v3242 = vrot.slane %v3235, %v3241
        %v3243 = vcombine.low %v2849, %v2856
        %v3245 = vunpack.c.l.s4 1983009808
        %v3246 = vunpack.c.0.s8 %v3245
        %v3247 = vlaneseq
        %v3248 = vshrl.u32 %v3247, 7
        %v3249 = vsub.s32 %v3246, %v3248
        %v3250 = vrot.slane %v3243, %v3249
        %v3251 = vcombine.low %v2859, %v2860
        %v3253 = vunpack.c.l.s4 1983009808
        %v3254 = vunpack.c.0.s8 %v3253
        %v3255 = vlaneseq
        %v3256 = vshrl.u32 %v3255, 7
        %v3257 = vsub.s32 %v3254, %v3256
        %v3258 = vrot.slane %v3251, %v3257
        %v3259 = vcombine.low %v3234, %v3242
        %v3261 = vunpack.c.l.s4 1934713408
        %v3262 = vunpack.c.0.s8 %v3261
        %v3263 = vlaneseq
        %v3264 = vshrl.u32 %v3263, 7
        %v3265 = vsub.s32 %v3262, %v3264
        %v3266 = vrot.slane %v3259, %v3265
        %v3267 = vcombine.low %v3250, %v3258
        %v3269 = vunpack.c.l.s4 1934713408
        %v3270 = vunpack.c.0.s8 %v3269
        %v3271 = vlaneseq
        %v3272 = vshrl.u32 %v3271, 7
        %v3273 = vsub.s32 %v3270, %v3272
        %v3274 = vrot.slane %v3267, %v3273
        %v3275 = vcombine.low %v3266, %v3274
        %v3276 = vcombine.high %v3266, %v3274
        %v3277 = vcombine.low %v2899, %v2906
        %v3279 = vunpack.c.l.s4 1983009808
        %v3280 = vunpack.c.0.s8 %v3279
        %v3281 = vlaneseq
        %v3282 = vshrl.u32 %v3281, 7
        %v3283 = vsub.s32 %v3280, %v3282
        %v3284 = vrot.slane %v3277, %v3283
        %v3285 = vcombine.low %v2923, %v2924
        %v3287 = vunpack.c.l.s4 1983009808
        %v3288 = vunpack.c.0.s8 %v3287
        %v3289 = vlaneseq
        %v3290 = vshrl.u32 %v3289, 7
        %v3291 = vsub.s32 %v3288, %v3290
        %v3292 = vrot.slane %v3285, %v3291
        %v3293 = vcombine.low %v2915, %v2922
        %v3295 = vunpack.c.l.s4 1983009808
        %v3296 = vunpack.c.0.s8 %v3295
        %v3297 = vlaneseq
        %v3298 = vshrl.u32 %v3297, 7
        %v3299 = vsub.s32 %v3296, %v3298
        %v3300 = vrot.slane %v3293, %v3299
        %v3301 = vcombine.low %v2925, %v2926
        %v3303 = vunpack.c.l.s4 1983009808
        %v3304 = vunpack.c.0.s8 %v3303
        %v3305 = vlaneseq
        %v3306 = vshrl.u32 %v3305, 7
        %v3307 = vsub.s32 %v3304, %v3306
        %v3308 = vrot.slane %v3301, %v3307
        %v3309 = vcombine.low %v3284, %v3292
        %v3311 = vunpack.c.l.s4 1934713408
        %v3312 = vunpack.c.0.s8 %v3311
        %v3313 = vlaneseq
        %v3314 = vshrl.u32 %v3313, 7
        %v3315 = vsub.s32 %v3312, %v3314
        %v3316 = vrot.slane %v3309, %v3315
        %v3317 = vcombine.low %v3300, %v3308
        %v3319 = vunpack.c.l.s4 1934713408
        %v3320 = vunpack.c.0.s8 %v3319
        %v3321 = vlaneseq
        %v3322 = vshrl.u32 %v3321, 7
        %v3323 = vsub.s32 %v3320, %v3322
        %v3324 = vrot.slane %v3317, %v3323
        %v3325 = vcombine.low %v3316, %v3324
        %v3326 = vcombine.high %v3316, %v3324
        %v3329 = vpack.i.b16 %v3025, %v2975
        %v3330 = vshrl.u32 %v2975, 16
        %v3331 = vshrl.u32 %v3025, 16
        %v3332 = vpack.i.b16 %v3331, %v3330
        %v3335 = vpack.i.b16 %v3026, %v2976
        %v3336 = vshrl.u32 %v2976, 16
        %v3337 = vshrl.u32 %v3026, 16
        %v3338 = vpack.i.b16 %v3337, %v3336
        %v3341 = vpack.i.b16 %v3125, %v3075
        %v3342 = vshrl.u32 %v3075, 16
        %v3343 = vshrl.u32 %v3125, 16
        %v3344 = vpack.i.b16 %v3343, %v3342
        %v3347 = vpack.i.b16 %v3126, %v3076
        %v3348 = vshrl.u32 %v3076, 16
        %v3349 = vshrl.u32 %v3126, 16
        %v3350 = vpack.i.b16 %v3349, %v3348
        %v3353 = vpack.i.b16 %v3225, %v3175
        %v3354 = vshrl.u32 %v3175, 16
        %v3355 = vshrl.u32 %v3225, 16
        %v3356 = vpack.i.b16 %v3355, %v3354
        %v3359 = vpack.i.b16 %v3226, %v3176
        %v3360 = vshrl.u32 %v3176, 16
        %v3361 = vshrl.u32 %v3226, 16
        %v3362 = vpack.i.b16 %v3361, %v3360
        %v3365 = vpack.i.b16 %v3325, %v3275
        %v3366 = vshrl.u32 %v3275, 16
        %v3367 = vshrl.u32 %v3325, 16
        %v3368 = vpack.i.b16 %v3367, %v3366
        %v3371 = vpack.i.b16 %v3326, %v3276
        %v3372 = vshrl.u32 %v3276, 16
        %v3373 = vshrl.u32 %v3326, 16
        %v3374 = vpack.i.b16 %v3373, %v3372
        %3375 = vrot.lane.b32.xlu0 %v1225, 64
        %v3376 = vpop.permute.xlu0 %3375
        %3377 = vrot.lane.b32.xlu0 %v1226, 64
        %v3378 = vpop.permute.xlu0 %3377
        %3379 = vrot.lane.b32.xlu0 %v1227, 64
        %v3380 = vpop.permute.xlu0 %3379
        %3381 = vrot.lane.b32.xlu0 %v1228, 64
        %v3382 = vpop.permute.xlu0 %3381
        %3383 = vrot.lane.b32.xlu0 %v1234, 64
        %v3384 = vpop.permute.xlu0 %3383
        %3385 = vrot.lane.b32.xlu0 %v1236, 64
        %v3386 = vpop.permute.xlu0 %3385
        %3387 = vrot.lane.b32.xlu0 %v1238, 64
        %v3388 = vpop.permute.xlu0 %3387
        %3389 = vrot.lane.b32.xlu0 %v1240, 64
        %v3390 = vpop.permute.xlu0 %3389
        %3391 = vrot.lane.b32.xlu0 %v1242, 64
        %v3392 = vpop.permute.xlu0 %3391
        %3393 = vrot.lane.b32.xlu0 %v1244, 64
        %v3394 = vpop.permute.xlu0 %3393
        %3395 = vrot.lane.b32.xlu0 %v1246, 64
        %v3396 = vpop.permute.xlu0 %3395
        %3397 = vrot.lane.b32.xlu0 %v1248, 64
        %v3398 = vpop.permute.xlu0 %3397
        %3399 = vrot.lane.b32.xlu0 %v1250, 64
        %v3400 = vpop.permute.xlu0 %3399
        %3401 = vrot.lane.b32.xlu0 %v1252, 64
        %v3402 = vpop.permute.xlu0 %3401
        %3403 = vrot.lane.b32.xlu0 %v1254, 64
        %v3404 = vpop.permute.xlu0 %3403
        %3405 = vrot.lane.b32.xlu0 %v1256, 64
        %v3406 = vpop.permute.xlu0 %3405
        %v3409 = vpack.i.b16 %v3384, %v3376
        %v3411 = vshrl.u32 %v3376, 16
        %v3412 = vshrl.u32 %v3384, 16
        %v3413 = vpack.i.b16 %v3412, %v3411
        %v3417 = vpack.i.b16 %v3400, %v3392
        %v3419 = vshrl.u32 %v3392, 16
        %v3420 = vshrl.u32 %v3400, 16
        %v3421 = vpack.i.b16 %v3420, %v3419
        %v3425 = vpack.i.b16 %v3386, %v3378
        %v3427 = vshrl.u32 %v3378, 16
        %v3428 = vshrl.u32 %v3386, 16
        %v3429 = vpack.i.b16 %v3428, %v3427
        %v3433 = vpack.i.b16 %v3402, %v3394
        %v3435 = vshrl.u32 %v3394, 16
        %v3436 = vshrl.u32 %v3402, 16
        %v3437 = vpack.i.b16 %v3436, %v3435
        %v3441 = vpack.i.b16 %v3388, %v3380
        %v3443 = vshrl.u32 %v3380, 16
        %v3444 = vshrl.u32 %v3388, 16
        %v3445 = vpack.i.b16 %v3444, %v3443
        %v3449 = vpack.i.b16 %v3404, %v3396
        %v3451 = vshrl.u32 %v3396, 16
        %v3452 = vshrl.u32 %v3404, 16
        %v3453 = vpack.i.b16 %v3452, %v3451
        %v3457 = vpack.i.b16 %v3390, %v3382
        %v3459 = vshrl.u32 %v3382, 16
        %v3460 = vshrl.u32 %v3390, 16
        %v3461 = vpack.i.b16 %v3460, %v3459
        %v3465 = vpack.i.b16 %v3406, %v3398
        %v3467 = vshrl.u32 %v3398, 16
        %v3468 = vshrl.u32 %v3406, 16
        %v3469 = vpack.i.b16 %v3468, %v3467
        %v3471 = vcombine.high %v3409, %v1274
        %v3473 = vunpack.c.l.s4 1983009808
        %v3474 = vunpack.c.0.s8 %v3473
        %v3475 = vlaneseq
        %v3476 = vshrl.u32 %v3475, 7
        %v3477 = vsub.s32 %v3474, %v3476
        %v3478 = vrot.slane %v3409, %v3477
        %v3480 = vunpack.c.l.s4 1983009808
        %v3481 = vunpack.c.0.s8 %v3480
        %v3482 = vlaneseq
        %v3483 = vshrl.u32 %v3482, 7
        %v3484 = vsub.s32 %v3481, %v3483
        %v3485 = vrot.slane %v3471, %v3484
        %v3486 = vcombine.high %v3417, %v1274
        %v3488 = vunpack.c.l.s4 1983009808
        %v3489 = vunpack.c.0.s8 %v3488
        %v3490 = vlaneseq
        %v3491 = vshrl.u32 %v3490, 7
        %v3492 = vsub.s32 %v3489, %v3491
        %v3493 = vrot.slane %v3417, %v3492
        %v3495 = vunpack.c.l.s4 1983009808
        %v3496 = vunpack.c.0.s8 %v3495
        %v3497 = vlaneseq
        %v3498 = vshrl.u32 %v3497, 7
        %v3499 = vsub.s32 %v3496, %v3498
        %v3500 = vrot.slane %v3486, %v3499
        %v3501 = vcombine.low %v3478, %v3493
        %v3502 = vcombine.high %v3478, %v3493
        %v3504 = vunpack.c.l.s4 1934713408
        %v3505 = vunpack.c.0.s8 %v3504
        %v3506 = vlaneseq
        %v3507 = vshrl.u32 %v3506, 7
        %v3508 = vsub.s32 %v3505, %v3507
        %v3509 = vrot.slane %v3501, %v3508
        %v3511 = vunpack.c.l.s4 1934713408
        %v3512 = vunpack.c.0.s8 %v3511
        %v3513 = vlaneseq
        %v3514 = vshrl.u32 %v3513, 7
        %v3515 = vsub.s32 %v3512, %v3514
        %v3516 = vrot.slane %v3502, %v3515
        %v3517 = vcombine.low %v3485, %v3500
        %v3518 = vcombine.high %v3485, %v3500
        %v3520 = vunpack.c.l.s4 1934713408
        %v3521 = vunpack.c.0.s8 %v3520
        %v3522 = vlaneseq
        %v3523 = vshrl.u32 %v3522, 7
        %v3524 = vsub.s32 %v3521, %v3523
        %v3525 = vrot.slane %v3517, %v3524
        %v3527 = vunpack.c.l.s4 1934713408
        %v3528 = vunpack.c.0.s8 %v3527
        %v3529 = vlaneseq
        %v3530 = vshrl.u32 %v3529, 7
        %v3531 = vsub.s32 %v3528, %v3530
        %v3532 = vrot.slane %v3518, %v3531
        %v3533 = vcombine.high %v3509, 0
        %v3534 = vcombine.high %v3516, 0
        %v3535 = vcombine.high %v3525, 0
        %v3536 = vcombine.high %v3532, 0
        %v3537 = vcombine.high %v3413, %v1277
        %v3539 = vunpack.c.l.s4 1983009808
        %v3540 = vunpack.c.0.s8 %v3539
        %v3541 = vlaneseq
        %v3542 = vshrl.u32 %v3541, 7
        %v3543 = vsub.s32 %v3540, %v3542
        %v3544 = vrot.slane %v3413, %v3543
        %v3546 = vunpack.c.l.s4 1983009808
        %v3547 = vunpack.c.0.s8 %v3546
        %v3548 = vlaneseq
        %v3549 = vshrl.u32 %v3548, 7
        %v3550 = vsub.s32 %v3547, %v3549
        %v3551 = vrot.slane %v3537, %v3550
        %v3552 = vcombine.high %v3421, %v1277
        %v3554 = vunpack.c.l.s4 1983009808
        %v3555 = vunpack.c.0.s8 %v3554
        %v3556 = vlaneseq
        %v3557 = vshrl.u32 %v3556, 7
        %v3558 = vsub.s32 %v3555, %v3557
        %v3559 = vrot.slane %v3421, %v3558
        %v3561 = vunpack.c.l.s4 1983009808
        %v3562 = vunpack.c.0.s8 %v3561
        %v3563 = vlaneseq
        %v3564 = vshrl.u32 %v3563, 7
        %v3565 = vsub.s32 %v3562, %v3564
        %v3566 = vrot.slane %v3552, %v3565
        %v3567 = vcombine.low %v3544, %v3559
        %v3568 = vcombine.high %v3544, %v3559
        %v3570 = vunpack.c.l.s4 1934713408
        %v3571 = vunpack.c.0.s8 %v3570
        %v3572 = vlaneseq
        %v3573 = vshrl.u32 %v3572, 7
        %v3574 = vsub.s32 %v3571, %v3573
        %v3575 = vrot.slane %v3567, %v3574
        %v3577 = vunpack.c.l.s4 1934713408
        %v3578 = vunpack.c.0.s8 %v3577
        %v3579 = vlaneseq
        %v3580 = vshrl.u32 %v3579, 7
        %v3581 = vsub.s32 %v3578, %v3580
        %v3582 = vrot.slane %v3568, %v3581
        %v3583 = vcombine.low %v3551, %v3566
        %v3584 = vcombine.high %v3551, %v3566
        %v3586 = vunpack.c.l.s4 1934713408
        %v3587 = vunpack.c.0.s8 %v3586
        %v3588 = vlaneseq
        %v3589 = vshrl.u32 %v3588, 7
        %v3590 = vsub.s32 %v3587, %v3589
        %v3591 = vrot.slane %v3583, %v3590
        %v3593 = vunpack.c.l.s4 1934713408
        %v3594 = vunpack.c.0.s8 %v3593
        %v3595 = vlaneseq
        %v3596 = vshrl.u32 %v3595, 7
        %v3597 = vsub.s32 %v3594, %v3596
        %v3598 = vrot.slane %v3584, %v3597
        %v3599 = vcombine.high %v3575, 0
        %v3600 = vcombine.high %v3582, 0
        %v3601 = vcombine.high %v3591, 0
        %v3602 = vcombine.high %v3598, 0
        %v3603 = vcombine.high %v3425, %v1274
        %v3605 = vunpack.c.l.s4 1983009808
        %v3606 = vunpack.c.0.s8 %v3605
        %v3607 = vlaneseq
        %v3608 = vshrl.u32 %v3607, 7
        %v3609 = vsub.s32 %v3606, %v3608
        %v3610 = vrot.slane %v3425, %v3609
        %v3612 = vunpack.c.l.s4 1983009808
        %v3613 = vunpack.c.0.s8 %v3612
        %v3614 = vlaneseq
        %v3615 = vshrl.u32 %v3614, 7
        %v3616 = vsub.s32 %v3613, %v3615
        %v3617 = vrot.slane %v3603, %v3616
        %v3618 = vcombine.high %v3433, %v1274
        %v3620 = vunpack.c.l.s4 1983009808
        %v3621 = vunpack.c.0.s8 %v3620
        %v3622 = vlaneseq
        %v3623 = vshrl.u32 %v3622, 7
        %v3624 = vsub.s32 %v3621, %v3623
        %v3625 = vrot.slane %v3433, %v3624
        %v3627 = vunpack.c.l.s4 1983009808
        %v3628 = vunpack.c.0.s8 %v3627
        %v3629 = vlaneseq
        %v3630 = vshrl.u32 %v3629, 7
        %v3631 = vsub.s32 %v3628, %v3630
        %v3632 = vrot.slane %v3618, %v3631
        %v3633 = vcombine.low %v3610, %v3625
        %v3634 = vcombine.high %v3610, %v3625
        %v3636 = vunpack.c.l.s4 1934713408
        %v3637 = vunpack.c.0.s8 %v3636
        %v3638 = vlaneseq
        %v3639 = vshrl.u32 %v3638, 7
        %v3640 = vsub.s32 %v3637, %v3639
        %v3641 = vrot.slane %v3633, %v3640
        %v3643 = vunpack.c.l.s4 1934713408
        %v3644 = vunpack.c.0.s8 %v3643
        %v3645 = vlaneseq
        %v3646 = vshrl.u32 %v3645, 7
        %v3647 = vsub.s32 %v3644, %v3646
        %v3648 = vrot.slane %v3634, %v3647
        %v3649 = vcombine.low %v3617, %v3632
        %v3650 = vcombine.high %v3617, %v3632
        %v3652 = vunpack.c.l.s4 1934713408
        %v3653 = vunpack.c.0.s8 %v3652
        %v3654 = vlaneseq
        %v3655 = vshrl.u32 %v3654, 7
        %v3656 = vsub.s32 %v3653, %v3655
        %v3657 = vrot.slane %v3649, %v3656
        %v3659 = vunpack.c.l.s4 1934713408
        %v3660 = vunpack.c.0.s8 %v3659
        %v3661 = vlaneseq
        %v3662 = vshrl.u32 %v3661, 7
        %v3663 = vsub.s32 %v3660, %v3662
        %v3664 = vrot.slane %v3650, %v3663
        %v3665 = vcombine.high %v3641, 0
        %v3666 = vcombine.high %v3648, 0
        %v3667 = vcombine.high %v3657, 0
        %v3668 = vcombine.high %v3664, 0
        %v3669 = vcombine.high %v3429, %v1277
        %v3671 = vunpack.c.l.s4 1983009808
        %v3672 = vunpack.c.0.s8 %v3671
        %v3673 = vlaneseq
        %v3674 = vshrl.u32 %v3673, 7
        %v3675 = vsub.s32 %v3672, %v3674
        %v3676 = vrot.slane %v3429, %v3675
        %v3678 = vunpack.c.l.s4 1983009808
        %v3679 = vunpack.c.0.s8 %v3678
        %v3680 = vlaneseq
        %v3681 = vshrl.u32 %v3680, 7
        %v3682 = vsub.s32 %v3679, %v3681
        %v3683 = vrot.slane %v3669, %v3682
        %v3684 = vcombine.high %v3437, %v1277
        %v3686 = vunpack.c.l.s4 1983009808
        %v3687 = vunpack.c.0.s8 %v3686
        %v3688 = vlaneseq
        %v3689 = vshrl.u32 %v3688, 7
        %v3690 = vsub.s32 %v3687, %v3689
        %v3691 = vrot.slane %v3437, %v3690
        %v3693 = vunpack.c.l.s4 1983009808
        %v3694 = vunpack.c.0.s8 %v3693
        %v3695 = vlaneseq
        %v3696 = vshrl.u32 %v3695, 7
        %v3697 = vsub.s32 %v3694, %v3696
        %v3698 = vrot.slane %v3684, %v3697
        %v3699 = vcombine.low %v3676, %v3691
        %v3700 = vcombine.high %v3676, %v3691
        %v3702 = vunpack.c.l.s4 1934713408
        %v3703 = vunpack.c.0.s8 %v3702
        %v3704 = vlaneseq
        %v3705 = vshrl.u32 %v3704, 7
        %v3706 = vsub.s32 %v3703, %v3705
        %v3707 = vrot.slane %v3699, %v3706
        %v3709 = vunpack.c.l.s4 1934713408
        %v3710 = vunpack.c.0.s8 %v3709
        %v3711 = vlaneseq
        %v3712 = vshrl.u32 %v3711, 7
        %v3713 = vsub.s32 %v3710, %v3712
        %v3714 = vrot.slane %v3700, %v3713
        %v3715 = vcombine.low %v3683, %v3698
        %v3716 = vcombine.high %v3683, %v3698
        %v3718 = vunpack.c.l.s4 1934713408
        %v3719 = vunpack.c.0.s8 %v3718
        %v3720 = vlaneseq
        %v3721 = vshrl.u32 %v3720, 7
        %v3722 = vsub.s32 %v3719, %v3721
        %v3723 = vrot.slane %v3715, %v3722
        %v3725 = vunpack.c.l.s4 1934713408
        %v3726 = vunpack.c.0.s8 %v3725
        %v3727 = vlaneseq
        %v3728 = vshrl.u32 %v3727, 7
        %v3729 = vsub.s32 %v3726, %v3728
        %v3730 = vrot.slane %v3716, %v3729
        %v3731 = vcombine.high %v3707, 0
        %v3732 = vcombine.high %v3714, 0
        %v3733 = vcombine.high %v3723, 0
        %v3734 = vcombine.high %v3730, 0
        %v3735 = vcombine.high %v3441, %v1274
        %v3737 = vunpack.c.l.s4 1983009808
        %v3738 = vunpack.c.0.s8 %v3737
        %v3739 = vlaneseq
        %v3740 = vshrl.u32 %v3739, 7
        %v3741 = vsub.s32 %v3738, %v3740
        %v3742 = vrot.slane %v3441, %v3741
        %v3744 = vunpack.c.l.s4 1983009808
        %v3745 = vunpack.c.0.s8 %v3744
        %v3746 = vlaneseq
        %v3747 = vshrl.u32 %v3746, 7
        %v3748 = vsub.s32 %v3745, %v3747
        %v3749 = vrot.slane %v3735, %v3748
        %v3750 = vcombine.high %v3449, %v1274
        %v3752 = vunpack.c.l.s4 1983009808
        %v3753 = vunpack.c.0.s8 %v3752
        %v3754 = vlaneseq
        %v3755 = vshrl.u32 %v3754, 7
        %v3756 = vsub.s32 %v3753, %v3755
        %v3757 = vrot.slane %v3449, %v3756
        %v3759 = vunpack.c.l.s4 1983009808
        %v3760 = vunpack.c.0.s8 %v3759
        %v3761 = vlaneseq
        %v3762 = vshrl.u32 %v3761, 7
        %v3763 = vsub.s32 %v3760, %v3762
        %v3764 = vrot.slane %v3750, %v3763
        %v3765 = vcombine.low %v3742, %v3757
        %v3766 = vcombine.high %v3742, %v3757
        %v3768 = vunpack.c.l.s4 1934713408
        %v3769 = vunpack.c.0.s8 %v3768
        %v3770 = vlaneseq
        %v3771 = vshrl.u32 %v3770, 7
        %v3772 = vsub.s32 %v3769, %v3771
        %v3773 = vrot.slane %v3765, %v3772
        %v3775 = vunpack.c.l.s4 1934713408
        %v3776 = vunpack.c.0.s8 %v3775
        %v3777 = vlaneseq
        %v3778 = vshrl.u32 %v3777, 7
        %v3779 = vsub.s32 %v3776, %v3778
        %v3780 = vrot.slane %v3766, %v3779
        %v3781 = vcombine.low %v3749, %v3764
        %v3782 = vcombine.high %v3749, %v3764
        %v3784 = vunpack.c.l.s4 1934713408
        %v3785 = vunpack.c.0.s8 %v3784
        %v3786 = vlaneseq
        %v3787 = vshrl.u32 %v3786, 7
        %v3788 = vsub.s32 %v3785, %v3787
        %v3789 = vrot.slane %v3781, %v3788
        %v3791 = vunpack.c.l.s4 1934713408
        %v3792 = vunpack.c.0.s8 %v3791
        %v3793 = vlaneseq
        %v3794 = vshrl.u32 %v3793, 7
        %v3795 = vsub.s32 %v3792, %v3794
        %v3796 = vrot.slane %v3782, %v3795
        %v3797 = vcombine.high %v3773, 0
        %v3798 = vcombine.high %v3780, 0
        %v3799 = vcombine.high %v3789, 0
        %v3800 = vcombine.high %v3796, 0
        %v3801 = vcombine.high %v3445, %v1277
        %v3803 = vunpack.c.l.s4 1983009808
        %v3804 = vunpack.c.0.s8 %v3803
        %v3805 = vlaneseq
        %v3806 = vshrl.u32 %v3805, 7
        %v3807 = vsub.s32 %v3804, %v3806
        %v3808 = vrot.slane %v3445, %v3807
        %v3810 = vunpack.c.l.s4 1983009808
        %v3811 = vunpack.c.0.s8 %v3810
        %v3812 = vlaneseq
        %v3813 = vshrl.u32 %v3812, 7
        %v3814 = vsub.s32 %v3811, %v3813
        %v3815 = vrot.slane %v3801, %v3814
        %v3816 = vcombine.high %v3453, %v1277
        %v3818 = vunpack.c.l.s4 1983009808
        %v3819 = vunpack.c.0.s8 %v3818
        %v3820 = vlaneseq
        %v3821 = vshrl.u32 %v3820, 7
        %v3822 = vsub.s32 %v3819, %v3821
        %v3823 = vrot.slane %v3453, %v3822
        %v3825 = vunpack.c.l.s4 1983009808
        %v3826 = vunpack.c.0.s8 %v3825
        %v3827 = vlaneseq
        %v3828 = vshrl.u32 %v3827, 7
        %v3829 = vsub.s32 %v3826, %v3828
        %v3830 = vrot.slane %v3816, %v3829
        %v3831 = vcombine.low %v3808, %v3823
        %v3832 = vcombine.high %v3808, %v3823
        %v3834 = vunpack.c.l.s4 1934713408
        %v3835 = vunpack.c.0.s8 %v3834
        %v3836 = vlaneseq
        %v3837 = vshrl.u32 %v3836, 7
        %v3838 = vsub.s32 %v3835, %v3837
        %v3839 = vrot.slane %v3831, %v3838
        %v3841 = vunpack.c.l.s4 1934713408
        %v3842 = vunpack.c.0.s8 %v3841
        %v3843 = vlaneseq
        %v3844 = vshrl.u32 %v3843, 7
        %v3845 = vsub.s32 %v3842, %v3844
        %v3846 = vrot.slane %v3832, %v3845
        %v3847 = vcombine.low %v3815, %v3830
        %v3848 = vcombine.high %v3815, %v3830
        %v3850 = vunpack.c.l.s4 1934713408
        %v3851 = vunpack.c.0.s8 %v3850
        %v3852 = vlaneseq
        %v3853 = vshrl.u32 %v3852, 7
        %v3854 = vsub.s32 %v3851, %v3853
        %v3855 = vrot.slane %v3847, %v3854
        %v3857 = vunpack.c.l.s4 1934713408
        %v3858 = vunpack.c.0.s8 %v3857
        %v3859 = vlaneseq
        %v3860 = vshrl.u32 %v3859, 7
        %v3861 = vsub.s32 %v3858, %v3860
        %v3862 = vrot.slane %v3848, %v3861
        %v3863 = vcombine.high %v3839, 0
        %v3864 = vcombine.high %v3846, 0
        %v3865 = vcombine.high %v3855, 0
        %v3866 = vcombine.high %v3862, 0
        %v3867 = vcombine.high %v3457, %v1274
        %v3869 = vunpack.c.l.s4 1983009808
        %v3870 = vunpack.c.0.s8 %v3869
        %v3871 = vlaneseq
        %v3872 = vshrl.u32 %v3871, 7
        %v3873 = vsub.s32 %v3870, %v3872
        %v3874 = vrot.slane %v3457, %v3873
        %v3876 = vunpack.c.l.s4 1983009808
        %v3877 = vunpack.c.0.s8 %v3876
        %v3878 = vlaneseq
        %v3879 = vshrl.u32 %v3878, 7
        %v3880 = vsub.s32 %v3877, %v3879
        %v3881 = vrot.slane %v3867, %v3880
        %v3882 = vcombine.high %v3465, %v1274
        %v3884 = vunpack.c.l.s4 1983009808
        %v3885 = vunpack.c.0.s8 %v3884
        %v3886 = vlaneseq
        %v3887 = vshrl.u32 %v3886, 7
        %v3888 = vsub.s32 %v3885, %v3887
        %v3889 = vrot.slane %v3465, %v3888
        %v3891 = vunpack.c.l.s4 1983009808
        %v3892 = vunpack.c.0.s8 %v3891
        %v3893 = vlaneseq
        %v3894 = vshrl.u32 %v3893, 7
        %v3895 = vsub.s32 %v3892, %v3894
        %v3896 = vrot.slane %v3882, %v3895
        %v3897 = vcombine.low %v3874, %v3889
        %v3898 = vcombine.high %v3874, %v3889
        %v3900 = vunpack.c.l.s4 1934713408
        %v3901 = vunpack.c.0.s8 %v3900
        %v3902 = vlaneseq
        %v3903 = vshrl.u32 %v3902, 7
        %v3904 = vsub.s32 %v3901, %v3903
        %v3905 = vrot.slane %v3897, %v3904
        %v3907 = vunpack.c.l.s4 1934713408
        %v3908 = vunpack.c.0.s8 %v3907
        %v3909 = vlaneseq
        %v3910 = vshrl.u32 %v3909, 7
        %v3911 = vsub.s32 %v3908, %v3910
        %v3912 = vrot.slane %v3898, %v3911
        %v3913 = vcombine.low %v3881, %v3896
        %v3914 = vcombine.high %v3881, %v3896
        %v3916 = vunpack.c.l.s4 1934713408
        %v3917 = vunpack.c.0.s8 %v3916
        %v3918 = vlaneseq
        %v3919 = vshrl.u32 %v3918, 7
        %v3920 = vsub.s32 %v3917, %v3919
        %v3921 = vrot.slane %v3913, %v3920
        %v3923 = vunpack.c.l.s4 1934713408
        %v3924 = vunpack.c.0.s8 %v3923
        %v3925 = vlaneseq
        %v3926 = vshrl.u32 %v3925, 7
        %v3927 = vsub.s32 %v3924, %v3926
        %v3928 = vrot.slane %v3914, %v3927
        %v3929 = vcombine.high %v3905, 0
        %v3930 = vcombine.high %v3912, 0
        %v3931 = vcombine.high %v3921, 0
        %v3932 = vcombine.high %v3928, 0
        %v3933 = vcombine.high %v3461, %v1277
        %v3935 = vunpack.c.l.s4 1983009808
        %v3936 = vunpack.c.0.s8 %v3935
        %v3937 = vlaneseq
        %v3938 = vshrl.u32 %v3937, 7
        %v3939 = vsub.s32 %v3936, %v3938
        %v3940 = vrot.slane %v3461, %v3939
        %v3942 = vunpack.c.l.s4 1983009808
        %v3943 = vunpack.c.0.s8 %v3942
        %v3944 = vlaneseq
        %v3945 = vshrl.u32 %v3944, 7
        %v3946 = vsub.s32 %v3943, %v3945
        %v3947 = vrot.slane %v3933, %v3946
        %v3948 = vcombine.high %v3469, %v1277
        %v3950 = vunpack.c.l.s4 1983009808
        %v3951 = vunpack.c.0.s8 %v3950
        %v3952 = vlaneseq
        %v3953 = vshrl.u32 %v3952, 7
        %v3954 = vsub.s32 %v3951, %v3953
        %v3955 = vrot.slane %v3469, %v3954
        %v3957 = vunpack.c.l.s4 1983009808
        %v3958 = vunpack.c.0.s8 %v3957
        %v3959 = vlaneseq
        %v3960 = vshrl.u32 %v3959, 7
        %v3961 = vsub.s32 %v3958, %v3960
        %v3962 = vrot.slane %v3948, %v3961
        %v3963 = vcombine.low %v3940, %v3955
        %v3964 = vcombine.high %v3940, %v3955
        %v3966 = vunpack.c.l.s4 1934713408
        %v3967 = vunpack.c.0.s8 %v3966
        %v3968 = vlaneseq
        %v3969 = vshrl.u32 %v3968, 7
        %v3970 = vsub.s32 %v3967, %v3969
        %v3971 = vrot.slane %v3963, %v3970
        %v3973 = vunpack.c.l.s4 1934713408
        %v3974 = vunpack.c.0.s8 %v3973
        %v3975 = vlaneseq
        %v3976 = vshrl.u32 %v3975, 7
        %v3977 = vsub.s32 %v3974, %v3976
        %v3978 = vrot.slane %v3964, %v3977
        %v3979 = vcombine.low %v3947, %v3962
        %v3980 = vcombine.high %v3947, %v3962
        %v3982 = vunpack.c.l.s4 1934713408
        %v3983 = vunpack.c.0.s8 %v3982
        %v3984 = vlaneseq
        %v3985 = vshrl.u32 %v3984, 7
        %v3986 = vsub.s32 %v3983, %v3985
        %v3987 = vrot.slane %v3979, %v3986
        %v3989 = vunpack.c.l.s4 1934713408
        %v3990 = vunpack.c.0.s8 %v3989
        %v3991 = vlaneseq
        %v3992 = vshrl.u32 %v3991, 7
        %v3993 = vsub.s32 %v3990, %v3992
        %v3994 = vrot.slane %v3980, %v3993
        %v3995 = vcombine.high %v3971, 0
        %v3996 = vcombine.high %v3978, 0
        %v3997 = vcombine.high %v3987, 0
        %v3998 = vcombine.high %v3994, 0
        %v3999 = vcombine.low %v3509, %v3516
        %v4001 = vunpack.c.l.s4 1983009808
        %v4002 = vunpack.c.0.s8 %v4001
        %v4003 = vlaneseq
        %v4004 = vshrl.u32 %v4003, 7
        %v4005 = vsub.s32 %v4002, %v4004
        %v4006 = vrot.slane %v3999, %v4005
        %v4007 = vcombine.low %v3533, %v3534
        %v4009 = vunpack.c.l.s4 1983009808
        %v4010 = vunpack.c.0.s8 %v4009
        %v4011 = vlaneseq
        %v4012 = vshrl.u32 %v4011, 7
        %v4013 = vsub.s32 %v4010, %v4012
        %v4014 = vrot.slane %v4007, %v4013
        %v4015 = vcombine.low %v3525, %v3532
        %v4017 = vunpack.c.l.s4 1983009808
        %v4018 = vunpack.c.0.s8 %v4017
        %v4019 = vlaneseq
        %v4020 = vshrl.u32 %v4019, 7
        %v4021 = vsub.s32 %v4018, %v4020
        %v4022 = vrot.slane %v4015, %v4021
        %v4023 = vcombine.low %v3535, %v3536
        %v4025 = vunpack.c.l.s4 1983009808
        %v4026 = vunpack.c.0.s8 %v4025
        %v4027 = vlaneseq
        %v4028 = vshrl.u32 %v4027, 7
        %v4029 = vsub.s32 %v4026, %v4028
        %v4030 = vrot.slane %v4023, %v4029
        %v4031 = vcombine.low %v4006, %v4014
        %v4033 = vunpack.c.l.s4 1934713408
        %v4034 = vunpack.c.0.s8 %v4033
        %v4035 = vlaneseq
        %v4036 = vshrl.u32 %v4035, 7
        %v4037 = vsub.s32 %v4034, %v4036
        %v4038 = vrot.slane %v4031, %v4037
        %v4039 = vcombine.low %v4022, %v4030
        %v4041 = vunpack.c.l.s4 1934713408
        %v4042 = vunpack.c.0.s8 %v4041
        %v4043 = vlaneseq
        %v4044 = vshrl.u32 %v4043, 7
        %v4045 = vsub.s32 %v4042, %v4044
        %v4046 = vrot.slane %v4039, %v4045
        %v4047 = vcombine.low %v4038, %v4046
        %v4048 = vcombine.high %v4038, %v4046
        %v4049 = vcombine.low %v3575, %v3582
        %v4051 = vunpack.c.l.s4 1983009808
        %v4052 = vunpack.c.0.s8 %v4051
        %v4053 = vlaneseq
        %v4054 = vshrl.u32 %v4053, 7
        %v4055 = vsub.s32 %v4052, %v4054
        %v4056 = vrot.slane %v4049, %v4055
        %v4057 = vcombine.low %v3599, %v3600
        %v4059 = vunpack.c.l.s4 1983009808
        %v4060 = vunpack.c.0.s8 %v4059
        %v4061 = vlaneseq
        %v4062 = vshrl.u32 %v4061, 7
        %v4063 = vsub.s32 %v4060, %v4062
        %v4064 = vrot.slane %v4057, %v4063
        %v4065 = vcombine.low %v3591, %v3598
        %v4067 = vunpack.c.l.s4 1983009808
        %v4068 = vunpack.c.0.s8 %v4067
        %v4069 = vlaneseq
        %v4070 = vshrl.u32 %v4069, 7
        %v4071 = vsub.s32 %v4068, %v4070
        %v4072 = vrot.slane %v4065, %v4071
        %v4073 = vcombine.low %v3601, %v3602
        %v4075 = vunpack.c.l.s4 1983009808
        %v4076 = vunpack.c.0.s8 %v4075
        %v4077 = vlaneseq
        %v4078 = vshrl.u32 %v4077, 7
        %v4079 = vsub.s32 %v4076, %v4078
        %v4080 = vrot.slane %v4073, %v4079
        %v4081 = vcombine.low %v4056, %v4064
        %v4083 = vunpack.c.l.s4 1934713408
        %v4084 = vunpack.c.0.s8 %v4083
        %v4085 = vlaneseq
        %v4086 = vshrl.u32 %v4085, 7
        %v4087 = vsub.s32 %v4084, %v4086
        %v4088 = vrot.slane %v4081, %v4087
        %v4089 = vcombine.low %v4072, %v4080
        %v4091 = vunpack.c.l.s4 1934713408
        %v4092 = vunpack.c.0.s8 %v4091
        %v4093 = vlaneseq
        %v4094 = vshrl.u32 %v4093, 7
        %v4095 = vsub.s32 %v4092, %v4094
        %v4096 = vrot.slane %v4089, %v4095
        %v4097 = vcombine.low %v4088, %v4096
        %v4098 = vcombine.high %v4088, %v4096
        %v4099 = vcombine.low %v3641, %v3648
        %v4101 = vunpack.c.l.s4 1983009808
        %v4102 = vunpack.c.0.s8 %v4101
        %v4103 = vlaneseq
        %v4104 = vshrl.u32 %v4103, 7
        %v4105 = vsub.s32 %v4102, %v4104
        %v4106 = vrot.slane %v4099, %v4105
        %v4107 = vcombine.low %v3665, %v3666
        %v4109 = vunpack.c.l.s4 1983009808
        %v4110 = vunpack.c.0.s8 %v4109
        %v4111 = vlaneseq
        %v4112 = vshrl.u32 %v4111, 7
        %v4113 = vsub.s32 %v4110, %v4112
        %v4114 = vrot.slane %v4107, %v4113
        %v4115 = vcombine.low %v3657, %v3664
        %v4117 = vunpack.c.l.s4 1983009808
        %v4118 = vunpack.c.0.s8 %v4117
        %v4119 = vlaneseq
        %v4120 = vshrl.u32 %v4119, 7
        %v4121 = vsub.s32 %v4118, %v4120
        %v4122 = vrot.slane %v4115, %v4121
        %v4123 = vcombine.low %v3667, %v3668
        %v4125 = vunpack.c.l.s4 1983009808
        %v4126 = vunpack.c.0.s8 %v4125
        %v4127 = vlaneseq
        %v4128 = vshrl.u32 %v4127, 7
        %v4129 = vsub.s32 %v4126, %v4128
        %v4130 = vrot.slane %v4123, %v4129
        %v4131 = vcombine.low %v4106, %v4114
        %v4133 = vunpack.c.l.s4 1934713408
        %v4134 = vunpack.c.0.s8 %v4133
        %v4135 = vlaneseq
        %v4136 = vshrl.u32 %v4135, 7
        %v4137 = vsub.s32 %v4134, %v4136
        %v4138 = vrot.slane %v4131, %v4137
        %v4139 = vcombine.low %v4122, %v4130
        %v4141 = vunpack.c.l.s4 1934713408
        %v4142 = vunpack.c.0.s8 %v4141
        %v4143 = vlaneseq
        %v4144 = vshrl.u32 %v4143, 7
        %v4145 = vsub.s32 %v4142, %v4144
        %v4146 = vrot.slane %v4139, %v4145
        %v4147 = vcombine.low %v4138, %v4146
        %v4148 = vcombine.high %v4138, %v4146
        %v4149 = vcombine.low %v3707, %v3714
        %v4151 = vunpack.c.l.s4 1983009808
        %v4152 = vunpack.c.0.s8 %v4151
        %v4153 = vlaneseq
        %v4154 = vshrl.u32 %v4153, 7
        %v4155 = vsub.s32 %v4152, %v4154
        %v4156 = vrot.slane %v4149, %v4155
        %v4157 = vcombine.low %v3731, %v3732
        %v4159 = vunpack.c.l.s4 1983009808
        %v4160 = vunpack.c.0.s8 %v4159
        %v4161 = vlaneseq
        %v4162 = vshrl.u32 %v4161, 7
        %v4163 = vsub.s32 %v4160, %v4162
        %v4164 = vrot.slane %v4157, %v4163
        %v4165 = vcombine.low %v3723, %v3730
        %v4167 = vunpack.c.l.s4 1983009808
        %v4168 = vunpack.c.0.s8 %v4167
        %v4169 = vlaneseq
        %v4170 = vshrl.u32 %v4169, 7
        %v4171 = vsub.s32 %v4168, %v4170
        %v4172 = vrot.slane %v4165, %v4171
        %v4173 = vcombine.low %v3733, %v3734
        %v4175 = vunpack.c.l.s4 1983009808
        %v4176 = vunpack.c.0.s8 %v4175
        %v4177 = vlaneseq
        %v4178 = vshrl.u32 %v4177, 7
        %v4179 = vsub.s32 %v4176, %v4178
        %v4180 = vrot.slane %v4173, %v4179
        %v4181 = vcombine.low %v4156, %v4164
        %v4183 = vunpack.c.l.s4 1934713408
        %v4184 = vunpack.c.0.s8 %v4183
        %v4185 = vlaneseq
        %v4186 = vshrl.u32 %v4185, 7
        %v4187 = vsub.s32 %v4184, %v4186
        %v4188 = vrot.slane %v4181, %v4187
        %v4189 = vcombine.low %v4172, %v4180
        %v4191 = vunpack.c.l.s4 1934713408
        %v4192 = vunpack.c.0.s8 %v4191
        %v4193 = vlaneseq
        %v4194 = vshrl.u32 %v4193, 7
        %v4195 = vsub.s32 %v4192, %v4194
        %v4196 = vrot.slane %v4189, %v4195
        %v4197 = vcombine.low %v4188, %v4196
        %v4198 = vcombine.high %v4188, %v4196
        %v4199 = vcombine.low %v3773, %v3780
        %v4201 = vunpack.c.l.s4 1983009808
        %v4202 = vunpack.c.0.s8 %v4201
        %v4203 = vlaneseq
        %v4204 = vshrl.u32 %v4203, 7
        %v4205 = vsub.s32 %v4202, %v4204
        %v4206 = vrot.slane %v4199, %v4205
        %v4207 = vcombine.low %v3797, %v3798
        %v4209 = vunpack.c.l.s4 1983009808
        %v4210 = vunpack.c.0.s8 %v4209
        %v4211 = vlaneseq
        %v4212 = vshrl.u32 %v4211, 7
        %v4213 = vsub.s32 %v4210, %v4212
        %v4214 = vrot.slane %v4207, %v4213
        %v4215 = vcombine.low %v3789, %v3796
        %v4217 = vunpack.c.l.s4 1983009808
        %v4218 = vunpack.c.0.s8 %v4217
        %v4219 = vlaneseq
        %v4220 = vshrl.u32 %v4219, 7
        %v4221 = vsub.s32 %v4218, %v4220
        %v4222 = vrot.slane %v4215, %v4221
        %v4223 = vcombine.low %v3799, %v3800
        %v4225 = vunpack.c.l.s4 1983009808
        %v4226 = vunpack.c.0.s8 %v4225
        %v4227 = vlaneseq
        %v4228 = vshrl.u32 %v4227, 7
        %v4229 = vsub.s32 %v4226, %v4228
        %v4230 = vrot.slane %v4223, %v4229
        %v4231 = vcombine.low %v4206, %v4214
        %v4233 = vunpack.c.l.s4 1934713408
        %v4234 = vunpack.c.0.s8 %v4233
        %v4235 = vlaneseq
        %v4236 = vshrl.u32 %v4235, 7
        %v4237 = vsub.s32 %v4234, %v4236
        %v4238 = vrot.slane %v4231, %v4237
        %v4239 = vcombine.low %v4222, %v4230
        %v4241 = vunpack.c.l.s4 1934713408
        %v4242 = vunpack.c.0.s8 %v4241
        %v4243 = vlaneseq
        %v4244 = vshrl.u32 %v4243, 7
        %v4245 = vsub.s32 %v4242, %v4244
        %v4246 = vrot.slane %v4239, %v4245
        %v4247 = vcombine.low %v4238, %v4246
        %v4248 = vcombine.high %v4238, %v4246
        %v4249 = vcombine.low %v3839, %v3846
        %v4251 = vunpack.c.l.s4 1983009808
        %v4252 = vunpack.c.0.s8 %v4251
        %v4253 = vlaneseq
        %v4254 = vshrl.u32 %v4253, 7
        %v4255 = vsub.s32 %v4252, %v4254
        %v4256 = vrot.slane %v4249, %v4255
        %v4257 = vcombine.low %v3863, %v3864
        %v4259 = vunpack.c.l.s4 1983009808
        %v4260 = vunpack.c.0.s8 %v4259
        %v4261 = vlaneseq
        %v4262 = vshrl.u32 %v4261, 7
        %v4263 = vsub.s32 %v4260, %v4262
        %v4264 = vrot.slane %v4257, %v4263
        %v4265 = vcombine.low %v3855, %v3862
        %v4267 = vunpack.c.l.s4 1983009808
        %v4268 = vunpack.c.0.s8 %v4267
        %v4269 = vlaneseq
        %v4270 = vshrl.u32 %v4269, 7
        %v4271 = vsub.s32 %v4268, %v4270
        %v4272 = vrot.slane %v4265, %v4271
        %v4273 = vcombine.low %v3865, %v3866
        %v4275 = vunpack.c.l.s4 1983009808
        %v4276 = vunpack.c.0.s8 %v4275
        %v4277 = vlaneseq
        %v4278 = vshrl.u32 %v4277, 7
        %v4279 = vsub.s32 %v4276, %v4278
        %v4280 = vrot.slane %v4273, %v4279
        %v4281 = vcombine.low %v4256, %v4264
        %v4283 = vunpack.c.l.s4 1934713408
        %v4284 = vunpack.c.0.s8 %v4283
        %v4285 = vlaneseq
        %v4286 = vshrl.u32 %v4285, 7
        %v4287 = vsub.s32 %v4284, %v4286
        %v4288 = vrot.slane %v4281, %v4287
        %v4289 = vcombine.low %v4272, %v4280
        %v4291 = vunpack.c.l.s4 1934713408
        %v4292 = vunpack.c.0.s8 %v4291
        %v4293 = vlaneseq
        %v4294 = vshrl.u32 %v4293, 7
        %v4295 = vsub.s32 %v4292, %v4294
        %v4296 = vrot.slane %v4289, %v4295
        %v4297 = vcombine.low %v4288, %v4296
        %v4298 = vcombine.high %v4288, %v4296
        %v4299 = vcombine.low %v3905, %v3912
        %v4301 = vunpack.c.l.s4 1983009808
        %v4302 = vunpack.c.0.s8 %v4301
        %v4303 = vlaneseq
        %v4304 = vshrl.u32 %v4303, 7
        %v4305 = vsub.s32 %v4302, %v4304
        %v4306 = vrot.slane %v4299, %v4305
        %v4307 = vcombine.low %v3929, %v3930
        %v4309 = vunpack.c.l.s4 1983009808
        %v4310 = vunpack.c.0.s8 %v4309
        %v4311 = vlaneseq
        %v4312 = vshrl.u32 %v4311, 7
        %v4313 = vsub.s32 %v4310, %v4312
        %v4314 = vrot.slane %v4307, %v4313
        %v4315 = vcombine.low %v3921, %v3928
        %v4317 = vunpack.c.l.s4 1983009808
        %v4318 = vunpack.c.0.s8 %v4317
        %v4319 = vlaneseq
        %v4320 = vshrl.u32 %v4319, 7
        %v4321 = vsub.s32 %v4318, %v4320
        %v4322 = vrot.slane %v4315, %v4321
        %v4323 = vcombine.low %v3931, %v3932
        %v4325 = vunpack.c.l.s4 1983009808
        %v4326 = vunpack.c.0.s8 %v4325
        %v4327 = vlaneseq
        %v4328 = vshrl.u32 %v4327, 7
        %v4329 = vsub.s32 %v4326, %v4328
        %v4330 = vrot.slane %v4323, %v4329
        %v4331 = vcombine.low %v4306, %v4314
        %v4333 = vunpack.c.l.s4 1934713408
        %v4334 = vunpack.c.0.s8 %v4333
        %v4335 = vlaneseq
        %v4336 = vshrl.u32 %v4335, 7
        %v4337 = vsub.s32 %v4334, %v4336
        %v4338 = vrot.slane %v4331, %v4337
        %v4339 = vcombine.low %v4322, %v4330
        %v4341 = vunpack.c.l.s4 1934713408
        %v4342 = vunpack.c.0.s8 %v4341
        %v4343 = vlaneseq
        %v4344 = vshrl.u32 %v4343, 7
        %v4345 = vsub.s32 %v4342, %v4344
        %v4346 = vrot.slane %v4339, %v4345
        %v4347 = vcombine.low %v4338, %v4346
        %v4348 = vcombine.high %v4338, %v4346
        %v4349 = vcombine.low %v3971, %v3978
        %v4351 = vunpack.c.l.s4 1983009808
        %v4352 = vunpack.c.0.s8 %v4351
        %v4353 = vlaneseq
        %v4354 = vshrl.u32 %v4353, 7
        %v4355 = vsub.s32 %v4352, %v4354
        %v4356 = vrot.slane %v4349, %v4355
        %v4357 = vcombine.low %v3995, %v3996
        %v4359 = vunpack.c.l.s4 1983009808
        %v4360 = vunpack.c.0.s8 %v4359
        %v4361 = vlaneseq
        %v4362 = vshrl.u32 %v4361, 7
        %v4363 = vsub.s32 %v4360, %v4362
        %v4364 = vrot.slane %v4357, %v4363
        %v4365 = vcombine.low %v3987, %v3994
        %v4367 = vunpack.c.l.s4 1983009808
        %v4368 = vunpack.c.0.s8 %v4367
        %v4369 = vlaneseq
        %v4370 = vshrl.u32 %v4369, 7
        %v4371 = vsub.s32 %v4368, %v4370
        %v4372 = vrot.slane %v4365, %v4371
        %v4373 = vcombine.low %v3997, %v3998
        %v4375 = vunpack.c.l.s4 1983009808
        %v4376 = vunpack.c.0.s8 %v4375
        %v4377 = vlaneseq
        %v4378 = vshrl.u32 %v4377, 7
        %v4379 = vsub.s32 %v4376, %v4378
        %v4380 = vrot.slane %v4373, %v4379
        %v4381 = vcombine.low %v4356, %v4364
        %v4383 = vunpack.c.l.s4 1934713408
        %v4384 = vunpack.c.0.s8 %v4383
        %v4385 = vlaneseq
        %v4386 = vshrl.u32 %v4385, 7
        %v4387 = vsub.s32 %v4384, %v4386
        %v4388 = vrot.slane %v4381, %v4387
        %v4389 = vcombine.low %v4372, %v4380
        %v4391 = vunpack.c.l.s4 1934713408
        %v4392 = vunpack.c.0.s8 %v4391
        %v4393 = vlaneseq
        %v4394 = vshrl.u32 %v4393, 7
        %v4395 = vsub.s32 %v4392, %v4394
        %v4396 = vrot.slane %v4389, %v4395
        %v4397 = vcombine.low %v4388, %v4396
        %v4398 = vcombine.high %v4388, %v4396
        %v4401 = vpack.i.b16 %v4097, %v4047
        %v4403 = vshrl.u32 %v4047, 16
        %v4404 = vshrl.u32 %v4097, 16
        %v4405 = vpack.i.b16 %v4404, %v4403
        %v4409 = vpack.i.b16 %v4098, %v4048
        %v4411 = vshrl.u32 %v4048, 16
        %v4412 = vshrl.u32 %v4098, 16
        %v4413 = vpack.i.b16 %v4412, %v4411
        %v4417 = vpack.i.b16 %v4197, %v4147
        %v4419 = vshrl.u32 %v4147, 16
        %v4420 = vshrl.u32 %v4197, 16
        %v4421 = vpack.i.b16 %v4420, %v4419
        %v4425 = vpack.i.b16 %v4198, %v4148
        %v4427 = vshrl.u32 %v4148, 16
        %v4428 = vshrl.u32 %v4198, 16
        %v4429 = vpack.i.b16 %v4428, %v4427
        %v4433 = vpack.i.b16 %v4297, %v4247
        %v4435 = vshrl.u32 %v4247, 16
        %v4436 = vshrl.u32 %v4297, 16
        %v4437 = vpack.i.b16 %v4436, %v4435
        %v4441 = vpack.i.b16 %v4298, %v4248
        %v4443 = vshrl.u32 %v4248, 16
        %v4444 = vshrl.u32 %v4298, 16
        %v4445 = vpack.i.b16 %v4444, %v4443
        %v4449 = vpack.i.b16 %v4397, %v4347
        %v4451 = vshrl.u32 %v4347, 16
        %v4452 = vshrl.u32 %v4397, 16
        %v4453 = vpack.i.b16 %v4452, %v4451
        %v4457 = vpack.i.b16 %v4398, %v4348
        %v4459 = vshrl.u32 %v4348, 16
        %v4460 = vshrl.u32 %v4398, 16
        %v4461 = vpack.i.b16 %v4460, %v4459
        %vm4463 = vcmask 64512
        %v4465 = vsel %vm4463, %v2257, 0
        %v4468 = vsel %vm4463, %v2269, 0
        %v4471 = vsel %vm4463, %v3329, 0
        %v4474 = vsel %vm4463, %v3341, 0
        %4476 = vmatprep.subr.bf16.mxu0 0
        %4477 = vmatpush1.bf16.xpose.msra.mxu0 %v4471
        %4478 = vmatprep.subr.bf16.mxu0 0
        %4479 = vmatpush1.bf16.xpose.msra.mxu0 %v4474
        %4480 = vmatprep.subr.bf16.mxu0 0
        %4481 = vmatpush1.bf16.xpose.msra.mxu0 0
        %4482 = vmatprep.subr.bf16.mxu0 0
        %4483 = vmatpush1.bf16.xpose.msra.mxu0 0
        %4484 = vmatprep.subr.bf16.mxu0 0
        %4485 = vmatpush1.bf16.xpose.msra.mxu0 0
        %4486 = vmatprep.subr.bf16.mxu0 0
        %4487 = vmatpush1.bf16.xpose.msra.mxu0 0
        %4488 = vmatprep.subr.bf16.mxu0 0
        %4489 = vmatpush1.bf16.xpose.msra.mxu0 0
        %4490 = vmatprep.subr.bf16.mxu0 0
        %4491 = vmatpush1.bf16.xpose.msra.mxu0 0
        %4492 = vmatprep.subr.bf16.mxu0 0
        %4493 = vmatpush1.bf16.xpose.msra.mxu0 0
        %4494 = vmatprep.subr.bf16.mxu0 0
        %4495 = vmatpush1.bf16.xpose.msra.mxu0 0
        %4496 = vmatprep.subr.bf16.mxu0 0
        %4497 = vmatpush1.bf16.xpose.msra.mxu0 0
        %4498 = vmatprep.subr.bf16.mxu0 0
        %4499 = vmatpush1.bf16.xpose.msra.mxu0 0
        %4500 = vmatprep.subr.bf16.mxu0 0
        %4501 = vmatpush1.bf16.xpose.msra.mxu0 0
        %4502 = vmatprep.subr.bf16.mxu0 0
        %4503 = vmatpush1.bf16.xpose.msra.mxu0 0
        %4504 = vmatprep.subr.bf16.mxu0 0
        %4505 = vmatpush1.bf16.xpose.msra.mxu0 0
        %4506 = vmatprep.subr.bf16.mxu0 0
        %4507 = vmatpush1.bf16.xpose.msra.mxu0 0
        %4508 = vmatprep.mubr.bf16.mxu0 0
        %4509 = vmatmul.mubr.bf16.gmra.mrb[0].mxu0 %v4465
        %v4510 = vpop.f32.mrb[0].mxu0
        %v4511 = vadd.f32 0.0, %v4510
        %v4512 = vpop.f32.mrb[0].mxu0
        %v4513 = vpop.f32.mrb[0].mxu0
        %v4514 = vadd.f32 0.0, %v4513
        %v4515 = vpop.f32.mrb[0].mxu0
        %4516 = vmatprep.mubr.bf16.mxu0 0
        %4517 = vmatmul.mubr.bf16.gmra.mrb[0].mxu0 %v4468
        %v4518 = vpop.f32.mrb[0].mxu0
        %v4519 = vadd.f32 0.0, %v4518
        %v4520 = vpop.f32.mrb[0].mxu0
        %v4521 = vpop.f32.mrb[0].mxu0
        %v4522 = vadd.f32 0.0, %v4521
        %v4523 = vpop.f32.mrb[0].mxu0
        %4524 = vdwg.mxu0
        %v4526 = vsel %vm4463, %v2260, 0
        %v4529 = vsel %vm4463, %v2272, 0
        %v4532 = vsel %vm4463, %v3332, 0
        %v4535 = vsel %vm4463, %v3344, 0
        %4537 = vmatprep.subr.bf16.mxu0 0
        %4538 = vmatpush1.bf16.xpose.msra.mxu0 %v4532
        %4539 = vmatprep.subr.bf16.mxu0 0
        %4540 = vmatpush1.bf16.xpose.msra.mxu0 %v4535
        %4541 = vmatprep.subr.bf16.mxu0 0
        %4542 = vmatpush1.bf16.xpose.msra.mxu0 0
        %4543 = vmatprep.subr.bf16.mxu0 0
        %4544 = vmatpush1.bf16.xpose.msra.mxu0 0
        %4545 = vmatprep.subr.bf16.mxu0 0
        %4546 = vmatpush1.bf16.xpose.msra.mxu0 0
        %4547 = vmatprep.subr.bf16.mxu0 0
        %4548 = vmatpush1.bf16.xpose.msra.mxu0 0
        %4549 = vmatprep.subr.bf16.mxu0 0
        %4550 = vmatpush1.bf16.xpose.msra.mxu0 0
        %4551 = vmatprep.subr.bf16.mxu0 0
        %4552 = vmatpush1.bf16.xpose.msra.mxu0 0
        %4553 = vmatprep.subr.bf16.mxu0 0
        %4554 = vmatpush1.bf16.xpose.msra.mxu0 0
        %4555 = vmatprep.subr.bf16.mxu0 0
        %4556 = vmatpush1.bf16.xpose.msra.mxu0 0
        %4557 = vmatprep.subr.bf16.mxu0 0
        %4558 = vmatpush1.bf16.xpose.msra.mxu0 0
        %4559 = vmatprep.subr.bf16.mxu0 0
        %4560 = vmatpush1.bf16.xpose.msra.mxu0 0
        %4561 = vmatprep.subr.bf16.mxu0 0
        %4562 = vmatpush1.bf16.xpose.msra.mxu0 0
        %4563 = vmatprep.subr.bf16.mxu0 0
        %4564 = vmatpush1.bf16.xpose.msra.mxu0 0
        %4565 = vmatprep.subr.bf16.mxu0 0
        %4566 = vmatpush1.bf16.xpose.msra.mxu0 0
        %4567 = vmatprep.subr.bf16.mxu0 0
        %4568 = vmatpush1.bf16.xpose.msra.mxu0 0
        %4569 = vmatprep.mubr.bf16.mxu0 0
        %4570 = vmatmul.mubr.bf16.gmra.mrb[0].mxu0 %v4526
        %v4571 = vpop.f32.mrb[0].mxu0
        %v4572 = vadd.f32 0.0, %v4571
        %v4573 = vpop.f32.mrb[0].mxu0
        %v4574 = vpop.f32.mrb[0].mxu0
        %v4575 = vadd.f32 0.0, %v4574
        %v4576 = vpop.f32.mrb[0].mxu0
        %4577 = vmatprep.mubr.bf16.mxu0 0
        %4578 = vmatmul.mubr.bf16.gmra.mrb[0].mxu0 %v4529
        %v4579 = vpop.f32.mrb[0].mxu0
        %v4580 = vadd.f32 0.0, %v4579
        %v4581 = vpop.f32.mrb[0].mxu0
        %v4582 = vpop.f32.mrb[0].mxu0
        %v4583 = vadd.f32 0.0, %v4582
        %v4584 = vpop.f32.mrb[0].mxu0
        %4585 = vdwg.mxu0
        %v4587 = vsel %vm4463, %v2263, 0
        %v4590 = vsel %vm4463, %v2275, 0
        %v4593 = vsel %vm4463, %v3335, 0
        %v4596 = vsel %vm4463, %v3347, 0
        %4598 = vmatprep.subr.bf16.mxu0 0
        %4599 = vmatpush1.bf16.xpose.msra.mxu0 %v4593
        %4600 = vmatprep.subr.bf16.mxu0 0
        %4601 = vmatpush1.bf16.xpose.msra.mxu0 %v4596
        %4602 = vmatprep.subr.bf16.mxu0 0
        %4603 = vmatpush1.bf16.xpose.msra.mxu0 0
        %4604 = vmatprep.subr.bf16.mxu0 0
        %4605 = vmatpush1.bf16.xpose.msra.mxu0 0
        %4606 = vmatprep.subr.bf16.mxu0 0
        %4607 = vmatpush1.bf16.xpose.msra.mxu0 0
        %4608 = vmatprep.subr.bf16.mxu0 0
        %4609 = vmatpush1.bf16.xpose.msra.mxu0 0
        %4610 = vmatprep.subr.bf16.mxu0 0
        %4611 = vmatpush1.bf16.xpose.msra.mxu0 0
        %4612 = vmatprep.subr.bf16.mxu0 0
        %4613 = vmatpush1.bf16.xpose.msra.mxu0 0
        %4614 = vmatprep.subr.bf16.mxu0 0
        %4615 = vmatpush1.bf16.xpose.msra.mxu0 0
        %4616 = vmatprep.subr.bf16.mxu0 0
        %4617 = vmatpush1.bf16.xpose.msra.mxu0 0
        %4618 = vmatprep.subr.bf16.mxu0 0
        %4619 = vmatpush1.bf16.xpose.msra.mxu0 0
        %4620 = vmatprep.subr.bf16.mxu0 0
        %4621 = vmatpush1.bf16.xpose.msra.mxu0 0
        %4622 = vmatprep.subr.bf16.mxu0 0
        %4623 = vmatpush1.bf16.xpose.msra.mxu0 0
        %4624 = vmatprep.subr.bf16.mxu0 0
        %4625 = vmatpush1.bf16.xpose.msra.mxu0 0
        %4626 = vmatprep.subr.bf16.mxu0 0
        %4627 = vmatpush1.bf16.xpose.msra.mxu0 0
        %4628 = vmatprep.subr.bf16.mxu0 0
        %4629 = vmatpush1.bf16.xpose.msra.mxu0 0
        %4630 = vmatprep.mubr.bf16.mxu0 0
        %4631 = vmatmul.mubr.bf16.gmra.mrb[0].mxu0 %v4587
        %v4632 = vpop.f32.mrb[0].mxu0
        %v4633 = vadd.f32 0.0, %v4632
        %v4634 = vpop.f32.mrb[0].mxu0
        %v4635 = vpop.f32.mrb[0].mxu0
        %v4636 = vadd.f32 0.0, %v4635
        %v4637 = vpop.f32.mrb[0].mxu0
        %4638 = vmatprep.mubr.bf16.mxu0 0
        %4639 = vmatmul.mubr.bf16.gmra.mrb[0].mxu0 %v4590
        %v4640 = vpop.f32.mrb[0].mxu0
        %v4641 = vadd.f32 0.0, %v4640
        %v4642 = vpop.f32.mrb[0].mxu0
        %v4643 = vpop.f32.mrb[0].mxu0
        %v4644 = vadd.f32 0.0, %v4643
        %v4645 = vpop.f32.mrb[0].mxu0
        %4646 = vdwg.mxu0
        %v4648 = vsel %vm4463, %v2266, 0
        %v4651 = vsel %vm4463, %v2278, 0
        %v4654 = vsel %vm4463, %v3338, 0
        %v4657 = vsel %vm4463, %v3350, 0
        %4659 = vmatprep.subr.bf16.mxu0 0
        %4660 = vmatpush1.bf16.xpose.msra.mxu0 %v4654
        %4661 = vmatprep.subr.bf16.mxu0 0
        %4662 = vmatpush1.bf16.xpose.msra.mxu0 %v4657
        %4663 = vmatprep.subr.bf16.mxu0 0
        %4664 = vmatpush1.bf16.xpose.msra.mxu0 0
        %4665 = vmatprep.subr.bf16.mxu0 0
        %4666 = vmatpush1.bf16.xpose.msra.mxu0 0
        %4667 = vmatprep.subr.bf16.mxu0 0
        %4668 = vmatpush1.bf16.xpose.msra.mxu0 0
        %4669 = vmatprep.subr.bf16.mxu0 0
        %4670 = vmatpush1.bf16.xpose.msra.mxu0 0
        %4671 = vmatprep.subr.bf16.mxu0 0
        %4672 = vmatpush1.bf16.xpose.msra.mxu0 0
        %4673 = vmatprep.subr.bf16.mxu0 0
        %4674 = vmatpush1.bf16.xpose.msra.mxu0 0
        %4675 = vmatprep.subr.bf16.mxu0 0
        %4676 = vmatpush1.bf16.xpose.msra.mxu0 0
        %4677 = vmatprep.subr.bf16.mxu0 0
        %4678 = vmatpush1.bf16.xpose.msra.mxu0 0
        %4679 = vmatprep.subr.bf16.mxu0 0
        %4680 = vmatpush1.bf16.xpose.msra.mxu0 0
        %4681 = vmatprep.subr.bf16.mxu0 0
        %4682 = vmatpush1.bf16.xpose.msra.mxu0 0
        %4683 = vmatprep.subr.bf16.mxu0 0
        %4684 = vmatpush1.bf16.xpose.msra.mxu0 0
        %4685 = vmatprep.subr.bf16.mxu0 0
        %4686 = vmatpush1.bf16.xpose.msra.mxu0 0
        %4687 = vmatprep.subr.bf16.mxu0 0
        %4688 = vmatpush1.bf16.xpose.msra.mxu0 0
        %4689 = vmatprep.subr.bf16.mxu0 0
        %4690 = vmatpush1.bf16.xpose.msra.mxu0 0
        %4691 = vmatprep.mubr.bf16.mxu0 0
        %4692 = vmatmul.mubr.bf16.gmra.mrb[0].mxu0 %v4648
        %v4693 = vpop.f32.mrb[0].mxu0
        %v4694 = vadd.f32 0.0, %v4693
        %v4695 = vpop.f32.mrb[0].mxu0
        %v4696 = vpop.f32.mrb[0].mxu0
        %v4697 = vadd.f32 0.0, %v4696
        %v4698 = vpop.f32.mrb[0].mxu0
        %4699 = vmatprep.mubr.bf16.mxu0 0
        %4700 = vmatmul.mubr.bf16.gmra.mrb[0].mxu0 %v4651
        %v4701 = vpop.f32.mrb[0].mxu0
        %v4702 = vadd.f32 0.0, %v4701
        %v4703 = vpop.f32.mrb[0].mxu0
        %v4704 = vpop.f32.mrb[0].mxu0
        %v4705 = vadd.f32 0.0, %v4704
        %v4706 = vpop.f32.mrb[0].mxu0
        %4707 = vdwg.mxu0
        %v4709 = vsel %vm4463, %v2281, 0
        %v4712 = vsel %vm4463, %v2293, 0
        %v4715 = vsel %vm4463, %v3353, 0
        %v4718 = vsel %vm4463, %v3365, 0
        %4720 = vmatprep.subr.bf16.mxu0 0
        %4721 = vmatpush1.bf16.xpose.msra.mxu0 %v4715
        %4722 = vmatprep.subr.bf16.mxu0 0
        %4723 = vmatpush1.bf16.xpose.msra.mxu0 %v4718
        %4724 = vmatprep.subr.bf16.mxu0 0
        %4725 = vmatpush1.bf16.xpose.msra.mxu0 0
        %4726 = vmatprep.subr.bf16.mxu0 0
        %4727 = vmatpush1.bf16.xpose.msra.mxu0 0
        %4728 = vmatprep.subr.bf16.mxu0 0
        %4729 = vmatpush1.bf16.xpose.msra.mxu0 0
        %4730 = vmatprep.subr.bf16.mxu0 0
        %4731 = vmatpush1.bf16.xpose.msra.mxu0 0
        %4732 = vmatprep.subr.bf16.mxu0 0
        %4733 = vmatpush1.bf16.xpose.msra.mxu0 0
        %4734 = vmatprep.subr.bf16.mxu0 0
        %4735 = vmatpush1.bf16.xpose.msra.mxu0 0
        %4736 = vmatprep.subr.bf16.mxu0 0
        %4737 = vmatpush1.bf16.xpose.msra.mxu0 0
        %4738 = vmatprep.subr.bf16.mxu0 0
        %4739 = vmatpush1.bf16.xpose.msra.mxu0 0
        %4740 = vmatprep.subr.bf16.mxu0 0
        %4741 = vmatpush1.bf16.xpose.msra.mxu0 0
        %4742 = vmatprep.subr.bf16.mxu0 0
        %4743 = vmatpush1.bf16.xpose.msra.mxu0 0
        %4744 = vmatprep.subr.bf16.mxu0 0
        %4745 = vmatpush1.bf16.xpose.msra.mxu0 0
        %4746 = vmatprep.subr.bf16.mxu0 0
        %4747 = vmatpush1.bf16.xpose.msra.mxu0 0
        %4748 = vmatprep.subr.bf16.mxu0 0
        %4749 = vmatpush1.bf16.xpose.msra.mxu0 0
        %4750 = vmatprep.subr.bf16.mxu0 0
        %4751 = vmatpush1.bf16.xpose.msra.mxu0 0
        %4752 = vmatprep.mubr.bf16.mxu0 0
        %4753 = vmatmul.mubr.bf16.gmra.mrb[0].mxu0 %v4709
        %v4754 = vpop.f32.mrb[0].mxu0
        %v4755 = vadd.f32 0.0, %v4754
        %v4756 = vpop.f32.mrb[0].mxu0
        %v4757 = vpop.f32.mrb[0].mxu0
        %v4758 = vadd.f32 0.0, %v4757
        %v4759 = vpop.f32.mrb[0].mxu0
        %4760 = vmatprep.mubr.bf16.mxu0 0
        %4761 = vmatmul.mubr.bf16.gmra.mrb[0].mxu0 %v4712
        %v4762 = vpop.f32.mrb[0].mxu0
        %v4763 = vadd.f32 0.0, %v4762
        %v4764 = vpop.f32.mrb[0].mxu0
        %v4765 = vpop.f32.mrb[0].mxu0
        %v4766 = vadd.f32 0.0, %v4765
        %v4767 = vpop.f32.mrb[0].mxu0
        %4768 = vdwg.mxu0
        %v4770 = vsel %vm4463, %v2284, 0
        %v4773 = vsel %vm4463, %v2296, 0
        %v4776 = vsel %vm4463, %v3356, 0
        %v4779 = vsel %vm4463, %v3368, 0
        %4781 = vmatprep.subr.bf16.mxu0 0
        %4782 = vmatpush1.bf16.xpose.msra.mxu0 %v4776
        %4783 = vmatprep.subr.bf16.mxu0 0
        %4784 = vmatpush1.bf16.xpose.msra.mxu0 %v4779
        %4785 = vmatprep.subr.bf16.mxu0 0
        %4786 = vmatpush1.bf16.xpose.msra.mxu0 0
        %4787 = vmatprep.subr.bf16.mxu0 0
        %4788 = vmatpush1.bf16.xpose.msra.mxu0 0
        %4789 = vmatprep.subr.bf16.mxu0 0
        %4790 = vmatpush1.bf16.xpose.msra.mxu0 0
        %4791 = vmatprep.subr.bf16.mxu0 0
        %4792 = vmatpush1.bf16.xpose.msra.mxu0 0
        %4793 = vmatprep.subr.bf16.mxu0 0
        %4794 = vmatpush1.bf16.xpose.msra.mxu0 0
        %4795 = vmatprep.subr.bf16.mxu0 0
        %4796 = vmatpush1.bf16.xpose.msra.mxu0 0
        %4797 = vmatprep.subr.bf16.mxu0 0
        %4798 = vmatpush1.bf16.xpose.msra.mxu0 0
        %4799 = vmatprep.subr.bf16.mxu0 0
        %4800 = vmatpush1.bf16.xpose.msra.mxu0 0
        %4801 = vmatprep.subr.bf16.mxu0 0
        %4802 = vmatpush1.bf16.xpose.msra.mxu0 0
        %4803 = vmatprep.subr.bf16.mxu0 0
        %4804 = vmatpush1.bf16.xpose.msra.mxu0 0
        %4805 = vmatprep.subr.bf16.mxu0 0
        %4806 = vmatpush1.bf16.xpose.msra.mxu0 0
        %4807 = vmatprep.subr.bf16.mxu0 0
        %4808 = vmatpush1.bf16.xpose.msra.mxu0 0
        %4809 = vmatprep.subr.bf16.mxu0 0
        %4810 = vmatpush1.bf16.xpose.msra.mxu0 0
        %4811 = vmatprep.subr.bf16.mxu0 0
        %4812 = vmatpush1.bf16.xpose.msra.mxu0 0
        %4813 = vmatprep.mubr.bf16.mxu0 0
        %4814 = vmatmul.mubr.bf16.gmra.mrb[0].mxu0 %v4770
        %v4815 = vpop.f32.mrb[0].mxu0
        %v4816 = vadd.f32 0.0, %v4815
        %v4817 = vpop.f32.mrb[0].mxu0
        %v4818 = vpop.f32.mrb[0].mxu0
        %v4819 = vadd.f32 0.0, %v4818
        %v4820 = vpop.f32.mrb[0].mxu0
        %4821 = vmatprep.mubr.bf16.mxu0 0
        %4822 = vmatmul.mubr.bf16.gmra.mrb[0].mxu0 %v4773
        %v4823 = vpop.f32.mrb[0].mxu0
        %v4824 = vadd.f32 0.0, %v4823
        %v4825 = vpop.f32.mrb[0].mxu0
        %v4826 = vpop.f32.mrb[0].mxu0
        %v4827 = vadd.f32 0.0, %v4826
        %v4828 = vpop.f32.mrb[0].mxu0
        %4829 = vdwg.mxu0
        %v4831 = vsel %vm4463, %v2287, 0
        %v4834 = vsel %vm4463, %v2299, 0
        %v4837 = vsel %vm4463, %v3359, 0
        %v4840 = vsel %vm4463, %v3371, 0
        %4842 = vmatprep.subr.bf16.mxu0 0
        %4843 = vmatpush1.bf16.xpose.msra.mxu0 %v4837
        %4844 = vmatprep.subr.bf16.mxu0 0
        %4845 = vmatpush1.bf16.xpose.msra.mxu0 %v4840
        %4846 = vmatprep.subr.bf16.mxu0 0
        %4847 = vmatpush1.bf16.xpose.msra.mxu0 0
        %4848 = vmatprep.subr.bf16.mxu0 0
        %4849 = vmatpush1.bf16.xpose.msra.mxu0 0
        %4850 = vmatprep.subr.bf16.mxu0 0
        %4851 = vmatpush1.bf16.xpose.msra.mxu0 0
        %4852 = vmatprep.subr.bf16.mxu0 0
        %4853 = vmatpush1.bf16.xpose.msra.mxu0 0
        %4854 = vmatprep.subr.bf16.mxu0 0
        %4855 = vmatpush1.bf16.xpose.msra.mxu0 0
        %4856 = vmatprep.subr.bf16.mxu0 0
        %4857 = vmatpush1.bf16.xpose.msra.mxu0 0
        %4858 = vmatprep.subr.bf16.mxu0 0
        %4859 = vmatpush1.bf16.xpose.msra.mxu0 0
        %4860 = vmatprep.subr.bf16.mxu0 0
        %4861 = vmatpush1.bf16.xpose.msra.mxu0 0
        %4862 = vmatprep.subr.bf16.mxu0 0
        %4863 = vmatpush1.bf16.xpose.msra.mxu0 0
        %4864 = vmatprep.subr.bf16.mxu0 0
        %4865 = vmatpush1.bf16.xpose.msra.mxu0 0
        %4866 = vmatprep.subr.bf16.mxu0 0
        %4867 = vmatpush1.bf16.xpose.msra.mxu0 0
        %4868 = vmatprep.subr.bf16.mxu0 0
        %4869 = vmatpush1.bf16.xpose.msra.mxu0 0
        %4870 = vmatprep.subr.bf16.mxu0 0
        %4871 = vmatpush1.bf16.xpose.msra.mxu0 0
        %4872 = vmatprep.subr.bf16.mxu0 0
        %4873 = vmatpush1.bf16.xpose.msra.mxu0 0
        %4874 = vmatprep.mubr.bf16.mxu0 0
        %4875 = vmatmul.mubr.bf16.gmra.mrb[0].mxu0 %v4831
        %v4876 = vpop.f32.mrb[0].mxu0
        %v4877 = vadd.f32 0.0, %v4876
        %v4878 = vpop.f32.mrb[0].mxu0
        %v4879 = vpop.f32.mrb[0].mxu0
        %v4880 = vadd.f32 0.0, %v4879
        %v4881 = vpop.f32.mrb[0].mxu0
        %4882 = vmatprep.mubr.bf16.mxu0 0
        %4883 = vmatmul.mubr.bf16.gmra.mrb[0].mxu0 %v4834
        %v4884 = vpop.f32.mrb[0].mxu0
        %v4885 = vadd.f32 0.0, %v4884
        %v4886 = vpop.f32.mrb[0].mxu0
        %v4887 = vpop.f32.mrb[0].mxu0
        %v4888 = vadd.f32 0.0, %v4887
        %v4889 = vpop.f32.mrb[0].mxu0
        %4890 = vdwg.mxu0
        %v4892 = vsel %vm4463, %v2290, 0
        %v4895 = vsel %vm4463, %v2302, 0
        %v4898 = vsel %vm4463, %v3362, 0
        %v4901 = vsel %vm4463, %v3374, 0
        %4903 = vmatprep.subr.bf16.mxu0 0
        %4904 = vmatpush1.bf16.xpose.msra.mxu0 %v4898
        %4905 = vmatprep.subr.bf16.mxu0 0
        %4906 = vmatpush1.bf16.xpose.msra.mxu0 %v4901
        %4907 = vmatprep.subr.bf16.mxu0 0
        %4908 = vmatpush1.bf16.xpose.msra.mxu0 0
        %4909 = vmatprep.subr.bf16.mxu0 0
        %4910 = vmatpush1.bf16.xpose.msra.mxu0 0
        %4911 = vmatprep.subr.bf16.mxu0 0
        %4912 = vmatpush1.bf16.xpose.msra.mxu0 0
        %4913 = vmatprep.subr.bf16.mxu0 0
        %4914 = vmatpush1.bf16.xpose.msra.mxu0 0
        %4915 = vmatprep.subr.bf16.mxu0 0
        %4916 = vmatpush1.bf16.xpose.msra.mxu0 0
        %4917 = vmatprep.subr.bf16.mxu0 0
        %4918 = vmatpush1.bf16.xpose.msra.mxu0 0
        %4919 = vmatprep.subr.bf16.mxu0 0
        %4920 = vmatpush1.bf16.xpose.msra.mxu0 0
        %4921 = vmatprep.subr.bf16.mxu0 0
        %4922 = vmatpush1.bf16.xpose.msra.mxu0 0
        %4923 = vmatprep.subr.bf16.mxu0 0
        %4924 = vmatpush1.bf16.xpose.msra.mxu0 0
        %4925 = vmatprep.subr.bf16.mxu0 0
        %4926 = vmatpush1.bf16.xpose.msra.mxu0 0
        %4927 = vmatprep.subr.bf16.mxu0 0
        %4928 = vmatpush1.bf16.xpose.msra.mxu0 0
        %4929 = vmatprep.subr.bf16.mxu0 0
        %4930 = vmatpush1.bf16.xpose.msra.mxu0 0
        %4931 = vmatprep.subr.bf16.mxu0 0
        %4932 = vmatpush1.bf16.xpose.msra.mxu0 0
        %4933 = vmatprep.subr.bf16.mxu0 0
        %4934 = vmatpush1.bf16.xpose.msra.mxu0 0
        %4935 = vmatprep.mubr.bf16.mxu0 0
        %4936 = vmatmul.mubr.bf16.gmra.mrb[0].mxu0 %v4892
        %v4937 = vpop.f32.mrb[0].mxu0
        %v4938 = vadd.f32 0.0, %v4937
        %v4939 = vpop.f32.mrb[0].mxu0
        %v4940 = vpop.f32.mrb[0].mxu0
        %v4941 = vadd.f32 0.0, %v4940
        %v4942 = vpop.f32.mrb[0].mxu0
        %4943 = vmatprep.mubr.bf16.mxu0 0
        %4944 = vmatmul.mubr.bf16.gmra.mrb[0].mxu0 %v4895
        %v4945 = vpop.f32.mrb[0].mxu0
        %v4946 = vadd.f32 0.0, %v4945
        %v4947 = vpop.f32.mrb[0].mxu0
        %v4948 = vpop.f32.mrb[0].mxu0
        %v4949 = vadd.f32 0.0, %v4948
        %v4950 = vpop.f32.mrb[0].mxu0
        %4951 = vdwg.mxu0
        %v4952 = vlaneseq
        %v4953 = vand.u32 %v4952, 127
        %vm4954 = vcmp.lt.s32.totalorder %v4953, 17
        %v4955 = vsel %vm4954, %v4511, -1e+30
        %v4956 = vsel %vm4954, %v4514, -1e+30
        %v4957 = vsel %vm4954, %v4519, -1e+30
        %v4958 = vsel %vm4954, %v4522, -1e+30
        %v4959 = vsel %vm4954, %v4572, -1e+30
        %v4960 = vsel %vm4954, %v4575, -1e+30
        %v4961 = vsel %vm4954, %v4580, -1e+30
        %v4962 = vsel %vm4954, %v4583, -1e+30
        %v4963 = vsel %vm4954, %v4633, -1e+30
        %v4964 = vsel %vm4954, %v4636, -1e+30
        %v4965 = vsel %vm4954, %v4641, -1e+30
        %v4966 = vsel %vm4954, %v4644, -1e+30
        %v4967 = vsel %vm4954, %v4694, -1e+30
        %v4968 = vsel %vm4954, %v4697, -1e+30
        %v4969 = vsel %vm4954, %v4702, -1e+30
        %v4970 = vsel %vm4954, %v4705, -1e+30
        %v4971 = vsel %vm4954, %v4755, -1e+30
        %v4972 = vsel %vm4954, %v4758, -1e+30
        %v4973 = vsel %vm4954, %v4763, -1e+30
        %v4974 = vsel %vm4954, %v4766, -1e+30
        %v4975 = vsel %vm4954, %v4816, -1e+30
        %v4976 = vsel %vm4954, %v4819, -1e+30
        %v4977 = vsel %vm4954, %v4824, -1e+30
        %v4978 = vsel %vm4954, %v4827, -1e+30
        %v4979 = vsel %vm4954, %v4877, -1e+30
        %v4980 = vsel %vm4954, %v4880, -1e+30
        %v4981 = vsel %vm4954, %v4885, -1e+30
        %v4982 = vsel %vm4954, %v4888, -1e+30
        %v4983 = vsel %vm4954, %v4938, -1e+30
        %v4984 = vsel %vm4954, %v4941, -1e+30
        %v4985 = vsel %vm4954, %v4946, -1e+30
        %v4986 = vsel %vm4954, %v4949, -1e+30
        %v4987 = vsel %vm987, %v4955, -inf
        %4988 = vmax.xlane.f32.xlu0 %v4987
        %v4989 = vpop.xlane.xlu0 %4988
        %v4990 = vsel %vm987, %v4956, -inf
        %4991 = vmax.xlane.f32.xlu0 %v4990
        %v4992 = vpop.xlane.xlu0 %4991
        %v4993 = vsel %vm987, %v4957, -inf
        %4994 = vmax.xlane.f32.xlu0 %v4993
        %v4995 = vpop.xlane.xlu0 %4994
        %v4996 = vsel %vm987, %v4958, -inf
        %4997 = vmax.xlane.f32.xlu0 %v4996
        %v4998 = vpop.xlane.xlu0 %4997
        %v4999 = vsel %vm987, %v4959, -inf
        %5000 = vmax.xlane.f32.xlu0 %v4999
        %v5001 = vpop.xlane.xlu0 %5000
        %v5002 = vsel %vm987, %v4960, -inf
        %5003 = vmax.xlane.f32.xlu0 %v5002
        %v5004 = vpop.xlane.xlu0 %5003
        %v5005 = vsel %vm987, %v4961, -inf
        %5006 = vmax.xlane.f32.xlu0 %v5005
        %v5007 = vpop.xlane.xlu0 %5006
        %v5008 = vsel %vm987, %v4962, -inf
        %5009 = vmax.xlane.f32.xlu0 %v5008
        %v5010 = vpop.xlane.xlu0 %5009
        %v5011 = vsel %vm987, %v4963, -inf
        %5012 = vmax.xlane.f32.xlu0 %v5011
        %v5013 = vpop.xlane.xlu0 %5012
        %v5014 = vsel %vm987, %v4964, -inf
        %5015 = vmax.xlane.f32.xlu0 %v5014
        %v5016 = vpop.xlane.xlu0 %5015
        %v5017 = vsel %vm987, %v4965, -inf
        %5018 = vmax.xlane.f32.xlu0 %v5017
        %v5019 = vpop.xlane.xlu0 %5018
        %v5020 = vsel %vm987, %v4966, -inf
        %5021 = vmax.xlane.f32.xlu0 %v5020
        %v5022 = vpop.xlane.xlu0 %5021
        %v5023 = vsel %vm987, %v4967, -inf
        %5024 = vmax.xlane.f32.xlu0 %v5023
        %v5025 = vpop.xlane.xlu0 %5024
        %v5026 = vsel %vm987, %v4968, -inf
        %5027 = vmax.xlane.f32.xlu0 %v5026
        %v5028 = vpop.xlane.xlu0 %5027
        %v5029 = vsel %vm987, %v4969, -inf
        %5030 = vmax.xlane.f32.xlu0 %v5029
        %v5031 = vpop.xlane.xlu0 %5030
        %v5032 = vsel %vm987, %v4970, -inf
        %5033 = vmax.xlane.f32.xlu0 %v5032
        %v5034 = vpop.xlane.xlu0 %5033
        %v5035 = vsel %vm987, %v4971, -inf
        %5036 = vmax.xlane.f32.xlu0 %v5035
        %v5037 = vpop.xlane.xlu0 %5036
        %v5038 = vsel %vm987, %v4972, -inf
        %5039 = vmax.xlane.f32.xlu0 %v5038
        %v5040 = vpop.xlane.xlu0 %5039
        %v5041 = vsel %vm987, %v4973, -inf
        %5042 = vmax.xlane.f32.xlu0 %v5041
        %v5043 = vpop.xlane.xlu0 %5042
        %v5044 = vsel %vm987, %v4974, -inf
        %5045 = vmax.xlane.f32.xlu0 %v5044
        %v5046 = vpop.xlane.xlu0 %5045
        %v5047 = vsel %vm987, %v4975, -inf
        %5048 = vmax.xlane.f32.xlu0 %v5047
        %v5049 = vpop.xlane.xlu0 %5048
        %v5050 = vsel %vm987, %v4976, -inf
        %5051 = vmax.xlane.f32.xlu0 %v5050
        %v5052 = vpop.xlane.xlu0 %5051
        %v5053 = vsel %vm987, %v4977, -inf
        %5054 = vmax.xlane.f32.xlu0 %v5053
        %v5055 = vpop.xlane.xlu0 %5054
        %v5056 = vsel %vm987, %v4978, -inf
        %5057 = vmax.xlane.f32.xlu0 %v5056
        %v5058 = vpop.xlane.xlu0 %5057
        %v5059 = vsel %vm987, %v4979, -inf
        %5060 = vmax.xlane.f32.xlu0 %v5059
        %v5061 = vpop.xlane.xlu0 %5060
        %v5062 = vsel %vm987, %v4980, -inf
        %5063 = vmax.xlane.f32.xlu0 %v5062
        %v5064 = vpop.xlane.xlu0 %5063
        %v5065 = vsel %vm987, %v4981, -inf
        %5066 = vmax.xlane.f32.xlu0 %v5065
        %v5067 = vpop.xlane.xlu0 %5066
        %v5068 = vsel %vm987, %v4982, -inf
        %5069 = vmax.xlane.f32.xlu0 %v5068
        %v5070 = vpop.xlane.xlu0 %5069
        %v5071 = vsel %vm987, %v4983, -inf
        %5072 = vmax.xlane.f32.xlu0 %v5071
        %v5073 = vpop.xlane.xlu0 %5072
        %v5074 = vsel %vm987, %v4984, -inf
        %5075 = vmax.xlane.f32.xlu0 %v5074
        %v5076 = vpop.xlane.xlu0 %5075
        %v5077 = vsel %vm987, %v4985, -inf
        %5078 = vmax.xlane.f32.xlu0 %v5077
        %v5079 = vpop.xlane.xlu0 %5078
        %v5080 = vsel %vm987, %v4986, -inf
        %5081 = vmax.xlane.f32.xlu0 %v5080
        %v5082 = vpop.xlane.xlu0 %5081
        %v5083 = vsub.f32 %v4955, %v4989
        %v5084 = vsub.f32 %v4956, %v4992
        %v5085 = vsub.f32 %v4957, %v4995
        %v5086 = vsub.f32 %v4958, %v4998
        %v5087 = vsub.f32 %v4959, %v5001
        %v5088 = vsub.f32 %v4960, %v5004
        %v5089 = vsub.f32 %v4961, %v5007
        %v5090 = vsub.f32 %v4962, %v5010
        %v5091 = vsub.f32 %v4963, %v5013
        %v5092 = vsub.f32 %v4964, %v5016
        %v5093 = vsub.f32 %v4965, %v5019
        %v5094 = vsub.f32 %v4966, %v5022
        %v5095 = vsub.f32 %v4967, %v5025
        %v5096 = vsub.f32 %v4968, %v5028
        %v5097 = vsub.f32 %v4969, %v5031
        %v5098 = vsub.f32 %v4970, %v5034
        %v5099 = vsub.f32 %v4971, %v5037
        %v5100 = vsub.f32 %v4972, %v5040
        %v5101 = vsub.f32 %v4973, %v5043
        %v5102 = vsub.f32 %v4974, %v5046
        %v5103 = vsub.f32 %v4975, %v5049
        %v5104 = vsub.f32 %v4976, %v5052
        %v5105 = vsub.f32 %v4977, %v5055
        %v5106 = vsub.f32 %v4978, %v5058
        %v5107 = vsub.f32 %v4979, %v5061
        %v5108 = vsub.f32 %v4980, %v5064
        %v5109 = vsub.f32 %v4981, %v5067
        %v5110 = vsub.f32 %v4982, %v5070
        %v5111 = vsub.f32 %v4983, %v5073
        %v5112 = vsub.f32 %v4984, %v5076
        %v5113 = vsub.f32 %v4985, %v5079
        %v5114 = vsub.f32 %v4986, %v5082
        %v5115 = vmul.f32 %v5083, 1.442695
        %v5116 = vpow.pop %v5115
        %v5117 = vmul.f32 %v5084, 1.442695
        %v5118 = vpow.pop %v5117
        %v5119 = vmul.f32 %v5085, 1.442695
        %v5120 = vpow.pop %v5119
        %v5121 = vmul.f32 %v5086, 1.442695
        %v5122 = vpow.pop %v5121
        %v5123 = vmul.f32 %v5087, 1.442695
        %v5124 = vpow.pop %v5123
        %v5125 = vmul.f32 %v5088, 1.442695
        %v5126 = vpow.pop %v5125
        %v5127 = vmul.f32 %v5089, 1.442695
        %v5128 = vpow.pop %v5127
        %v5129 = vmul.f32 %v5090, 1.442695
        %v5130 = vpow.pop %v5129
        %v5131 = vmul.f32 %v5091, 1.442695
        %v5132 = vpow.pop %v5131
        %v5133 = vmul.f32 %v5092, 1.442695
        %v5134 = vpow.pop %v5133
        %v5135 = vmul.f32 %v5093, 1.442695
        %v5136 = vpow.pop %v5135
        %v5137 = vmul.f32 %v5094, 1.442695
        %v5138 = vpow.pop %v5137
        %v5139 = vmul.f32 %v5095, 1.442695
        %v5140 = vpow.pop %v5139
        %v5141 = vmul.f32 %v5096, 1.442695
        %v5142 = vpow.pop %v5141
        %v5143 = vmul.f32 %v5097, 1.442695
        %v5144 = vpow.pop %v5143
        %v5145 = vmul.f32 %v5098, 1.442695
        %v5146 = vpow.pop %v5145
        %v5147 = vmul.f32 %v5099, 1.442695
        %v5148 = vpow.pop %v5147
        %v5149 = vmul.f32 %v5100, 1.442695
        %v5150 = vpow.pop %v5149
        %v5151 = vmul.f32 %v5101, 1.442695
        %v5152 = vpow.pop %v5151
        %v5153 = vmul.f32 %v5102, 1.442695
        %v5154 = vpow.pop %v5153
        %v5155 = vmul.f32 %v5103, 1.442695
        %v5156 = vpow.pop %v5155
        %v5157 = vmul.f32 %v5104, 1.442695
        %v5158 = vpow.pop %v5157
        %v5159 = vmul.f32 %v5105, 1.442695
        %v5160 = vpow.pop %v5159
        %v5161 = vmul.f32 %v5106, 1.442695
        %v5162 = vpow.pop %v5161
        %v5163 = vmul.f32 %v5107, 1.442695
        %v5164 = vpow.pop %v5163
        %v5165 = vmul.f32 %v5108, 1.442695
        %v5166 = vpow.pop %v5165
        %v5167 = vmul.f32 %v5109, 1.442695
        %v5168 = vpow.pop %v5167
        %v5169 = vmul.f32 %v5110, 1.442695
        %v5170 = vpow.pop %v5169
        %v5171 = vmul.f32 %v5111, 1.442695
        %v5172 = vpow.pop %v5171
        %v5173 = vmul.f32 %v5112, 1.442695
        %v5174 = vpow.pop %v5173
        %v5175 = vmul.f32 %v5113, 1.442695
        %v5176 = vpow.pop %v5175
        %v5177 = vmul.f32 %v5114, 1.442695
        %v5178 = vpow.pop %v5177
        %v5179 = vsel %vm987, %v5116, 0.0
        %5180 = vadd.xlane.f32.xlu0 %v5179
        %v5181 = vpop.xlane.xlu0 %5180
        %v5182 = vsel %vm987, %v5118, 0.0
        %5183 = vadd.xlane.f32.xlu0 %v5182
        %v5184 = vpop.xlane.xlu0 %5183
        %v5185 = vsel %vm987, %v5120, 0.0
        %5186 = vadd.xlane.f32.xlu0 %v5185
        %v5187 = vpop.xlane.xlu0 %5186
        %v5188 = vsel %vm987, %v5122, 0.0
        %5189 = vadd.xlane.f32.xlu0 %v5188
        %v5190 = vpop.xlane.xlu0 %5189
        %v5191 = vsel %vm987, %v5124, 0.0
        %5192 = vadd.xlane.f32.xlu0 %v5191
        %v5193 = vpop.xlane.xlu0 %5192
        %v5194 = vsel %vm987, %v5126, 0.0
        %5195 = vadd.xlane.f32.xlu0 %v5194
        %v5196 = vpop.xlane.xlu0 %5195
        %v5197 = vsel %vm987, %v5128, 0.0
        %5198 = vadd.xlane.f32.xlu0 %v5197
        %v5199 = vpop.xlane.xlu0 %5198
        %v5200 = vsel %vm987, %v5130, 0.0
        %5201 = vadd.xlane.f32.xlu0 %v5200
        %v5202 = vpop.xlane.xlu0 %5201
        %v5203 = vsel %vm987, %v5132, 0.0
        %5204 = vadd.xlane.f32.xlu0 %v5203
        %v5205 = vpop.xlane.xlu0 %5204
        %v5206 = vsel %vm987, %v5134, 0.0
        %5207 = vadd.xlane.f32.xlu0 %v5206
        %v5208 = vpop.xlane.xlu0 %5207
        %v5209 = vsel %vm987, %v5136, 0.0
        %5210 = vadd.xlane.f32.xlu0 %v5209
        %v5211 = vpop.xlane.xlu0 %5210
        %v5212 = vsel %vm987, %v5138, 0.0
        %5213 = vadd.xlane.f32.xlu0 %v5212
        %v5214 = vpop.xlane.xlu0 %5213
        %v5215 = vsel %vm987, %v5140, 0.0
        %5216 = vadd.xlane.f32.xlu0 %v5215
        %v5217 = vpop.xlane.xlu0 %5216
        %v5218 = vsel %vm987, %v5142, 0.0
        %5219 = vadd.xlane.f32.xlu0 %v5218
        %v5220 = vpop.xlane.xlu0 %5219
        %v5221 = vsel %vm987, %v5144, 0.0
        %5222 = vadd.xlane.f32.xlu0 %v5221
        %v5223 = vpop.xlane.xlu0 %5222
        %v5224 = vsel %vm987, %v5146, 0.0
        %5225 = vadd.xlane.f32.xlu0 %v5224
        %v5226 = vpop.xlane.xlu0 %5225
        %v5227 = vsel %vm987, %v5148, 0.0
        %5228 = vadd.xlane.f32.xlu0 %v5227
        %v5229 = vpop.xlane.xlu0 %5228
        %v5230 = vsel %vm987, %v5150, 0.0
        %5231 = vadd.xlane.f32.xlu0 %v5230
        %v5232 = vpop.xlane.xlu0 %5231
        %v5233 = vsel %vm987, %v5152, 0.0
        %5234 = vadd.xlane.f32.xlu0 %v5233
        %v5235 = vpop.xlane.xlu0 %5234
        %v5236 = vsel %vm987, %v5154, 0.0
        %5237 = vadd.xlane.f32.xlu0 %v5236
        %v5238 = vpop.xlane.xlu0 %5237
        %v5239 = vsel %vm987, %v5156, 0.0
        %5240 = vadd.xlane.f32.xlu0 %v5239
        %v5241 = vpop.xlane.xlu0 %5240
        %v5242 = vsel %vm987, %v5158, 0.0
        %5243 = vadd.xlane.f32.xlu0 %v5242
        %v5244 = vpop.xlane.xlu0 %5243
        %v5245 = vsel %vm987, %v5160, 0.0
        %5246 = vadd.xlane.f32.xlu0 %v5245
        %v5247 = vpop.xlane.xlu0 %5246
        %v5248 = vsel %vm987, %v5162, 0.0
        %5249 = vadd.xlane.f32.xlu0 %v5248
        %v5250 = vpop.xlane.xlu0 %5249
        %v5251 = vsel %vm987, %v5164, 0.0
        %5252 = vadd.xlane.f32.xlu0 %v5251
        %v5253 = vpop.xlane.xlu0 %5252
        %v5254 = vsel %vm987, %v5166, 0.0
        %5255 = vadd.xlane.f32.xlu0 %v5254
        %v5256 = vpop.xlane.xlu0 %5255
        %v5257 = vsel %vm987, %v5168, 0.0
        %5258 = vadd.xlane.f32.xlu0 %v5257
        %v5259 = vpop.xlane.xlu0 %5258
        %v5260 = vsel %vm987, %v5170, 0.0
        %5261 = vadd.xlane.f32.xlu0 %v5260
        %v5262 = vpop.xlane.xlu0 %5261
        %v5263 = vsel %vm987, %v5172, 0.0
        %5264 = vadd.xlane.f32.xlu0 %v5263
        %v5265 = vpop.xlane.xlu0 %5264
        %v5266 = vsel %vm987, %v5174, 0.0
        %5267 = vadd.xlane.f32.xlu0 %v5266
        %v5268 = vpop.xlane.xlu0 %5267
        %v5269 = vsel %vm987, %v5176, 0.0
        %5270 = vadd.xlane.f32.xlu0 %v5269
        %v5271 = vpop.xlane.xlu0 %5270
        %v5272 = vsel %vm987, %v5178, 0.0
        %5273 = vadd.xlane.f32.xlu0 %v5272
        %v5274 = vpop.xlane.xlu0 %5273
        %v5275 = vrcp.pop %v5181
        %v5276 = vrcp.pop %v5184
        %v5277 = vrcp.pop %v5187
        %v5278 = vrcp.pop %v5190
        %v5279 = vrcp.pop %v5193
        %v5280 = vrcp.pop %v5196
        %v5281 = vrcp.pop %v5199
        %v5282 = vrcp.pop %v5202
        %v5283 = vrcp.pop %v5205
        %v5284 = vrcp.pop %v5208
        %v5285 = vrcp.pop %v5211
        %v5286 = vrcp.pop %v5214
        %v5287 = vrcp.pop %v5217
        %v5288 = vrcp.pop %v5220
        %v5289 = vrcp.pop %v5223
        %v5290 = vrcp.pop %v5226
        %v5291 = vrcp.pop %v5229
        %v5292 = vrcp.pop %v5232
        %v5293 = vrcp.pop %v5235
        %v5294 = vrcp.pop %v5238
        %v5295 = vrcp.pop %v5241
        %v5296 = vrcp.pop %v5244
        %v5297 = vrcp.pop %v5247
        %v5298 = vrcp.pop %v5250
        %v5299 = vrcp.pop %v5253
        %v5300 = vrcp.pop %v5256
        %v5301 = vrcp.pop %v5259
        %v5302 = vrcp.pop %v5262
        %v5303 = vrcp.pop %v5265
        %v5304 = vrcp.pop %v5268
        %v5305 = vrcp.pop %v5271
        %v5306 = vrcp.pop %v5274
        %v5307 = vmul.f32 %v5116, %v5275
        %v5308 = vmul.f32 %v5118, %v5276
        %v5309 = vmul.f32 %v5120, %v5277
        %v5310 = vmul.f32 %v5122, %v5278
        %v5311 = vmul.f32 %v5124, %v5279
        %v5312 = vmul.f32 %v5126, %v5280
        %v5313 = vmul.f32 %v5128, %v5281
        %v5314 = vmul.f32 %v5130, %v5282
        %v5315 = vmul.f32 %v5132, %v5283
        %v5316 = vmul.f32 %v5134, %v5284
        %v5317 = vmul.f32 %v5136, %v5285
        %v5318 = vmul.f32 %v5138, %v5286
        %v5319 = vmul.f32 %v5140, %v5287
        %v5320 = vmul.f32 %v5142, %v5288
        %v5321 = vmul.f32 %v5144, %v5289
        %v5322 = vmul.f32 %v5146, %v5290
        %v5323 = vmul.f32 %v5148, %v5291
        %v5324 = vmul.f32 %v5150, %v5292
        %v5325 = vmul.f32 %v5152, %v5293
        %v5326 = vmul.f32 %v5154, %v5294
        %v5327 = vmul.f32 %v5156, %v5295
        %v5328 = vmul.f32 %v5158, %v5296
        %v5329 = vmul.f32 %v5160, %v5297
        %v5330 = vmul.f32 %v5162, %v5298
        %v5331 = vmul.f32 %v5164, %v5299
        %v5332 = vmul.f32 %v5166, %v5300
        %v5333 = vmul.f32 %v5168, %v5301
        %v5334 = vmul.f32 %v5170, %v5302
        %v5335 = vmul.f32 %v5172, %v5303
        %v5336 = vmul.f32 %v5174, %v5304
        %v5337 = vmul.f32 %v5176, %v5305
        %v5338 = vmul.f32 %v5178, %v5306
        %v5339 = vpack.c.bf16 %v5308, %v5307
        %v5340 = vpack.c.bf16 %v5310, %v5309
        %v5341 = vpack.c.bf16 %v5312, %v5311
        %v5342 = vpack.c.bf16 %v5314, %v5313
        %v5343 = vpack.c.bf16 %v5316, %v5315
        %v5344 = vpack.c.bf16 %v5318, %v5317
        %v5345 = vpack.c.bf16 %v5320, %v5319
        %v5346 = vpack.c.bf16 %v5322, %v5321
        %v5347 = vpack.c.bf16 %v5324, %v5323
        %v5348 = vpack.c.bf16 %v5326, %v5325
        %v5349 = vpack.c.bf16 %v5328, %v5327
        %v5350 = vpack.c.bf16 %v5330, %v5329
        %v5351 = vpack.c.bf16 %v5332, %v5331
        %v5352 = vpack.c.bf16 %v5334, %v5333
        %v5353 = vpack.c.bf16 %v5336, %v5335
        %v5354 = vpack.c.bf16 %v5338, %v5337
        %v5356 = vsel %vm987, %v5339, 0
        %v5359 = vsel %vm987, %v5340, 0
        %5361 = vmatprep.subr.bf16.mxu0 0
        %5362 = vmatpush1.bf16.msra.mxu0 %v4401
        %5363 = vmatprep.subr.bf16.mxu0 0
        %5364 = vmatpush1.bf16.msra.mxu0 %v4417
        %5365 = vmatprep.subr.bf16.mxu0 0
        %5366 = vmatpush1.bf16.msra.mxu0 0
        %5367 = vmatprep.subr.bf16.mxu0 0
        %5368 = vmatpush1.bf16.msra.mxu0 0
        %5369 = vmatprep.subr.bf16.mxu0 0
        %5370 = vmatpush1.bf16.msra.mxu0 0
        %5371 = vmatprep.subr.bf16.mxu0 0
        %5372 = vmatpush1.bf16.msra.mxu0 0
        %5373 = vmatprep.subr.bf16.mxu0 0
        %5374 = vmatpush1.bf16.msra.mxu0 0
        %5375 = vmatprep.subr.bf16.mxu0 0
        %5376 = vmatpush1.bf16.msra.mxu0 0
        %5377 = vmatprep.subr.bf16.mxu0 0
        %5378 = vmatpush1.bf16.msra.mxu0 0
        %5379 = vmatprep.subr.bf16.mxu0 0
        %5380 = vmatpush1.bf16.msra.mxu0 0
        %5381 = vmatprep.subr.bf16.mxu0 0
        %5382 = vmatpush1.bf16.msra.mxu0 0
        %5383 = vmatprep.subr.bf16.mxu0 0
        %5384 = vmatpush1.bf16.msra.mxu0 0
        %5385 = vmatprep.subr.bf16.mxu0 0
        %5386 = vmatpush1.bf16.msra.mxu0 0
        %5387 = vmatprep.subr.bf16.mxu0 0
        %5388 = vmatpush1.bf16.msra.mxu0 0
        %5389 = vmatprep.subr.bf16.mxu0 0
        %5390 = vmatpush1.bf16.msra.mxu0 0
        %5391 = vmatprep.subr.bf16.mxu0 0
        %5392 = vmatpush1.bf16.msra.mxu0 0
        %5393 = vmatprep.mubr.bf16.mxu0 0
        %5394 = vmatmul.mubr.bf16.gmra.mrb[0].mxu0 %v5356
        %v5395 = vpop.f32.mrb[0].mxu0
        %v5396 = vadd.f32 0.0, %v5395
        %v5397 = vpop.f32.mrb[0].mxu0
        %v5398 = vpop.f32.mrb[0].mxu0
        %v5399 = vadd.f32 0.0, %v5398
        %v5400 = vpop.f32.mrb[0].mxu0
        %5401 = vmatprep.mubr.bf16.mxu0 0
        %5402 = vmatmul.mubr.bf16.gmra.mrb[0].mxu0 %v5359
        %v5403 = vpop.f32.mrb[0].mxu0
        %v5404 = vadd.f32 0.0, %v5403
        %v5405 = vpop.f32.mrb[0].mxu0
        %v5406 = vpop.f32.mrb[0].mxu0
        %v5407 = vadd.f32 0.0, %v5406
        %v5408 = vpop.f32.mrb[0].mxu0
        %5409 = vdwg.mxu0
        %v5411 = vsel %vm987, %v5341, 0
        %v5414 = vsel %vm987, %v5342, 0
        %5416 = vmatprep.subr.bf16.mxu0 0
        %5417 = vmatpush1.bf16.msra.mxu0 %v4405
        %5418 = vmatprep.subr.bf16.mxu0 0
        %5419 = vmatpush1.bf16.msra.mxu0 %v4421
        %5420 = vmatprep.subr.bf16.mxu0 0
        %5421 = vmatpush1.bf16.msra.mxu0 0
        %5422 = vmatprep.subr.bf16.mxu0 0
        %5423 = vmatpush1.bf16.msra.mxu0 0
        %5424 = vmatprep.subr.bf16.mxu0 0
        %5425 = vmatpush1.bf16.msra.mxu0 0
        %5426 = vmatprep.subr.bf16.mxu0 0
        %5427 = vmatpush1.bf16.msra.mxu0 0
        %5428 = vmatprep.subr.bf16.mxu0 0
        %5429 = vmatpush1.bf16.msra.mxu0 0
        %5430 = vmatprep.subr.bf16.mxu0 0
        %5431 = vmatpush1.bf16.msra.mxu0 0
        %5432 = vmatprep.subr.bf16.mxu0 0
        %5433 = vmatpush1.bf16.msra.mxu0 0
        %5434 = vmatprep.subr.bf16.mxu0 0
        %5435 = vmatpush1.bf16.msra.mxu0 0
        %5436 = vmatprep.subr.bf16.mxu0 0
        %5437 = vmatpush1.bf16.msra.mxu0 0
        %5438 = vmatprep.subr.bf16.mxu0 0
        %5439 = vmatpush1.bf16.msra.mxu0 0
        %5440 = vmatprep.subr.bf16.mxu0 0
        %5441 = vmatpush1.bf16.msra.mxu0 0
        %5442 = vmatprep.subr.bf16.mxu0 0
        %5443 = vmatpush1.bf16.msra.mxu0 0
        %5444 = vmatprep.subr.bf16.mxu0 0
        %5445 = vmatpush1.bf16.msra.mxu0 0
        %5446 = vmatprep.subr.bf16.mxu0 0
        %5447 = vmatpush1.bf16.msra.mxu0 0
        %5448 = vmatprep.mubr.bf16.mxu0 0
        %5449 = vmatmul.mubr.bf16.gmra.mrb[0].mxu0 %v5411
        %v5450 = vpop.f32.mrb[0].mxu0
        %v5451 = vadd.f32 0.0, %v5450
        %v5452 = vpop.f32.mrb[0].mxu0
        %v5453 = vpop.f32.mrb[0].mxu0
        %v5454 = vadd.f32 0.0, %v5453
        %v5455 = vpop.f32.mrb[0].mxu0
        %5456 = vmatprep.mubr.bf16.mxu0 0
        %5457 = vmatmul.mubr.bf16.gmra.mrb[0].mxu0 %v5414
        %v5458 = vpop.f32.mrb[0].mxu0
        %v5459 = vadd.f32 0.0, %v5458
        %v5460 = vpop.f32.mrb[0].mxu0
        %v5461 = vpop.f32.mrb[0].mxu0
        %v5462 = vadd.f32 0.0, %v5461
        %v5463 = vpop.f32.mrb[0].mxu0
        %5464 = vdwg.mxu0
        %v5466 = vsel %vm987, %v5343, 0
        %v5469 = vsel %vm987, %v5344, 0
        %5471 = vmatprep.subr.bf16.mxu0 0
        %5472 = vmatpush1.bf16.msra.mxu0 %v4409
        %5473 = vmatprep.subr.bf16.mxu0 0
        %5474 = vmatpush1.bf16.msra.mxu0 %v4425
        %5475 = vmatprep.subr.bf16.mxu0 0
        %5476 = vmatpush1.bf16.msra.mxu0 0
        %5477 = vmatprep.subr.bf16.mxu0 0
        %5478 = vmatpush1.bf16.msra.mxu0 0
        %5479 = vmatprep.subr.bf16.mxu0 0
        %5480 = vmatpush1.bf16.msra.mxu0 0
        %5481 = vmatprep.subr.bf16.mxu0 0
        %5482 = vmatpush1.bf16.msra.mxu0 0
        %5483 = vmatprep.subr.bf16.mxu0 0
        %5484 = vmatpush1.bf16.msra.mxu0 0
        %5485 = vmatprep.subr.bf16.mxu0 0
        %5486 = vmatpush1.bf16.msra.mxu0 0
        %5487 = vmatprep.subr.bf16.mxu0 0
        %5488 = vmatpush1.bf16.msra.mxu0 0
        %5489 = vmatprep.subr.bf16.mxu0 0
        %5490 = vmatpush1.bf16.msra.mxu0 0
        %5491 = vmatprep.subr.bf16.mxu0 0
        %5492 = vmatpush1.bf16.msra.mxu0 0
        %5493 = vmatprep.subr.bf16.mxu0 0
        %5494 = vmatpush1.bf16.msra.mxu0 0
        %5495 = vmatprep.subr.bf16.mxu0 0
        %5496 = vmatpush1.bf16.msra.mxu0 0
        %5497 = vmatprep.subr.bf16.mxu0 0
        %5498 = vmatpush1.bf16.msra.mxu0 0
        %5499 = vmatprep.subr.bf16.mxu0 0
        %5500 = vmatpush1.bf16.msra.mxu0 0
        %5501 = vmatprep.subr.bf16.mxu0 0
        %5502 = vmatpush1.bf16.msra.mxu0 0
        %5503 = vmatprep.mubr.bf16.mxu0 0
        %5504 = vmatmul.mubr.bf16.gmra.mrb[0].mxu0 %v5466
        %v5505 = vpop.f32.mrb[0].mxu0
        %v5506 = vadd.f32 0.0, %v5505
        %v5507 = vpop.f32.mrb[0].mxu0
        %v5508 = vpop.f32.mrb[0].mxu0
        %v5509 = vadd.f32 0.0, %v5508
        %v5510 = vpop.f32.mrb[0].mxu0
        %5511 = vmatprep.mubr.bf16.mxu0 0
        %5512 = vmatmul.mubr.bf16.gmra.mrb[0].mxu0 %v5469
        %v5513 = vpop.f32.mrb[0].mxu0
        %v5514 = vadd.f32 0.0, %v5513
        %v5515 = vpop.f32.mrb[0].mxu0
        %v5516 = vpop.f32.mrb[0].mxu0
        %v5517 = vadd.f32 0.0, %v5516
        %v5518 = vpop.f32.mrb[0].mxu0
        %5519 = vdwg.mxu0
        %v5521 = vsel %vm987, %v5345, 0
        %v5524 = vsel %vm987, %v5346, 0
        %5526 = vmatprep.subr.bf16.mxu0 0
        %5527 = vmatpush1.bf16.msra.mxu0 %v4413
        %5528 = vmatprep.subr.bf16.mxu0 0
        %5529 = vmatpush1.bf16.msra.mxu0 %v4429
        %5530 = vmatprep.subr.bf16.mxu0 0
        %5531 = vmatpush1.bf16.msra.mxu0 0
        %5532 = vmatprep.subr.bf16.mxu0 0
        %5533 = vmatpush1.bf16.msra.mxu0 0
        %5534 = vmatprep.subr.bf16.mxu0 0
        %5535 = vmatpush1.bf16.msra.mxu0 0
        %5536 = vmatprep.subr.bf16.mxu0 0
        %5537 = vmatpush1.bf16.msra.mxu0 0
        %5538 = vmatprep.subr.bf16.mxu0 0
        %5539 = vmatpush1.bf16.msra.mxu0 0
        %5540 = vmatprep.subr.bf16.mxu0 0
        %5541 = vmatpush1.bf16.msra.mxu0 0
        %5542 = vmatprep.subr.bf16.mxu0 0
        %5543 = vmatpush1.bf16.msra.mxu0 0
        %5544 = vmatprep.subr.bf16.mxu0 0
        %5545 = vmatpush1.bf16.msra.mxu0 0
        %5546 = vmatprep.subr.bf16.mxu0 0
        %5547 = vmatpush1.bf16.msra.mxu0 0
        %5548 = vmatprep.subr.bf16.mxu0 0
        %5549 = vmatpush1.bf16.msra.mxu0 0
        %5550 = vmatprep.subr.bf16.mxu0 0
        %5551 = vmatpush1.bf16.msra.mxu0 0
        %5552 = vmatprep.subr.bf16.mxu0 0
        %5553 = vmatpush1.bf16.msra.mxu0 0
        %5554 = vmatprep.subr.bf16.mxu0 0
        %5555 = vmatpush1.bf16.msra.mxu0 0
        %5556 = vmatprep.subr.bf16.mxu0 0
        %5557 = vmatpush1.bf16.msra.mxu0 0
        %5558 = vmatprep.mubr.bf16.mxu0 0
        %5559 = vmatmul.mubr.bf16.gmra.mrb[0].mxu0 %v5521
        %v5560 = vpop.f32.mrb[0].mxu0
        %v5561 = vadd.f32 0.0, %v5560
        %v5562 = vpop.f32.mrb[0].mxu0
        %v5563 = vpop.f32.mrb[0].mxu0
        %v5564 = vadd.f32 0.0, %v5563
        %v5565 = vpop.f32.mrb[0].mxu0
        %5566 = vmatprep.mubr.bf16.mxu0 0
        %5567 = vmatmul.mubr.bf16.gmra.mrb[0].mxu0 %v5524
        %v5568 = vpop.f32.mrb[0].mxu0
        %v5569 = vadd.f32 0.0, %v5568
        %v5570 = vpop.f32.mrb[0].mxu0
        %v5571 = vpop.f32.mrb[0].mxu0
        %v5572 = vadd.f32 0.0, %v5571
        %v5573 = vpop.f32.mrb[0].mxu0
        %5574 = vdwg.mxu0
        %v5576 = vsel %vm987, %v5347, 0
        %v5579 = vsel %vm987, %v5348, 0
        %5581 = vmatprep.subr.bf16.mxu0 0
        %5582 = vmatpush1.bf16.msra.mxu0 %v4433
        %5583 = vmatprep.subr.bf16.mxu0 0
        %5584 = vmatpush1.bf16.msra.mxu0 %v4449
        %5585 = vmatprep.subr.bf16.mxu0 0
        %5586 = vmatpush1.bf16.msra.mxu0 0
        %5587 = vmatprep.subr.bf16.mxu0 0
        %5588 = vmatpush1.bf16.msra.mxu0 0
        %5589 = vmatprep.subr.bf16.mxu0 0
        %5590 = vmatpush1.bf16.msra.mxu0 0
        %5591 = vmatprep.subr.bf16.mxu0 0
        %5592 = vmatpush1.bf16.msra.mxu0 0
        %5593 = vmatprep.subr.bf16.mxu0 0
        %5594 = vmatpush1.bf16.msra.mxu0 0
        %5595 = vmatprep.subr.bf16.mxu0 0
        %5596 = vmatpush1.bf16.msra.mxu0 0
        %5597 = vmatprep.subr.bf16.mxu0 0
        %5598 = vmatpush1.bf16.msra.mxu0 0
        %5599 = vmatprep.subr.bf16.mxu0 0
        %5600 = vmatpush1.bf16.msra.mxu0 0
        %5601 = vmatprep.subr.bf16.mxu0 0
        %5602 = vmatpush1.bf16.msra.mxu0 0
        %5603 = vmatprep.subr.bf16.mxu0 0
        %5604 = vmatpush1.bf16.msra.mxu0 0
        %5605 = vmatprep.subr.bf16.mxu0 0
        %5606 = vmatpush1.bf16.msra.mxu0 0
        %5607 = vmatprep.subr.bf16.mxu0 0
        %5608 = vmatpush1.bf16.msra.mxu0 0
        %5609 = vmatprep.subr.bf16.mxu0 0
        %5610 = vmatpush1.bf16.msra.mxu0 0
        %5611 = vmatprep.subr.bf16.mxu0 0
        %5612 = vmatpush1.bf16.msra.mxu0 0
        %5613 = vmatprep.mubr.bf16.mxu0 0
        %5614 = vmatmul.mubr.bf16.gmra.mrb[0].mxu0 %v5576
        %v5615 = vpop.f32.mrb[0].mxu0
        %v5616 = vadd.f32 0.0, %v5615
        %v5617 = vpop.f32.mrb[0].mxu0
        %v5618 = vpop.f32.mrb[0].mxu0
        %v5619 = vadd.f32 0.0, %v5618
        %v5620 = vpop.f32.mrb[0].mxu0
        %5621 = vmatprep.mubr.bf16.mxu0 0
        %5622 = vmatmul.mubr.bf16.gmra.mrb[0].mxu0 %v5579
        %v5623 = vpop.f32.mrb[0].mxu0
        %v5624 = vadd.f32 0.0, %v5623
        %v5625 = vpop.f32.mrb[0].mxu0
        %v5626 = vpop.f32.mrb[0].mxu0
        %v5627 = vadd.f32 0.0, %v5626
        %v5628 = vpop.f32.mrb[0].mxu0
        %5629 = vdwg.mxu0
        %v5631 = vsel %vm987, %v5349, 0
        %v5634 = vsel %vm987, %v5350, 0
        %5636 = vmatprep.subr.bf16.mxu0 0
        %5637 = vmatpush1.bf16.msra.mxu0 %v4437
        %5638 = vmatprep.subr.bf16.mxu0 0
        %5639 = vmatpush1.bf16.msra.mxu0 %v4453
        %5640 = vmatprep.subr.bf16.mxu0 0
        %5641 = vmatpush1.bf16.msra.mxu0 0
        %5642 = vmatprep.subr.bf16.mxu0 0
        %5643 = vmatpush1.bf16.msra.mxu0 0
        %5644 = vmatprep.subr.bf16.mxu0 0
        %5645 = vmatpush1.bf16.msra.mxu0 0
        %5646 = vmatprep.subr.bf16.mxu0 0
        %5647 = vmatpush1.bf16.msra.mxu0 0
        %5648 = vmatprep.subr.bf16.mxu0 0
        %5649 = vmatpush1.bf16.msra.mxu0 0
        %5650 = vmatprep.subr.bf16.mxu0 0
        %5651 = vmatpush1.bf16.msra.mxu0 0
        %5652 = vmatprep.subr.bf16.mxu0 0
        %5653 = vmatpush1.bf16.msra.mxu0 0
        %5654 = vmatprep.subr.bf16.mxu0 0
        %5655 = vmatpush1.bf16.msra.mxu0 0
        %5656 = vmatprep.subr.bf16.mxu0 0
        %5657 = vmatpush1.bf16.msra.mxu0 0
        %5658 = vmatprep.subr.bf16.mxu0 0
        %5659 = vmatpush1.bf16.msra.mxu0 0
        %5660 = vmatprep.subr.bf16.mxu0 0
        %5661 = vmatpush1.bf16.msra.mxu0 0
        %5662 = vmatprep.subr.bf16.mxu0 0
        %5663 = vmatpush1.bf16.msra.mxu0 0
        %5664 = vmatprep.subr.bf16.mxu0 0
        %5665 = vmatpush1.bf16.msra.mxu0 0
        %5666 = vmatprep.subr.bf16.mxu0 0
        %5667 = vmatpush1.bf16.msra.mxu0 0
        %5668 = vmatprep.mubr.bf16.mxu0 0
        %5669 = vmatmul.mubr.bf16.gmra.mrb[0].mxu0 %v5631
        %v5670 = vpop.f32.mrb[0].mxu0
        %v5671 = vadd.f32 0.0, %v5670
        %v5672 = vpop.f32.mrb[0].mxu0
        %v5673 = vpop.f32.mrb[0].mxu0
        %v5674 = vadd.f32 0.0, %v5673
        %v5675 = vpop.f32.mrb[0].mxu0
        %5676 = vmatprep.mubr.bf16.mxu0 0
        %5677 = vmatmul.mubr.bf16.gmra.mrb[0].mxu0 %v5634
        %v5678 = vpop.f32.mrb[0].mxu0
        %v5679 = vadd.f32 0.0, %v5678
        %v5680 = vpop.f32.mrb[0].mxu0
        %v5681 = vpop.f32.mrb[0].mxu0
        %v5682 = vadd.f32 0.0, %v5681
        %v5683 = vpop.f32.mrb[0].mxu0
        %5684 = vdwg.mxu0
        %v5686 = vsel %vm987, %v5351, 0
        %v5689 = vsel %vm987, %v5352, 0
        %5691 = vmatprep.subr.bf16.mxu0 0
        %5692 = vmatpush1.bf16.msra.mxu0 %v4441
        %5693 = vmatprep.subr.bf16.mxu0 0
        %5694 = vmatpush1.bf16.msra.mxu0 %v4457
        %5695 = vmatprep.subr.bf16.mxu0 0
        %5696 = vmatpush1.bf16.msra.mxu0 0
        %5697 = vmatprep.subr.bf16.mxu0 0
        %5698 = vmatpush1.bf16.msra.mxu0 0
        %5699 = vmatprep.subr.bf16.mxu0 0
        %5700 = vmatpush1.bf16.msra.mxu0 0
        %5701 = vmatprep.subr.bf16.mxu0 0
        %5702 = vmatpush1.bf16.msra.mxu0 0
        %5703 = vmatprep.subr.bf16.mxu0 0
        %5704 = vmatpush1.bf16.msra.mxu0 0
        %5705 = vmatprep.subr.bf16.mxu0 0
        %5706 = vmatpush1.bf16.msra.mxu0 0
        %5707 = vmatprep.subr.bf16.mxu0 0
        %5708 = vmatpush1.bf16.msra.mxu0 0
        %5709 = vmatprep.subr.bf16.mxu0 0
        %5710 = vmatpush1.bf16.msra.mxu0 0
        %5711 = vmatprep.subr.bf16.mxu0 0
        %5712 = vmatpush1.bf16.msra.mxu0 0
        %5713 = vmatprep.subr.bf16.mxu0 0
        %5714 = vmatpush1.bf16.msra.mxu0 0
        %5715 = vmatprep.subr.bf16.mxu0 0
        %5716 = vmatpush1.bf16.msra.mxu0 0
        %5717 = vmatprep.subr.bf16.mxu0 0
        %5718 = vmatpush1.bf16.msra.mxu0 0
        %5719 = vmatprep.subr.bf16.mxu0 0
        %5720 = vmatpush1.bf16.msra.mxu0 0
        %5721 = vmatprep.subr.bf16.mxu0 0
        %5722 = vmatpush1.bf16.msra.mxu0 0
        %5723 = vmatprep.mubr.bf16.mxu0 0
        %5724 = vmatmul.mubr.bf16.gmra.mrb[0].mxu0 %v5686
        %v5725 = vpop.f32.mrb[0].mxu0
        %v5726 = vadd.f32 0.0, %v5725
        %v5727 = vpop.f32.mrb[0].mxu0
        %v5728 = vpop.f32.mrb[0].mxu0
        %v5729 = vadd.f32 0.0, %v5728
        %v5730 = vpop.f32.mrb[0].mxu0
        %5731 = vmatprep.mubr.bf16.mxu0 0
        %5732 = vmatmul.mubr.bf16.gmra.mrb[0].mxu0 %v5689
        %v5733 = vpop.f32.mrb[0].mxu0
        %v5734 = vadd.f32 0.0, %v5733
        %v5735 = vpop.f32.mrb[0].mxu0
        %v5736 = vpop.f32.mrb[0].mxu0
        %v5737 = vadd.f32 0.0, %v5736
        %v5738 = vpop.f32.mrb[0].mxu0
        %5739 = vdwg.mxu0
        %v5741 = vsel %vm987, %v5353, 0
        %v5744 = vsel %vm987, %v5354, 0
        %5746 = vmatprep.subr.bf16.mxu0 0
        %5747 = vmatpush1.bf16.msra.mxu0 %v4445
        %5748 = vmatprep.subr.bf16.mxu0 0
        %5749 = vmatpush1.bf16.msra.mxu0 %v4461
        %5750 = vmatprep.subr.bf16.mxu0 0
        %5751 = vmatpush1.bf16.msra.mxu0 0
        %5752 = vmatprep.subr.bf16.mxu0 0
        %5753 = vmatpush1.bf16.msra.mxu0 0
        %5754 = vmatprep.subr.bf16.mxu0 0
        %5755 = vmatpush1.bf16.msra.mxu0 0
        %5756 = vmatprep.subr.bf16.mxu0 0
        %5757 = vmatpush1.bf16.msra.mxu0 0
        %5758 = vmatprep.subr.bf16.mxu0 0
        %5759 = vmatpush1.bf16.msra.mxu0 0
        %5760 = vmatprep.subr.bf16.mxu0 0
        %5761 = vmatpush1.bf16.msra.mxu0 0
        %5762 = vmatprep.subr.bf16.mxu0 0
        %5763 = vmatpush1.bf16.msra.mxu0 0
        %5764 = vmatprep.subr.bf16.mxu0 0
        %5765 = vmatpush1.bf16.msra.mxu0 0
        %5766 = vmatprep.subr.bf16.mxu0 0
        %5767 = vmatpush1.bf16.msra.mxu0 0
        %5768 = vmatprep.subr.bf16.mxu0 0
        %5769 = vmatpush1.bf16.msra.mxu0 0
        %5770 = vmatprep.subr.bf16.mxu0 0
        %5771 = vmatpush1.bf16.msra.mxu0 0
        %5772 = vmatprep.subr.bf16.mxu0 0
        %5773 = vmatpush1.bf16.msra.mxu0 0
        %5774 = vmatprep.subr.bf16.mxu0 0
        %5775 = vmatpush1.bf16.msra.mxu0 0
        %5776 = vmatprep.subr.bf16.mxu0 0
        %5777 = vmatpush1.bf16.msra.mxu0 0
        %5778 = vmatprep.mubr.bf16.mxu0 0
        %5779 = vmatmul.mubr.bf16.gmra.mrb[0].mxu0 %v5741
        %v5780 = vpop.f32.mrb[0].mxu0
        %v5781 = vadd.f32 0.0, %v5780
        %v5782 = vpop.f32.mrb[0].mxu0
        %v5783 = vpop.f32.mrb[0].mxu0
        %v5784 = vadd.f32 0.0, %v5783
        %v5785 = vpop.f32.mrb[0].mxu0
        %5786 = vmatprep.mubr.bf16.mxu0 0
        %5787 = vmatmul.mubr.bf16.gmra.mrb[0].mxu0 %v5744
        %v5788 = vpop.f32.mrb[0].mxu0
        %v5789 = vadd.f32 0.0, %v5788
        %v5790 = vpop.f32.mrb[0].mxu0
        %v5791 = vpop.f32.mrb[0].mxu0
        %v5792 = vadd.f32 0.0, %v5791
        %v5793 = vpop.f32.mrb[0].mxu0
        %5794 = vdwg.mxu0
        %v5795 = vcombine.low %v5396, %v5506
        %v5796 = vcombine.high %v5396, %v5506
        %v5798 = vunpack.c.l.s4 1983009808
        %v5799 = vunpack.c.0.s8 %v5798
        %v5800 = vlaneseq
        %v5801 = vshrl.u32 %v5800, 7
        %v5802 = vsub.s32 %v5799, %v5801
        %v5803 = vrot.slane %v5795, %v5802
        %v5805 = vunpack.c.l.s4 1983009808
        %v5806 = vunpack.c.0.s8 %v5805
        %v5807 = vlaneseq
        %v5808 = vshrl.u32 %v5807, 7
        %v5809 = vsub.s32 %v5806, %v5808
        %v5810 = vrot.slane %v5796, %v5809
        %v5811 = vcombine.low %v5451, %v5561
        %v5812 = vcombine.high %v5451, %v5561
        %v5814 = vunpack.c.l.s4 1983009808
        %v5815 = vunpack.c.0.s8 %v5814
        %v5816 = vlaneseq
        %v5817 = vshrl.u32 %v5816, 7
        %v5818 = vsub.s32 %v5815, %v5817
        %v5819 = vrot.slane %v5811, %v5818
        %v5821 = vunpack.c.l.s4 1983009808
        %v5822 = vunpack.c.0.s8 %v5821
        %v5823 = vlaneseq
        %v5824 = vshrl.u32 %v5823, 7
        %v5825 = vsub.s32 %v5822, %v5824
        %v5826 = vrot.slane %v5812, %v5825
        %v5827 = vcombine.low %v5803, %v5819
        %v5828 = vcombine.high %v5803, %v5819
        %v5830 = vunpack.c.l.s4 1934713408
        %v5831 = vunpack.c.0.s8 %v5830
        %v5832 = vlaneseq
        %v5833 = vshrl.u32 %v5832, 7
        %v5834 = vsub.s32 %v5831, %v5833
        %v5835 = vrot.slane %v5827, %v5834
        %v5837 = vunpack.c.l.s4 1934713408
        %v5838 = vunpack.c.0.s8 %v5837
        %v5839 = vlaneseq
        %v5840 = vshrl.u32 %v5839, 7
        %v5841 = vsub.s32 %v5838, %v5840
        %v5842 = vrot.slane %v5828, %v5841
        %v5843 = vcombine.low %v5810, %v5826
        %v5844 = vcombine.high %v5810, %v5826
        %v5846 = vunpack.c.l.s4 1934713408
        %v5847 = vunpack.c.0.s8 %v5846
        %v5848 = vlaneseq
        %v5849 = vshrl.u32 %v5848, 7
        %v5850 = vsub.s32 %v5847, %v5849
        %v5851 = vrot.slane %v5843, %v5850
        %v5853 = vunpack.c.l.s4 1934713408
        %v5854 = vunpack.c.0.s8 %v5853
        %v5855 = vlaneseq
        %v5856 = vshrl.u32 %v5855, 7
        %v5857 = vsub.s32 %v5854, %v5856
        %v5858 = vrot.slane %v5844, %v5857
        %v5859 = vcombine.high %v5835, 0.0
        %v5860 = vcombine.high %v5842, 0.0
        %v5861 = vcombine.high %v5851, 0.0
        %v5862 = vcombine.high %v5858, 0.0
        %v5863 = vcombine.low %v5399, %v5509
        %v5864 = vcombine.high %v5399, %v5509
        %v5866 = vunpack.c.l.s4 1983009808
        %v5867 = vunpack.c.0.s8 %v5866
        %v5868 = vlaneseq
        %v5869 = vshrl.u32 %v5868, 7
        %v5870 = vsub.s32 %v5867, %v5869
        %v5871 = vrot.slane %v5863, %v5870
        %v5873 = vunpack.c.l.s4 1983009808
        %v5874 = vunpack.c.0.s8 %v5873
        %v5875 = vlaneseq
        %v5876 = vshrl.u32 %v5875, 7
        %v5877 = vsub.s32 %v5874, %v5876
        %v5878 = vrot.slane %v5864, %v5877
        %v5879 = vcombine.low %v5454, %v5564
        %v5880 = vcombine.high %v5454, %v5564
        %v5882 = vunpack.c.l.s4 1983009808
        %v5883 = vunpack.c.0.s8 %v5882
        %v5884 = vlaneseq
        %v5885 = vshrl.u32 %v5884, 7
        %v5886 = vsub.s32 %v5883, %v5885
        %v5887 = vrot.slane %v5879, %v5886
        %v5889 = vunpack.c.l.s4 1983009808
        %v5890 = vunpack.c.0.s8 %v5889
        %v5891 = vlaneseq
        %v5892 = vshrl.u32 %v5891, 7
        %v5893 = vsub.s32 %v5890, %v5892
        %v5894 = vrot.slane %v5880, %v5893
        %v5895 = vcombine.low %v5871, %v5887
        %v5896 = vcombine.high %v5871, %v5887
        %v5898 = vunpack.c.l.s4 1934713408
        %v5899 = vunpack.c.0.s8 %v5898
        %v5900 = vlaneseq
        %v5901 = vshrl.u32 %v5900, 7
        %v5902 = vsub.s32 %v5899, %v5901
        %v5903 = vrot.slane %v5895, %v5902
        %v5905 = vunpack.c.l.s4 1934713408
        %v5906 = vunpack.c.0.s8 %v5905
        %v5907 = vlaneseq
        %v5908 = vshrl.u32 %v5907, 7
        %v5909 = vsub.s32 %v5906, %v5908
        %v5910 = vrot.slane %v5896, %v5909
        %v5911 = vcombine.low %v5878, %v5894
        %v5912 = vcombine.high %v5878, %v5894
        %v5914 = vunpack.c.l.s4 1934713408
        %v5915 = vunpack.c.0.s8 %v5914
        %v5916 = vlaneseq
        %v5917 = vshrl.u32 %v5916, 7
        %v5918 = vsub.s32 %v5915, %v5917
        %v5919 = vrot.slane %v5911, %v5918
        %v5921 = vunpack.c.l.s4 1934713408
        %v5922 = vunpack.c.0.s8 %v5921
        %v5923 = vlaneseq
        %v5924 = vshrl.u32 %v5923, 7
        %v5925 = vsub.s32 %v5922, %v5924
        %v5926 = vrot.slane %v5912, %v5925
        %v5927 = vcombine.high %v5903, 0.0
        %v5928 = vcombine.high %v5910, 0.0
        %v5929 = vcombine.high %v5919, 0.0
        %v5930 = vcombine.high %v5926, 0.0
        %v5931 = vcombine.low %v5404, %v5514
        %v5932 = vcombine.high %v5404, %v5514
        %v5934 = vunpack.c.l.s4 1983009808
        %v5935 = vunpack.c.0.s8 %v5934
        %v5936 = vlaneseq
        %v5937 = vshrl.u32 %v5936, 7
        %v5938 = vsub.s32 %v5935, %v5937
        %v5939 = vrot.slane %v5931, %v5938
        %v5941 = vunpack.c.l.s4 1983009808
        %v5942 = vunpack.c.0.s8 %v5941
        %v5943 = vlaneseq
        %v5944 = vshrl.u32 %v5943, 7
        %v5945 = vsub.s32 %v5942, %v5944
        %v5946 = vrot.slane %v5932, %v5945
        %v5947 = vcombine.low %v5459, %v5569
        %v5948 = vcombine.high %v5459, %v5569
        %v5950 = vunpack.c.l.s4 1983009808
        %v5951 = vunpack.c.0.s8 %v5950
        %v5952 = vlaneseq
        %v5953 = vshrl.u32 %v5952, 7
        %v5954 = vsub.s32 %v5951, %v5953
        %v5955 = vrot.slane %v5947, %v5954
        %v5957 = vunpack.c.l.s4 1983009808
        %v5958 = vunpack.c.0.s8 %v5957
        %v5959 = vlaneseq
        %v5960 = vshrl.u32 %v5959, 7
        %v5961 = vsub.s32 %v5958, %v5960
        %v5962 = vrot.slane %v5948, %v5961
        %v5963 = vcombine.low %v5939, %v5955
        %v5964 = vcombine.high %v5939, %v5955
        %v5966 = vunpack.c.l.s4 1934713408
        %v5967 = vunpack.c.0.s8 %v5966
        %v5968 = vlaneseq
        %v5969 = vshrl.u32 %v5968, 7
        %v5970 = vsub.s32 %v5967, %v5969
        %v5971 = vrot.slane %v5963, %v5970
        %v5973 = vunpack.c.l.s4 1934713408
        %v5974 = vunpack.c.0.s8 %v5973
        %v5975 = vlaneseq
        %v5976 = vshrl.u32 %v5975, 7
        %v5977 = vsub.s32 %v5974, %v5976
        %v5978 = vrot.slane %v5964, %v5977
        %v5979 = vcombine.low %v5946, %v5962
        %v5980 = vcombine.high %v5946, %v5962
        %v5982 = vunpack.c.l.s4 1934713408
        %v5983 = vunpack.c.0.s8 %v5982
        %v5984 = vlaneseq
        %v5985 = vshrl.u32 %v5984, 7
        %v5986 = vsub.s32 %v5983, %v5985
        %v5987 = vrot.slane %v5979, %v5986
        %v5989 = vunpack.c.l.s4 1934713408
        %v5990 = vunpack.c.0.s8 %v5989
        %v5991 = vlaneseq
        %v5992 = vshrl.u32 %v5991, 7
        %v5993 = vsub.s32 %v5990, %v5992
        %v5994 = vrot.slane %v5980, %v5993
        %v5995 = vcombine.high %v5971, 0.0
        %v5996 = vcombine.high %v5978, 0.0
        %v5997 = vcombine.high %v5987, 0.0
        %v5998 = vcombine.high %v5994, 0.0
        %v5999 = vcombine.low %v5407, %v5517
        %v6000 = vcombine.high %v5407, %v5517
        %v6002 = vunpack.c.l.s4 1983009808
        %v6003 = vunpack.c.0.s8 %v6002
        %v6004 = vlaneseq
        %v6005 = vshrl.u32 %v6004, 7
        %v6006 = vsub.s32 %v6003, %v6005
        %v6007 = vrot.slane %v5999, %v6006
        %v6009 = vunpack.c.l.s4 1983009808
        %v6010 = vunpack.c.0.s8 %v6009
        %v6011 = vlaneseq
        %v6012 = vshrl.u32 %v6011, 7
        %v6013 = vsub.s32 %v6010, %v6012
        %v6014 = vrot.slane %v6000, %v6013
        %v6015 = vcombine.low %v5462, %v5572
        %v6016 = vcombine.high %v5462, %v5572
        %v6018 = vunpack.c.l.s4 1983009808
        %v6019 = vunpack.c.0.s8 %v6018
        %v6020 = vlaneseq
        %v6021 = vshrl.u32 %v6020, 7
        %v6022 = vsub.s32 %v6019, %v6021
        %v6023 = vrot.slane %v6015, %v6022
        %v6025 = vunpack.c.l.s4 1983009808
        %v6026 = vunpack.c.0.s8 %v6025
        %v6027 = vlaneseq
        %v6028 = vshrl.u32 %v6027, 7
        %v6029 = vsub.s32 %v6026, %v6028
        %v6030 = vrot.slane %v6016, %v6029
        %v6031 = vcombine.low %v6007, %v6023
        %v6032 = vcombine.high %v6007, %v6023
        %v6034 = vunpack.c.l.s4 1934713408
        %v6035 = vunpack.c.0.s8 %v6034
        %v6036 = vlaneseq
        %v6037 = vshrl.u32 %v6036, 7
        %v6038 = vsub.s32 %v6035, %v6037
        %v6039 = vrot.slane %v6031, %v6038
        %v6041 = vunpack.c.l.s4 1934713408
        %v6042 = vunpack.c.0.s8 %v6041
        %v6043 = vlaneseq
        %v6044 = vshrl.u32 %v6043, 7
        %v6045 = vsub.s32 %v6042, %v6044
        %v6046 = vrot.slane %v6032, %v6045
        %v6047 = vcombine.low %v6014, %v6030
        %v6048 = vcombine.high %v6014, %v6030
        %v6050 = vunpack.c.l.s4 1934713408
        %v6051 = vunpack.c.0.s8 %v6050
        %v6052 = vlaneseq
        %v6053 = vshrl.u32 %v6052, 7
        %v6054 = vsub.s32 %v6051, %v6053
        %v6055 = vrot.slane %v6047, %v6054
        %v6057 = vunpack.c.l.s4 1934713408
        %v6058 = vunpack.c.0.s8 %v6057
        %v6059 = vlaneseq
        %v6060 = vshrl.u32 %v6059, 7
        %v6061 = vsub.s32 %v6058, %v6060
        %v6062 = vrot.slane %v6048, %v6061
        %v6063 = vcombine.high %v6039, 0.0
        %v6064 = vcombine.high %v6046, 0.0
        %v6065 = vcombine.high %v6055, 0.0
        %v6066 = vcombine.high %v6062, 0.0
        %v6067 = vcombine.low %v5616, %v5726
        %v6068 = vcombine.high %v5616, %v5726
        %v6070 = vunpack.c.l.s4 1983009808
        %v6071 = vunpack.c.0.s8 %v6070
        %v6072 = vlaneseq
        %v6073 = vshrl.u32 %v6072, 7
        %v6074 = vsub.s32 %v6071, %v6073
        %v6075 = vrot.slane %v6067, %v6074
        %v6077 = vunpack.c.l.s4 1983009808
        %v6078 = vunpack.c.0.s8 %v6077
        %v6079 = vlaneseq
        %v6080 = vshrl.u32 %v6079, 7
        %v6081 = vsub.s32 %v6078, %v6080
        %v6082 = vrot.slane %v6068, %v6081
        %v6083 = vcombine.low %v5671, %v5781
        %v6084 = vcombine.high %v5671, %v5781
        %v6086 = vunpack.c.l.s4 1983009808
        %v6087 = vunpack.c.0.s8 %v6086
        %v6088 = vlaneseq
        %v6089 = vshrl.u32 %v6088, 7
        %v6090 = vsub.s32 %v6087, %v6089
        %v6091 = vrot.slane %v6083, %v6090
        %v6093 = vunpack.c.l.s4 1983009808
        %v6094 = vunpack.c.0.s8 %v6093
        %v6095 = vlaneseq
        %v6096 = vshrl.u32 %v6095, 7
        %v6097 = vsub.s32 %v6094, %v6096
        %v6098 = vrot.slane %v6084, %v6097
        %v6099 = vcombine.low %v6075, %v6091
        %v6100 = vcombine.high %v6075, %v6091
        %v6102 = vunpack.c.l.s4 1934713408
        %v6103 = vunpack.c.0.s8 %v6102
        %v6104 = vlaneseq
        %v6105 = vshrl.u32 %v6104, 7
        %v6106 = vsub.s32 %v6103, %v6105
        %v6107 = vrot.slane %v6099, %v6106
        %v6109 = vunpack.c.l.s4 1934713408
        %v6110 = vunpack.c.0.s8 %v6109
        %v6111 = vlaneseq
        %v6112 = vshrl.u32 %v6111, 7
        %v6113 = vsub.s32 %v6110, %v6112
        %v6114 = vrot.slane %v6100, %v6113
        %v6115 = vcombine.low %v6082, %v6098
        %v6116 = vcombine.high %v6082, %v6098
        %v6118 = vunpack.c.l.s4 1934713408
        %v6119 = vunpack.c.0.s8 %v6118
        %v6120 = vlaneseq
        %v6121 = vshrl.u32 %v6120, 7
        %v6122 = vsub.s32 %v6119, %v6121
        %v6123 = vrot.slane %v6115, %v6122
        %v6125 = vunpack.c.l.s4 1934713408
        %v6126 = vunpack.c.0.s8 %v6125
        %v6127 = vlaneseq
        %v6128 = vshrl.u32 %v6127, 7
        %v6129 = vsub.s32 %v6126, %v6128
        %v6130 = vrot.slane %v6116, %v6129
        %v6131 = vcombine.high %v6107, 0.0
        %v6132 = vcombine.high %v6114, 0.0
        %v6133 = vcombine.high %v6123, 0.0
        %v6134 = vcombine.high %v6130, 0.0
        %v6135 = vcombine.low %v5619, %v5729
        %v6136 = vcombine.high %v5619, %v5729
        %v6138 = vunpack.c.l.s4 1983009808
        %v6139 = vunpack.c.0.s8 %v6138
        %v6140 = vlaneseq
        %v6141 = vshrl.u32 %v6140, 7
        %v6142 = vsub.s32 %v6139, %v6141
        %v6143 = vrot.slane %v6135, %v6142
        %v6145 = vunpack.c.l.s4 1983009808
        %v6146 = vunpack.c.0.s8 %v6145
        %v6147 = vlaneseq
        %v6148 = vshrl.u32 %v6147, 7
        %v6149 = vsub.s32 %v6146, %v6148
        %v6150 = vrot.slane %v6136, %v6149
        %v6151 = vcombine.low %v5674, %v5784
        %v6152 = vcombine.high %v5674, %v5784
        %v6154 = vunpack.c.l.s4 1983009808
        %v6155 = vunpack.c.0.s8 %v6154
        %v6156 = vlaneseq
        %v6157 = vshrl.u32 %v6156, 7
        %v6158 = vsub.s32 %v6155, %v6157
        %v6159 = vrot.slane %v6151, %v6158
        %v6161 = vunpack.c.l.s4 1983009808
        %v6162 = vunpack.c.0.s8 %v6161
        %v6163 = vlaneseq
        %v6164 = vshrl.u32 %v6163, 7
        %v6165 = vsub.s32 %v6162, %v6164
        %v6166 = vrot.slane %v6152, %v6165
        %v6167 = vcombine.low %v6143, %v6159
        %v6168 = vcombine.high %v6143, %v6159
        %v6170 = vunpack.c.l.s4 1934713408
        %v6171 = vunpack.c.0.s8 %v6170
        %v6172 = vlaneseq
        %v6173 = vshrl.u32 %v6172, 7
        %v6174 = vsub.s32 %v6171, %v6173
        %v6175 = vrot.slane %v6167, %v6174
        %v6177 = vunpack.c.l.s4 1934713408
        %v6178 = vunpack.c.0.s8 %v6177
        %v6179 = vlaneseq
        %v6180 = vshrl.u32 %v6179, 7
        %v6181 = vsub.s32 %v6178, %v6180
        %v6182 = vrot.slane %v6168, %v6181
        %v6183 = vcombine.low %v6150, %v6166
        %v6184 = vcombine.high %v6150, %v6166
        %v6186 = vunpack.c.l.s4 1934713408
        %v6187 = vunpack.c.0.s8 %v6186
        %v6188 = vlaneseq
        %v6189 = vshrl.u32 %v6188, 7
        %v6190 = vsub.s32 %v6187, %v6189
        %v6191 = vrot.slane %v6183, %v6190
        %v6193 = vunpack.c.l.s4 1934713408
        %v6194 = vunpack.c.0.s8 %v6193
        %v6195 = vlaneseq
        %v6196 = vshrl.u32 %v6195, 7
        %v6197 = vsub.s32 %v6194, %v6196
        %v6198 = vrot.slane %v6184, %v6197
        %v6199 = vcombine.high %v6175, 0.0
        %v6200 = vcombine.high %v6182, 0.0
        %v6201 = vcombine.high %v6191, 0.0
        %v6202 = vcombine.high %v6198, 0.0
        %v6203 = vcombine.low %v5624, %v5734
        %v6204 = vcombine.high %v5624, %v5734
        %v6206 = vunpack.c.l.s4 1983009808
        %v6207 = vunpack.c.0.s8 %v6206
        %v6208 = vlaneseq
        %v6209 = vshrl.u32 %v6208, 7
        %v6210 = vsub.s32 %v6207, %v6209
        %v6211 = vrot.slane %v6203, %v6210
        %v6213 = vunpack.c.l.s4 1983009808
        %v6214 = vunpack.c.0.s8 %v6213
        %v6215 = vlaneseq
        %v6216 = vshrl.u32 %v6215, 7
        %v6217 = vsub.s32 %v6214, %v6216
        %v6218 = vrot.slane %v6204, %v6217
        %v6219 = vcombine.low %v5679, %v5789
        %v6220 = vcombine.high %v5679, %v5789
        %v6222 = vunpack.c.l.s4 1983009808
        %v6223 = vunpack.c.0.s8 %v6222
        %v6224 = vlaneseq
        %v6225 = vshrl.u32 %v6224, 7
        %v6226 = vsub.s32 %v6223, %v6225
        %v6227 = vrot.slane %v6219, %v6226
        %v6229 = vunpack.c.l.s4 1983009808
        %v6230 = vunpack.c.0.s8 %v6229
        %v6231 = vlaneseq
        %v6232 = vshrl.u32 %v6231, 7
        %v6233 = vsub.s32 %v6230, %v6232
        %v6234 = vrot.slane %v6220, %v6233
        %v6235 = vcombine.low %v6211, %v6227
        %v6236 = vcombine.high %v6211, %v6227
        %v6238 = vunpack.c.l.s4 1934713408
        %v6239 = vunpack.c.0.s8 %v6238
        %v6240 = vlaneseq
        %v6241 = vshrl.u32 %v6240, 7
        %v6242 = vsub.s32 %v6239, %v6241
        %v6243 = vrot.slane %v6235, %v6242
        %v6245 = vunpack.c.l.s4 1934713408
        %v6246 = vunpack.c.0.s8 %v6245
        %v6247 = vlaneseq
        %v6248 = vshrl.u32 %v6247, 7
        %v6249 = vsub.s32 %v6246, %v6248
        %v6250 = vrot.slane %v6236, %v6249
        %v6251 = vcombine.low %v6218, %v6234
        %v6252 = vcombine.high %v6218, %v6234
        %v6254 = vunpack.c.l.s4 1934713408
        %v6255 = vunpack.c.0.s8 %v6254
        %v6256 = vlaneseq
        %v6257 = vshrl.u32 %v6256, 7
        %v6258 = vsub.s32 %v6255, %v6257
        %v6259 = vrot.slane %v6251, %v6258
        %v6261 = vunpack.c.l.s4 1934713408
        %v6262 = vunpack.c.0.s8 %v6261
        %v6263 = vlaneseq
        %v6264 = vshrl.u32 %v6263, 7
        %v6265 = vsub.s32 %v6262, %v6264
        %v6266 = vrot.slane %v6252, %v6265
        %v6267 = vcombine.high %v6243, 0.0
        %v6268 = vcombine.high %v6250, 0.0
        %v6269 = vcombine.high %v6259, 0.0
        %v6270 = vcombine.high %v6266, 0.0
        %v6271 = vcombine.low %v5627, %v5737
        %v6272 = vcombine.high %v5627, %v5737
        %v6274 = vunpack.c.l.s4 1983009808
        %v6275 = vunpack.c.0.s8 %v6274
        %v6276 = vlaneseq
        %v6277 = vshrl.u32 %v6276, 7
        %v6278 = vsub.s32 %v6275, %v6277
        %v6279 = vrot.slane %v6271, %v6278
        %v6281 = vunpack.c.l.s4 1983009808
        %v6282 = vunpack.c.0.s8 %v6281
        %v6283 = vlaneseq
        %v6284 = vshrl.u32 %v6283, 7
        %v6285 = vsub.s32 %v6282, %v6284
        %v6286 = vrot.slane %v6272, %v6285
        %v6287 = vcombine.low %v5682, %v5792
        %v6288 = vcombine.high %v5682, %v5792
        %v6290 = vunpack.c.l.s4 1983009808
        %v6291 = vunpack.c.0.s8 %v6290
        %v6292 = vlaneseq
        %v6293 = vshrl.u32 %v6292, 7
        %v6294 = vsub.s32 %v6291, %v6293
        %v6295 = vrot.slane %v6287, %v6294
        %v6297 = vunpack.c.l.s4 1983009808
        %v6298 = vunpack.c.0.s8 %v6297
        %v6299 = vlaneseq
        %v6300 = vshrl.u32 %v6299, 7
        %v6301 = vsub.s32 %v6298, %v6300
        %v6302 = vrot.slane %v6288, %v6301
        %v6303 = vcombine.low %v6279, %v6295
        %v6304 = vcombine.high %v6279, %v6295
        %v6306 = vunpack.c.l.s4 1934713408
        %v6307 = vunpack.c.0.s8 %v6306
        %v6308 = vlaneseq
        %v6309 = vshrl.u32 %v6308, 7
        %v6310 = vsub.s32 %v6307, %v6309
        %v6311 = vrot.slane %v6303, %v6310
        %v6313 = vunpack.c.l.s4 1934713408
        %v6314 = vunpack.c.0.s8 %v6313
        %v6315 = vlaneseq
        %v6316 = vshrl.u32 %v6315, 7
        %v6317 = vsub.s32 %v6314, %v6316
        %v6318 = vrot.slane %v6304, %v6317
        %v6319 = vcombine.low %v6286, %v6302
        %v6320 = vcombine.high %v6286, %v6302
        %v6322 = vunpack.c.l.s4 1934713408
        %v6323 = vunpack.c.0.s8 %v6322
        %v6324 = vlaneseq
        %v6325 = vshrl.u32 %v6324, 7
        %v6326 = vsub.s32 %v6323, %v6325
        %v6327 = vrot.slane %v6319, %v6326
        %v6329 = vunpack.c.l.s4 1934713408
        %v6330 = vunpack.c.0.s8 %v6329
        %v6331 = vlaneseq
        %v6332 = vshrl.u32 %v6331, 7
        %v6333 = vsub.s32 %v6330, %v6332
        %v6334 = vrot.slane %v6320, %v6333
        %v6335 = vcombine.high %v6311, 0.0
        %v6336 = vcombine.high %v6318, 0.0
        %v6337 = vcombine.high %v6327, 0.0
        %v6338 = vcombine.high %v6334, 0.0
        %v6339 = vcombine.low %v5835, %v5842
        %v6341 = vunpack.c.l.s4 1983009808
        %v6342 = vunpack.c.0.s8 %v6341
        %v6343 = vlaneseq
        %v6344 = vshrl.u32 %v6343, 7
        %v6345 = vsub.s32 %v6342, %v6344
        %v6346 = vrot.slane %v6339, %v6345
        %v6347 = vcombine.low %v5859, %v5860
        %v6349 = vunpack.c.l.s4 1983009808
        %v6350 = vunpack.c.0.s8 %v6349
        %v6351 = vlaneseq
        %v6352 = vshrl.u32 %v6351, 7
        %v6353 = vsub.s32 %v6350, %v6352
        %v6354 = vrot.slane %v6347, %v6353
        %v6355 = vcombine.low %v5851, %v5858
        %v6357 = vunpack.c.l.s4 1983009808
        %v6358 = vunpack.c.0.s8 %v6357
        %v6359 = vlaneseq
        %v6360 = vshrl.u32 %v6359, 7
        %v6361 = vsub.s32 %v6358, %v6360
        %v6362 = vrot.slane %v6355, %v6361
        %v6363 = vcombine.low %v5861, %v5862
        %v6365 = vunpack.c.l.s4 1983009808
        %v6366 = vunpack.c.0.s8 %v6365
        %v6367 = vlaneseq
        %v6368 = vshrl.u32 %v6367, 7
        %v6369 = vsub.s32 %v6366, %v6368
        %v6370 = vrot.slane %v6363, %v6369
        %v6371 = vcombine.low %v6346, %v6354
        %v6372 = vcombine.high %v6346, %v6354
        %v6374 = vunpack.c.l.s4 1934713408
        %v6375 = vunpack.c.0.s8 %v6374
        %v6376 = vlaneseq
        %v6377 = vshrl.u32 %v6376, 7
        %v6378 = vsub.s32 %v6375, %v6377
        %v6379 = vrot.slane %v6371, %v6378
        %v6381 = vunpack.c.l.s4 1934713408
        %v6382 = vunpack.c.0.s8 %v6381
        %v6383 = vlaneseq
        %v6384 = vshrl.u32 %v6383, 7
        %v6385 = vsub.s32 %v6382, %v6384
        %v6386 = vrot.slane %v6372, %v6385
        %v6387 = vcombine.low %v6362, %v6370
        %v6388 = vcombine.high %v6362, %v6370
        %v6390 = vunpack.c.l.s4 1934713408
        %v6391 = vunpack.c.0.s8 %v6390
        %v6392 = vlaneseq
        %v6393 = vshrl.u32 %v6392, 7
        %v6394 = vsub.s32 %v6391, %v6393
        %v6395 = vrot.slane %v6387, %v6394
        %v6397 = vunpack.c.l.s4 1934713408
        %v6398 = vunpack.c.0.s8 %v6397
        %v6399 = vlaneseq
        %v6400 = vshrl.u32 %v6399, 7
        %v6401 = vsub.s32 %v6398, %v6400
        %v6402 = vrot.slane %v6388, %v6401
        %v6403 = vcombine.low %v6379, %v6395
        %v6404 = vcombine.high %v6379, %v6395
        %v6405 = vcombine.low %v6386, %v6402
        %v6406 = vcombine.high %v6386, %v6402
        %v6407 = vcombine.low %v5903, %v5910
        %v6409 = vunpack.c.l.s4 1983009808
        %v6410 = vunpack.c.0.s8 %v6409
        %v6411 = vlaneseq
        %v6412 = vshrl.u32 %v6411, 7
        %v6413 = vsub.s32 %v6410, %v6412
        %v6414 = vrot.slane %v6407, %v6413
        %v6415 = vcombine.low %v5927, %v5928
        %v6417 = vunpack.c.l.s4 1983009808
        %v6418 = vunpack.c.0.s8 %v6417
        %v6419 = vlaneseq
        %v6420 = vshrl.u32 %v6419, 7
        %v6421 = vsub.s32 %v6418, %v6420
        %v6422 = vrot.slane %v6415, %v6421
        %v6423 = vcombine.low %v5919, %v5926
        %v6425 = vunpack.c.l.s4 1983009808
        %v6426 = vunpack.c.0.s8 %v6425
        %v6427 = vlaneseq
        %v6428 = vshrl.u32 %v6427, 7
        %v6429 = vsub.s32 %v6426, %v6428
        %v6430 = vrot.slane %v6423, %v6429
        %v6431 = vcombine.low %v5929, %v5930
        %v6433 = vunpack.c.l.s4 1983009808
        %v6434 = vunpack.c.0.s8 %v6433
        %v6435 = vlaneseq
        %v6436 = vshrl.u32 %v6435, 7
        %v6437 = vsub.s32 %v6434, %v6436
        %v6438 = vrot.slane %v6431, %v6437
        %v6439 = vcombine.low %v6414, %v6422
        %v6440 = vcombine.high %v6414, %v6422
        %v6442 = vunpack.c.l.s4 1934713408
        %v6443 = vunpack.c.0.s8 %v6442
        %v6444 = vlaneseq
        %v6445 = vshrl.u32 %v6444, 7
        %v6446 = vsub.s32 %v6443, %v6445
        %v6447 = vrot.slane %v6439, %v6446
        %v6449 = vunpack.c.l.s4 1934713408
        %v6450 = vunpack.c.0.s8 %v6449
        %v6451 = vlaneseq
        %v6452 = vshrl.u32 %v6451, 7
        %v6453 = vsub.s32 %v6450, %v6452
        %v6454 = vrot.slane %v6440, %v6453
        %v6455 = vcombine.low %v6430, %v6438
        %v6456 = vcombine.high %v6430, %v6438
        %v6458 = vunpack.c.l.s4 1934713408
        %v6459 = vunpack.c.0.s8 %v6458
        %v6460 = vlaneseq
        %v6461 = vshrl.u32 %v6460, 7
        %v6462 = vsub.s32 %v6459, %v6461
        %v6463 = vrot.slane %v6455, %v6462
        %v6465 = vunpack.c.l.s4 1934713408
        %v6466 = vunpack.c.0.s8 %v6465
        %v6467 = vlaneseq
        %v6468 = vshrl.u32 %v6467, 7
        %v6469 = vsub.s32 %v6466, %v6468
        %v6470 = vrot.slane %v6456, %v6469
        %v6471 = vcombine.low %v6447, %v6463
        %v6472 = vcombine.high %v6447, %v6463
        %v6473 = vcombine.low %v6454, %v6470
        %v6474 = vcombine.high %v6454, %v6470
        %v6475 = vcombine.low %v5971, %v5978
        %v6477 = vunpack.c.l.s4 1983009808
        %v6478 = vunpack.c.0.s8 %v6477
        %v6479 = vlaneseq
        %v6480 = vshrl.u32 %v6479, 7
        %v6481 = vsub.s32 %v6478, %v6480
        %v6482 = vrot.slane %v6475, %v6481
        %v6483 = vcombine.low %v5995, %v5996
        %v6485 = vunpack.c.l.s4 1983009808
        %v6486 = vunpack.c.0.s8 %v6485
        %v6487 = vlaneseq
        %v6488 = vshrl.u32 %v6487, 7
        %v6489 = vsub.s32 %v6486, %v6488
        %v6490 = vrot.slane %v6483, %v6489
        %v6491 = vcombine.low %v5987, %v5994
        %v6493 = vunpack.c.l.s4 1983009808
        %v6494 = vunpack.c.0.s8 %v6493
        %v6495 = vlaneseq
        %v6496 = vshrl.u32 %v6495, 7
        %v6497 = vsub.s32 %v6494, %v6496
        %v6498 = vrot.slane %v6491, %v6497
        %v6499 = vcombine.low %v5997, %v5998
        %v6501 = vunpack.c.l.s4 1983009808
        %v6502 = vunpack.c.0.s8 %v6501
        %v6503 = vlaneseq
        %v6504 = vshrl.u32 %v6503, 7
        %v6505 = vsub.s32 %v6502, %v6504
        %v6506 = vrot.slane %v6499, %v6505
        %v6507 = vcombine.low %v6482, %v6490
        %v6508 = vcombine.high %v6482, %v6490
        %v6510 = vunpack.c.l.s4 1934713408
        %v6511 = vunpack.c.0.s8 %v6510
        %v6512 = vlaneseq
        %v6513 = vshrl.u32 %v6512, 7
        %v6514 = vsub.s32 %v6511, %v6513
        %v6515 = vrot.slane %v6507, %v6514
        %v6517 = vunpack.c.l.s4 1934713408
        %v6518 = vunpack.c.0.s8 %v6517
        %v6519 = vlaneseq
        %v6520 = vshrl.u32 %v6519, 7
        %v6521 = vsub.s32 %v6518, %v6520
        %v6522 = vrot.slane %v6508, %v6521
        %v6523 = vcombine.low %v6498, %v6506
        %v6524 = vcombine.high %v6498, %v6506
        %v6526 = vunpack.c.l.s4 1934713408
        %v6527 = vunpack.c.0.s8 %v6526
        %v6528 = vlaneseq
        %v6529 = vshrl.u32 %v6528, 7
        %v6530 = vsub.s32 %v6527, %v6529
        %v6531 = vrot.slane %v6523, %v6530
        %v6533 = vunpack.c.l.s4 1934713408
        %v6534 = vunpack.c.0.s8 %v6533
        %v6535 = vlaneseq
        %v6536 = vshrl.u32 %v6535, 7
        %v6537 = vsub.s32 %v6534, %v6536
        %v6538 = vrot.slane %v6524, %v6537
        %v6539 = vcombine.low %v6515, %v6531
        %v6540 = vcombine.high %v6515, %v6531
        %v6541 = vcombine.low %v6522, %v6538
        %v6542 = vcombine.high %v6522, %v6538
        %v6543 = vcombine.low %v6039, %v6046
        %v6545 = vunpack.c.l.s4 1983009808
        %v6546 = vunpack.c.0.s8 %v6545
        %v6547 = vlaneseq
        %v6548 = vshrl.u32 %v6547, 7
        %v6549 = vsub.s32 %v6546, %v6548
        %v6550 = vrot.slane %v6543, %v6549
        %v6551 = vcombine.low %v6063, %v6064
        %v6553 = vunpack.c.l.s4 1983009808
        %v6554 = vunpack.c.0.s8 %v6553
        %v6555 = vlaneseq
        %v6556 = vshrl.u32 %v6555, 7
        %v6557 = vsub.s32 %v6554, %v6556
        %v6558 = vrot.slane %v6551, %v6557
        %v6559 = vcombine.low %v6055, %v6062
        %v6561 = vunpack.c.l.s4 1983009808
        %v6562 = vunpack.c.0.s8 %v6561
        %v6563 = vlaneseq
        %v6564 = vshrl.u32 %v6563, 7
        %v6565 = vsub.s32 %v6562, %v6564
        %v6566 = vrot.slane %v6559, %v6565
        %v6567 = vcombine.low %v6065, %v6066
        %v6569 = vunpack.c.l.s4 1983009808
        %v6570 = vunpack.c.0.s8 %v6569
        %v6571 = vlaneseq
        %v6572 = vshrl.u32 %v6571, 7
        %v6573 = vsub.s32 %v6570, %v6572
        %v6574 = vrot.slane %v6567, %v6573
        %v6575 = vcombine.low %v6550, %v6558
        %v6576 = vcombine.high %v6550, %v6558
        %v6578 = vunpack.c.l.s4 1934713408
        %v6579 = vunpack.c.0.s8 %v6578
        %v6580 = vlaneseq
        %v6581 = vshrl.u32 %v6580, 7
        %v6582 = vsub.s32 %v6579, %v6581
        %v6583 = vrot.slane %v6575, %v6582
        %v6585 = vunpack.c.l.s4 1934713408
        %v6586 = vunpack.c.0.s8 %v6585
        %v6587 = vlaneseq
        %v6588 = vshrl.u32 %v6587, 7
        %v6589 = vsub.s32 %v6586, %v6588
        %v6590 = vrot.slane %v6576, %v6589
        %v6591 = vcombine.low %v6566, %v6574
        %v6592 = vcombine.high %v6566, %v6574
        %v6594 = vunpack.c.l.s4 1934713408
        %v6595 = vunpack.c.0.s8 %v6594
        %v6596 = vlaneseq
        %v6597 = vshrl.u32 %v6596, 7
        %v6598 = vsub.s32 %v6595, %v6597
        %v6599 = vrot.slane %v6591, %v6598
        %v6601 = vunpack.c.l.s4 1934713408
        %v6602 = vunpack.c.0.s8 %v6601
        %v6603 = vlaneseq
        %v6604 = vshrl.u32 %v6603, 7
        %v6605 = vsub.s32 %v6602, %v6604
        %v6606 = vrot.slane %v6592, %v6605
        %v6607 = vcombine.low %v6583, %v6599
        %v6608 = vcombine.high %v6583, %v6599
        %v6609 = vcombine.low %v6590, %v6606
        %v6610 = vcombine.high %v6590, %v6606
        %v6611 = vcombine.low %v6107, %v6114
        %v6613 = vunpack.c.l.s4 1983009808
        %v6614 = vunpack.c.0.s8 %v6613
        %v6615 = vlaneseq
        %v6616 = vshrl.u32 %v6615, 7
        %v6617 = vsub.s32 %v6614, %v6616
        %v6618 = vrot.slane %v6611, %v6617
        %v6619 = vcombine.low %v6131, %v6132
        %v6621 = vunpack.c.l.s4 1983009808
        %v6622 = vunpack.c.0.s8 %v6621
        %v6623 = vlaneseq
        %v6624 = vshrl.u32 %v6623, 7
        %v6625 = vsub.s32 %v6622, %v6624
        %v6626 = vrot.slane %v6619, %v6625
        %v6627 = vcombine.low %v6123, %v6130
        %v6629 = vunpack.c.l.s4 1983009808
        %v6630 = vunpack.c.0.s8 %v6629
        %v6631 = vlaneseq
        %v6632 = vshrl.u32 %v6631, 7
        %v6633 = vsub.s32 %v6630, %v6632
        %v6634 = vrot.slane %v6627, %v6633
        %v6635 = vcombine.low %v6133, %v6134
        %v6637 = vunpack.c.l.s4 1983009808
        %v6638 = vunpack.c.0.s8 %v6637
        %v6639 = vlaneseq
        %v6640 = vshrl.u32 %v6639, 7
        %v6641 = vsub.s32 %v6638, %v6640
        %v6642 = vrot.slane %v6635, %v6641
        %v6643 = vcombine.low %v6618, %v6626
        %v6644 = vcombine.high %v6618, %v6626
        %v6646 = vunpack.c.l.s4 1934713408
        %v6647 = vunpack.c.0.s8 %v6646
        %v6648 = vlaneseq
        %v6649 = vshrl.u32 %v6648, 7
        %v6650 = vsub.s32 %v6647, %v6649
        %v6651 = vrot.slane %v6643, %v6650
        %v6653 = vunpack.c.l.s4 1934713408
        %v6654 = vunpack.c.0.s8 %v6653
        %v6655 = vlaneseq
        %v6656 = vshrl.u32 %v6655, 7
        %v6657 = vsub.s32 %v6654, %v6656
        %v6658 = vrot.slane %v6644, %v6657
        %v6659 = vcombine.low %v6634, %v6642
        %v6660 = vcombine.high %v6634, %v6642
        %v6662 = vunpack.c.l.s4 1934713408
        %v6663 = vunpack.c.0.s8 %v6662
        %v6664 = vlaneseq
        %v6665 = vshrl.u32 %v6664, 7
        %v6666 = vsub.s32 %v6663, %v6665
        %v6667 = vrot.slane %v6659, %v6666
        %v6669 = vunpack.c.l.s4 1934713408
        %v6670 = vunpack.c.0.s8 %v6669
        %v6671 = vlaneseq
        %v6672 = vshrl.u32 %v6671, 7
        %v6673 = vsub.s32 %v6670, %v6672
        %v6674 = vrot.slane %v6660, %v6673
        %v6675 = vcombine.low %v6651, %v6667
        %v6676 = vcombine.high %v6651, %v6667
        %v6677 = vcombine.low %v6658, %v6674
        %v6678 = vcombine.high %v6658, %v6674
        %v6679 = vcombine.low %v6175, %v6182
        %v6681 = vunpack.c.l.s4 1983009808
        %v6682 = vunpack.c.0.s8 %v6681
        %v6683 = vlaneseq
        %v6684 = vshrl.u32 %v6683, 7
        %v6685 = vsub.s32 %v6682, %v6684
        %v6686 = vrot.slane %v6679, %v6685
        %v6687 = vcombine.low %v6199, %v6200
        %v6689 = vunpack.c.l.s4 1983009808
        %v6690 = vunpack.c.0.s8 %v6689
        %v6691 = vlaneseq
        %v6692 = vshrl.u32 %v6691, 7
        %v6693 = vsub.s32 %v6690, %v6692
        %v6694 = vrot.slane %v6687, %v6693
        %v6695 = vcombine.low %v6191, %v6198
        %v6697 = vunpack.c.l.s4 1983009808
        %v6698 = vunpack.c.0.s8 %v6697
        %v6699 = vlaneseq
        %v6700 = vshrl.u32 %v6699, 7
        %v6701 = vsub.s32 %v6698, %v6700
        %v6702 = vrot.slane %v6695, %v6701
        %v6703 = vcombine.low %v6201, %v6202
        %v6705 = vunpack.c.l.s4 1983009808
        %v6706 = vunpack.c.0.s8 %v6705
        %v6707 = vlaneseq
        %v6708 = vshrl.u32 %v6707, 7
        %v6709 = vsub.s32 %v6706, %v6708
        %v6710 = vrot.slane %v6703, %v6709
        %v6711 = vcombine.low %v6686, %v6694
        %v6712 = vcombine.high %v6686, %v6694
        %v6714 = vunpack.c.l.s4 1934713408
        %v6715 = vunpack.c.0.s8 %v6714
        %v6716 = vlaneseq
        %v6717 = vshrl.u32 %v6716, 7
        %v6718 = vsub.s32 %v6715, %v6717
        %v6719 = vrot.slane %v6711, %v6718
        %v6721 = vunpack.c.l.s4 1934713408
        %v6722 = vunpack.c.0.s8 %v6721
        %v6723 = vlaneseq
        %v6724 = vshrl.u32 %v6723, 7
        %v6725 = vsub.s32 %v6722, %v6724
        %v6726 = vrot.slane %v6712, %v6725
        %v6727 = vcombine.low %v6702, %v6710
        %v6728 = vcombine.high %v6702, %v6710
        %v6730 = vunpack.c.l.s4 1934713408
        %v6731 = vunpack.c.0.s8 %v6730
        %v6732 = vlaneseq
        %v6733 = vshrl.u32 %v6732, 7
        %v6734 = vsub.s32 %v6731, %v6733
        %v6735 = vrot.slane %v6727, %v6734
        %v6737 = vunpack.c.l.s4 1934713408
        %v6738 = vunpack.c.0.s8 %v6737
        %v6739 = vlaneseq
        %v6740 = vshrl.u32 %v6739, 7
        %v6741 = vsub.s32 %v6738, %v6740
        %v6742 = vrot.slane %v6728, %v6741
        %v6743 = vcombine.low %v6719, %v6735
        %v6744 = vcombine.high %v6719, %v6735
        %v6745 = vcombine.low %v6726, %v6742
        %v6746 = vcombine.high %v6726, %v6742
        %v6747 = vcombine.low %v6243, %v6250
        %v6749 = vunpack.c.l.s4 1983009808
        %v6750 = vunpack.c.0.s8 %v6749
        %v6751 = vlaneseq
        %v6752 = vshrl.u32 %v6751, 7
        %v6753 = vsub.s32 %v6750, %v6752
        %v6754 = vrot.slane %v6747, %v6753
        %v6755 = vcombine.low %v6267, %v6268
        %v6757 = vunpack.c.l.s4 1983009808
        %v6758 = vunpack.c.0.s8 %v6757
        %v6759 = vlaneseq
        %v6760 = vshrl.u32 %v6759, 7
        %v6761 = vsub.s32 %v6758, %v6760
        %v6762 = vrot.slane %v6755, %v6761
        %v6763 = vcombine.low %v6259, %v6266
        %v6765 = vunpack.c.l.s4 1983009808
        %v6766 = vunpack.c.0.s8 %v6765
        %v6767 = vlaneseq
        %v6768 = vshrl.u32 %v6767, 7
        %v6769 = vsub.s32 %v6766, %v6768
        %v6770 = vrot.slane %v6763, %v6769
        %v6771 = vcombine.low %v6269, %v6270
        %v6773 = vunpack.c.l.s4 1983009808
        %v6774 = vunpack.c.0.s8 %v6773
        %v6775 = vlaneseq
        %v6776 = vshrl.u32 %v6775, 7
        %v6777 = vsub.s32 %v6774, %v6776
        %v6778 = vrot.slane %v6771, %v6777
        %v6779 = vcombine.low %v6754, %v6762
        %v6780 = vcombine.high %v6754, %v6762
        %v6782 = vunpack.c.l.s4 1934713408
        %v6783 = vunpack.c.0.s8 %v6782
        %v6784 = vlaneseq
        %v6785 = vshrl.u32 %v6784, 7
        %v6786 = vsub.s32 %v6783, %v6785
        %v6787 = vrot.slane %v6779, %v6786
        %v6789 = vunpack.c.l.s4 1934713408
        %v6790 = vunpack.c.0.s8 %v6789
        %v6791 = vlaneseq
        %v6792 = vshrl.u32 %v6791, 7
        %v6793 = vsub.s32 %v6790, %v6792
        %v6794 = vrot.slane %v6780, %v6793
        %v6795 = vcombine.low %v6770, %v6778
        %v6796 = vcombine.high %v6770, %v6778
        %v6798 = vunpack.c.l.s4 1934713408
        %v6799 = vunpack.c.0.s8 %v6798
        %v6800 = vlaneseq
        %v6801 = vshrl.u32 %v6800, 7
        %v6802 = vsub.s32 %v6799, %v6801
        %v6803 = vrot.slane %v6795, %v6802
        %v6805 = vunpack.c.l.s4 1934713408
        %v6806 = vunpack.c.0.s8 %v6805
        %v6807 = vlaneseq
        %v6808 = vshrl.u32 %v6807, 7
        %v6809 = vsub.s32 %v6806, %v6808
        %v6810 = vrot.slane %v6796, %v6809
        %v6811 = vcombine.low %v6787, %v6803
        %v6812 = vcombine.high %v6787, %v6803
        %v6813 = vcombine.low %v6794, %v6810
        %v6814 = vcombine.high %v6794, %v6810
        %v6815 = vcombine.low %v6311, %v6318
        %v6817 = vunpack.c.l.s4 1983009808
        %v6818 = vunpack.c.0.s8 %v6817
        %v6819 = vlaneseq
        %v6820 = vshrl.u32 %v6819, 7
        %v6821 = vsub.s32 %v6818, %v6820
        %v6822 = vrot.slane %v6815, %v6821
        %v6823 = vcombine.low %v6335, %v6336
        %v6825 = vunpack.c.l.s4 1983009808
        %v6826 = vunpack.c.0.s8 %v6825
        %v6827 = vlaneseq
        %v6828 = vshrl.u32 %v6827, 7
        %v6829 = vsub.s32 %v6826, %v6828
        %v6830 = vrot.slane %v6823, %v6829
        %v6831 = vcombine.low %v6327, %v6334
        %v6833 = vunpack.c.l.s4 1983009808
        %v6834 = vunpack.c.0.s8 %v6833
        %v6835 = vlaneseq
        %v6836 = vshrl.u32 %v6835, 7
        %v6837 = vsub.s32 %v6834, %v6836
        %v6838 = vrot.slane %v6831, %v6837
        %v6839 = vcombine.low %v6337, %v6338
        %v6841 = vunpack.c.l.s4 1983009808
        %v6842 = vunpack.c.0.s8 %v6841
        %v6843 = vlaneseq
        %v6844 = vshrl.u32 %v6843, 7
        %v6845 = vsub.s32 %v6842, %v6844
        %v6846 = vrot.slane %v6839, %v6845
        %v6847 = vcombine.low %v6822, %v6830
        %v6848 = vcombine.high %v6822, %v6830
        %v6850 = vunpack.c.l.s4 1934713408
        %v6851 = vunpack.c.0.s8 %v6850
        %v6852 = vlaneseq
        %v6853 = vshrl.u32 %v6852, 7
        %v6854 = vsub.s32 %v6851, %v6853
        %v6855 = vrot.slane %v6847, %v6854
        %v6857 = vunpack.c.l.s4 1934713408
        %v6858 = vunpack.c.0.s8 %v6857
        %v6859 = vlaneseq
        %v6860 = vshrl.u32 %v6859, 7
        %v6861 = vsub.s32 %v6858, %v6860
        %v6862 = vrot.slane %v6848, %v6861
        %v6863 = vcombine.low %v6838, %v6846
        %v6864 = vcombine.high %v6838, %v6846
        %v6866 = vunpack.c.l.s4 1934713408
        %v6867 = vunpack.c.0.s8 %v6866
        %v6868 = vlaneseq
        %v6869 = vshrl.u32 %v6868, 7
        %v6870 = vsub.s32 %v6867, %v6869
        %v6871 = vrot.slane %v6863, %v6870
        %v6873 = vunpack.c.l.s4 1934713408
        %v6874 = vunpack.c.0.s8 %v6873
        %v6875 = vlaneseq
        %v6876 = vshrl.u32 %v6875, 7
        %v6877 = vsub.s32 %v6874, %v6876
        %v6878 = vrot.slane %v6864, %v6877
        %v6879 = vcombine.low %v6855, %v6871
        %v6880 = vcombine.high %v6855, %v6871
        %v6881 = vcombine.low %v6862, %v6878
        %v6882 = vcombine.high %v6862, %v6878
        %6891 = vrot.lane.b32.xlu0 %v6404, 8
        %v6892 = vpop.permute.xlu0 %6891
        %6893 = vrot.lane.b32.xlu0 %v6472, 8
        %v6894 = vpop.permute.xlu0 %6893
        %6895 = vrot.lane.b32.xlu0 %v6540, 8
        %v6896 = vpop.permute.xlu0 %6895
        %6897 = vrot.lane.b32.xlu0 %v6608, 8
        %v6898 = vpop.permute.xlu0 %6897
        %6899 = vrot.lane.b32.xlu0 %v6676, 8
        %v6900 = vpop.permute.xlu0 %6899
        %6901 = vrot.lane.b32.xlu0 %v6744, 8
        %v6902 = vpop.permute.xlu0 %6901
        %6903 = vrot.lane.b32.xlu0 %v6812, 8
        %v6904 = vpop.permute.xlu0 %6903
        %6905 = vrot.lane.b32.xlu0 %v6880, 8
        %v6906 = vpop.permute.xlu0 %6905
        %6923 = vrot.lane.b32.xlu0 %v6405, 16
        %v6924 = vpop.permute.xlu0 %6923
        %6925 = vrot.lane.b32.xlu0 %v6473, 16
        %v6926 = vpop.permute.xlu0 %6925
        %6927 = vrot.lane.b32.xlu0 %v6541, 16
        %v6928 = vpop.permute.xlu0 %6927
        %6929 = vrot.lane.b32.xlu0 %v6609, 16
        %v6930 = vpop.permute.xlu0 %6929
        %6931 = vrot.lane.b32.xlu0 %v6677, 16
        %v6932 = vpop.permute.xlu0 %6931
        %6933 = vrot.lane.b32.xlu0 %v6745, 16
        %v6934 = vpop.permute.xlu0 %6933
        %6935 = vrot.lane.b32.xlu0 %v6813, 16
        %v6936 = vpop.permute.xlu0 %6935
        %6937 = vrot.lane.b32.xlu0 %v6881, 16
        %v6938 = vpop.permute.xlu0 %6937
        %6955 = vrot.lane.b32.xlu0 %v6406, 24
        %v6956 = vpop.permute.xlu0 %6955
        %6957 = vrot.lane.b32.xlu0 %v6474, 24
        %v6958 = vpop.permute.xlu0 %6957
        %6959 = vrot.lane.b32.xlu0 %v6542, 24
        %v6960 = vpop.permute.xlu0 %6959
        %6961 = vrot.lane.b32.xlu0 %v6610, 24
        %v6962 = vpop.permute.xlu0 %6961
        %6963 = vrot.lane.b32.xlu0 %v6678, 24
        %v6964 = vpop.permute.xlu0 %6963
        %6965 = vrot.lane.b32.xlu0 %v6746, 24
        %v6966 = vpop.permute.xlu0 %6965
        %6967 = vrot.lane.b32.xlu0 %v6814, 24
        %v6968 = vpop.permute.xlu0 %6967
        %6969 = vrot.lane.b32.xlu0 %v6882, 24
        %v6970 = vpop.permute.xlu0 %6969
        %v6979 = vsel %vm4463, %v6403, %v6892
        %v6980 = vsel %vm4463, %v6471, %v6894
        %v6981 = vsel %vm4463, %v6539, %v6896
        %v6982 = vsel %vm4463, %v6607, %v6898
        %v6983 = vsel %vm4463, %v6675, %v6900
        %v6984 = vsel %vm4463, %v6743, %v6902
        %v6985 = vsel %vm4463, %v6811, %v6904
        %v6986 = vsel %vm4463, %v6879, %v6906
        %vm6987 = vcmask 130048
        %v6988 = vsel %vm6987, %v6979, %v6924
        %v6989 = vsel %vm6987, %v6980, %v6926
        %v6990 = vsel %vm6987, %v6981, %v6928
        %v6991 = vsel %vm6987, %v6982, %v6930
        %v6992 = vsel %vm6987, %v6983, %v6932
        %v6993 = vsel %vm6987, %v6984, %v6934
        %v6994 = vsel %vm6987, %v6985, %v6936
        %v6995 = vsel %vm6987, %v6986, %v6938
        %vm6996 = vcmask 195584
        %v6997 = vsel %vm6996, %v6988, %v6956
        %v6998 = vsel %vm6996, %v6989, %v6958
        %v6999 = vsel %vm6996, %v6990, %v6960
        %v7000 = vsel %vm6996, %v6991, %v6962
        %v7001 = vsel %vm6996, %v6992, %v6964
        %v7002 = vsel %vm6996, %v6993, %v6966
        %v7003 = vsel %vm6996, %v6994, %v6968
        %v7004 = vsel %vm6996, %v6995, %v6970
        %v7005 = vpack.c.bf16 %v6998, %v6997
        %v7006 = vpack.c.bf16 %v7000, %v6999
        %v7007 = vpack.c.bf16 %v7002, %v7001
        %v7008 = vpack.c.bf16 %v7004, %v7003
        %v7009 = vld [vmem:[%s830] sm:$0xf]
        %v7010 = vld [vmem:[%s830 + $0x4] sm:$0xf]
        %v7011 = vld [vmem:[%s830 + $0x8] sm:$0xf]
        %v7012 = vld [vmem:[%s830 + $0xc] sm:$0xf]
        %v7013 = vld [vmem:[%s833] sm:$0x1]
        %v7015 = vlaneseq
        %v7016 = vshrl.u32 %v7015, 7
        %v7017 = vsub.s32 0, %v7016
        %v7018 = vrot.slane %v7013, %v7017
        %v7024 = vunpack.c.l.b16 %v7009
        %v7025 = vunpack.c.l.b16 %v7010
        %v7026 = vunpack.c.l.b16 %v7011
        %v7027 = vunpack.c.l.b16 %v7012
        %v7028 = vpack.c.b16 %v7025, %v7024
        %v7029 = vpack.c.b16 %v7027, %v7026
        %v7033 = vsel %vm987, %v7005, 0
        %v7036 = vsel %vm987, %v7006, 0
        %v7039 = vsel %vm987, %v7007, 0
        %v7042 = vsel %vm987, %v7008, 0
        %7044 = vmatprep.subr.bf16.mxu0 0
        %7045 = vmatpush1.bf16.msra.mxu0 %v7028
        %7046 = vmatprep.subr.bf16.mxu0 0
        %7047 = vmatpush1.bf16.msra.mxu0 %v7029
        %7048 = vmatprep.subr.bf16.mxu0 0
        %7049 = vmatpush1.bf16.msra.mxu0 0
        %7050 = vmatprep.subr.bf16.mxu0 0
        %7051 = vmatpush1.bf16.msra.mxu0 0
        %7052 = vmatprep.subr.bf16.mxu0 0
        %7053 = vmatpush1.bf16.msra.mxu0 0
        %7054 = vmatprep.subr.bf16.mxu0 0
        %7055 = vmatpush1.bf16.msra.mxu0 0
        %7056 = vmatprep.subr.bf16.mxu0 0
        %7057 = vmatpush1.bf16.msra.mxu0 0
        %7058 = vmatprep.subr.bf16.mxu0 0
        %7059 = vmatpush1.bf16.msra.mxu0 0
        %7060 = vmatprep.subr.bf16.mxu0 0
        %7061 = vmatpush1.bf16.msra.mxu0 0
        %7062 = vmatprep.subr.bf16.mxu0 0
        %7063 = vmatpush1.bf16.msra.mxu0 0
        %7064 = vmatprep.subr.bf16.mxu0 0
        %7065 = vmatpush1.bf16.msra.mxu0 0
        %7066 = vmatprep.subr.bf16.mxu0 0
        %7067 = vmatpush1.bf16.msra.mxu0 0
        %7068 = vmatprep.subr.bf16.mxu0 0
        %7069 = vmatpush1.bf16.msra.mxu0 0
        %7070 = vmatprep.subr.bf16.mxu0 0
        %7071 = vmatpush1.bf16.msra.mxu0 0
        %7072 = vmatprep.subr.bf16.mxu0 0
        %7073 = vmatpush1.bf16.msra.mxu0 0
        %7074 = vmatprep.subr.bf16.mxu0 0
        %7075 = vmatpush1.bf16.msra.mxu0 0
        %7076 = vmatprep.mubr.bf16.mxu0 0
        %7077 = vmatmul.mubr.bf16.gmra.mrb[0].mxu0 %v7033
        %v7078 = vpop.f32.mrb[0].mxu0
        %v7079 = vadd.f32 %v7018, %v7078
        %v7080 = vpop.f32.mrb[0].mxu0
        %v7081 = vpop.f32.mrb[0].mxu0
        %v7082 = vadd.f32 %v7018, %v7081
        %v7083 = vpop.f32.mrb[0].mxu0
        %7084 = vmatprep.mubr.bf16.mxu0 0
        %7085 = vmatmul.mubr.bf16.gmra.mrb[0].mxu0 %v7036
        %v7086 = vpop.f32.mrb[0].mxu0
        %v7087 = vadd.f32 %v7018, %v7086
        %v7088 = vpop.f32.mrb[0].mxu0
        %v7089 = vpop.f32.mrb[0].mxu0
        %v7090 = vadd.f32 %v7018, %v7089
        %v7091 = vpop.f32.mrb[0].mxu0
        %7092 = vmatprep.mubr.bf16.mxu0 0
        %7093 = vmatmul.mubr.bf16.gmra.mrb[0].mxu0 %v7039
        %v7094 = vpop.f32.mrb[0].mxu0
        %v7095 = vadd.f32 %v7018, %v7094
        %v7096 = vpop.f32.mrb[0].mxu0
        %v7097 = vpop.f32.mrb[0].mxu0
        %v7098 = vadd.f32 %v7018, %v7097
        %v7099 = vpop.f32.mrb[0].mxu0
        %7100 = vmatprep.mubr.bf16.mxu0 0
        %7101 = vmatmul.mubr.bf16.gmra.mrb[0].mxu0 %v7042
        %v7102 = vpop.f32.mrb[0].mxu0
        %v7103 = vadd.f32 %v7018, %v7102
        %v7104 = vpop.f32.mrb[0].mxu0
        %v7105 = vpop.f32.mrb[0].mxu0
        %v7106 = vadd.f32 %v7018, %v7105
        %v7107 = vpop.f32.mrb[0].mxu0
        %7108 = vdwg.mxu0
        %v7109 = vadd.f32 %v977, %v7079
        %v7110 = vadd.f32 %v978, %v7082
        %v7111 = vadd.f32 %v979, %v7087
        %v7112 = vadd.f32 %v980, %v7090
        %v7113 = vadd.f32 %v981, %v7095
        %v7114 = vadd.f32 %v982, %v7098
        %v7115 = vadd.f32 %v983, %v7103
        %v7116 = vadd.f32 %v984, %v7106
        %v7117 = vld [vmem:[%s836] sm:$0x1]
        %v7118 = vld [vmem:[%s839] sm:$0x1]
        %v7119 = vsel %vm987, %v7109, 0.0
        %7120 = vadd.xlane.f32.xlu0 %v7119
        %v7121 = vpop.xlane.xlu0 %7120
        %v7122 = vsel %vm987, %v7110, 0.0
        %7123 = vadd.xlane.f32.xlu0 %v7122
        %v7124 = vpop.xlane.xlu0 %7123
        %v7125 = vsel %vm987, %v7111, 0.0
        %7126 = vadd.xlane.f32.xlu0 %v7125
        %v7127 = vpop.xlane.xlu0 %7126
        %v7128 = vsel %vm987, %v7112, 0.0
        %7129 = vadd.xlane.f32.xlu0 %v7128
        %v7130 = vpop.xlane.xlu0 %7129
        %v7131 = vsel %vm987, %v7113, 0.0
        %7132 = vadd.xlane.f32.xlu0 %v7131
        %v7133 = vpop.xlane.xlu0 %7132
        %v7134 = vsel %vm987, %v7114, 0.0
        %7135 = vadd.xlane.f32.xlu0 %v7134
        %v7136 = vpop.xlane.xlu0 %7135
        %v7137 = vsel %vm987, %v7115, 0.0
        %7138 = vadd.xlane.f32.xlu0 %v7137
        %v7139 = vpop.xlane.xlu0 %7138
        %v7140 = vsel %vm987, %v7116, 0.0
        %7141 = vadd.xlane.f32.xlu0 %v7140
        %v7142 = vpop.xlane.xlu0 %7141
        %v7143 = vmul.f32 %v7121, %v1012
        %v7144 = vmul.f32 %v7124, %v1012
        %v7145 = vmul.f32 %v7127, %v1012
        %v7146 = vmul.f32 %v7130, %v1012
        %v7147 = vmul.f32 %v7133, %v1012
        %v7148 = vmul.f32 %v7136, %v1012
        %v7149 = vmul.f32 %v7139, %v1012
        %v7150 = vmul.f32 %v7142, %v1012
        %v7151 = vsub.f32 %v7109, %v7143
        %v7152 = vsub.f32 %v7110, %v7144
        %v7153 = vsub.f32 %v7111, %v7145
        %v7154 = vsub.f32 %v7112, %v7146
        %v7155 = vsub.f32 %v7113, %v7147
        %v7156 = vsub.f32 %v7114, %v7148
        %v7157 = vsub.f32 %v7115, %v7149
        %v7158 = vsub.f32 %v7116, %v7150
        %v7159 = vmul.f32 %v7151, %v7151
        %v7160 = vmul.f32 %v7152, %v7152
        %v7161 = vmul.f32 %v7153, %v7153
        %v7162 = vmul.f32 %v7154, %v7154
        %v7163 = vmul.f32 %v7155, %v7155
        %v7164 = vmul.f32 %v7156, %v7156
        %v7165 = vmul.f32 %v7157, %v7157
        %v7166 = vmul.f32 %v7158, %v7158
        %v7167 = vsel %vm987, %v7159, 0.0
        %7168 = vadd.xlane.f32.xlu0 %v7167
        %v7169 = vpop.xlane.xlu0 %7168
        %v7170 = vsel %vm987, %v7160, 0.0
        %7171 = vadd.xlane.f32.xlu0 %v7170
        %v7172 = vpop.xlane.xlu0 %7171
        %v7173 = vsel %vm987, %v7161, 0.0
        %7174 = vadd.xlane.f32.xlu0 %v7173
        %v7175 = vpop.xlane.xlu0 %7174
        %v7176 = vsel %vm987, %v7162, 0.0
        %7177 = vadd.xlane.f32.xlu0 %v7176
        %v7178 = vpop.xlane.xlu0 %7177
        %v7179 = vsel %vm987, %v7163, 0.0
        %7180 = vadd.xlane.f32.xlu0 %v7179
        %v7181 = vpop.xlane.xlu0 %7180
        %v7182 = vsel %vm987, %v7164, 0.0
        %7183 = vadd.xlane.f32.xlu0 %v7182
        %v7184 = vpop.xlane.xlu0 %7183
        %v7185 = vsel %vm987, %v7165, 0.0
        %7186 = vadd.xlane.f32.xlu0 %v7185
        %v7187 = vpop.xlane.xlu0 %7186
        %v7188 = vsel %vm987, %v7166, 0.0
        %7189 = vadd.xlane.f32.xlu0 %v7188
        %v7190 = vpop.xlane.xlu0 %7189
        %v7191 = vmul.f32 %v7169, %v1012
        %v7192 = vmul.f32 %v7172, %v1012
        %v7193 = vmul.f32 %v7175, %v1012
        %v7194 = vmul.f32 %v7178, %v1012
        %v7195 = vmul.f32 %v7181, %v1012
        %v7196 = vmul.f32 %v7184, %v1012
        %v7197 = vmul.f32 %v7187, %v1012
        %v7198 = vmul.f32 %v7190, %v1012
        %v7199 = vadd.f32 %v7191, 1e-06
        %v7200 = vadd.f32 %v7192, 1e-06
        %v7201 = vadd.f32 %v7193, 1e-06
        %v7202 = vadd.f32 %v7194, 1e-06
        %v7203 = vadd.f32 %v7195, 1e-06
        %v7204 = vadd.f32 %v7196, 1e-06
        %v7205 = vadd.f32 %v7197, 1e-06
        %v7206 = vadd.f32 %v7198, 1e-06
        %v7207 = vrsqrt.pop %v7199
        %v7208 = vrsqrt.pop %v7200
        %v7209 = vrsqrt.pop %v7201
        %v7210 = vrsqrt.pop %v7202
        %v7211 = vrsqrt.pop %v7203
        %v7212 = vrsqrt.pop %v7204
        %v7213 = vrsqrt.pop %v7205
        %v7214 = vrsqrt.pop %v7206
        %v7215 = vmul.f32 %v7151, %v7207
        %v7216 = vmul.f32 %v7152, %v7208
        %v7217 = vmul.f32 %v7153, %v7209
        %v7218 = vmul.f32 %v7154, %v7210
        %v7219 = vmul.f32 %v7155, %v7211
        %v7220 = vmul.f32 %v7156, %v7212
        %v7221 = vmul.f32 %v7157, %v7213
        %v7222 = vmul.f32 %v7158, %v7214
        %v7224 = vlaneseq
        %v7225 = vshrl.u32 %v7224, 7
        %v7226 = vsub.s32 0, %v7225
        %v7227 = vrot.slane %v7117, %v7226
        %v7229 = vmul.f32 %v7215, %v7227
        %v7230 = vmul.f32 %v7216, %v7227
        %v7231 = vmul.f32 %v7217, %v7227
        %v7232 = vmul.f32 %v7218, %v7227
        %v7233 = vmul.f32 %v7219, %v7227
        %v7234 = vmul.f32 %v7220, %v7227
        %v7235 = vmul.f32 %v7221, %v7227
        %v7236 = vmul.f32 %v7222, %v7227
        %v7238 = vlaneseq
        %v7239 = vshrl.u32 %v7238, 7
        %v7240 = vsub.s32 0, %v7239
        %v7241 = vrot.slane %v7118, %v7240
        %v7243 = vadd.f32 %v7229, %v7241
        %v7244 = vadd.f32 %v7230, %v7241
        %v7245 = vadd.f32 %v7231, %v7241
        %v7246 = vadd.f32 %v7232, %v7241
        %v7247 = vadd.f32 %v7233, %v7241
        %v7248 = vadd.f32 %v7234, %v7241
        %v7249 = vadd.f32 %v7235, %v7241
        %v7250 = vadd.f32 %v7236, %v7241
        %v7251 = vpack.c.bf16 %v7244, %v7243
        %v7252 = vpack.c.bf16 %v7246, %v7245
        %v7253 = vpack.c.bf16 %v7248, %v7247
        %v7254 = vpack.c.bf16 %v7250, %v7249
        %v7255 = vld [vmem:[%s844] sm:$0xf]
        %v7256 = vld [vmem:[%s844 + $0x4] sm:$0xf]
        %v7257 = vld [vmem:[%s844 + $0x8] sm:$0xf]
        %v7258 = vld [vmem:[%s844 + $0xc] sm:$0xf]
        %v7259 = vld [vmem:[%s847] sm:$0x1]
        %v7261 = vlaneseq
        %v7262 = vshrl.u32 %v7261, 7
        %v7263 = vsub.s32 0, %v7262
        %v7264 = vrot.slane %v7259, %v7263
        %v7270 = vunpack.c.l.b16 %v7255
        %v7271 = vunpack.c.l.b16 %v7256
        %v7272 = vunpack.c.l.b16 %v7257
        %v7273 = vunpack.c.l.b16 %v7258
        %v7274 = vpack.c.b16 %v7271, %v7270
        %v7275 = vpack.c.b16 %v7273, %v7272
        %v7279 = vsel %vm987, %v7251, 0
        %v7282 = vsel %vm987, %v7252, 0
        %v7285 = vsel %vm987, %v7253, 0
        %v7288 = vsel %vm987, %v7254, 0
        %7290 = vmatprep.subr.bf16.mxu0 0
        %7291 = vmatpush1.bf16.msra.mxu0 %v7274
        %7292 = vmatprep.subr.bf16.mxu0 0
        %7293 = vmatpush1.bf16.msra.mxu0 %v7275
        %7294 = vmatprep.subr.bf16.mxu0 0
        %7295 = vmatpush1.bf16.msra.mxu0 0
        %7296 = vmatprep.subr.bf16.mxu0 0
        %7297 = vmatpush1.bf16.msra.mxu0 0
        %7298 = vmatprep.subr.bf16.mxu0 0
        %7299 = vmatpush1.bf16.msra.mxu0 0
        %7300 = vmatprep.subr.bf16.mxu0 0
        %7301 = vmatpush1.bf16.msra.mxu0 0
        %7302 = vmatprep.subr.bf16.mxu0 0
        %7303 = vmatpush1.bf16.msra.mxu0 0
        %7304 = vmatprep.subr.bf16.mxu0 0
        %7305 = vmatpush1.bf16.msra.mxu0 0
        %7306 = vmatprep.subr.bf16.mxu0 0
        %7307 = vmatpush1.bf16.msra.mxu0 0
        %7308 = vmatprep.subr.bf16.mxu0 0
        %7309 = vmatpush1.bf16.msra.mxu0 0
        %7310 = vmatprep.subr.bf16.mxu0 0
        %7311 = vmatpush1.bf16.msra.mxu0 0
        %7312 = vmatprep.subr.bf16.mxu0 0
        %7313 = vmatpush1.bf16.msra.mxu0 0
        %7314 = vmatprep.subr.bf16.mxu0 0
        %7315 = vmatpush1.bf16.msra.mxu0 0
        %7316 = vmatprep.subr.bf16.mxu0 0
        %7317 = vmatpush1.bf16.msra.mxu0 0
        %7318 = vmatprep.subr.bf16.mxu0 0
        %7319 = vmatpush1.bf16.msra.mxu0 0
        %7320 = vmatprep.subr.bf16.mxu0 0
        %7321 = vmatpush1.bf16.msra.mxu0 0
        %7322 = vmatprep.mubr.bf16.mxu0 0
        %7323 = vmatmul.mubr.bf16.gmra.mrb[0].mxu0 %v7279
        %v7324 = vpop.f32.mrb[0].mxu0
        %v7325 = vadd.f32 %v7264, %v7324
        %v7326 = vpop.f32.mrb[0].mxu0
        %v7327 = vpop.f32.mrb[0].mxu0
        %v7328 = vadd.f32 %v7264, %v7327
        %v7329 = vpop.f32.mrb[0].mxu0
        %7330 = vmatprep.mubr.bf16.mxu0 0
        %7331 = vmatmul.mubr.bf16.gmra.mrb[0].mxu0 %v7282
        %v7332 = vpop.f32.mrb[0].mxu0
        %v7333 = vadd.f32 %v7264, %v7332
        %v7334 = vpop.f32.mrb[0].mxu0
        %v7335 = vpop.f32.mrb[0].mxu0
        %v7336 = vadd.f32 %v7264, %v7335
        %v7337 = vpop.f32.mrb[0].mxu0
        %7338 = vmatprep.mubr.bf16.mxu0 0
        %7339 = vmatmul.mubr.bf16.gmra.mrb[0].mxu0 %v7285
        %v7340 = vpop.f32.mrb[0].mxu0
        %v7341 = vadd.f32 %v7264, %v7340
        %v7342 = vpop.f32.mrb[0].mxu0
        %v7343 = vpop.f32.mrb[0].mxu0
        %v7344 = vadd.f32 %v7264, %v7343
        %v7345 = vpop.f32.mrb[0].mxu0
        %7346 = vmatprep.mubr.bf16.mxu0 0
        %7347 = vmatmul.mubr.bf16.gmra.mrb[0].mxu0 %v7288
        %v7348 = vpop.f32.mrb[0].mxu0
        %v7349 = vadd.f32 %v7264, %v7348
        %v7350 = vpop.f32.mrb[0].mxu0
        %v7351 = vpop.f32.mrb[0].mxu0
        %v7352 = vadd.f32 %v7264, %v7351
        %v7353 = vpop.f32.mrb[0].mxu0
        %7354 = vdwg.mxu0
        %v7355 = vmul.f32 %v7325, 0.5
        %v7356 = vmul.f32 %v7328, 0.5
        %v7357 = vmul.f32 %v7333, 0.5
        %v7358 = vmul.f32 %v7336, 0.5
        %v7359 = vmul.f32 %v7341, 0.5
        %v7360 = vmul.f32 %v7344, 0.5
        %v7361 = vmul.f32 %v7349, 0.5
        %v7362 = vmul.f32 %v7352, 0.5
        %v7363 = vmul.f32 %v7325, 0.70710677
        %v7364 = vmul.f32 %v7328, 0.70710677
        %v7365 = vmul.f32 %v7333, 0.70710677
        %v7366 = vmul.f32 %v7336, 0.70710677
        %v7367 = vmul.f32 %v7341, 0.70710677
        %v7368 = vmul.f32 %v7344, 0.70710677
        %v7369 = vmul.f32 %v7349, 0.70710677
        %v7370 = vmul.f32 %v7352, 0.70710677
        %v7371 = vand.u32 2147483647, %v7363
        %v7372 = vand.u32 2147483647, %v7364
        %v7373 = vand.u32 2147483647, %v7365
        %v7374 = vand.u32 2147483647, %v7366
        %v7375 = vand.u32 2147483647, %v7367
        %v7376 = vand.u32 2147483647, %v7368
        %v7377 = vand.u32 2147483647, %v7369
        %v7378 = vand.u32 2147483647, %v7370
        %v7379 = vmul.f32 %v7371, 0.3275911
        %v7380 = vmul.f32 %v7372, 0.3275911
        %v7381 = vmul.f32 %v7373, 0.3275911
        %v7382 = vmul.f32 %v7374, 0.3275911
        %v7383 = vmul.f32 %v7375, 0.3275911
        %v7384 = vmul.f32 %v7376, 0.3275911
        %v7385 = vmul.f32 %v7377, 0.3275911
        %v7386 = vmul.f32 %v7378, 0.3275911
        %v7387 = vadd.f32 %v7379, 1.0
        %v7388 = vadd.f32 %v7380, 1.0
        %v7389 = vadd.f32 %v7381, 1.0
        %v7390 = vadd.f32 %v7382, 1.0
        %v7391 = vadd.f32 %v7383, 1.0
        %v7392 = vadd.f32 %v7384, 1.0
        %v7393 = vadd.f32 %v7385, 1.0
        %v7394 = vadd.f32 %v7386, 1.0
        %v7395 = vrcp.pop %v7387
        %v7396 = vmul.f32 1.0, %v7395
        %v7397 = vrcp.pop %v7388
        %v7398 = vmul.f32 1.0, %v7397
        %v7399 = vrcp.pop %v7389
        %v7400 = vmul.f32 1.0, %v7399
        %v7401 = vrcp.pop %v7390
        %v7402 = vmul.f32 1.0, %v7401
        %v7403 = vrcp.pop %v7391
        %v7404 = vmul.f32 1.0, %v7403
        %v7405 = vrcp.pop %v7392
        %v7406 = vmul.f32 1.0, %v7405
        %v7407 = vrcp.pop %v7393
        %v7408 = vmul.f32 1.0, %v7407
        %v7409 = vrcp.pop %v7394
        %v7410 = vmul.f32 1.0, %v7409
        %v7411 = vmul.f32 %v7396, 1.0614054
        %v7412 = vmul.f32 %v7398, 1.0614054
        %v7413 = vmul.f32 %v7400, 1.0614054
        %v7414 = vmul.f32 %v7402, 1.0614054
        %v7415 = vmul.f32 %v7404, 1.0614054
        %v7416 = vmul.f32 %v7406, 1.0614054
        %v7417 = vmul.f32 %v7408, 1.0614054
        %v7418 = vmul.f32 %v7410, 1.0614054
        %v7419 = vadd.f32 %v7411, -1.4531521
        %v7420 = vadd.f32 %v7412, -1.4531521
        %v7421 = vadd.f32 %v7413, -1.4531521
        %v7422 = vadd.f32 %v7414, -1.4531521
        %v7423 = vadd.f32 %v7415, -1.4531521
        %v7424 = vadd.f32 %v7416, -1.4531521
        %v7425 = vadd.f32 %v7417, -1.4531521
        %v7426 = vadd.f32 %v7418, -1.4531521
        %v7427 = vmul.f32 %v7419, %v7396
        %v7428 = vmul.f32 %v7420, %v7398
        %v7429 = vmul.f32 %v7421, %v7400
        %v7430 = vmul.f32 %v7422, %v7402
        %v7431 = vmul.f32 %v7423, %v7404
        %v7432 = vmul.f32 %v7424, %v7406
        %v7433 = vmul.f32 %v7425, %v7408
        %v7434 = vmul.f32 %v7426, %v7410
        %v7435 = vadd.f32 %v7427, 1.4214138
        %v7436 = vadd.f32 %v7428, 1.4214138
        %v7437 = vadd.f32 %v7429, 1.4214138
        %v7438 = vadd.f32 %v7430, 1.4214138
        %v7439 = vadd.f32 %v7431, 1.4214138
        %v7440 = vadd.f32 %v7432, 1.4214138
        %v7441 = vadd.f32 %v7433, 1.4214138
        %v7442 = vadd.f32 %v7434, 1.4214138
        %v7443 = vmul.f32 %v7435, %v7396
        %v7444 = vmul.f32 %v7436, %v7398
        %v7445 = vmul.f32 %v7437, %v7400
        %v7446 = vmul.f32 %v7438, %v7402
        %v7447 = vmul.f32 %v7439, %v7404
        %v7448 = vmul.f32 %v7440, %v7406
        %v7449 = vmul.f32 %v7441, %v7408
        %v7450 = vmul.f32 %v7442, %v7410
        %v7451 = vadd.f32 %v7443, -0.28449672
        %v7452 = vadd.f32 %v7444, -0.28449672
        %v7453 = vadd.f32 %v7445, -0.28449672
        %v7454 = vadd.f32 %v7446, -0.28449672
        %v7455 = vadd.f32 %v7447, -0.28449672
        %v7456 = vadd.f32 %v7448, -0.28449672
        %v7457 = vadd.f32 %v7449, -0.28449672
        %v7458 = vadd.f32 %v7450, -0.28449672
        %v7459 = vmul.f32 %v7451, %v7396
        %v7460 = vmul.f32 %v7452, %v7398
        %v7461 = vmul.f32 %v7453, %v7400
        %v7462 = vmul.f32 %v7454, %v7402
        %v7463 = vmul.f32 %v7455, %v7404
        %v7464 = vmul.f32 %v7456, %v7406
        %v7465 = vmul.f32 %v7457, %v7408
        %v7466 = vmul.f32 %v7458, %v7410
        %v7467 = vadd.f32 %v7459, 0.2548296
        %v7468 = vadd.f32 %v7460, 0.2548296
        %v7469 = vadd.f32 %v7461, 0.2548296
        %v7470 = vadd.f32 %v7462, 0.2548296
        %v7471 = vadd.f32 %v7463, 0.2548296
        %v7472 = vadd.f32 %v7464, 0.2548296
        %v7473 = vadd.f32 %v7465, 0.2548296
        %v7474 = vadd.f32 %v7466, 0.2548296
        %v7475 = vmul.f32 %v7467, %v7396
        %v7476 = vmul.f32 %v7468, %v7398
        %v7477 = vmul.f32 %v7469, %v7400
        %v7478 = vmul.f32 %v7470, %v7402
        %v7479 = vmul.f32 %v7471, %v7404
        %v7480 = vmul.f32 %v7472, %v7406
        %v7481 = vmul.f32 %v7473, %v7408
        %v7482 = vmul.f32 %v7474, %v7410
        %v7483 = vsub.f32 0.0, %v7371
        %v7484 = vsub.f32 0.0, %v7372
        %v7485 = vsub.f32 0.0, %v7373
        %v7486 = vsub.f32 0.0, %v7374
        %v7487 = vsub.f32 0.0, %v7375
        %v7488 = vsub.f32 0.0, %v7376
        %v7489 = vsub.f32 0.0, %v7377
        %v7490 = vsub.f32 0.0, %v7378
        %v7491 = vmul.f32 %v7483, %v7371
        %v7492 = vmul.f32 %v7484, %v7372
        %v7493 = vmul.f32 %v7485, %v7373
        %v7494 = vmul.f32 %v7486, %v7374
        %v7495 = vmul.f32 %v7487, %v7375
        %v7496 = vmul.f32 %v7488, %v7376
        %v7497 = vmul.f32 %v7489, %v7377
        %v7498 = vmul.f32 %v7490, %v7378
        %v7499 = vmul.f32 %v7491, 1.442695
        %v7500 = vpow.pop %v7499
        %v7501 = vmul.f32 %v7492, 1.442695
        %v7502 = vpow.pop %v7501
        %v7503 = vmul.f32 %v7493, 1.442695
        %v7504 = vpow.pop %v7503
        %v7505 = vmul.f32 %v7494, 1.442695
        %v7506 = vpow.pop %v7505
        %v7507 = vmul.f32 %v7495, 1.442695
        %v7508 = vpow.pop %v7507
        %v7509 = vmul.f32 %v7496, 1.442695
        %v7510 = vpow.pop %v7509
        %v7511 = vmul.f32 %v7497, 1.442695
        %v7512 = vpow.pop %v7511
        %v7513 = vmul.f32 %v7498, 1.442695
        %v7514 = vpow.pop %v7513
        %v7515 = vmul.f32 %v7475, %v7500
        %v7516 = vmul.f32 %v7476, %v7502
        %v7517 = vmul.f32 %v7477, %v7504
        %v7518 = vmul.f32 %v7478, %v7506
        %v7519 = vmul.f32 %v7479, %v7508
        %v7520 = vmul.f32 %v7480, %v7510
        %v7521 = vmul.f32 %v7481, %v7512
        %v7522 = vmul.f32 %v7482, %v7514
        %v7523 = vsub.f32 1.0, %v7515
        %v7524 = vsub.f32 1.0, %v7516
        %v7525 = vsub.f32 1.0, %v7517
        %v7526 = vsub.f32 1.0, %v7518
        %v7527 = vsub.f32 1.0, %v7519
        %v7528 = vsub.f32 1.0, %v7520
        %v7529 = vsub.f32 1.0, %v7521
        %v7530 = vsub.f32 1.0, %v7522
        %vm7531 = vcmp.lt.f32.partialorder %v7363, 0.0
        %vm7532 = vcmp.lt.f32.partialorder %v7364, 0.0
        %vm7533 = vcmp.lt.f32.partialorder %v7365, 0.0
        %vm7534 = vcmp.lt.f32.partialorder %v7366, 0.0
        %vm7535 = vcmp.lt.f32.partialorder %v7367, 0.0
        %vm7536 = vcmp.lt.f32.partialorder %v7368, 0.0
        %vm7537 = vcmp.lt.f32.partialorder %v7369, 0.0
        %vm7538 = vcmp.lt.f32.partialorder %v7370, 0.0
        %v7539 = vsub.f32 0.0, %v7523
        %v7540 = vsub.f32 0.0, %v7524
        %v7541 = vsub.f32 0.0, %v7525
        %v7542 = vsub.f32 0.0, %v7526
        %v7543 = vsub.f32 0.0, %v7527
        %v7544 = vsub.f32 0.0, %v7528
        %v7545 = vsub.f32 0.0, %v7529
        %v7546 = vsub.f32 0.0, %v7530
        %v7547 = vsel %vm7531, %v7539, %v7523
        %v7548 = vsel %vm7532, %v7540, %v7524
        %v7549 = vsel %vm7533, %v7541, %v7525
        %v7550 = vsel %vm7534, %v7542, %v7526
        %v7551 = vsel %vm7535, %v7543, %v7527
        %v7552 = vsel %vm7536, %v7544, %v7528
        %v7553 = vsel %vm7537, %v7545, %v7529
        %v7554 = vsel %vm7538, %v7546, %v7530
        %v7555 = vadd.f32 %v7547, 1.0
        %v7556 = vadd.f32 %v7548, 1.0
        %v7557 = vadd.f32 %v7549, 1.0
        %v7558 = vadd.f32 %v7550, 1.0
        %v7559 = vadd.f32 %v7551, 1.0
        %v7560 = vadd.f32 %v7552, 1.0
        %v7561 = vadd.f32 %v7553, 1.0
        %v7562 = vadd.f32 %v7554, 1.0
        %v7563 = vmul.f32 %v7355, %v7555
        %v7564 = vmul.f32 %v7356, %v7556
        %v7565 = vmul.f32 %v7357, %v7557
        %v7566 = vmul.f32 %v7358, %v7558
        %v7567 = vmul.f32 %v7359, %v7559
        %v7568 = vmul.f32 %v7360, %v7560
        %v7569 = vmul.f32 %v7361, %v7561
        %v7570 = vmul.f32 %v7362, %v7562
        %v7571 = vpack.c.bf16 %v7564, %v7563
        %v7572 = vpack.c.bf16 %v7566, %v7565
        %v7573 = vpack.c.bf16 %v7568, %v7567
        %v7574 = vpack.c.bf16 %v7570, %v7569
        %v7575 = vld [vmem:[%s852] sm:$0xf]
        %v7576 = vld [vmem:[%s852 + $0x4] sm:$0xf]
        %v7577 = vld [vmem:[%s852 + $0x8] sm:$0xf]
        %v7578 = vld [vmem:[%s852 + $0xc] sm:$0xf]
        %v7579 = vld [vmem:[%s852 + $0x10] sm:$0xf]
        %v7580 = vld [vmem:[%s852 + $0x14] sm:$0xf]
        %v7581 = vld [vmem:[%s852 + $0x18] sm:$0xf]
        %v7582 = vld [vmem:[%s852 + $0x1c] sm:$0xf]
        %v7583 = vld [vmem:[%s852 + $0x20] sm:$0xf]
        %v7584 = vld [vmem:[%s852 + $0x24] sm:$0xf]
        %v7585 = vld [vmem:[%s852 + $0x28] sm:$0xf]
        %v7586 = vld [vmem:[%s852 + $0x2c] sm:$0xf]
        %v7587 = vld [vmem:[%s852 + $0x30] sm:$0xf]
        %v7588 = vld [vmem:[%s852 + $0x34] sm:$0xf]
        %v7589 = vld [vmem:[%s852 + $0x38] sm:$0xf]
        %v7590 = vld [vmem:[%s852 + $0x3c] sm:$0xf]
        %v7591 = vld [vmem:[%s855] sm:$0x1]
        %v7593 = vlaneseq
        %v7594 = vshrl.u32 %v7593, 7
        %v7595 = vsub.s32 0, %v7594
        %v7596 = vrot.slane %v7591, %v7595
        %v7614 = vunpack.c.l.b16 %v7575
        %v7615 = vunpack.c.l.b16 %v7576
        %v7616 = vunpack.c.l.b16 %v7577
        %v7617 = vunpack.c.l.b16 %v7578
        %v7618 = vunpack.c.l.b16 %v7579
        %v7619 = vunpack.c.l.b16 %v7580
        %v7620 = vunpack.c.l.b16 %v7581
        %v7621 = vunpack.c.l.b16 %v7582
        %v7622 = vunpack.c.l.b16 %v7583
        %v7623 = vunpack.c.l.b16 %v7584
        %v7624 = vunpack.c.l.b16 %v7585
        %v7625 = vunpack.c.l.b16 %v7586
        %v7626 = vunpack.c.l.b16 %v7587
        %v7627 = vunpack.c.l.b16 %v7588
        %v7628 = vunpack.c.l.b16 %v7589
        %v7629 = vunpack.c.l.b16 %v7590
        %v7630 = vpack.c.b16 %v7615, %v7614
        %v7631 = vpack.c.b16 %v7617, %v7616
        %v7632 = vpack.c.b16 %v7619, %v7618
        %v7633 = vpack.c.b16 %v7621, %v7620
        %v7634 = vpack.c.b16 %v7623, %v7622
        %v7635 = vpack.c.b16 %v7625, %v7624
        %v7636 = vpack.c.b16 %v7627, %v7626
        %v7637 = vpack.c.b16 %v7629, %v7628
        %7646 = vmatprep.subr.bf16.mxu0 0
        %7647 = vmatpush1.bf16.msra.mxu0 %v7630
        %7648 = vmatprep.subr.bf16.mxu0 0
        %7649 = vmatpush1.bf16.msra.mxu0 %v7631
        %7650 = vmatprep.subr.bf16.mxu0 0
        %7651 = vmatpush1.bf16.msra.mxu0 %v7632
        %7652 = vmatprep.subr.bf16.mxu0 0
        %7653 = vmatpush1.bf16.msra.mxu0 %v7633
        %7654 = vmatprep.subr.bf16.mxu0 0
        %7655 = vmatpush1.bf16.msra.mxu0 %v7634
        %7656 = vmatprep.subr.bf16.mxu0 0
        %7657 = vmatpush1.bf16.msra.mxu0 %v7635
        %7658 = vmatprep.subr.bf16.mxu0 0
        %7659 = vmatpush1.bf16.msra.mxu0 %v7636
        %7660 = vmatprep.subr.bf16.mxu0 0
        %7661 = vmatpush1.bf16.msra.mxu0 %v7637
        %7662 = vmatprep.subr.bf16.mxu0 0
        %7663 = vmatpush1.bf16.msra.mxu0 0
        %7664 = vmatprep.subr.bf16.mxu0 0
        %7665 = vmatpush1.bf16.msra.mxu0 0
        %7666 = vmatprep.subr.bf16.mxu0 0
        %7667 = vmatpush1.bf16.msra.mxu0 0
        %7668 = vmatprep.subr.bf16.mxu0 0
        %7669 = vmatpush1.bf16.msra.mxu0 0
        %7670 = vmatprep.subr.bf16.mxu0 0
        %7671 = vmatpush1.bf16.msra.mxu0 0
        %7672 = vmatprep.subr.bf16.mxu0 0
        %7673 = vmatpush1.bf16.msra.mxu0 0
        %7674 = vmatprep.subr.bf16.mxu0 0
        %7675 = vmatpush1.bf16.msra.mxu0 0
        %7676 = vmatprep.subr.bf16.mxu0 0
        %7677 = vmatpush1.bf16.msra.mxu0 0
        %7678 = vmatprep.mubr.bf16.mxu0 0
        %7679 = vmatmul.mubr.bf16.gmra.mrb[0].mxu0 %v7571
        %v7680 = vpop.f32.mrb[0].mxu0
        %v7681 = vadd.f32 %v7596, %v7680
        %v7682 = vpop.f32.mrb[0].mxu0
        %v7683 = vpop.f32.mrb[0].mxu0
        %v7684 = vadd.f32 %v7596, %v7683
        %v7685 = vpop.f32.mrb[0].mxu0
        %7686 = vmatprep.mubr.bf16.mxu0 0
        %7687 = vmatmul.mubr.bf16.gmra.mrb[0].mxu0 %v7572
        %v7688 = vpop.f32.mrb[0].mxu0
        %v7689 = vadd.f32 %v7596, %v7688
        %v7690 = vpop.f32.mrb[0].mxu0
        %v7691 = vpop.f32.mrb[0].mxu0
        %v7692 = vadd.f32 %v7596, %v7691
        %v7693 = vpop.f32.mrb[0].mxu0
        %7694 = vmatprep.mubr.bf16.mxu0 0
        %7695 = vmatmul.mubr.bf16.gmra.mrb[0].mxu0 %v7573
        %v7696 = vpop.f32.mrb[0].mxu0
        %v7697 = vadd.f32 %v7596, %v7696
        %v7698 = vpop.f32.mrb[0].mxu0
        %v7699 = vpop.f32.mrb[0].mxu0
        %v7700 = vadd.f32 %v7596, %v7699
        %v7701 = vpop.f32.mrb[0].mxu0
        %7702 = vmatprep.mubr.bf16.mxu0 0
        %7703 = vmatmul.mubr.bf16.gmra.mrb[0].mxu0 %v7574
        %v7704 = vpop.f32.mrb[0].mxu0
        %v7705 = vadd.f32 %v7596, %v7704
        %v7706 = vpop.f32.mrb[0].mxu0
        %v7707 = vpop.f32.mrb[0].mxu0
        %v7708 = vadd.f32 %v7596, %v7707
        %v7709 = vpop.f32.mrb[0].mxu0
        %7710 = vdwg.mxu0
        %v7711 = vadd.f32 %v7109, %v7681
        %v7712 = vadd.f32 %v7110, %v7684
        %v7713 = vadd.f32 %v7111, %v7689
        %v7714 = vadd.f32 %v7112, %v7692
        %v7715 = vadd.f32 %v7113, %v7697
        %v7716 = vadd.f32 %v7114, %v7700
        %v7717 = vadd.f32 %v7115, %v7705
        %v7718 = vadd.f32 %v7116, %v7708
        %7719 = vst.msk [vmem:[#allocation2] sm:$0xff] %vm987, %v7711
        %7720 = vst.msk [vmem:[#allocation2 + $0x8] sm:$0xff] %vm987, %v7712
        %7721 = vst.msk [vmem:[#allocation2 + $0x10] sm:$0xff] %vm987, %v7713
        %7722 = vst.msk [vmem:[#allocation2 + $0x18] sm:$0xff] %vm987, %v7714
        %7723 = vst.msk [vmem:[#allocation2 + $0x20] sm:$0xff] %vm987, %v7715
        %7724 = vst.msk [vmem:[#allocation2 + $0x28] sm:$0xff] %vm987, %v7716
        %7725 = vst.msk [vmem:[#allocation2 + $0x30] sm:$0xff] %vm987, %v7717
        %7726 = vst.msk [vmem:[#allocation2 + $0x38] sm:$0xff] %vm987, %v7718
        %p7727 = scmp.eq.s32.totalorder %s39, 1
        // Predicated region
        $region113: #{tpu_custom_call.1} parent=99 // pred_check
          %p7728 = pneg %p7727
        $region114: #{tpu_custom_call.1} parent=99 // pred_check_branch
          %7730 = sbr.rel (%p7728) target = $region116
        $region115: #{tpu_custom_call.1} parent=99 // pred_region
          %v7731 = vld [vmem:[%s17] sm:$0x1]
          %v7732 = vld [vmem:[%s18] sm:$0x1]
          %v7735 = vrot.slane %v7715, 7
          %vm7736 = vcmask 1041409
          %v7737 = vsel %vm7736, %v7735, %v7711
          %vm7739 = vcmask 254976
          %v7740 = vsel %vm7739, %v7737, 0.0
          %7741 = vadd.xlane.f32.xlu0 %v7740
          %v7742 = vpop.xlane.xlu0 %7741
          %v7743 = vmul.f32 %v7742, %v1012
          %v7745 = vrot.slane %v7743, 1
          %v7748 = vsub.f32 %v7711, %v7743
          %v7749 = vsub.f32 %v7715, %v7745
          %v7750 = vmul.f32 %v7748, %v7748
          %v7751 = vmul.f32 %v7749, %v7749
          %v7754 = vrot.slane %v7751, 7
          %v7755 = vsel %vm7736, %v7754, %v7750
          %v7757 = vsel %vm7739, %v7755, 0.0
          %7758 = vadd.xlane.f32.xlu0 %v7757
          %v7759 = vpop.xlane.xlu0 %7758
          %v7760 = vmul.f32 %v7759, %v1012
          %v7761 = vadd.f32 %v7760, 1e-06
          %v7762 = vrsqrt.pop %v7761
          %v7764 = vrot.slane %v7762, 1
          %v7767 = vmul.f32 %v7748, %v7762
          %v7768 = vmul.f32 %v7749, %v7764
          %v7770 = vlaneseq
          %v7771 = vshrl.u32 %v7770, 7
          %v7772 = vsub.s32 0, %v7771
          %v7773 = vrot.slane %v7731, %v7772
          %v7775 = vmul.f32 %v7767, %v7773
          %v7776 = vmul.f32 %v7768, %v7773
          %v7778 = vlaneseq
          %v7779 = vshrl.u32 %v7778, 7
          %v7780 = vsub.s32 0, %v7779
          %v7781 = vrot.slane %v7732, %v7780
          %v7783 = vadd.f32 %v7775, %v7781
          %v7784 = vadd.f32 %v7776, %v7781
          %v7785 = vpack.c.bf16 %v7783, %v7783
          %v7786 = vpack.c.bf16 %v7784, %v7784
          %v7787 = vld [vmem:[%s19] sm:$0xf]
          %v7788 = vld [vmem:[%s19 + $0x4] sm:$0xf]
          %v7789 = vld [vmem:[%s19 + $0x8] sm:$0xf]
          %v7790 = vld [vmem:[%s19 + $0xc] sm:$0xf]
          %v7793 = vunpack.c.l.b16 %v7785
          %v7794 = vunpack.c.l.b16 %v7786
          %v7795 = vrot.slane %v7794, 7
          %v7796 = vsel %vm7736, %v7795, %v7793
          %v7797 = vpack.c.b16 %v7796, %v7796
          %v7802 = vunpack.c.l.b16 %v7787
          %v7803 = vunpack.c.l.b16 %v7788
          %v7804 = vunpack.c.l.b16 %v7789
          %v7805 = vunpack.c.l.b16 %v7790
          %v7806 = vpack.c.b16 %v7803, %v7802
          %v7807 = vpack.c.b16 %v7805, %v7804
          %v7811 = vsel %vm987, %v7797, 0
          %7813 = vmatprep.subr.bf16.mxu0 0
          %7814 = vmatpush1.bf16.msra.mxu0 %v7806
          %7815 = vmatprep.subr.bf16.mxu0 0
          %7816 = vmatpush1.bf16.msra.mxu0 %v7807
          %7817 = vmatprep.subr.bf16.mxu0 0
          %7818 = vmatpush1.bf16.msra.mxu0 0
          %7819 = vmatprep.subr.bf16.mxu0 0
          %7820 = vmatpush1.bf16.msra.mxu0 0
          %7821 = vmatprep.subr.bf16.mxu0 0
          %7822 = vmatpush1.bf16.msra.mxu0 0
          %7823 = vmatprep.subr.bf16.mxu0 0
          %7824 = vmatpush1.bf16.msra.mxu0 0
          %7825 = vmatprep.subr.bf16.mxu0 0
          %7826 = vmatpush1.bf16.msra.mxu0 0
          %7827 = vmatprep.subr.bf16.mxu0 0
          %7828 = vmatpush1.bf16.msra.mxu0 0
          %7829 = vmatprep.subr.bf16.mxu0 0
          %7830 = vmatpush1.bf16.msra.mxu0 0
          %7831 = vmatprep.subr.bf16.mxu0 0
          %7832 = vmatpush1.bf16.msra.mxu0 0
          %7833 = vmatprep.subr.bf16.mxu0 0
          %7834 = vmatpush1.bf16.msra.mxu0 0
          %7835 = vmatprep.subr.bf16.mxu0 0
          %7836 = vmatpush1.bf16.msra.mxu0 0
          %7837 = vmatprep.subr.bf16.mxu0 0
          %7838 = vmatpush1.bf16.msra.mxu0 0
          %7839 = vmatprep.subr.bf16.mxu0 0
          %7840 = vmatpush1.bf16.msra.mxu0 0
          %7841 = vmatprep.subr.bf16.mxu0 0
          %7842 = vmatpush1.bf16.msra.mxu0 0
          %7843 = vmatprep.subr.bf16.mxu0 0
          %7844 = vmatpush1.bf16.msra.mxu0 0
          %7845 = vmatprep.mubr.bf16.mxu0 0
          %7846 = vmatmul.mubr.bf16.gmra.mrb[0].mxu0 %v7811
          %v7847 = vpop.f32.mrb[0].mxu0
          %v7848 = vadd.f32 0.0, %v7847
          %v7849 = vpop.f32.mrb[0].mxu0
          %v7850 = vpop.f32.mrb[0].mxu0
          %v7851 = vpop.f32.mrb[0].mxu0
          %7852 = vdwg.mxu0
          %v7855 = vunpack.c.l.s4 1966171168
          %v7856 = vunpack.c.0.s8 %v7855
          %v7857 = vlaneseq
          %v7858 = vshrl.u32 %v7857, 7
          %v7859 = vsub.s32 %v7856, %v7858
          %v7860 = vrot.slane %v7848, %v7859
          %v7861 = vcombine.high %v7860, %v7860
          %v7863 = vunpack.c.l.s4 1966171168
          %v7864 = vunpack.c.0.s8 %v7863
          %v7865 = vlaneseq
          %v7866 = vshrl.u32 %v7865, 7
          %v7867 = vsub.s32 %v7864, %v7866
          %v7868 = vrot.slane %v7860, %v7867
          %v7870 = vunpack.c.l.s4 1966171168
          %v7871 = vunpack.c.0.s8 %v7870
          %v7872 = vlaneseq
          %v7873 = vshrl.u32 %v7872, 7
          %v7874 = vsub.s32 %v7871, %v7873
          %v7875 = vrot.slane %v7861, %v7874
          %vm7878 = vcmask 516096
          %7879 = vst.msk [vmem:[#allocation8] sm:$0x1] %vm7878, %v7868
          %7880 = vst.msk [vmem:[#allocation8 + $0x1] sm:$0x1] %vm7878, %v7875
        $region116: #{tpu_custom_call.1} parent=99 // pred_fallthru
          _
        // Predicated region
        $region117: #{tpu_custom_call.1} parent=99 // pred_check
          %p7881 = pneg %p549
        $region118: #{tpu_custom_call.1} parent=99 // pred_check_branch
          %7883 = sbr.rel (%p7881) target = $region120
        $region119: #{tpu_custom_call.1} parent=99 // pred_region
          %s7884 = smul.u32 2, %s38
          %s7886 = ssub.s32 32, 32
          %7887 = vsyncadd [#allocation5], %s7886
          %s7888 = smul.addr %s7884, 16
          %s7889 = scalar_lea.hbm %s20, %s7888
          %s7890 = sshll.u32 [#allocation8], 4
          %s7891 = int_to_ptr.vmem [resolvable:$true] %s7890
          %7896 = dma.vmem_to_hbm [thread:$0]  %s7891, 32, %s7889, [#allocation5], 16, 16, 1
        $region120: #{tpu_custom_call.1} parent=99 // pred_fallthru
          _
        // Predicated region
        $region121: #{tpu_custom_call.1} parent=99 // pred_check
          %p7897 = pneg %p549
        $region122: #{tpu_custom_call.1} parent=99 // pred_check_branch
          %7899 = sbr.rel (%p7897) target = $region124
        $region123: #{tpu_custom_call.1} parent=99 // pred_region
          %7900 = dma.done [#allocation5], 32
        $region124: #{tpu_custom_call.1} parent=99 // pred_fallthru
          _
      $region100: #{tpu_custom_call.1} parent=5 // pred_fallthru
        _
      %p7901 = scmp.le.s32.totalorder 2, %s29
      // Predicated region
      $region125: #{tpu_custom_call.1} parent=5 // pred_check
        %p7902 = pneg %p7901
      $region126: #{tpu_custom_call.1} parent=5 // pred_check_branch
        %7904 = sbr.rel (%p7902) target = $region128
      $region127: #{tpu_custom_call.1} parent=5 // pred_region
        %s7905 = ssub.s32 %s29, 2
      $region128: #{tpu_custom_call.1} parent=5 // pred_fallthru
        _
    $region6: #{tpu_custom_call.1} parent=1 // loop_footer
      %s33 = sadd.s32 1, %s29
    $region7: #{tpu_custom_call.1} parent=1 // loop_footer_branch
      %28 = sbr.rel target = $region3
    $region8: #{tpu_custom_call.1} parent=1 // loop_exit
      _
    %7906 = vsyncpa [#allocation4], 1
    %s7907 = scalar_lea.sflag [#allocation4], 1
    %7908 = vsyncpa %s7907, 1
    %7909 = vsyncpa [#allocation7], 1
    %7910 = vsyncpa [#allocation5], 1
    %s7911 = scalar_lea.sflag [#allocation5], 1
    %7912 = vsyncpa %s7911, 1

</llo_original>
